<compile_context>
chip_gen: v5e
topology: v5e:2x2
jax: 0.10.0
libtpu: 0.0.40
codegen_flags: <defaults>
</compile_context>

<pallas_src>
import functools

import jax
import jax.numpy as jnp
from jax.experimental import pallas as pl
from jax.experimental.pallas import tpu as pltpu

EPS = 1e-5
USE_APPROX_SOFTMAX_RECIP = True   # deviation from torch exact softmax (gateable)

# ----------------------- model config (small synthetic wav2vec2) --------------------
CONV_LAYERS = [(128, 10, 5), (128, 3, 2), (128, 2, 2)]  # (out_ch, kernel, stride), conv_bias=False
C_FEAT = 128         # CNN feature dim (lane-dense)
D = 128              # encoder embedding dim
H = 4                # attention heads
HD = D // H          # head dim
FFN = 256            # feed-forward dim
N_LAYERS = 2         # transformer layers
POS_K = 8            # positional conv kernel (even -> SamePad trims 1)
POS_G = 4            # positional conv groups
NORMALIZE_INPUT = True   # cfg.task.normalize
OUTPUT_NORM = True

_VMEM_LIMIT = 48 * 1024 * 1024
_PAR = pltpu.CompilerParams(dimension_semantics=("parallel",), vmem_limit_bytes=_VMEM_LIMIT)
_SEQ = pltpu.CompilerParams(dimension_semantics=("arbitrary",), vmem_limit_bytes=_VMEM_LIMIT)

_SQRT2_INV = 0.7071067811865476


def _gelu(x):
    # exact erf GELU (matches torch.nn.functional.gelu), computed in-kernel
    return x * 0.5 * (1.0 + jax.lax.erf(x * _SQRT2_INV))


# ================================ Pallas kernels =====================================

def _global_norm_kernel(x_ref, o_ref, *, eps):
    # F.layer_norm(x, x.shape): one mean/var over the whole tensor, no affine.
    x = x_ref[...]
    mu = jnp.mean(x)
    var = jnp.mean(jnp.square(x - mu))
    o_ref[...] = (x - mu) * jax.lax.rsqrt(var + eps)


def global_layer_norm(x, eps=EPS):
    # TODO(synk): for real sequence lengths this must become a tiled two-pass reduction.
    shp = x.shape
    x2 = x.reshape(-1, shp[-1])
    M, C = x2.shape
    y = pl.pallas_call(
        functools.partial(_global_norm_kernel, eps=eps),
        out_shape=jax.ShapeDtypeStruct((M, C), jnp.float32),
        grid=(1,),
        in_specs=[pl.BlockSpec((M, C), lambda i: (0, 0))],
        out_specs=pl.BlockSpec((M, C), lambda i: (0, 0)),
        compiler_params=_SEQ,
    )(x2)
    return y.reshape(shp)


def _conv_acc(xp_ref, w_ref, n_taps, t_out):
    # phase-packed conv: out[t] = sum_a xp[t + a] @ W_a   (W_a full contraction depth)
    xp = xp_ref[0]                                                            # (R, P)
    acc = jnp.dot(xp[0:t_out, :], w_ref[0], preferred_element_type=jnp.float32)
    for a in range(1, n_taps):
        acc = acc + jnp.dot(xp[a:a + t_out, :], w_ref[a],
                            preferred_element_type=jnp.float32)
    return acc


def _conv_gn_gelu_kernel(xp_ref, w_ref, g_ref, b_ref, o_ref, *, n_taps, t_out, eps):
    # conv (phase-packed matmuls) + per-channel GroupNorm over time + exact GELU
    y = _conv_acc(xp_ref, w_ref, n_taps, t_out)                               # (t_out, Cout)
    mu = jnp.mean(y, axis=0, keepdims=True)
    var = jnp.mean(jnp.square(y - mu), axis=0, keepdims=True)
    y = (y - mu) * jax.lax.rsqrt(var + eps) * g_ref[...] + b_ref[...]
    o_ref[0] = _gelu(y)


def _conv_gelu_kernel(xp_ref, w_ref, o_ref, *, n_taps, t_out):
    o_ref[0] = _gelu(_conv_acc(xp_ref, w_ref, n_taps, t_out))


def _conv_gelu_ln_proj_kernel(xp_ref, w_ref, lg_ref, lb_ref, pw_ref, pb_ref, o_ref,
                              *, n_taps, t_out, eps):
    # last conv + GELU + feature-extractor LayerNorm (affine) + post_extract_proj, fused
    y = _gelu(_conv_acc(xp_ref, w_ref, n_taps, t_out))                        # (t_out, C)
    mu = jnp.mean(y, axis=-1, keepdims=True)
    var = jnp.mean(jnp.square(y - mu), axis=-1, keepdims=True)
    yn = (y - mu) * jax.lax.rsqrt(var + eps) * lg_ref[...] + lb_ref[...]
    o_ref[0] = jnp.dot(yn, pw_ref[...], preferred_element_type=jnp.float32) + pb_ref[...]


def _posconv_ln_kernel(xp_ref, w_ref, b_ref, g_ref, be_ref, o_ref, *, K, T, pad, eps):
    # grouped pos-conv as ONE matmul: (T, K*D) shifted-window LHS x (K*D, D) block-diag weight,
    # + SamePad trim, + exact GELU, + residual, + encoder LayerNorm -- all fused.
    xp = xp_ref[0]                                                            # (T + 2*pad, D)
    lhs = jnp.concatenate([xp[k:k + T, :] for k in range(K)], axis=1)         # (T, K*D)
    pos = jnp.dot(lhs, w_ref[...], preferred_element_type=jnp.float32) + b_ref[...]
    z = xp[pad:pad + T, :] + _gelu(pos)                                       # residual (dropout=0)
    mu = jnp.mean(z, axis=-1, keepdims=True)
    var = jnp.mean(jnp.square(z - mu), axis=-1, keepdims=True)
    o_ref[0] = (z - mu) * jax.lax.rsqrt(var + eps) * g_ref[...] + be_ref[...]


def _encoder_layer_kernel(x_ref, wqkv_ref, bqkv_ref, wo_ref, bo_ref,
                          g1_ref, b1_ref, w1_ref, bf1_ref, w2_ref, bf2_ref,
                          g2_ref, b2_ref, o_ref, *, heads, scale, eps, approx_recip):
    """One fused post-LN transformer layer: QKV, per-head attention folded into out-proj,
    residual, LN1, fc1, erf-GELU, fc2, residual, LN2."""
    x = x_ref[0]                                                              # (T, D)
    d = x.shape[-1]
    hd = d // heads
    qkv = jnp.dot(x, wqkv_ref[...], preferred_element_type=jnp.float32) + bqkv_ref[...]

    attn = None
    for h in range(heads):
        q = qkv[:, h * hd:(h + 1) * hd] * scale
        k = qkv[:, d + h * hd:d + (h + 1) * hd]
        v = qkv[:, 2 * d + h * hd:2 * d + (h + 1) * hd]
        s = jax.lax.dot_general(q, k, (((1,), (1,)), ((), ())),
                                preferred_element_type=jnp.float32)           # (T, T)
        s = s - jnp.max(s, axis=-1, keepdims=True)
        p = jnp.exp(s)
        denom = jnp.sum(p, axis=-1, keepdims=True)
        if approx_recip:
            p = p * pl.reciprocal(denom, approx=True)
        else:
            p = p / denom
        o_h = jnp.dot(p, v, preferred_element_type=jnp.float32)               # (T, hd)
        # fold head h straight into the output projection (rows h*hd:(h+1)*hd of W_o)
        contrib = jnp.dot(o_h, wo_ref[h * hd:(h + 1) * hd, :],
                          preferred_element_type=jnp.float32)                 # (T, D)
        attn = contrib if attn is None else attn + contrib

    y = x + attn + bo_ref[...]                                                # residual
    mu = jnp.mean(y, axis=-1, keepdims=True)
    var = jnp.mean(jnp.square(y - mu), axis=-1, keepdims=True)
    y = (y - mu) * jax.lax.rsqrt(var + eps) * g1_ref[...] + b1_ref[...]       # self_attn_layer_norm

    h1 = jnp.dot(y, w1_ref[...], preferred_element_type=jnp.float32) + bf1_ref[...]
    h1 = _gelu(h1)                                                            # (T, FFN) stays in VMEM
    z = y + jnp.dot(h1, w2_ref[...], preferred_element_type=jnp.float32) + bf2_ref[...]
    mu = jnp.mean(z, axis=-1, keepdims=True)
    var = jnp.mean(jnp.square(z - mu), axis=-1, keepdims=True)
    o_ref[0] = (z - mu) * jax.lax.rsqrt(var + eps) * g2_ref[...] + b2_ref[...]  # final_layer_norm


# ================================ wrappers ===========================================

def _packed_width(cin, stride):
    return max(128, -(-(stride * cin) // 128) * 128)


def _pack_time(x, stride, rows, packed_pad):
    """(B, T, C) -> (B, rows, packed_pad): pack `stride` consecutive time steps into lanes."""
    Bn, T, C = x.shape
    Tp = rows * stride
    if Tp > T:
        x = jnp.pad(x, ((0, 0), (0, Tp - T), (0, 0)))
    elif Tp < T:
        x = x[:, :Tp]
    xp = x.reshape(Bn, rows, stride * C)
    if packed_pad > stride * C:
        xp = jnp.pad(xp, ((0, 0), (0, 0), (0, packed_pad - stride * C)))
    return xp


def conv_gn_gelu(xp, wp, g, b, t_out):
    Bn, R, P = xp.shape
    A, _, Cout = wp.shape
    return pl.pallas_call(
        functools.partial(_conv_gn_gelu_kernel, n_taps=A, t_out=t_out, eps=EPS),
        out_shape=jax.ShapeDtypeStruct((Bn, t_out, Cout), jnp.float32),
        grid=(Bn,),
        in_specs=[pl.BlockSpec((1, R, P), lambda i: (i, 0, 0)),
                  pl.BlockSpec((A, P, Cout), lambda i: (0, 0, 0)),
                  pl.BlockSpec((1, Cout), lambda i: (0, 0)),
                  pl.BlockSpec((1, Cout), lambda i: (0, 0))],
        out_specs=pl.BlockSpec((1, t_out, Cout), lambda i: (i, 0, 0)),
        compiler_params=_PAR,
    )(xp, wp, g, b)


def conv_gelu(xp, wp, t_out):
    Bn, R, P = xp.shape
    A, _, Cout = wp.shape
    return pl.pallas_call(
        functools.partial(_conv_gelu_kernel, n_taps=A, t_out=t_out),
        out_shape=jax.ShapeDtypeStruct((Bn, t_out, Cout), jnp.float32),
        grid=(Bn,),
        in_specs=[pl.BlockSpec((1, R, P), lambda i: (i, 0, 0)),
                  pl.BlockSpec((A, P, Cout), lambda i: (0, 0, 0))],
        out_specs=pl.BlockSpec((1, t_out, Cout), lambda i: (i, 0, 0)),
        compiler_params=_PAR,
    )(xp, wp)


def conv_gelu_ln_proj(xp, wp, lg, lb, pw, pb, t_out):
    Bn, R, P = xp.shape
    A, _, Cout = wp.shape
    Dm = pw.shape[1]
    return pl.pallas_call(
        functools.partial(_conv_gelu_ln_proj_kernel, n_taps=A, t_out=t_out, eps=EPS),
        out_shape=jax.ShapeDtypeStruct((Bn, t_out, Dm), jnp.float32),
        grid=(Bn,),
        in_specs=[pl.BlockSpec((1, R, P), lambda i: (i, 0, 0)),
                  pl.BlockSpec((A, P, Cout), lambda i: (0, 0, 0)),
                  pl.BlockSpec((1, Cout), lambda i: (0, 0)),
                  pl.BlockSpec((1, Cout), lambda i: (0, 0)),
                  pl.BlockSpec((Cout, Dm), lambda i: (0, 0)),
                  pl.BlockSpec((1, Dm), lambda i: (0, 0))],
        out_specs=pl.BlockSpec((1, t_out, Dm), lambda i: (i, 0, 0)),
        compiler_params=_PAR,
    )(xp, wp, lg, lb, pw, pb)


def posconv_residual_ln(x, wflat, bias, g, b, K):
    Bn, T, Dm = x.shape
    pad = K // 2
    xpad = jnp.pad(x, ((0, 0), (pad, pad), (0, 0)))                           # (B, T+2p, D)
    Tp = T + 2 * pad
    return pl.pallas_call(
        functools.partial(_posconv_ln_kernel, K=K, T=T, pad=pad, eps=EPS),
        out_shape=jax.ShapeDtypeStruct((Bn, T, Dm), jnp.float32),
        grid=(Bn,),
        in_specs=[pl.BlockSpec((1, Tp, Dm), lambda i: (i, 0, 0)),
                  pl.BlockSpec((K * Dm, Dm), lambda i: (0, 0)),
                  pl.BlockSpec((1, Dm), lambda i: (0, 0)),
                  pl.BlockSpec((1, Dm), lambda i: (0, 0)),
                  pl.BlockSpec((1, Dm), lambda i: (0, 0))],
        out_specs=pl.BlockSpec((1, T, Dm), lambda i: (i, 0, 0)),
        compiler_params=_PAR,
    )(xpad, wflat, bias, g, b)


def transformer_layer(x, lp, heads):
    """fairseq TransformerSentenceEncoderLayer, layer_norm_first=False (post-LN), eval mode."""
    Bn, T, Dm = x.shape
    ffn = lp["fc1_w"].shape[1]
    hd = Dm // heads
    scale = hd ** -0.5
    return pl.pallas_call(
        functools.partial(_encoder_layer_kernel, heads=heads, scale=scale, eps=EPS,
                          approx_recip=USE_APPROX_SOFTMAX_RECIP),
        out_shape=jax.ShapeDtypeStruct((Bn, T, Dm), jnp.float32),
        grid=(Bn,),
        in_specs=[pl.BlockSpec((1, T, Dm), lambda i: (i, 0, 0)),
                  pl.BlockSpec((Dm, 3 * Dm), lambda i: (0, 0)),
                  pl.BlockSpec((1, 3 * Dm), lambda i: (0, 0)),
                  pl.BlockSpec((Dm, Dm), lambda i: (0, 0)),
                  pl.BlockSpec((1, Dm), lambda i: (0, 0)),
                  pl.BlockSpec((1, Dm), lambda i: (0, 0)),
                  pl.BlockSpec((1, Dm), lambda i: (0, 0)),
                  pl.BlockSpec((Dm, ffn), lambda i: (0, 0)),
                  pl.BlockSpec((1, ffn), lambda i: (0, 0)),
                  pl.BlockSpec((ffn, Dm), lambda i: (0, 0)),
                  pl.BlockSpec((1, Dm), lambda i: (0, 0)),
                  pl.BlockSpec((1, Dm), lambda i: (0, 0)),
                  pl.BlockSpec((1, Dm), lambda i: (0, 0))],
        out_specs=pl.BlockSpec((1, T, Dm), lambda i: (i, 0, 0)),
        compiler_params=_PAR,
    )(x, lp["wqkv"], lp["bqkv"], lp["o_w"], lp["o_b"],
      lp["ln1_g"], lp["ln1_b"], lp["fc1_w"], lp["fc1_b"],
      lp["fc2_w"], lp["fc2_b"], lp["ln2_g"], lp["ln2_b"])


# ================================ full forward =======================================

def fairseq_wav2vec2_forward(wav, prep):
    """wav: (B, T_wav) -> (N_LAYERS, B, T_frames, D)  [output_all_hiddens=True]."""
    # F.layer_norm(wav, wav.shape): joint whole-tensor norm, as the SpeechBrain wrapper does.
    x = global_layer_norm(wav) if NORMALIZE_INPUT else wav

    # ---- CNN feature extractor (mode="default": GroupNorm only after first conv) ----
    h = x[:, :, None]                                     # (B, T_wav, 1) channel-last
    n_conv = len(CONV_LAYERS)
    for li, (co, k, s) in enumerate(CONV_LAYERS):
        wp = prep[f"conv{li}_wp"]
        A = wp.shape[0]
        _, Tin, Cin = h.shape
        t_out = (Tin - k) // s + 1
        rows = t_out + A - 1
        xp = _pack_time(h, s, rows, _packed_width(Cin, s))
        if li == 0:
            h = conv_gn_gelu(xp, wp, prep["gn_g"], prep["gn_b"], t_out)
        elif li == n_conv - 1:
            # last conv fused with feature-extractor LayerNorm + post_extract_proj
            h = conv_gelu_ln_proj(xp, wp, prep["fe_ln_g"], prep["fe_ln_b"],
                                  prep["proj_w"], prep["proj_b"], t_out)
        else:
            h = conv_gelu(xp, wp, t_out)

    x = h                                                  # (B, Tf, D)

    # ---- transformer encoder (layer_norm_first=False) ----
    x = posconv_residual_ln(x, prep["pos_wflat"], prep["pos_b"],
                            prep["enc_ln_g"], prep["enc_ln_b"], POS_K)

    layer_results = []
    for li in range(N_LAYERS):
        x = transformer_layer(x, prep["layers"][li], H)
        layer_results.append(x)                            # fairseq stores T,B,C; SB transposes back

    # TODO(synk): for real sizes, write each layer directly into an (L,B,T,D) slab via
    # input_output_aliases instead of stacking here.
    out = jnp.stack(layer_results, axis=0)                 # (L, B, T, D); include_CNN_layer=False
    if OUTPUT_NORM:
        out = global_layer_norm(out)                       # F.layer_norm(out, out.shape)
    return out


# ================================ parameter init / prep ==============================

def init_params(key):
    keys = iter(jax.random.split(key, 128))

    def nrm(shape, std=0.02):
        return std * jax.random.normal(next(keys), shape, jnp.float32)

    p = {}
    c_in = 1
    for li, (co, k, s) in enumerate(CONV_LAYERS):
        p[f"conv{li}_w"] = nrm((co, c_in, k), 0.5)
        c_in = co
    p["gn_g"] = jnp.ones((C_FEAT,), jnp.float32)
    p["gn_b"] = jnp.zeros((C_FEAT,), jnp.float32)
    p["fe_ln_g"] = jnp.ones((C_FEAT,), jnp.float32)
    p["fe_ln_b"] = jnp.zeros((C_FEAT,), jnp.float32)
    p["proj_w"] = nrm((C_FEAT, D))
    p["proj_b"] = jnp.zeros((D,), jnp.float32)
    p["pos_w"] = nrm((D, D // POS_G, POS_K))              # weight_norm folded into plain weight
    p["pos_b"] = jnp.zeros((D,), jnp.float32)
    p["enc_ln_g"] = jnp.ones((D,), jnp.float32)
    p["enc_ln_b"] = jnp.zeros((D,), jnp.float32)

    layers = []
    for _ in range(N_LAYERS):
        layers.append({
            "q_w": nrm((D, D)), "q_b": jnp.zeros((D,), jnp.float32),
            "k_w": nrm((D, D)), "k_b": jnp.zeros((D,), jnp.float32),
            "v_w": nrm((D, D)), "v_b": jnp.zeros((D,), jnp.float32),
            "o_w": nrm((D, D)), "o_b": jnp.zeros((D,), jnp.float32),
            "ln1_g": jnp.ones((D,), jnp.float32), "ln1_b": jnp.zeros((D,), jnp.float32),
            "fc1_w": nrm((D, FFN)), "fc1_b": jnp.zeros((FFN,), jnp.float32),
            "fc2_w": nrm((FFN, D)), "fc2_b": jnp.zeros((D,), jnp.float32),
            "ln2_g": jnp.ones((D,), jnp.float32), "ln2_b": jnp.zeros((D,), jnp.float32),
        })
    p["layers"] = layers
    return p


def _packed_conv_weight(w, stride):
    """(Cout, Cin, K) PyTorch conv weight -> (A, packed_pad, Cout) phase-packed matmul weights."""
    co, cin, k = w.shape
    A = -(-k // stride)
    packed_pad = _packed_width(cin, stride)
    wp = jnp.zeros((A, packed_pad, co), jnp.float32)
    for a in range(A):
        for r in range(stride):
            kk = a * stride + r
            if kk < k:
                wp = wp.at[a, r * cin:(r + 1) * cin, :].set(jnp.transpose(w[:, :, kk]))
    return wp


def _packed_pos_weight(w, groups):
    """(D, D//groups, K) grouped-conv weight -> (K*D, D) block-diagonal flat matmul weight."""
    Dm, Dg, K = w.shape[0], w.shape[0] // groups, w.shape[2]
    wflat = jnp.zeros((K * Dm, Dm), jnp.float32)
    for kk in range(K):
        for g in range(groups):
            blk = jnp.transpose(w[g * Dg:(g + 1) * Dg, :, kk])   # (i_local, o_local)
            wflat = wflat.at[kk * Dm + g * Dg:kk * Dm + (g + 1) * Dg,
                             g * Dg:(g + 1) * Dg].set(blk)
    return wflat


def prepare_params(p):
    """One-time weight preparation (hoisted out of the jitted forward)."""
    prep = {}
    for li, (co, k, s) in enumerate(CONV_LAYERS):
        prep[f"conv{li}_wp"] = _packed_conv_weight(p[f"conv{li}_w"], s)
    prep["gn_g"] = p["gn_g"].reshape(1, C_FEAT)
    prep["gn_b"] = p["gn_b"].reshape(1, C_FEAT)
    prep["fe_ln_g"] = p["fe_ln_g"].reshape(1, C_FEAT)
    prep["fe_ln_b"] = p["fe_ln_b"].reshape(1, C_FEAT)
    prep["proj_w"] = p["proj_w"]
    prep["proj_b"] = p["proj_b"].reshape(1, D)
    prep["pos_wflat"] = _packed_pos_weight(p["pos_w"], POS_G)
    prep["pos_b"] = p["pos_b"].reshape(1, D)
    prep["enc_ln_g"] = p["enc_ln_g"].reshape(1, D)
    prep["enc_ln_b"] = p["enc_ln_b"].reshape(1, D)

    layers = []
    for lp in p["layers"]:
        layers.append({
            "wqkv": jnp.concatenate([lp["q_w"], lp["k_w"], lp["v_w"]], axis=1),
            "bqkv": jnp.concatenate([lp["q_b"], lp["k_b"], lp["v_b"]]).reshape(1, 3 * D),
            "o_w": lp["o_w"], "o_b": lp["o_b"].reshape(1, D),
            "ln1_g": lp["ln1_g"].reshape(1, D), "ln1_b": lp["ln1_b"].reshape(1, D),
            "fc1_w": lp["fc1_w"], "fc1_b": lp["fc1_b"].reshape(1, FFN),
            "fc2_w": lp["fc2_w"], "fc2_b": lp["fc2_b"].reshape(1, D),
            "ln2_g": lp["ln2_g"].reshape(1, D), "ln2_b": lp["ln2_b"].reshape(1, D),
        })
    prep["layers"] = layers
    return prep


# ====================================== main =========================================

if __name__ == "__main__":
    key = jax.random.PRNGKey(0)
    k_param, k_wav = jax.random.split(key)
    params = init_params(k_param)
    prep = prepare_params(params)          # hoisted one-time weight prep

    B, T_WAV = 2, 490                      # 490 samples -> 97 -> 48 -> 24 frames (mult. of 8)
    wav = jax.random.normal(k_wav, (B, T_WAV), jnp.float32)

    # expected frame count from the conv stack
    t = T_WAV
    for (_, k, s) in CONV_LAYERS:
        t = (t - k) // s + 1

    out = jax.jit(fairseq_wav2vec2_forward)(wav, prep)
    out = jax.block_until_ready(out)

    assert out.shape == (N_LAYERS, B, t, D), out.shape
    assert out.dtype == jnp.float32
    assert bool(jnp.all(jnp.isfinite(out)))
    print("KERNEL_OK")
</pallas_src>

<mosaic_0001>
module attributes {stable_mosaic.version = 11 : i64} {
  func.func @_global_norm_kernel(%arg0: i32, %arg1: memref<2x490xf32, #tpu.memory_space<vmem>>, %arg2: memref<2x490xf32, #tpu.memory_space<vmem>>) attributes {dimension_semantics = [#tpu.dimension_semantics<arbitrary>], iteration_bounds = array<i64: 1>, scalar_prefetch = 0 : i64, scratch_operands = 0 : i64, tpu.core_type = #tpu.core_type<tc>, window_params = [{pipeline_mode = #tpu.pipeline_mode<synchronous>, transform_indices = @transform_0, window_bounds = array<i64: 2, 490>}, {pipeline_mode = #tpu.pipeline_mode<synchronous>, transform_indices = @transform_1, window_bounds = array<i64: 2, 490>}]} {
    %c0 = arith.constant 0 : index
    %c0_0 = arith.constant 0 : index
    %0 = vector.load %arg1[%c0, %c0_0] : memref<2x490xf32, #tpu.memory_space<vmem>>, vector<2x490xf32>
    %1 = vector.shape_cast %0 : vector<2x490xf32> to vector<1x2x490xf32>
    %cst = arith.constant dense<0.000000e+00> : vector<1xf32>
    %2 = vector.multi_reduction <add>, %1, %cst [1, 2] : vector<1x2x490xf32> to vector<1xf32>
    %3 = vector.shape_cast %2 : vector<1xf32> to vector<1x1x1xf32>
    %4 = vector.extract %3[0, 0, 0] : f32 from vector<1x1x1xf32>
    %cst_1 = arith.constant 9.800000e+02 : f32
    %5 = arith.divf %4, %cst_1 : f32
    %6 = vector.broadcast %5 : f32 to vector<2x490xf32>
    %7 = arith.subf %0, %6 : vector<2x490xf32>
    %8 = arith.mulf %7, %7 : vector<2x490xf32>
    %9 = vector.shape_cast %8 : vector<2x490xf32> to vector<1x2x490xf32>
    %cst_2 = arith.constant dense<0.000000e+00> : vector<1xf32>
    %10 = vector.multi_reduction <add>, %9, %cst_2 [1, 2] : vector<1x2x490xf32> to vector<1xf32>
    %11 = vector.shape_cast %10 : vector<1xf32> to vector<1x1x1xf32>
    %12 = vector.extract %11[0, 0, 0] : f32 from vector<1x1x1xf32>
    %cst_3 = arith.constant 9.800000e+02 : f32
    %13 = arith.divf %12, %cst_3 : f32
    %14 = vector.broadcast %5 : f32 to vector<2x490xf32>
    %15 = arith.subf %0, %14 : vector<2x490xf32>
    %cst_4 = arith.constant 9.99999974E-6 : f32
    %16 = arith.addf %13, %cst_4 : f32
    %17 = math.rsqrt %16 : f32
    %18 = vector.broadcast %17 : f32 to vector<2x490xf32>
    %19 = arith.mulf %15, %18 : vector<2x490xf32>
    %c0_5 = arith.constant 0 : index
    %c0_6 = arith.constant 0 : index
    %20 = vector.load %arg2[%c0_5, %c0_6] : memref<2x490xf32, #tpu.memory_space<vmem>>, vector<2x490xf32>
    tpu.vector_store %arg2[%c0_5, %c0_6], %19 {strides = array<i32>} : memref<2x490xf32, #tpu.memory_space<vmem>>, vector<2x490xf32>,
    return
  }
  func.func @transform_0(%arg0: i32) -> (i32, i32) {
    %c0_i32 = arith.constant 0 : i32
    %c0_i32_0 = arith.constant 0 : i32
    %c0_i32_1 = arith.constant 0 : i32
    return %c0_i32, %c0_i32_0 : i32, i32
  }
  func.func @transform_1(%arg0: i32) -> (i32, i32) {
    %c0_i32 = arith.constant 0 : i32
    %c0_i32_0 = arith.constant 0 : i32
    %c0_i32_1 = arith.constant 0 : i32
    return %c0_i32, %c0_i32_0 : i32, i32
  }
}

module attributes {stable_mosaic.version = 11 : i64} {
  func.func @_conv_gn_gelu_kernel(%arg0: i32, %arg1: memref<1x98x128xf32, #tpu.memory_space<vmem>>, %arg2: memref<2x128x128xf32, #tpu.memory_space<vmem>>, %arg3: memref<1x128xf32, #tpu.memory_space<vmem>>, %arg4: memref<1x128xf32, #tpu.memory_space<vmem>>, %arg5: memref<1x97x128xf32, #tpu.memory_space<vmem>>) attributes {dimension_semantics = [#tpu.dimension_semantics<parallel>], iteration_bounds = array<i64: 2>, scalar_prefetch = 0 : i64, scratch_operands = 0 : i64, tpu.core_type = #tpu.core_type<tc>, window_params = [{transform_indices = @transform_0, window_bounds = array<i64: 1, 98, 128>}, {pipeline_mode = #tpu.pipeline_mode<synchronous>, transform_indices = @transform_1, window_bounds = array<i64: 2, 128, 128>}, {pipeline_mode = #tpu.pipeline_mode<synchronous>, transform_indices = @transform_2, window_bounds = array<i64: 1, 128>}, {pipeline_mode = #tpu.pipeline_mode<synchronous>, transform_indices = @transform_3, window_bounds = array<i64: 1, 128>}, {transform_indices = @transform_4, window_bounds = array<i64: 1, 97, 128>}]} {
    %c0 = arith.constant 0 : index
    %c0_0 = arith.constant 0 : index
    %c0_1 = arith.constant 0 : index
    %0 = vector.load %arg1[%c0, %c0_0, %c0_1] : memref<1x98x128xf32, #tpu.memory_space<vmem>>, vector<1x98x128xf32>
    %1 = vector.shape_cast %0 : vector<1x98x128xf32> to vector<98x128xf32>
    %2 = vector.extract_strided_slice %1 {offsets = [0, 0], sizes = [97, 128], strides = [1, 1]} : vector<98x128xf32> to vector<97x128xf32>
    %c0_2 = arith.constant 0 : index
    %c0_3 = arith.constant 0 : index
    %c0_4 = arith.constant 0 : index
    %3 = vector.load %arg2[%c0_2, %c0_3, %c0_4] : memref<2x128x128xf32, #tpu.memory_space<vmem>>, vector<1x128x128xf32>
    %4 = vector.shape_cast %3 : vector<1x128x128xf32> to vector<128x128xf32>
    %cst = arith.constant dense<0.000000e+00> : vector<97x128xf32>
    %5 = tpu.matmul %2, %4, %cst {dimension_numbers = #tpu.dot_dimension_numbers<[1], [0], [0], [1], [0, 0, 1, 1], [], []>} : vector<97x128xf32>, vector<128x128xf32>, vector<97x128xf32> -> vector<97x128xf32>
    %6 = vector.extract_strided_slice %1 {offsets = [1, 0], sizes = [97, 128], strides = [1, 1]} : vector<98x128xf32> to vector<97x128xf32>
    %c1 = arith.constant 1 : index
    %c0_5 = arith.constant 0 : index
    %c0_6 = arith.constant 0 : index
    %7 = vector.load %arg2[%c1, %c0_5, %c0_6] : memref<2x128x128xf32, #tpu.memory_space<vmem>>, vector<1x128x128xf32>
    %8 = vector.shape_cast %7 : vector<1x128x128xf32> to vector<128x128xf32>
    %cst_7 = arith.constant dense<0.000000e+00> : vector<97x128xf32>
    %9 = tpu.matmul %6, %8, %cst_7 {dimension_numbers = #tpu.dot_dimension_numbers<[1], [0], [0], [1], [0, 0, 1, 1], [], []>} : vector<97x128xf32>, vector<128x128xf32>, vector<97x128xf32> -> vector<97x128xf32>
    %10 = arith.addf %5, %9 : vector<97x128xf32>
    %cst_8 = arith.constant dense<0.000000e+00> : vector<128xf32>
    %11 = vector.multi_reduction <add>, %10, %cst_8 [0] : vector<97x128xf32> to vector<128xf32>
    %12 = vector.shape_cast %11 : vector<128xf32> to vector<1x128xf32>
    %cst_9 = arith.constant 9.700000e+01 : f32
    %13 = vector.broadcast %cst_9 : f32 to vector<1x128xf32>
    %14 = arith.divf %12, %13 : vector<1x128xf32>
    %15 = vector.broadcast %14 : vector<1x128xf32> to vector<97x128xf32>
    %16 = arith.subf %10, %15 : vector<97x128xf32>
    %17 = arith.mulf %16, %16 : vector<97x128xf32>
    %cst_10 = arith.constant dense<0.000000e+00> : vector<128xf32>
    %18 = vector.multi_reduction <add>, %17, %cst_10 [0] : vector<97x128xf32> to vector<128xf32>
    %19 = vector.shape_cast %18 : vector<128xf32> to vector<1x128xf32>
    %cst_11 = arith.constant 9.700000e+01 : f32
    %20 = vector.broadcast %cst_11 : f32 to vector<1x128xf32>
    %21 = arith.divf %19, %20 : vector<1x128xf32>
    %22 = vector.broadcast %14 : vector<1x128xf32> to vector<97x128xf32>
    %23 = arith.subf %10, %22 : vector<97x128xf32>
    %cst_12 = arith.constant 9.99999974E-6 : f32
    %24 = vector.broadcast %cst_12 : f32 to vector<1x128xf32>
    %25 = arith.addf %21, %24 : vector<1x128xf32>
    %26 = math.rsqrt %25 : vector<1x128xf32>
    %27 = vector.broadcast %26 : vector<1x128xf32> to vector<97x128xf32>
    %28 = arith.mulf %23, %27 : vector<97x128xf32>
    %c0_13 = arith.constant 0 : index
    %c0_14 = arith.constant 0 : index
    %29 = vector.load %arg3[%c0_13, %c0_14] : memref<1x128xf32, #tpu.memory_space<vmem>>, vector<1x128xf32>
    %30 = vector.broadcast %29 : vector<1x128xf32> to vector<97x128xf32>
    %31 = arith.mulf %28, %30 : vector<97x128xf32>
    %c0_15 = arith.constant 0 : index
    %c0_16 = arith.constant 0 : index
    %32 = vector.load %arg4[%c0_15, %c0_16] : memref<1x128xf32, #tpu.memory_space<vmem>>, vector<1x128xf32>
    %33 = vector.broadcast %32 : vector<1x128xf32> to vector<97x128xf32>
    %34 = arith.addf %31, %33 : vector<97x128xf32>
    %cst_17 = arith.constant 5.000000e-01 : f32
    %35 = vector.broadcast %cst_17 : f32 to vector<97x128xf32>
    %36 = arith.mulf %34, %35 : vector<97x128xf32>
    %cst_18 = arith.constant 0.707106769 : f32
    %37 = vector.broadcast %cst_18 : f32 to vector<97x128xf32>
    %38 = arith.mulf %34, %37 : vector<97x128xf32>
    %39 = math.erf %38 : vector<97x128xf32>
    %cst_19 = arith.constant 1.000000e+00 : f32
    %40 = vector.broadcast %cst_19 : f32 to vector<97x128xf32>
    %41 = arith.addf %40, %39 : vector<97x128xf32>
    %42 = arith.mulf %36, %41 : vector<97x128xf32>
    %c0_20 = arith.constant 0 : index
    %c0_21 = arith.constant 0 : index
    %c0_22 = arith.constant 0 : index
    %43 = vector.load %arg5[%c0_20, %c0_21, %c0_22] : memref<1x97x128xf32, #tpu.memory_space<vmem>>, vector<1x97x128xf32>
    %44 = vector.shape_cast %43 : vector<1x97x128xf32> to vector<97x128xf32>
    %45 = vector.shape_cast %42 : vector<97x128xf32> to vector<1x97x128xf32>
    tpu.vector_store %arg5[%c0_20, %c0_21, %c0_22], %45 {strides = array<i32>} : memref<1x97x128xf32, #tpu.memory_space<vmem>>, vector<1x97x128xf32>,
    return
  }
  func.func @transform_0(%arg0: i32) -> (i32, i32, i32) {
    %c0_i32 = arith.constant 0 : i32
    %c0_i32_0 = arith.constant 0 : i32
    %c0_i32_1 = arith.constant 0 : i32
    return %arg0, %c0_i32, %c0_i32_0 : i32, i32, i32
  }
  func.func @transform_1(%arg0: i32) -> (i32, i32, i32) {
    %c0_i32 = arith.constant 0 : i32
    %c0_i32_0 = arith.constant 0 : i32
    %c0_i32_1 = arith.constant 0 : i32
    %c0_i32_2 = arith.constant 0 : i32
    return %c0_i32, %c0_i32_0, %c0_i32_1 : i32, i32, i32
  }
  func.func @transform_2(%arg0: i32) -> (i32, i32) {
    %c0_i32 = arith.constant 0 : i32
    %c0_i32_0 = arith.constant 0 : i32
    %c0_i32_1 = arith.constant 0 : i32
    return %c0_i32, %c0_i32_0 : i32, i32
  }
  func.func @transform_3(%arg0: i32) -> (i32, i32) {
    %c0_i32 = arith.constant 0 : i32
    %c0_i32_0 = arith.constant 0 : i32
    %c0_i32_1 = arith.constant 0 : i32
    return %c0_i32, %c0_i32_0 : i32, i32
  }
  func.func @transform_4(%arg0: i32) -> (i32, i32, i32) {
    %c0_i32 = arith.constant 0 : i32
    %c0_i32_0 = arith.constant 0 : i32
    %c0_i32_1 = arith.constant 0 : i32
    return %arg0, %c0_i32, %c0_i32_0 : i32, i32, i32
  }
}

module attributes {stable_mosaic.version = 11 : i64} {
  func.func @_conv_gelu_kernel(%arg0: i32, %arg1: memref<1x49x256xf32, #tpu.memory_space<vmem>>, %arg2: memref<2x256x128xf32, #tpu.memory_space<vmem>>, %arg3: memref<1x48x128xf32, #tpu.memory_space<vmem>>) attributes {dimension_semantics = [#tpu.dimension_semantics<parallel>], iteration_bounds = array<i64: 2>, scalar_prefetch = 0 : i64, scratch_operands = 0 : i64, tpu.core_type = #tpu.core_type<tc>, window_params = [{transform_indices = @transform_0, window_bounds = array<i64: 1, 49, 256>}, {pipeline_mode = #tpu.pipeline_mode<synchronous>, transform_indices = @transform_1, window_bounds = array<i64: 2, 256, 128>}, {transform_indices = @transform_2, window_bounds = array<i64: 1, 48, 128>}]} {
    %c0 = arith.constant 0 : index
    %c0_0 = arith.constant 0 : index
    %c0_1 = arith.constant 0 : index
    %0 = vector.load %arg1[%c0, %c0_0, %c0_1] : memref<1x49x256xf32, #tpu.memory_space<vmem>>, vector<1x49x256xf32>
    %1 = vector.shape_cast %0 : vector<1x49x256xf32> to vector<49x256xf32>
    %2 = vector.extract_strided_slice %1 {offsets = [0, 0], sizes = [48, 256], strides = [1, 1]} : vector<49x256xf32> to vector<48x256xf32>
    %c0_2 = arith.constant 0 : index
    %c0_3 = arith.constant 0 : index
    %c0_4 = arith.constant 0 : index
    %3 = vector.load %arg2[%c0_2, %c0_3, %c0_4] : memref<2x256x128xf32, #tpu.memory_space<vmem>>, vector<1x256x128xf32>
    %4 = vector.shape_cast %3 : vector<1x256x128xf32> to vector<256x128xf32>
    %cst = arith.constant dense<0.000000e+00> : vector<48x128xf32>
    %5 = tpu.matmul %2, %4, %cst {dimension_numbers = #tpu.dot_dimension_numbers<[1], [0], [0], [1], [0, 0, 1, 1], [], []>} : vector<48x256xf32>, vector<256x128xf32>, vector<48x128xf32> -> vector<48x128xf32>
    %6 = vector.extract_strided_slice %1 {offsets = [1, 0], sizes = [48, 256], strides = [1, 1]} : vector<49x256xf32> to vector<48x256xf32>
    %c1 = arith.constant 1 : index
    %c0_5 = arith.constant 0 : index
    %c0_6 = arith.constant 0 : index
    %7 = vector.load %arg2[%c1, %c0_5, %c0_6] : memref<2x256x128xf32, #tpu.memory_space<vmem>>, vector<1x256x128xf32>
    %8 = vector.shape_cast %7 : vector<1x256x128xf32> to vector<256x128xf32>
    %cst_7 = arith.constant dense<0.000000e+00> : vector<48x128xf32>
    %9 = tpu.matmul %6, %8, %cst_7 {dimension_numbers = #tpu.dot_dimension_numbers<[1], [0], [0], [1], [0, 0, 1, 1], [], []>} : vector<48x256xf32>, vector<256x128xf32>, vector<48x128xf32> -> vector<48x128xf32>
    %10 = arith.addf %5, %9 : vector<48x128xf32>
    %cst_8 = arith.constant 5.000000e-01 : f32
    %11 = vector.broadcast %cst_8 : f32 to vector<48x128xf32>
    %12 = arith.mulf %10, %11 : vector<48x128xf32>
    %cst_9 = arith.constant 0.707106769 : f32
    %13 = vector.broadcast %cst_9 : f32 to vector<48x128xf32>
    %14 = arith.mulf %10, %13 : vector<48x128xf32>
    %15 = math.erf %14 : vector<48x128xf32>
    %cst_10 = arith.constant 1.000000e+00 : f32
    %16 = vector.broadcast %cst_10 : f32 to vector<48x128xf32>
    %17 = arith.addf %16, %15 : vector<48x128xf32>
    %18 = arith.mulf %12, %17 : vector<48x128xf32>
    %c0_11 = arith.constant 0 : index
    %c0_12 = arith.constant 0 : index
    %c0_13 = arith.constant 0 : index
    %19 = vector.load %arg3[%c0_11, %c0_12, %c0_13] : memref<1x48x128xf32, #tpu.memory_space<vmem>>, vector<1x48x128xf32>
    %20 = vector.shape_cast %19 : vector<1x48x128xf32> to vector<48x128xf32>
    %21 = vector.shape_cast %18 : vector<48x128xf32> to vector<1x48x128xf32>
    tpu.vector_store %arg3[%c0_11, %c0_12, %c0_13], %21 {strides = array<i32>} : memref<1x48x128xf32, #tpu.memory_space<vmem>>, vector<1x48x128xf32>,
    return
  }
  func.func @transform_0(%arg0: i32) -> (i32, i32, i32) {
    %c0_i32 = arith.constant 0 : i32
    %c0_i32_0 = arith.constant 0 : i32
    %c0_i32_1 = arith.constant 0 : i32
    return %arg0, %c0_i32, %c0_i32_0 : i32, i32, i32
  }
  func.func @transform_1(%arg0: i32) -> (i32, i32, i32) {
    %c0_i32 = arith.constant 0 : i32
    %c0_i32_0 = arith.constant 0 : i32
    %c0_i32_1 = arith.constant 0 : i32
    %c0_i32_2 = arith.constant 0 : i32
    return %c0_i32, %c0_i32_0, %c0_i32_1 : i32, i32, i32
  }
  func.func @transform_2(%arg0: i32) -> (i32, i32, i32) {
    %c0_i32 = arith.constant 0 : i32
    %c0_i32_0 = arith.constant 0 : i32
    %c0_i32_1 = arith.constant 0 : i32
    return %arg0, %c0_i32, %c0_i32_0 : i32, i32, i32
  }
}

module attributes {stable_mosaic.version = 11 : i64} {
  func.func @_posconv_ln_kernel(%arg0: i32, %arg1: memref<1x32x128xf32, #tpu.memory_space<vmem>>, %arg2: memref<1024x128xf32, #tpu.memory_space<vmem>>, %arg3: memref<1x128xf32, #tpu.memory_space<vmem>>, %arg4: memref<1x128xf32, #tpu.memory_space<vmem>>, %arg5: memref<1x128xf32, #tpu.memory_space<vmem>>, %arg6: memref<1x24x128xf32, #tpu.memory_space<vmem>>) attributes {dimension_semantics = [#tpu.dimension_semantics<parallel>], iteration_bounds = array<i64: 2>, scalar_prefetch = 0 : i64, scratch_operands = 0 : i64, tpu.core_type = #tpu.core_type<tc>, window_params = [{transform_indices = @transform_0, window_bounds = array<i64: 1, 32, 128>}, {pipeline_mode = #tpu.pipeline_mode<synchronous>, transform_indices = @transform_1, window_bounds = array<i64: 1024, 128>}, {pipeline_mode = #tpu.pipeline_mode<synchronous>, transform_indices = @transform_2, window_bounds = array<i64: 1, 128>}, {pipeline_mode = #tpu.pipeline_mode<synchronous>, transform_indices = @transform_3, window_bounds = array<i64: 1, 128>}, {pipeline_mode = #tpu.pipeline_mode<synchronous>, transform_indices = @transform_4, window_bounds = array<i64: 1, 128>}, {transform_indices = @transform_5, window_bounds = array<i64: 1, 24, 128>}]} {
    %c0 = arith.constant 0 : index
    %c0_0 = arith.constant 0 : index
    %c0_1 = arith.constant 0 : index
    %0 = vector.load %arg1[%c0, %c0_0, %c0_1] : memref<1x32x128xf32, #tpu.memory_space<vmem>>, vector<1x32x128xf32>
    %1 = vector.shape_cast %0 : vector<1x32x128xf32> to vector<32x128xf32>
    %2 = vector.extract_strided_slice %1 {offsets = [0, 0], sizes = [24, 128], strides = [1, 1]} : vector<32x128xf32> to vector<24x128xf32>
    %3 = vector.extract_strided_slice %1 {offsets = [1, 0], sizes = [24, 128], strides = [1, 1]} : vector<32x128xf32> to vector<24x128xf32>
    %4 = vector.extract_strided_slice %1 {offsets = [2, 0], sizes = [24, 128], strides = [1, 1]} : vector<32x128xf32> to vector<24x128xf32>
    %5 = vector.extract_strided_slice %1 {offsets = [3, 0], sizes = [24, 128], strides = [1, 1]} : vector<32x128xf32> to vector<24x128xf32>
    %6 = vector.extract_strided_slice %1 {offsets = [4, 0], sizes = [24, 128], strides = [1, 1]} : vector<32x128xf32> to vector<24x128xf32>
    %7 = vector.extract_strided_slice %1 {offsets = [5, 0], sizes = [24, 128], strides = [1, 1]} : vector<32x128xf32> to vector<24x128xf32>
    %8 = vector.extract_strided_slice %1 {offsets = [6, 0], sizes = [24, 128], strides = [1, 1]} : vector<32x128xf32> to vector<24x128xf32>
    %9 = vector.extract_strided_slice %1 {offsets = [7, 0], sizes = [24, 128], strides = [1, 1]} : vector<32x128xf32> to vector<24x128xf32>
    %10 = tpu.concatenate %2, %3, %4, %5, %6, %7, %8, %9 in 1 : vector<24x128xf32>, vector<24x128xf32>, vector<24x128xf32>, vector<24x128xf32>, vector<24x128xf32>, vector<24x128xf32>, vector<24x128xf32>, vector<24x128xf32> -> vector<24x1024xf32>
    %c0_2 = arith.constant 0 : index
    %c0_3 = arith.constant 0 : index
    %11 = vector.load %arg2[%c0_2, %c0_3] : memref<1024x128xf32, #tpu.memory_space<vmem>>, vector<1024x128xf32>
    %cst = arith.constant dense<0.000000e+00> : vector<24x128xf32>
    %12 = tpu.matmul %10, %11, %cst {dimension_numbers = #tpu.dot_dimension_numbers<[1], [0], [0], [1], [0, 0, 1, 1], [], []>} : vector<24x1024xf32>, vector<1024x128xf32>, vector<24x128xf32> -> vector<24x128xf32>
    %c0_4 = arith.constant 0 : index
    %c0_5 = arith.constant 0 : index
    %13 = vector.load %arg3[%c0_4, %c0_5] : memref<1x128xf32, #tpu.memory_space<vmem>>, vector<1x128xf32>
    %14 = vector.broadcast %13 : vector<1x128xf32> to vector<24x128xf32>
    %15 = arith.addf %12, %14 : vector<24x128xf32>
    %16 = vector.extract_strided_slice %1 {offsets = [4, 0], sizes = [24, 128], strides = [1, 1]} : vector<32x128xf32> to vector<24x128xf32>
    %cst_6 = arith.constant 5.000000e-01 : f32
    %17 = vector.broadcast %cst_6 : f32 to vector<24x128xf32>
    %18 = arith.mulf %15, %17 : vector<24x128xf32>
    %cst_7 = arith.constant 0.707106769 : f32
    %19 = vector.broadcast %cst_7 : f32 to vector<24x128xf32>
    %20 = arith.mulf %15, %19 : vector<24x128xf32>
    %21 = math.erf %20 : vector<24x128xf32>
    %cst_8 = arith.constant 1.000000e+00 : f32
    %22 = vector.broadcast %cst_8 : f32 to vector<24x128xf32>
    %23 = arith.addf %22, %21 : vector<24x128xf32>
    %24 = arith.mulf %18, %23 : vector<24x128xf32>
    %25 = arith.addf %16, %24 : vector<24x128xf32>
    %cst_9 = arith.constant dense<0.000000e+00> : vector<24xf32>
    %26 = vector.multi_reduction <add>, %25, %cst_9 [1] : vector<24x128xf32> to vector<24xf32>
    %27 = vector.shape_cast %26 : vector<24xf32> to vector<24x1xf32>
    %cst_10 = arith.constant 1.280000e+02 : f32
    %28 = vector.broadcast %cst_10 : f32 to vector<24x1xf32>
    %29 = arith.divf %27, %28 : vector<24x1xf32>
    %30 = vector.broadcast %29 : vector<24x1xf32> to vector<24x128xf32>
    %31 = arith.subf %25, %30 : vector<24x128xf32>
    %32 = arith.mulf %31, %31 : vector<24x128xf32>
    %cst_11 = arith.constant dense<0.000000e+00> : vector<24xf32>
    %33 = vector.multi_reduction <add>, %32, %cst_11 [1] : vector<24x128xf32> to vector<24xf32>
    %34 = vector.shape_cast %33 : vector<24xf32> to vector<24x1xf32>
    %cst_12 = arith.constant 1.280000e+02 : f32
    %35 = vector.broadcast %cst_12 : f32 to vector<24x1xf32>
    %36 = arith.divf %34, %35 : vector<24x1xf32>
    %37 = vector.broadcast %29 : vector<24x1xf32> to vector<24x128xf32>
    %38 = arith.subf %25, %37 : vector<24x128xf32>
    %cst_13 = arith.constant 9.99999974E-6 : f32
    %39 = vector.broadcast %cst_13 : f32 to vector<24x1xf32>
    %40 = arith.addf %36, %39 : vector<24x1xf32>
    %41 = math.rsqrt %40 : vector<24x1xf32>
    %42 = vector.broadcast %41 : vector<24x1xf32> to vector<24x128xf32>
    %43 = arith.mulf %38, %42 : vector<24x128xf32>
    %c0_14 = arith.constant 0 : index
    %c0_15 = arith.constant 0 : index
    %44 = vector.load %arg4[%c0_14, %c0_15] : memref<1x128xf32, #tpu.memory_space<vmem>>, vector<1x128xf32>
    %45 = vector.broadcast %44 : vector<1x128xf32> to vector<24x128xf32>
    %46 = arith.mulf %43, %45 : vector<24x128xf32>
    %c0_16 = arith.constant 0 : index
    %c0_17 = arith.constant 0 : index
    %47 = vector.load %arg5[%c0_16, %c0_17] : memref<1x128xf32, #tpu.memory_space<vmem>>, vector<1x128xf32>
    %48 = vector.broadcast %47 : vector<1x128xf32> to vector<24x128xf32>
    %49 = arith.addf %46, %48 : vector<24x128xf32>
    %c0_18 = arith.constant 0 : index
    %c0_19 = arith.constant 0 : index
    %c0_20 = arith.constant 0 : index
    %50 = vector.load %arg6[%c0_18, %c0_19, %c0_20] : memref<1x24x128xf32, #tpu.memory_space<vmem>>, vector<1x24x128xf32>
    %51 = vector.shape_cast %50 : vector<1x24x128xf32> to vector<24x128xf32>
    %52 = vector.shape_cast %49 : vector<24x128xf32> to vector<1x24x128xf32>
    tpu.vector_store %arg6[%c0_18, %c0_19, %c0_20], %52 {strides = array<i32>} : memref<1x24x128xf32, #tpu.memory_space<vmem>>, vector<1x24x128xf32>,
    return
  }
  func.func @transform_0(%arg0: i32) -> (i32, i32, i32) {
    %c0_i32 = arith.constant 0 : i32
    %c0_i32_0 = arith.constant 0 : i32
    %c0_i32_1 = arith.constant 0 : i32
    return %arg0, %c0_i32, %c0_i32_0 : i32, i32, i32
  }
  func.func @transform_1(%arg0: i32) -> (i32, i32) {
    %c0_i32 = arith.constant 0 : i32
    %c0_i32_0 = arith.constant 0 : i32
    %c0_i32_1 = arith.constant 0 : i32
    return %c0_i32, %c0_i32_0 : i32, i32
  }
  func.func @transform_2(%arg0: i32) -> (i32, i32) {
    %c0_i32 = arith.constant 0 : i32
    %c0_i32_0 = arith.constant 0 : i32
    %c0_i32_1 = arith.constant 0 : i32
    return %c0_i32, %c0_i32_0 : i32, i32
  }
  func.func @transform_3(%arg0: i32) -> (i32, i32) {
    %c0_i32 = arith.constant 0 : i32
    %c0_i32_0 = arith.constant 0 : i32
    %c0_i32_1 = arith.constant 0 : i32
    return %c0_i32, %c0_i32_0 : i32, i32
  }
  func.func @transform_4(%arg0: i32) -> (i32, i32) {
    %c0_i32 = arith.constant 0 : i32
    %c0_i32_0 = arith.constant 0 : i32
    %c0_i32_1 = arith.constant 0 : i32
    return %c0_i32, %c0_i32_0 : i32, i32
  }
  func.func @transform_5(%arg0: i32) -> (i32, i32, i32) {
    %c0_i32 = arith.constant 0 : i32
    %c0_i32_0 = arith.constant 0 : i32
    %c0_i32_1 = arith.constant 0 : i32
    return %arg0, %c0_i32, %c0_i32_0 : i32, i32, i32
  }
}

module attributes {stable_mosaic.version = 11 : i64} {
  func.func @_conv_gelu_ln_proj_kernel(%arg0: i32, %arg1: memref<1x24x256xf32, #tpu.memory_space<vmem>>, %arg2: memref<1x256x128xf32, #tpu.memory_space<vmem>>, %arg3: memref<1x128xf32, #tpu.memory_space<vmem>>, %arg4: memref<1x128xf32, #tpu.memory_space<vmem>>, %arg5: memref<128x128xf32, #tpu.memory_space<vmem>>, %arg6: memref<1x128xf32, #tpu.memory_space<vmem>>, %arg7: memref<1x24x128xf32, #tpu.memory_space<vmem>>) attributes {dimension_semantics = [#tpu.dimension_semantics<parallel>], iteration_bounds = array<i64: 2>, scalar_prefetch = 0 : i64, scratch_operands = 0 : i64, tpu.core_type = #tpu.core_type<tc>, window_params = [{transform_indices = @transform_0, window_bounds = array<i64: 1, 24, 256>}, {pipeline_mode = #tpu.pipeline_mode<synchronous>, transform_indices = @transform_1, window_bounds = array<i64: 1, 256, 128>}, {pipeline_mode = #tpu.pipeline_mode<synchronous>, transform_indices = @transform_2, window_bounds = array<i64: 1, 128>}, {pipeline_mode = #tpu.pipeline_mode<synchronous>, transform_indices = @transform_3, window_bounds = array<i64: 1, 128>}, {pipeline_mode = #tpu.pipeline_mode<synchronous>, transform_indices = @transform_4, window_bounds = array<i64: 128, 128>}, {pipeline_mode = #tpu.pipeline_mode<synchronous>, transform_indices = @transform_5, window_bounds = array<i64: 1, 128>}, {transform_indices = @transform_6, window_bounds = array<i64: 1, 24, 128>}]} {
    %c0 = arith.constant 0 : index
    %c0_0 = arith.constant 0 : index
    %c0_1 = arith.constant 0 : index
    %0 = vector.load %arg1[%c0, %c0_0, %c0_1] : memref<1x24x256xf32, #tpu.memory_space<vmem>>, vector<1x24x256xf32>
    %1 = vector.shape_cast %0 : vector<1x24x256xf32> to vector<24x256xf32>
    %c0_2 = arith.constant 0 : index
    %c0_3 = arith.constant 0 : index
    %c0_4 = arith.constant 0 : index
    %2 = vector.load %arg2[%c0_2, %c0_3, %c0_4] : memref<1x256x128xf32, #tpu.memory_space<vmem>>, vector<1x256x128xf32>
    %3 = vector.shape_cast %2 : vector<1x256x128xf32> to vector<256x128xf32>
    %cst = arith.constant dense<0.000000e+00> : vector<24x128xf32>
    %4 = tpu.matmul %1, %3, %cst {dimension_numbers = #tpu.dot_dimension_numbers<[1], [0], [0], [1], [0, 0, 1, 1], [], []>} : vector<24x256xf32>, vector<256x128xf32>, vector<24x128xf32> -> vector<24x128xf32>
    %cst_5 = arith.constant 5.000000e-01 : f32
    %5 = vector.broadcast %cst_5 : f32 to vector<24x128xf32>
    %6 = arith.mulf %4, %5 : vector<24x128xf32>
    %cst_6 = arith.constant 0.707106769 : f32
    %7 = vector.broadcast %cst_6 : f32 to vector<24x128xf32>
    %8 = arith.mulf %4, %7 : vector<24x128xf32>
    %9 = math.erf %8 : vector<24x128xf32>
    %cst_7 = arith.constant 1.000000e+00 : f32
    %10 = vector.broadcast %cst_7 : f32 to vector<24x128xf32>
    %11 = arith.addf %10, %9 : vector<24x128xf32>
    %12 = arith.mulf %6, %11 : vector<24x128xf32>
    %cst_8 = arith.constant dense<0.000000e+00> : vector<24xf32>
    %13 = vector.multi_reduction <add>, %12, %cst_8 [1] : vector<24x128xf32> to vector<24xf32>
    %14 = vector.shape_cast %13 : vector<24xf32> to vector<24x1xf32>
    %cst_9 = arith.constant 1.280000e+02 : f32
    %15 = vector.broadcast %cst_9 : f32 to vector<24x1xf32>
    %16 = arith.divf %14, %15 : vector<24x1xf32>
    %17 = vector.broadcast %16 : vector<24x1xf32> to vector<24x128xf32>
    %18 = arith.subf %12, %17 : vector<24x128xf32>
    %19 = arith.mulf %18, %18 : vector<24x128xf32>
    %cst_10 = arith.constant dense<0.000000e+00> : vector<24xf32>
    %20 = vector.multi_reduction <add>, %19, %cst_10 [1] : vector<24x128xf32> to vector<24xf32>
    %21 = vector.shape_cast %20 : vector<24xf32> to vector<24x1xf32>
    %cst_11 = arith.constant 1.280000e+02 : f32
    %22 = vector.broadcast %cst_11 : f32 to vector<24x1xf32>
    %23 = arith.divf %21, %22 : vector<24x1xf32>
    %24 = vector.broadcast %16 : vector<24x1xf32> to vector<24x128xf32>
    %25 = arith.subf %12, %24 : vector<24x128xf32>
    %cst_12 = arith.constant 9.99999974E-6 : f32
    %26 = vector.broadcast %cst_12 : f32 to vector<24x1xf32>
    %27 = arith.addf %23, %26 : vector<24x1xf32>
    %28 = math.rsqrt %27 : vector<24x1xf32>
    %29 = vector.broadcast %28 : vector<24x1xf32> to vector<24x128xf32>
    %30 = arith.mulf %25, %29 : vector<24x128xf32>
    %c0_13 = arith.constant 0 : index
    %c0_14 = arith.constant 0 : index
    %31 = vector.load %arg3[%c0_13, %c0_14] : memref<1x128xf32, #tpu.memory_space<vmem>>, vector<1x128xf32>
    %32 = vector.broadcast %31 : vector<1x128xf32> to vector<24x128xf32>
    %33 = arith.mulf %30, %32 : vector<24x128xf32>
    %c0_15 = arith.constant 0 : index
    %c0_16 = arith.constant 0 : index
    %34 = vector.load %arg4[%c0_15, %c0_16] : memref<1x128xf32, #tpu.memory_space<vmem>>, vector<1x128xf32>
    %35 = vector.broadcast %34 : vector<1x128xf32> to vector<24x128xf32>
    %36 = arith.addf %33, %35 : vector<24x128xf32>
    %c0_17 = arith.constant 0 : index
    %c0_18 = arith.constant 0 : index
    %37 = vector.load %arg5[%c0_17, %c0_18] : memref<128x128xf32, #tpu.memory_space<vmem>>, vector<128x128xf32>
    %cst_19 = arith.constant dense<0.000000e+00> : vector<24x128xf32>
    %38 = tpu.matmul %36, %37, %cst_19 {dimension_numbers = #tpu.dot_dimension_numbers<[1], [0], [0], [1], [0, 0, 1, 1], [], []>} : vector<24x128xf32>, vector<128x128xf32>, vector<24x128xf32> -> vector<24x128xf32>
    %c0_20 = arith.constant 0 : index
    %c0_21 = arith.constant 0 : index
    %39 = vector.load %arg6[%c0_20, %c0_21] : memref<1x128xf32, #tpu.memory_space<vmem>>, vector<1x128xf32>
    %40 = vector.broadcast %39 : vector<1x128xf32> to vector<24x128xf32>
    %41 = arith.addf %38, %40 : vector<24x128xf32>
    %c0_22 = arith.constant 0 : index
    %c0_23 = arith.constant 0 : index
    %c0_24 = arith.constant 0 : index
    %42 = vector.load %arg7[%c0_22, %c0_23, %c0_24] : memref<1x24x128xf32, #tpu.memory_space<vmem>>, vector<1x24x128xf32>
    %43 = vector.shape_cast %42 : vector<1x24x128xf32> to vector<24x128xf32>
    %44 = vector.shape_cast %41 : vector<24x128xf32> to vector<1x24x128xf32>
    tpu.vector_store %arg7[%c0_22, %c0_23, %c0_24], %44 {strides = array<i32>} : memref<1x24x128xf32, #tpu.memory_space<vmem>>, vector<1x24x128xf32>,
    return
  }
  func.func @transform_0(%arg0: i32) -> (i32, i32, i32) {
    %c0_i32 = arith.constant 0 : i32
    %c0_i32_0 = arith.constant 0 : i32
    %c0_i32_1 = arith.constant 0 : i32
    return %arg0, %c0_i32, %c0_i32_0 : i32, i32, i32
  }
  func.func @transform_1(%arg0: i32) -> (i32, i32, i32) {
    %c0_i32 = arith.constant 0 : i32
    %c0_i32_0 = arith.constant 0 : i32
    %c0_i32_1 = arith.constant 0 : i32
    %c0_i32_2 = arith.constant 0 : i32
    return %c0_i32, %c0_i32_0, %c0_i32_1 : i32, i32, i32
  }
  func.func @transform_2(%arg0: i32) -> (i32, i32) {
    %c0_i32 = arith.constant 0 : i32
    %c0_i32_0 = arith.constant 0 : i32
    %c0_i32_1 = arith.constant 0 : i32
    return %c0_i32, %c0_i32_0 : i32, i32
  }
  func.func @transform_3(%arg0: i32) -> (i32, i32) {
    %c0_i32 = arith.constant 0 : i32
    %c0_i32_0 = arith.constant 0 : i32
    %c0_i32_1 = arith.constant 0 : i32
    return %c0_i32, %c0_i32_0 : i32, i32
  }
  func.func @transform_4(%arg0: i32) -> (i32, i32) {
    %c0_i32 = arith.constant 0 : i32
    %c0_i32_0 = arith.constant 0 : i32
    %c0_i32_1 = arith.constant 0 : i32
    return %c0_i32, %c0_i32_0 : i32, i32
  }
  func.func @transform_5(%arg0: i32) -> (i32, i32) {
    %c0_i32 = arith.constant 0 : i32
    %c0_i32_0 = arith.constant 0 : i32
    %c0_i32_1 = arith.constant 0 : i32
    return %c0_i32, %c0_i32_0 : i32, i32
  }
  func.func @transform_6(%arg0: i32) -> (i32, i32, i32) {
    %c0_i32 = arith.constant 0 : i32
    %c0_i32_0 = arith.constant 0 : i32
    %c0_i32_1 = arith.constant 0 : i32
    return %arg0, %c0_i32, %c0_i32_0 : i32, i32, i32
  }
}

module attributes {stable_mosaic.version = 11 : i64} {
  func.func @_encoder_layer_kernel(%arg0: i32, %arg1: memref<1x24x128xf32, #tpu.memory_space<vmem>>, %arg2: memref<128x384xf32, #tpu.memory_space<vmem>>, %arg3: memref<1x384xf32, #tpu.memory_space<vmem>>, %arg4: memref<128x128xf32, #tpu.memory_space<vmem>>, %arg5: memref<1x128xf32, #tpu.memory_space<vmem>>, %arg6: memref<1x128xf32, #tpu.memory_space<vmem>>, %arg7: memref<1x128xf32, #tpu.memory_space<vmem>>, %arg8: memref<128x256xf32, #tpu.memory_space<vmem>>, %arg9: memref<1x256xf32, #tpu.memory_space<vmem>>, %arg10: memref<256x128xf32, #tpu.memory_space<vmem>>, %arg11: memref<1x128xf32, #tpu.memory_space<vmem>>, %arg12: memref<1x128xf32, #tpu.memory_space<vmem>>, %arg13: memref<1x128xf32, #tpu.memory_space<vmem>>, %arg14: memref<1x24x128xf32, #tpu.memory_space<vmem>>) attributes {dimension_semantics = [#tpu.dimension_semantics<parallel>], iteration_bounds = array<i64: 2>, scalar_prefetch = 0 : i64, scratch_operands = 0 : i64, tpu.core_type = #tpu.core_type<tc>, window_params = [{transform_indices = @transform_0, window_bounds = array<i64: 1, 24, 128>}, {pipeline_mode = #tpu.pipeline_mode<synchronous>, transform_indices = @transform_1, window_bounds = array<i64: 128, 384>}, {pipeline_mode = #tpu.pipeline_mode<synchronous>, transform_indices = @transform_2, window_bounds = array<i64: 1, 384>}, {pipeline_mode = #tpu.pipeline_mode<synchronous>, transform_indices = @transform_3, window_bounds = array<i64: 128, 128>}, {pipeline_mode = #tpu.pipeline_mode<synchronous>, transform_indices = @transform_4, window_bounds = array<i64: 1, 128>}, {pipeline_mode = #tpu.pipeline_mode<synchronous>, transform_indices = @transform_5, window_bounds = array<i64: 1, 128>}, {pipeline_mode = #tpu.pipeline_mode<synchronous>, transform_indices = @transform_6, window_bounds = array<i64: 1, 128>}, {pipeline_mode = #tpu.pipeline_mode<synchronous>, transform_indices = @transform_7, window_bounds = array<i64: 128, 256>}, {pipeline_mode = #tpu.pipeline_mode<synchronous>, transform_indices = @transform_8, window_bounds = array<i64: 1, 256>}, {pipeline_mode = #tpu.pipeline_mode<synchronous>, transform_indices = @transform_9, window_bounds = array<i64: 256, 128>}, {pipeline_mode = #tpu.pipeline_mode<synchronous>, transform_indices = @transform_10, window_bounds = array<i64: 1, 128>}, {pipeline_mode = #tpu.pipeline_mode<synchronous>, transform_indices = @transform_11, window_bounds = array<i64: 1, 128>}, {pipeline_mode = #tpu.pipeline_mode<synchronous>, transform_indices = @transform_12, window_bounds = array<i64: 1, 128>}, {transform_indices = @transform_13, window_bounds = array<i64: 1, 24, 128>}]} {
    %c0 = arith.constant 0 : index
    %c0_0 = arith.constant 0 : index
    %c0_1 = arith.constant 0 : index
    %0 = vector.load %arg1[%c0, %c0_0, %c0_1] : memref<1x24x128xf32, #tpu.memory_space<vmem>>, vector<1x24x128xf32>
    %1 = vector.shape_cast %0 : vector<1x24x128xf32> to vector<24x128xf32>
    %c0_2 = arith.constant 0 : index
    %c0_3 = arith.constant 0 : index
    %2 = vector.load %arg2[%c0_2, %c0_3] : memref<128x384xf32, #tpu.memory_space<vmem>>, vector<128x384xf32>
    %cst = arith.constant dense<0.000000e+00> : vector<24x384xf32>
    %3 = tpu.matmul %1, %2, %cst {dimension_numbers = #tpu.dot_dimension_numbers<[1], [0], [0], [1], [0, 0, 1, 1], [], []>} : vector<24x128xf32>, vector<128x384xf32>, vector<24x384xf32> -> vector<24x384xf32>
    %c0_4 = arith.constant 0 : index
    %c0_5 = arith.constant 0 : index
    %4 = vector.load %arg3[%c0_4, %c0_5] : memref<1x384xf32, #tpu.memory_space<vmem>>, vector<1x384xf32>
    %5 = vector.broadcast %4 : vector<1x384xf32> to vector<24x384xf32>
    %6 = arith.addf %3, %5 : vector<24x384xf32>
    %7 = vector.extract_strided_slice %6 {offsets = [0, 0], sizes = [24, 32], strides = [1, 1]} : vector<24x384xf32> to vector<24x32xf32>
    %cst_6 = arith.constant 0.176776692 : f32
    %8 = vector.broadcast %cst_6 : f32 to vector<24x32xf32>
    %9 = arith.mulf %7, %8 : vector<24x32xf32>
    %10 = vector.extract_strided_slice %6 {offsets = [0, 128], sizes = [24, 32], strides = [1, 1]} : vector<24x384xf32> to vector<24x32xf32>
    %11 = vector.extract_strided_slice %6 {offsets = [0, 256], sizes = [24, 32], strides = [1, 1]} : vector<24x384xf32> to vector<24x32xf32>
    %cst_7 = arith.constant dense<0.000000e+00> : vector<24x24xf32>
    %12 = tpu.matmul %9, %10, %cst_7 {dimension_numbers = #tpu.dot_dimension_numbers<[1], [1], [0], [0], [0, 0, 1, 0], [], []>} : vector<24x32xf32>, vector<24x32xf32>, vector<24x24xf32> -> vector<24x24xf32>
    %cst_8 = arith.constant dense<0xFF800000> : vector<24xf32>
    %13 = vector.multi_reduction <maximumf>, %12, %cst_8 [1] : vector<24x24xf32> to vector<24xf32>
    %14 = vector.shape_cast %13 : vector<24xf32> to vector<24x1xf32>
    %15 = vector.broadcast %14 : vector<24x1xf32> to vector<24x24xf32>
    %16 = arith.subf %12, %15 : vector<24x24xf32>
    %17 = math.exp %16 : vector<24x24xf32>
    %cst_9 = arith.constant dense<0.000000e+00> : vector<24xf32>
    %18 = vector.multi_reduction <add>, %17, %cst_9 [1] : vector<24x24xf32> to vector<24xf32>
    %19 = vector.shape_cast %18 : vector<24xf32> to vector<24x1xf32>
    %20 = tpu.reciprocal %19 {approx = true} : vector<24x1xf32> -> vector<24x1xf32>
    %21 = vector.broadcast %20 : vector<24x1xf32> to vector<24x24xf32>
    %22 = arith.mulf %17, %21 : vector<24x24xf32>
    %cst_10 = arith.constant dense<0.000000e+00> : vector<24x32xf32>
    %23 = tpu.matmul %22, %11, %cst_10 {dimension_numbers = #tpu.dot_dimension_numbers<[1], [0], [0], [1], [0, 0, 1, 1], [], []>} : vector<24x24xf32>, vector<24x32xf32>, vector<24x32xf32> -> vector<24x32xf32>
    %c0_11 = arith.constant 0 : index
    %c0_12 = arith.constant 0 : index
    %24 = vector.load %arg4[%c0_11, %c0_12] : memref<128x128xf32, #tpu.memory_space<vmem>>, vector<32x128xf32>
    %cst_13 = arith.constant dense<0.000000e+00> : vector<24x128xf32>
    %25 = tpu.matmul %23, %24, %cst_13 {dimension_numbers = #tpu.dot_dimension_numbers<[1], [0], [0], [1], [0, 0, 1, 1], [], []>} : vector<24x32xf32>, vector<32x128xf32>, vector<24x128xf32> -> vector<24x128xf32>
    %26 = vector.extract_strided_slice %6 {offsets = [0, 32], sizes = [24, 32], strides = [1, 1]} : vector<24x384xf32> to vector<24x32xf32>
    %cst_14 = arith.constant 0.176776692 : f32
    %27 = vector.broadcast %cst_14 : f32 to vector<24x32xf32>
    %28 = arith.mulf %26, %27 : vector<24x32xf32>
    %29 = vector.extract_strided_slice %6 {offsets = [0, 160], sizes = [24, 32], strides = [1, 1]} : vector<24x384xf32> to vector<24x32xf32>
    %30 = vector.extract_strided_slice %6 {offsets = [0, 288], sizes = [24, 32], strides = [1, 1]} : vector<24x384xf32> to vector<24x32xf32>
    %cst_15 = arith.constant dense<0.000000e+00> : vector<24x24xf32>
    %31 = tpu.matmul %28, %29, %cst_15 {dimension_numbers = #tpu.dot_dimension_numbers<[1], [1], [0], [0], [0, 0, 1, 0], [], []>} : vector<24x32xf32>, vector<24x32xf32>, vector<24x24xf32> -> vector<24x24xf32>
    %cst_16 = arith.constant dense<0xFF800000> : vector<24xf32>
    %32 = vector.multi_reduction <maximumf>, %31, %cst_16 [1] : vector<24x24xf32> to vector<24xf32>
    %33 = vector.shape_cast %32 : vector<24xf32> to vector<24x1xf32>
    %34 = vector.broadcast %33 : vector<24x1xf32> to vector<24x24xf32>
    %35 = arith.subf %31, %34 : vector<24x24xf32>
    %36 = math.exp %35 : vector<24x24xf32>
    %cst_17 = arith.constant dense<0.000000e+00> : vector<24xf32>
    %37 = vector.multi_reduction <add>, %36, %cst_17 [1] : vector<24x24xf32> to vector<24xf32>
    %38 = vector.shape_cast %37 : vector<24xf32> to vector<24x1xf32>
    %39 = tpu.reciprocal %38 {approx = true} : vector<24x1xf32> -> vector<24x1xf32>
    %40 = vector.broadcast %39 : vector<24x1xf32> to vector<24x24xf32>
    %41 = arith.mulf %36, %40 : vector<24x24xf32>
    %cst_18 = arith.constant dense<0.000000e+00> : vector<24x32xf32>
    %42 = tpu.matmul %41, %30, %cst_18 {dimension_numbers = #tpu.dot_dimension_numbers<[1], [0], [0], [1], [0, 0, 1, 1], [], []>} : vector<24x24xf32>, vector<24x32xf32>, vector<24x32xf32> -> vector<24x32xf32>
    %c32 = arith.constant 32 : index
    %c0_19 = arith.constant 0 : index
    %43 = vector.load %arg4[%c32, %c0_19] : memref<128x128xf32, #tpu.memory_space<vmem>>, vector<32x128xf32>
    %cst_20 = arith.constant dense<0.000000e+00> : vector<24x128xf32>
    %44 = tpu.matmul %42, %43, %cst_20 {dimension_numbers = #tpu.dot_dimension_numbers<[1], [0], [0], [1], [0, 0, 1, 1], [], []>} : vector<24x32xf32>, vector<32x128xf32>, vector<24x128xf32> -> vector<24x128xf32>
    %45 = arith.addf %25, %44 : vector<24x128xf32>
    %46 = vector.extract_strided_slice %6 {offsets = [0, 64], sizes = [24, 32], strides = [1, 1]} : vector<24x384xf32> to vector<24x32xf32>
    %cst_21 = arith.constant 0.176776692 : f32
    %47 = vector.broadcast %cst_21 : f32 to vector<24x32xf32>
    %48 = arith.mulf %46, %47 : vector<24x32xf32>
    %49 = vector.extract_strided_slice %6 {offsets = [0, 192], sizes = [24, 32], strides = [1, 1]} : vector<24x384xf32> to vector<24x32xf32>
    %50 = vector.extract_strided_slice %6 {offsets = [0, 320], sizes = [24, 32], strides = [1, 1]} : vector<24x384xf32> to vector<24x32xf32>
    %cst_22 = arith.constant dense<0.000000e+00> : vector<24x24xf32>
    %51 = tpu.matmul %48, %49, %cst_22 {dimension_numbers = #tpu.dot_dimension_numbers<[1], [1], [0], [0], [0, 0, 1, 0], [], []>} : vector<24x32xf32>, vector<24x32xf32>, vector<24x24xf32> -> vector<24x24xf32>
    %cst_23 = arith.constant dense<0xFF800000> : vector<24xf32>
    %52 = vector.multi_reduction <maximumf>, %51, %cst_23 [1] : vector<24x24xf32> to vector<24xf32>
    %53 = vector.shape_cast %52 : vector<24xf32> to vector<24x1xf32>
    %54 = vector.broadcast %53 : vector<24x1xf32> to vector<24x24xf32>
    %55 = arith.subf %51, %54 : vector<24x24xf32>
    %56 = math.exp %55 : vector<24x24xf32>
    %cst_24 = arith.constant dense<0.000000e+00> : vector<24xf32>
    %57 = vector.multi_reduction <add>, %56, %cst_24 [1] : vector<24x24xf32> to vector<24xf32>
    %58 = vector.shape_cast %57 : vector<24xf32> to vector<24x1xf32>
    %59 = tpu.reciprocal %58 {approx = true} : vector<24x1xf32> -> vector<24x1xf32>
    %60 = vector.broadcast %59 : vector<24x1xf32> to vector<24x24xf32>
    %61 = arith.mulf %56, %60 : vector<24x24xf32>
    %cst_25 = arith.constant dense<0.000000e+00> : vector<24x32xf32>
    %62 = tpu.matmul %61, %50, %cst_25 {dimension_numbers = #tpu.dot_dimension_numbers<[1], [0], [0], [1], [0, 0, 1, 1], [], []>} : vector<24x24xf32>, vector<24x32xf32>, vector<24x32xf32> -> vector<24x32xf32>
    %c64 = arith.constant 64 : index
    %c0_26 = arith.constant 0 : index
    %63 = vector.load %arg4[%c64, %c0_26] : memref<128x128xf32, #tpu.memory_space<vmem>>, vector<32x128xf32>
    %cst_27 = arith.constant dense<0.000000e+00> : vector<24x128xf32>
    %64 = tpu.matmul %62, %63, %cst_27 {dimension_numbers = #tpu.dot_dimension_numbers<[1], [0], [0], [1], [0, 0, 1, 1], [], []>} : vector<24x32xf32>, vector<32x128xf32>, vector<24x128xf32> -> vector<24x128xf32>
    %65 = arith.addf %45, %64 : vector<24x128xf32>
    %66 = vector.extract_strided_slice %6 {offsets = [0, 96], sizes = [24, 32], strides = [1, 1]} : vector<24x384xf32> to vector<24x32xf32>
    %cst_28 = arith.constant 0.176776692 : f32
    %67 = vector.broadcast %cst_28 : f32 to vector<24x32xf32>
    %68 = arith.mulf %66, %67 : vector<24x32xf32>
    %69 = vector.extract_strided_slice %6 {offsets = [0, 224], sizes = [24, 32], strides = [1, 1]} : vector<24x384xf32> to vector<24x32xf32>
    %70 = vector.extract_strided_slice %6 {offsets = [0, 352], sizes = [24, 32], strides = [1, 1]} : vector<24x384xf32> to vector<24x32xf32>
    %cst_29 = arith.constant dense<0.000000e+00> : vector<24x24xf32>
    %71 = tpu.matmul %68, %69, %cst_29 {dimension_numbers = #tpu.dot_dimension_numbers<[1], [1], [0], [0], [0, 0, 1, 0], [], []>} : vector<24x32xf32>, vector<24x32xf32>, vector<24x24xf32> -> vector<24x24xf32>
    %cst_30 = arith.constant dense<0xFF800000> : vector<24xf32>
    %72 = vector.multi_reduction <maximumf>, %71, %cst_30 [1] : vector<24x24xf32> to vector<24xf32>
    %73 = vector.shape_cast %72 : vector<24xf32> to vector<24x1xf32>
    %74 = vector.broadcast %73 : vector<24x1xf32> to vector<24x24xf32>
    %75 = arith.subf %71, %74 : vector<24x24xf32>
    %76 = math.exp %75 : vector<24x24xf32>
    %cst_31 = arith.constant dense<0.000000e+00> : vector<24xf32>
    %77 = vector.multi_reduction <add>, %76, %cst_31 [1] : vector<24x24xf32> to vector<24xf32>
    %78 = vector.shape_cast %77 : vector<24xf32> to vector<24x1xf32>
    %79 = tpu.reciprocal %78 {approx = true} : vector<24x1xf32> -> vector<24x1xf32>
    %80 = vector.broadcast %79 : vector<24x1xf32> to vector<24x24xf32>
    %81 = arith.mulf %76, %80 : vector<24x24xf32>
    %cst_32 = arith.constant dense<0.000000e+00> : vector<24x32xf32>
    %82 = tpu.matmul %81, %70, %cst_32 {dimension_numbers = #tpu.dot_dimension_numbers<[1], [0], [0], [1], [0, 0, 1, 1], [], []>} : vector<24x24xf32>, vector<24x32xf32>, vector<24x32xf32> -> vector<24x32xf32>
    %c96 = arith.constant 96 : index
    %c0_33 = arith.constant 0 : index
    %83 = vector.load %arg4[%c96, %c0_33] : memref<128x128xf32, #tpu.memory_space<vmem>>, vector<32x128xf32>
    %cst_34 = arith.constant dense<0.000000e+00> : vector<24x128xf32>
    %84 = tpu.matmul %82, %83, %cst_34 {dimension_numbers = #tpu.dot_dimension_numbers<[1], [0], [0], [1], [0, 0, 1, 1], [], []>} : vector<24x32xf32>, vector<32x128xf32>, vector<24x128xf32> -> vector<24x128xf32>
    %85 = arith.addf %65, %84 : vector<24x128xf32>
    %86 = arith.addf %1, %85 : vector<24x128xf32>
    %c0_35 = arith.constant 0 : index
    %c0_36 = arith.constant 0 : index
    %87 = vector.load %arg5[%c0_35, %c0_36] : memref<1x128xf32, #tpu.memory_space<vmem>>, vector<1x128xf32>
    %88 = vector.broadcast %87 : vector<1x128xf32> to vector<24x128xf32>
    %89 = arith.addf %86, %88 : vector<24x128xf32>
    %cst_37 = arith.constant dense<0.000000e+00> : vector<24xf32>
    %90 = vector.multi_reduction <add>, %89, %cst_37 [1] : vector<24x128xf32> to vector<24xf32>
    %91 = vector.shape_cast %90 : vector<24xf32> to vector<24x1xf32>
    %cst_38 = arith.constant 1.280000e+02 : f32
    %92 = vector.broadcast %cst_38 : f32 to vector<24x1xf32>
    %93 = arith.divf %91, %92 : vector<24x1xf32>
    %94 = vector.broadcast %93 : vector<24x1xf32> to vector<24x128xf32>
    %95 = arith.subf %89, %94 : vector<24x128xf32>
    %96 = arith.mulf %95, %95 : vector<24x128xf32>
    %cst_39 = arith.constant dense<0.000000e+00> : vector<24xf32>
    %97 = vector.multi_reduction <add>, %96, %cst_39 [1] : vector<24x128xf32> to vector<24xf32>
    %98 = vector.shape_cast %97 : vector<24xf32> to vector<24x1xf32>
    %cst_40 = arith.constant 1.280000e+02 : f32
    %99 = vector.broadcast %cst_40 : f32 to vector<24x1xf32>
    %100 = arith.divf %98, %99 : vector<24x1xf32>
    %101 = vector.broadcast %93 : vector<24x1xf32> to vector<24x128xf32>
    %102 = arith.subf %89, %101 : vector<24x128xf32>
    %cst_41 = arith.constant 9.99999974E-6 : f32
    %103 = vector.broadcast %cst_41 : f32 to vector<24x1xf32>
    %104 = arith.addf %100, %103 : vector<24x1xf32>
    %105 = math.rsqrt %104 : vector<24x1xf32>
    %106 = vector.broadcast %105 : vector<24x1xf32> to vector<24x128xf32>
    %107 = arith.mulf %102, %106 : vector<24x128xf32>
    %c0_42 = arith.constant 0 : index
    %c0_43 = arith.constant 0 : index
    %108 = vector.load %arg6[%c0_42, %c0_43] : memref<1x128xf32, #tpu.memory_space<vmem>>, vector<1x128xf32>
    %109 = vector.broadcast %108 : vector<1x128xf32> to vector<24x128xf32>
    %110 = arith.mulf %107, %109 : vector<24x128xf32>
    %c0_44 = arith.constant 0 : index
    %c0_45 = arith.constant 0 : index
    %111 = vector.load %arg7[%c0_44, %c0_45] : memref<1x128xf32, #tpu.memory_space<vmem>>, vector<1x128xf32>
    %112 = vector.broadcast %111 : vector<1x128xf32> to vector<24x128xf32>
    %113 = arith.addf %110, %112 : vector<24x128xf32>
    %c0_46 = arith.constant 0 : index
    %c0_47 = arith.constant 0 : index
    %114 = vector.load %arg8[%c0_46, %c0_47] : memref<128x256xf32, #tpu.memory_space<vmem>>, vector<128x256xf32>
    %cst_48 = arith.constant dense<0.000000e+00> : vector<24x256xf32>
    %115 = tpu.matmul %113, %114, %cst_48 {dimension_numbers = #tpu.dot_dimension_numbers<[1], [0], [0], [1], [0, 0, 1, 1], [], []>} : vector<24x128xf32>, vector<128x256xf32>, vector<24x256xf32> -> vector<24x256xf32>
    %c0_49 = arith.constant 0 : index
    %c0_50 = arith.constant 0 : index
    %116 = vector.load %arg9[%c0_49, %c0_50] : memref<1x256xf32, #tpu.memory_space<vmem>>, vector<1x256xf32>
    %117 = vector.broadcast %116 : vector<1x256xf32> to vector<24x256xf32>
    %118 = arith.addf %115, %117 : vector<24x256xf32>
    %cst_51 = arith.constant 5.000000e-01 : f32
    %119 = vector.broadcast %cst_51 : f32 to vector<24x256xf32>
    %120 = arith.mulf %118, %119 : vector<24x256xf32>
    %cst_52 = arith.constant 0.707106769 : f32
    %121 = vector.broadcast %cst_52 : f32 to vector<24x256xf32>
    %122 = arith.mulf %118, %121 : vector<24x256xf32>
    %123 = math.erf %122 : vector<24x256xf32>
    %cst_53 = arith.constant 1.000000e+00 : f32
    %124 = vector.broadcast %cst_53 : f32 to vector<24x256xf32>
    %125 = arith.addf %124, %123 : vector<24x256xf32>
    %126 = arith.mulf %120, %125 : vector<24x256xf32>
    %c0_54 = arith.constant 0 : index
    %c0_55 = arith.constant 0 : index
    %127 = vector.load %arg10[%c0_54, %c0_55] : memref<256x128xf32, #tpu.memory_space<vmem>>, vector<256x128xf32>
    %cst_56 = arith.constant dense<0.000000e+00> : vector<24x128xf32>
    %128 = tpu.matmul %126, %127, %cst_56 {dimension_numbers = #tpu.dot_dimension_numbers<[1], [0], [0], [1], [0, 0, 1, 1], [], []>} : vector<24x256xf32>, vector<256x128xf32>, vector<24x128xf32> -> vector<24x128xf32>
    %129 = arith.addf %113, %128 : vector<24x128xf32>
    %c0_57 = arith.constant 0 : index
    %c0_58 = arith.constant 0 : index
    %130 = vector.load %arg11[%c0_57, %c0_58] : memref<1x128xf32, #tpu.memory_space<vmem>>, vector<1x128xf32>
    %131 = vector.broadcast %130 : vector<1x128xf32> to vector<24x128xf32>
    %132 = arith.addf %129, %131 : vector<24x128xf32>
    %cst_59 = arith.constant dense<0.000000e+00> : vector<24xf32>
    %133 = vector.multi_reduction <add>, %132, %cst_59 [1] : vector<24x128xf32> to vector<24xf32>
    %134 = vector.shape_cast %133 : vector<24xf32> to vector<24x1xf32>
    %cst_60 = arith.constant 1.280000e+02 : f32
    %135 = vector.broadcast %cst_60 : f32 to vector<24x1xf32>
    %136 = arith.divf %134, %135 : vector<24x1xf32>
    %137 = vector.broadcast %136 : vector<24x1xf32> to vector<24x128xf32>
    %138 = arith.subf %132, %137 : vector<24x128xf32>
    %139 = arith.mulf %138, %138 : vector<24x128xf32>
    %cst_61 = arith.constant dense<0.000000e+00> : vector<24xf32>
    %140 = vector.multi_reduction <add>, %139, %cst_61 [1] : vector<24x128xf32> to vector<24xf32>
    %141 = vector.shape_cast %140 : vector<24xf32> to vector<24x1xf32>
    %cst_62 = arith.constant 1.280000e+02 : f32
    %142 = vector.broadcast %cst_62 : f32 to vector<24x1xf32>
    %143 = arith.divf %141, %142 : vector<24x1xf32>
    %144 = vector.broadcast %136 : vector<24x1xf32> to vector<24x128xf32>
    %145 = arith.subf %132, %144 : vector<24x128xf32>
    %cst_63 = arith.constant 9.99999974E-6 : f32
    %146 = vector.broadcast %cst_63 : f32 to vector<24x1xf32>
    %147 = arith.addf %143, %146 : vector<24x1xf32>
    %148 = math.rsqrt %147 : vector<24x1xf32>
    %149 = vector.broadcast %148 : vector<24x1xf32> to vector<24x128xf32>
    %150 = arith.mulf %145, %149 : vector<24x128xf32>
    %c0_64 = arith.constant 0 : index
    %c0_65 = arith.constant 0 : index
    %151 = vector.load %arg12[%c0_64, %c0_65] : memref<1x128xf32, #tpu.memory_space<vmem>>, vector<1x128xf32>
    %152 = vector.broadcast %151 : vector<1x128xf32> to vector<24x128xf32>
    %153 = arith.mulf %150, %152 : vector<24x128xf32>
    %c0_66 = arith.constant 0 : index
    %c0_67 = arith.constant 0 : index
    %154 = vector.load %arg13[%c0_66, %c0_67] : memref<1x128xf32, #tpu.memory_space<vmem>>, vector<1x128xf32>
    %155 = vector.broadcast %154 : vector<1x128xf32> to vector<24x128xf32>
    %156 = arith.addf %153, %155 : vector<24x128xf32>
    %c0_68 = arith.constant 0 : index
    %c0_69 = arith.constant 0 : index
    %c0_70 = arith.constant 0 : index
    %157 = vector.load %arg14[%c0_68, %c0_69, %c0_70] : memref<1x24x128xf32, #tpu.memory_space<vmem>>, vector<1x24x128xf32>
    %158 = vector.shape_cast %157 : vector<1x24x128xf32> to vector<24x128xf32>
    %159 = vector.shape_cast %156 : vector<24x128xf32> to vector<1x24x128xf32>
    tpu.vector_store %arg14[%c0_68, %c0_69, %c0_70], %159 {strides = array<i32>} : memref<1x24x128xf32, #tpu.memory_space<vmem>>, vector<1x24x128xf32>,
    return
  }
  func.func @transform_0(%arg0: i32) -> (i32, i32, i32) {
    %c0_i32 = arith.constant 0 : i32
    %c0_i32_0 = arith.constant 0 : i32
    %c0_i32_1 = arith.constant 0 : i32
    return %arg0, %c0_i32, %c0_i32_0 : i32, i32, i32
  }
  func.func @transform_1(%arg0: i32) -> (i32, i32) {
    %c0_i32 = arith.constant 0 : i32
    %c0_i32_0 = arith.constant 0 : i32
    %c0_i32_1 = arith.constant 0 : i32
    return %c0_i32, %c0_i32_0 : i32, i32
  }
  func.func @transform_2(%arg0: i32) -> (i32, i32) {
    %c0_i32 = arith.constant 0 : i32
    %c0_i32_0 = arith.constant 0 : i32
    %c0_i32_1 = arith.constant 0 : i32
    return %c0_i32, %c0_i32_0 : i32, i32
  }
  func.func @transform_3(%arg0: i32) -> (i32, i32) {
    %c0_i32 = arith.constant 0 : i32
    %c0_i32_0 = arith.constant 0 : i32
    %c0_i32_1 = arith.constant 0 : i32
    return %c0_i32, %c0_i32_0 : i32, i32
  }
  func.func @transform_4(%arg0: i32) -> (i32, i32) {
    %c0_i32 = arith.constant 0 : i32
    %c0_i32_0 = arith.constant 0 : i32
    %c0_i32_1 = arith.constant 0 : i32
    return %c0_i32, %c0_i32_0 : i32, i32
  }
  func.func @transform_5(%arg0: i32) -> (i32, i32) {
    %c0_i32 = arith.constant 0 : i32
    %c0_i32_0 = arith.constant 0 : i32
    %c0_i32_1 = arith.constant 0 : i32
    return %c0_i32, %c0_i32_0 : i32, i32
  }
  func.func @transform_6(%arg0: i32) -> (i32, i32) {
    %c0_i32 = arith.constant 0 : i32
    %c0_i32_0 = arith.constant 0 : i32
    %c0_i32_1 = arith.constant 0 : i32
    return %c0_i32, %c0_i32_0 : i32, i32
  }
  func.func @transform_7(%arg0: i32) -> (i32, i32) {
    %c0_i32 = arith.constant 0 : i32
    %c0_i32_0 = arith.constant 0 : i32
    %c0_i32_1 = arith.constant 0 : i32
    return %c0_i32, %c0_i32_0 : i32, i32
  }
  func.func @transform_8(%arg0: i32) -> (i32, i32) {
    %c0_i32 = arith.constant 0 : i32
    %c0_i32_0 = arith.constant 0 : i32
    %c0_i32_1 = arith.constant 0 : i32
    return %c0_i32, %c0_i32_0 : i32, i32
  }
  func.func @transform_9(%arg0: i32) -> (i32, i32) {
    %c0_i32 = arith.constant 0 : i32
    %c0_i32_0 = arith.constant 0 : i32
    %c0_i32_1 = arith.constant 0 : i32
    return %c0_i32, %c0_i32_0 : i32, i32
  }
  func.func @transform_10(%arg0: i32) -> (i32, i32) {
    %c0_i32 = arith.constant 0 : i32
    %c0_i32_0 = arith.constant 0 : i32
    %c0_i32_1 = arith.constant 0 : i32
    return %c0_i32, %c0_i32_0 : i32, i32
  }
  func.func @transform_11(%arg0: i32) -> (i32, i32) {
    %c0_i32 = arith.constant 0 : i32
    %c0_i32_0 = arith.constant 0 : i32
    %c0_i32_1 = arith.constant 0 : i32
    return %c0_i32, %c0_i32_0 : i32, i32
  }
  func.func @transform_12(%arg0: i32) -> (i32, i32) {
    %c0_i32 = arith.constant 0 : i32
    %c0_i32_0 = arith.constant 0 : i32
    %c0_i32_1 = arith.constant 0 : i32
    return %c0_i32, %c0_i32_0 : i32, i32
  }
  func.func @transform_13(%arg0: i32) -> (i32, i32, i32) {
    %c0_i32 = arith.constant 0 : i32
    %c0_i32_0 = arith.constant 0 : i32
    %c0_i32_1 = arith.constant 0 : i32
    return %arg0, %c0_i32, %c0_i32_0 : i32, i32, i32
  }
}

module attributes {stable_mosaic.version = 11 : i64} {
  func.func @_global_norm_kernel(%arg0: i32, %arg1: memref<96x128xf32, #tpu.memory_space<vmem>>, %arg2: memref<96x128xf32, #tpu.memory_space<vmem>>) attributes {dimension_semantics = [#tpu.dimension_semantics<arbitrary>], iteration_bounds = array<i64: 1>, scalar_prefetch = 0 : i64, scratch_operands = 0 : i64, tpu.core_type = #tpu.core_type<tc>, window_params = [{pipeline_mode = #tpu.pipeline_mode<synchronous>, transform_indices = @transform_0, window_bounds = array<i64: 96, 128>}, {pipeline_mode = #tpu.pipeline_mode<synchronous>, transform_indices = @transform_1, window_bounds = array<i64: 96, 128>}]} {
    %c0 = arith.constant 0 : index
    %c0_0 = arith.constant 0 : index
    %0 = vector.load %arg1[%c0, %c0_0] : memref<96x128xf32, #tpu.memory_space<vmem>>, vector<96x128xf32>
    %1 = vector.shape_cast %0 : vector<96x128xf32> to vector<1x96x128xf32>
    %cst = arith.constant dense<0.000000e+00> : vector<1xf32>
    %2 = vector.multi_reduction <add>, %1, %cst [1, 2] : vector<1x96x128xf32> to vector<1xf32>
    %3 = vector.shape_cast %2 : vector<1xf32> to vector<1x1x1xf32>
    %4 = vector.extract %3[0, 0, 0] : f32 from vector<1x1x1xf32>
    %cst_1 = arith.constant 1.228800e+04 : f32
    %5 = arith.divf %4, %cst_1 : f32
    %6 = vector.broadcast %5 : f32 to vector<96x128xf32>
    %7 = arith.subf %0, %6 : vector<96x128xf32>
    %8 = arith.mulf %7, %7 : vector<96x128xf32>
    %9 = vector.shape_cast %8 : vector<96x128xf32> to vector<1x96x128xf32>
    %cst_2 = arith.constant dense<0.000000e+00> : vector<1xf32>
    %10 = vector.multi_reduction <add>, %9, %cst_2 [1, 2] : vector<1x96x128xf32> to vector<1xf32>
    %11 = vector.shape_cast %10 : vector<1xf32> to vector<1x1x1xf32>
    %12 = vector.extract %11[0, 0, 0] : f32 from vector<1x1x1xf32>
    %cst_3 = arith.constant 1.228800e+04 : f32
    %13 = arith.divf %12, %cst_3 : f32
    %14 = vector.broadcast %5 : f32 to vector<96x128xf32>
    %15 = arith.subf %0, %14 : vector<96x128xf32>
    %cst_4 = arith.constant 9.99999974E-6 : f32
    %16 = arith.addf %13, %cst_4 : f32
    %17 = math.rsqrt %16 : f32
    %18 = vector.broadcast %17 : f32 to vector<96x128xf32>
    %19 = arith.mulf %15, %18 : vector<96x128xf32>
    %c0_5 = arith.constant 0 : index
    %c0_6 = arith.constant 0 : index
    %20 = vector.load %arg2[%c0_5, %c0_6] : memref<96x128xf32, #tpu.memory_space<vmem>>, vector<96x128xf32>
    tpu.vector_store %arg2[%c0_5, %c0_6], %19 {strides = array<i32>} : memref<96x128xf32, #tpu.memory_space<vmem>>, vector<96x128xf32>,
    return
  }
  func.func @transform_0(%arg0: i32) -> (i32, i32) {
    %c0_i32 = arith.constant 0 : i32
    %c0_i32_0 = arith.constant 0 : i32
    %c0_i32_1 = arith.constant 0 : i32
    return %c0_i32, %c0_i32_0 : i32, i32
  }
  func.func @transform_1(%arg0: i32) -> (i32, i32) {
    %c0_i32 = arith.constant 0 : i32
    %c0_i32_0 = arith.constant 0 : i32
    %c0_i32_1 = arith.constant 0 : i32
    return %c0_i32, %c0_i32_0 : i32, i32
  }
}

</mosaic_0001>

<llo_original>
// kernel: fairseq_wav2vec2_forward.8
$region0: #{fairseq_wav2vec2_forward.8}
  #allocation0 [shape = 'u32[]', space=smem, size = 0x4, offset = 0x4, fixed_abs, tag = 'smem constant byte address 0x4 - core index']
  #allocation1 [shape = 'u32[72,128]{1,0:T(1,128)}', space=vmem, size = 0x9000, scoped, tag = 'internal scratch']
  %s0 = inlined_call_operand.hbm [shape: f32[2,490], index: 0, kind: input, shape index: {}]
  %s1 = inlined_call_operand.vmem [shape: f32[2,490], index: 1, kind: output, shape index: {}]
  %s2 = sld [smem:[#allocation0]]
  $region18: #{fairseq_wav2vec2_forward.8} parent=0
    _
  %s4 = ssub.s32 1, %s2
  %s5 = scalar_select 0, %s4, %s2
  $region1: #{fairseq_wav2vec2_forward.8} parent=0
    #allocation2 [shape = 'u8[4096]{0}', space=vmem, size = 0x1000, scoped, tag = 'input window, operand 0, single buffered']
    #allocation3 [shape = 's32[1]{0}', space=sflag, size = 0x4, scoped, tag = 'scoped memory for fairseq_wav2vec2_forward.8']
    %6 = vsyncpa [#allocation3], 0
    // Predicated region
    $region2: #{fairseq_wav2vec2_forward.8} parent=1 // pred_check
      _
    $region3: #{fairseq_wav2vec2_forward.8} parent=1 // pred_check_branch
      %8 = sbr.rel (0) target = $region5
    $region4: #{fairseq_wav2vec2_forward.8} parent=1 // pred_region
      %10 = vsyncadd [#allocation3], 0
      %s12 = sshll.u32 %s0, 4
      %s13 = int_to_ptr.hbm [resolvable:$true] %s12
      %s14 = sshll.u32 [#allocation2], 4
      %s15 = int_to_ptr.vmem [resolvable:$true] %s14
      %17 = dma.hbm_to_vmem [thread:$0]  %s13, 128, %s15, [#allocation3]
    $region5: #{fairseq_wav2vec2_forward.8} parent=1 // pred_fallthru
      _
    // Predicated region
    $region6: #{fairseq_wav2vec2_forward.8} parent=1 // pred_check
      _
    $region7: #{fairseq_wav2vec2_forward.8} parent=1 // pred_check_branch
      %19 = sbr.rel (0) target = $region9
    $region8: #{fairseq_wav2vec2_forward.8} parent=1 // pred_region
      %21 = dma.done [#allocation3], 128
    $region9: #{fairseq_wav2vec2_forward.8} parent=1 // pred_fallthru
      _
    %v22 = vld [vmem:[#allocation2] sm:$0xff]
    %24 = vst [vmem:[#allocation1] ss:$4 sm:$0xff] %v22
    %v25 = vld.sshfl [vmem:[#allocation1] sm:$0xff pattern:$0x73625140]
    %v26 = vld.sshfl [vmem:[#allocation1 + $0x8] sm:$0xff pattern:$0x73625140]
    %v27 = vld.sshfl [vmem:[#allocation1 + $0x10] sm:$0xff pattern:$0x73625140]
    %v28 = vld.sshfl [vmem:[#allocation1 + $0x18] sm:$0xff pattern:$0x73625140]
    %vm33 = vcmask 1041408
    %v34 = vsel %vm33, %v25, 0.0
    %v35 = vsel %vm33, %v26, 0.0
    %v36 = vadd.f32 %v34, %v35
    %v37 = vsel %vm33, %v27, 0.0
    %v38 = vadd.f32 %v36, %v37
    %vm39 = vcmask 861184
    %v40 = vsel %vm39, %v28, 0.0
    %v41 = vadd.f32 %v38, %v40
    %42 = vadd.xlane.f32.xlu0 %v41
    %v43 = vpop.xlane.xlu0 %42
    %v44 = vrot.slane %v43, 4
    %v45 = vadd.f32 %v43, %v44
    %v46 = vrot.slane %v45, 2
    %v47 = vadd.f32 %v45, %v46
    %v48 = vrot.slane %v47, 1
    %v49 = vadd.f32 %v47, %v48
    %s50 = vtos %v49
    %v51 = vrcp.pop 980.0
    %v52 = vmul.f32 980.0, %v51
    %v53 = vsub.f32 1.0, %v52
    %v54 = vmul.f32 %v51, %v53
    %v55 = vadd.f32 %v51, %v54
    %vm56 = vweird.f32 %v51
    %v57 = vsel %vm56, %v51, %v55
    %s58 = vtos %v57
    %s59 = smul.f32 %s50, %s58
    %v60 = vstv %s59
    %v61 = vsub.f32 %v22, %v60
    %v62 = vmul.f32 %v61, %v61
    %64 = vst [vmem:[#allocation1] ss:$4 sm:$0xff] %v62
    %v65 = vld.sshfl [vmem:[#allocation1] sm:$0xff pattern:$0x73625140]
    %v66 = vld.sshfl [vmem:[#allocation1 + $0x8] sm:$0xff pattern:$0x73625140]
    %v67 = vld.sshfl [vmem:[#allocation1 + $0x10] sm:$0xff pattern:$0x73625140]
    %v68 = vld.sshfl [vmem:[#allocation1 + $0x18] sm:$0xff pattern:$0x73625140]
    %v73 = vsel %vm33, %v65, 0.0
    %v74 = vsel %vm33, %v66, 0.0
    %v75 = vadd.f32 %v73, %v74
    %v76 = vsel %vm33, %v67, 0.0
    %v77 = vadd.f32 %v75, %v76
    %v78 = vsel %vm39, %v68, 0.0
    %v79 = vadd.f32 %v77, %v78
    %80 = vadd.xlane.f32.xlu0 %v79
    %v81 = vpop.xlane.xlu0 %80
    %v82 = vrot.slane %v81, 4
    %v83 = vadd.f32 %v81, %v82
    %v84 = vrot.slane %v83, 2
    %v85 = vadd.f32 %v83, %v84
    %v86 = vrot.slane %v85, 1
    %v87 = vadd.f32 %v85, %v86
    %s88 = vtos %v87
    %v89 = vrcp.pop 980.0
    %v90 = vmul.f32 980.0, %v89
    %v91 = vsub.f32 1.0, %v90
    %v92 = vmul.f32 %v89, %v91
    %v93 = vadd.f32 %v89, %v92
    %vm94 = vweird.f32 %v89
    %v95 = vsel %vm94, %v89, %v93
    %s96 = vtos %v95
    %s97 = smul.f32 %s88, %s96
    %s98 = sadd.f32 %s97, 1e-05
    %v99 = vstv %s98
    %v100 = vrsqrt.pop %v99
    %v101 = vmul.f32 %v100, %v99
    %v102 = vmul.f32 %v101, %v100
    %v103 = vmul.f32 0.5, %v102
    %v104 = vsub.f32 1.5, %v103
    %v105 = vmul.f32 %v100, %v104
    %vm106 = vweird.f32 %v99
    %vm107 = vweird.f32 %v100
    %vm108 = vmor %vm106, %vm107
    %v109 = vsel %vm108, %v100, %v105
    %s110 = vtos %v109
    %v111 = vstv %s110
    %v112 = vmul.f32 %v61, %v111
    %vm113 = vcmask 1043458
    %vm114 = vmor %vm113, %vm33
    %vm115 = vcmask 1045508
    %vm116 = vmor %vm115, %vm114
    %vm117 = vcmask 867334
    %vm118 = vmor %vm117, %vm116
    %119 = vst.msk [vmem:[%s1] sm:$0xff] %vm118, %v112
    // Predicated region
    $region10: #{fairseq_wav2vec2_forward.8} parent=1 // pred_check
      _
    $region11: #{fairseq_wav2vec2_forward.8} parent=1 // pred_check_branch
      %121 = sbr.rel (0) target = $region13
    $region12: #{fairseq_wav2vec2_forward.8} parent=1 // pred_region
      _
    $region13: #{fairseq_wav2vec2_forward.8} parent=1 // pred_fallthru
      _
    // Predicated region
    $region14: #{fairseq_wav2vec2_forward.8} parent=1 // pred_check
      _
    $region15: #{fairseq_wav2vec2_forward.8} parent=1 // pred_check_branch
      %123 = sbr.rel (0) target = $region17
    $region16: #{fairseq_wav2vec2_forward.8} parent=1 // pred_region
      _
    $region17: #{fairseq_wav2vec2_forward.8} parent=1 // pred_fallthru
      _
    %124 = vsyncpa [#allocation3], 1

// kernel: fairseq_wav2vec2_forward.9
$region0: #{fairseq_wav2vec2_forward.9}
  #allocation0 [shape = 'u32[]', space=smem, size = 0x4, offset = 0x4, fixed_abs, tag = 'smem constant byte address 0x4 - core index']
  #allocation1 [shape = 'u32[72,128]{1,0:T(1,128)}', space=vmem, size = 0x9000, scoped, tag = 'internal scratch']
  %s0 = inlined_call_operand.vmem [shape: f32[2,98,128], index: 0, kind: input, shape index: {}]
  %s1 = inlined_call_operand.hbm [shape: f32[2,128,128], index: 1, kind: input, shape index: {}]
  %s2 = inlined_call_operand.hbm [shape: f32[1,128], index: 2, kind: input, shape index: {}]
  %s3 = inlined_call_operand.hbm [shape: f32[1,128], index: 3, kind: input, shape index: {}]
  %s4 = inlined_call_operand.vmem [shape: f32[2,97,128], index: 4, kind: output, shape index: {}]
  %s5 = sld [smem:[#allocation0]]
  $region61: #{fairseq_wav2vec2_forward.9} parent=0
    _
  %s7 = ssub.s32 1, %s5
  %s8 = scalar_select 0, %s7, %s5
  $region1: #{fairseq_wav2vec2_forward.9} parent=0
    #allocation2 [shape = 'u8[131072]{0}', space=vmem, size = 0x20000, scoped, tag = 'input window, operand 1, single buffered']
    #allocation3 [shape = 's32[2]{0}', space=sflag, size = 0x8, scoped, tag = 'scoped memory for fairseq_wav2vec2_forward.9']
    #allocation4 [shape = 'u8[512]{0}', space=vmem, size = 0x400, scoped, tag = 'input window, operand 2, single buffered']
    #allocation5 [shape = 's32[1]{0}', space=sflag, size = 0x4, scoped, tag = 'scoped memory for fairseq_wav2vec2_forward.9']
    #allocation6 [shape = 'u8[512]{0}', space=vmem, size = 0x400, scoped, tag = 'input window, operand 3, single buffered']
    %9 = vsyncpa [#allocation3], 0
    %10 = vsyncpa [#allocation5], 0
    loop: start=0, step=1, limit=4
    $region2: #{fairseq_wav2vec2_forward.9} parent=1 // loop_pre_header
      _
    $region3: #{fairseq_wav2vec2_forward.9} parent=1 // loop_header
      %s12 = sphi 0, %s16
      %p13 = scmp.ge.s32.totalorder %s12, 4
      %s22 = sphi 0, %s24
      %s25 = sphi 0, %s22
      %s26 = sphi 0, %s25
      %s42 = sphi 0, %s26
      %s46 = sphi 0, %s46
      %s48 = sphi 0, %s46
      %s49 = sphi 0, %s48
      %s63 = sphi 0, %s49
      %s67 = sphi 0, %s67
      %s69 = sphi 0, %s67
      %s70 = sphi 0, %s69
      %s84 = sphi 0, %s70
      %s88 = sphi 0, %s88
      %s90 = sphi 0, %s88
      %s91 = sphi 0, %s90
      %s105 = sphi 0, %s91
      %s111 = sphi 0, %s113
      %s114 = sphi 0, %s111
      %s115 = sphi 0, %s114
      %s131 = sphi 0, %s115
    $region4: #{fairseq_wav2vec2_forward.9} parent=1 // loop_header_branch
      %15 = sbr.rel (%p13) target = $region8
    $region5: #{fairseq_wav2vec2_forward.9} parent=1 // loop_body
      %s17 = ssub.s32 %s12, 1
      %s18 = ssub.s32 %s12, 2
      %s19 = sadd.s32 %s12, 1
      %s20 = ssub.s32 %s12, %s19
      %p21 = scmp.eq.s32.totalorder %s20, 0
      %s23 = sadd.s32 %s22, 1
      %s24 = scalar_select %p21, %s22, %s23
      %p27 = pneg %p21
      %p28 = scmp.eq.s32.totalorder %s12, 1
      %p29 = por %p27, %p28
      %p30 = scmp.ne.s32.totalorder %s22, %s25
      %p31 = scmp.eq.s32.totalorder %s12, 0
      %p32 = por %p30, %p31
      %p33 = scmp.ne.s32.totalorder %s22, %s25
      %p34 = scmp.eq.s32.totalorder %s17, 1
      %p35 = por %p33, %p34
      %p36 = scmp.ne.s32.totalorder %s25, %s26
      %p37 = scmp.eq.s32.totalorder %s17, 0
      %p38 = por %p36, %p37
      %p39 = scmp.ne.s32.totalorder %s25, %s26
      %p40 = scmp.eq.s32.totalorder %s18, 1
      %p41 = por %p39, %p40
      %p43 = scmp.ne.s32.totalorder %s26, %s42
      %p44 = scmp.eq.s32.totalorder %s18, 0
      %p45 = por %p43, %p44
      %s47 = sadd.s32 %s46, 1
      %p50 = scmp.eq.s32.totalorder %s12, 1
      %p51 = scmp.ne.s32.totalorder %s46, %s48
      %p52 = scmp.eq.s32.totalorder %s12, 0
      %p53 = por %p51, %p52
      %p54 = scmp.ne.s32.totalorder %s46, %s48
      %p55 = scmp.eq.s32.totalorder %s17, 1
      %p56 = por %p54, %p55
      %p57 = scmp.ne.s32.totalorder %s48, %s49
      %p58 = scmp.eq.s32.totalorder %s17, 0
      %p59 = por %p57, %p58
      %p60 = scmp.ne.s32.totalorder %s48, %s49
      %p61 = scmp.eq.s32.totalorder %s18, 1
      %p62 = por %p60, %p61
      %p64 = scmp.ne.s32.totalorder %s49, %s63
      %p65 = scmp.eq.s32.totalorder %s18, 0
      %p66 = por %p64, %p65
      %s68 = sadd.s32 %s67, 1
      %p71 = scmp.eq.s32.totalorder %s12, 1
      %p72 = scmp.ne.s32.totalorder %s67, %s69
      %p73 = scmp.eq.s32.totalorder %s12, 0
      %p74 = por %p72, %p73
      %p75 = scmp.ne.s32.totalorder %s67, %s69
      %p76 = scmp.eq.s32.totalorder %s17, 1
      %p77 = por %p75, %p76
      %p78 = scmp.ne.s32.totalorder %s69, %s70
      %p79 = scmp.eq.s32.totalorder %s17, 0
      %p80 = por %p78, %p79
      %p81 = scmp.ne.s32.totalorder %s69, %s70
      %p82 = scmp.eq.s32.totalorder %s18, 1
      %p83 = por %p81, %p82
      %p85 = scmp.ne.s32.totalorder %s70, %s84
      %p86 = scmp.eq.s32.totalorder %s18, 0
      %p87 = por %p85, %p86
      %s89 = sadd.s32 %s88, 1
      %p92 = scmp.eq.s32.totalorder %s12, 1
      %p93 = scmp.ne.s32.totalorder %s88, %s90
      %p94 = scmp.eq.s32.totalorder %s12, 0
      %p95 = por %p93, %p94
      %p96 = scmp.ne.s32.totalorder %s88, %s90
      %p97 = scmp.eq.s32.totalorder %s17, 1
      %p98 = por %p96, %p97
      %p99 = scmp.ne.s32.totalorder %s90, %s91
      %p100 = scmp.eq.s32.totalorder %s17, 0
      %p101 = por %p99, %p100
      %p102 = scmp.ne.s32.totalorder %s90, %s91
      %p103 = scmp.eq.s32.totalorder %s18, 1
      %p104 = por %p102, %p103
      %p106 = scmp.ne.s32.totalorder %s91, %s105
      %p107 = scmp.eq.s32.totalorder %s18, 0
      %p108 = por %p106, %p107
      %s109 = ssub.s32 %s12, %s19
      %p110 = scmp.eq.s32.totalorder %s109, 0
      %s112 = sadd.s32 %s111, 1
      %s113 = scalar_select %p110, %s111, %s112
      %p116 = pneg %p110
      %p117 = scmp.eq.s32.totalorder %s12, 1
      %p118 = por %p116, %p117
      %p119 = scmp.ne.s32.totalorder %s111, %s114
      %p120 = scmp.eq.s32.totalorder %s12, 0
      %p121 = por %p119, %p120
      %p122 = scmp.ne.s32.totalorder %s111, %s114
      %p123 = scmp.eq.s32.totalorder %s17, 1
      %p124 = por %p122, %p123
      %p125 = scmp.ne.s32.totalorder %s114, %s115
      %p126 = scmp.eq.s32.totalorder %s17, 0
      %p127 = por %p125, %p126
      %p128 = scmp.ne.s32.totalorder %s114, %s115
      %p129 = scmp.eq.s32.totalorder %s18, 1
      %p130 = por %p128, %p129
      %p132 = scmp.ne.s32.totalorder %s115, %s131
      %p133 = scmp.eq.s32.totalorder %s18, 0
      %p134 = por %p132, %p133
      %p135 = scmp.le.s32.totalorder 1, %s12
      %p136 = scmp.lt.s32.totalorder %s12, 3
      %p137 = pnand %p135, %p136
      %p138 = pneg %p137
      // Predicated region
      $region9: #{fairseq_wav2vec2_forward.9} parent=5 // pred_check
        _
      $region10: #{fairseq_wav2vec2_forward.9} parent=5 // pred_check_branch
        %140 = sbr.rel (%p137) target = $region12
      $region11: #{fairseq_wav2vec2_forward.9} parent=5 // pred_region
        %s141 = ssub.s32 %s12, 1
        // Predicated region
        $region13: #{fairseq_wav2vec2_forward.9} parent=11 // pred_check
          %p142 = pneg %p59
        $region14: #{fairseq_wav2vec2_forward.9} parent=11 // pred_check_branch
          %144 = sbr.rel (%p142) target = $region16
        $region15: #{fairseq_wav2vec2_forward.9} parent=11 // pred_region
          %146 = vsyncadd [#allocation3], 0
          %s147 = sshll.u32 %s1, 4
          %s148 = int_to_ptr.hbm [resolvable:$true] %s147
          %s149 = sshll.u32 [#allocation2], 4
          %s150 = int_to_ptr.vmem [resolvable:$true] %s149
          %155 = dma.hbm_to_vmem [thread:$0]  %s148, 4096, %s150, [#allocation3], 128, 128, 8
        $region16: #{fairseq_wav2vec2_forward.9} parent=11 // pred_fallthru
          _
        // Predicated region
        $region17: #{fairseq_wav2vec2_forward.9} parent=11 // pred_check
          %p156 = pneg %p80
        $region18: #{fairseq_wav2vec2_forward.9} parent=11 // pred_check_branch
          %158 = sbr.rel (%p156) target = $region20
        $region19: #{fairseq_wav2vec2_forward.9} parent=11 // pred_region
          %160 = vsyncadd [#allocation5], 0
          %s162 = sshll.u32 %s2, 4
          %s163 = int_to_ptr.hbm [resolvable:$true] %s162
          %s164 = sshll.u32 [#allocation4], 4
          %s165 = int_to_ptr.vmem [resolvable:$true] %s164
          %167 = dma.hbm_to_vmem [thread:$0]  %s163, 16, %s165, [#allocation5]
        $region20: #{fairseq_wav2vec2_forward.9} parent=11 // pred_fallthru
          _
        // Predicated region
        $region21: #{fairseq_wav2vec2_forward.9} parent=11 // pred_check
          %p168 = pneg %p101
        $region22: #{fairseq_wav2vec2_forward.9} parent=11 // pred_check_branch
          %170 = sbr.rel (%p168) target = $region24
        $region23: #{fairseq_wav2vec2_forward.9} parent=11 // pred_region
          %172 = vsyncadd [#allocation5], 0
          %s174 = sshll.u32 %s3, 4
          %s175 = int_to_ptr.hbm [resolvable:$true] %s174
          %s176 = sshll.u32 [#allocation6], 4
          %s177 = int_to_ptr.vmem [resolvable:$true] %s176
          %179 = dma.hbm_to_vmem [thread:$0]  %s175, 16, %s177, [#allocation5]
        $region24: #{fairseq_wav2vec2_forward.9} parent=11 // pred_fallthru
          _
      $region12: #{fairseq_wav2vec2_forward.9} parent=5 // pred_fallthru
        _
      %p180 = scmp.lt.s32.totalorder %s12, 2
      // Predicated region
      $region25: #{fairseq_wav2vec2_forward.9} parent=5 // pred_check
        %p181 = pneg %p180
      $region26: #{fairseq_wav2vec2_forward.9} parent=5 // pred_check_branch
        %183 = sbr.rel (%p181) target = $region28
      $region27: #{fairseq_wav2vec2_forward.9} parent=5 // pred_region
        // Predicated region
        $region29: #{fairseq_wav2vec2_forward.9} parent=27 // pred_check
          %p184 = pneg %p32
        $region30: #{fairseq_wav2vec2_forward.9} parent=27 // pred_check_branch
          %186 = sbr.rel (%p184) target = $region32
        $region31: #{fairseq_wav2vec2_forward.9} parent=27 // pred_region
          %p187 = scmp.lt.s32.totalorder %s12, 1
          %s188 = scalar_select %p187, %s12, 1
          %s189 = smul.addr %s188, 13
          %s190 = smul.addr %s189, 8
          %s191 = scalar_lea.vmem %s0, %s190
        $region32: #{fairseq_wav2vec2_forward.9} parent=27 // pred_fallthru
          _
      $region28: #{fairseq_wav2vec2_forward.9} parent=5 // pred_fallthru
        _
      %p192 = scmp.le.s32.totalorder 1, %s12
      %p193 = scmp.lt.s32.totalorder %s12, 3
      %p194 = pnand %p192, %p193
      %p195 = pneg %p194
      // Predicated region
      $region33: #{fairseq_wav2vec2_forward.9} parent=5 // pred_check
        _
      $region34: #{fairseq_wav2vec2_forward.9} parent=5 // pred_check_branch
        %197 = sbr.rel (%p194) target = $region36
      $region35: #{fairseq_wav2vec2_forward.9} parent=5 // pred_region
        %s198 = ssub.s32 %s12, 1
        // Predicated region
        $region37: #{fairseq_wav2vec2_forward.9} parent=35 // pred_check
          %p199 = pneg %p59
        $region38: #{fairseq_wav2vec2_forward.9} parent=35 // pred_check_branch
          %201 = sbr.rel (%p199) target = $region40
        $region39: #{fairseq_wav2vec2_forward.9} parent=35 // pred_region
          %203 = dma.done [#allocation3], 4096
        $region40: #{fairseq_wav2vec2_forward.9} parent=35 // pred_fallthru
          _
        // Predicated region
        $region41: #{fairseq_wav2vec2_forward.9} parent=35 // pred_check
          %p204 = pneg %p80
        $region42: #{fairseq_wav2vec2_forward.9} parent=35 // pred_check_branch
          %206 = sbr.rel (%p204) target = $region44
        $region43: #{fairseq_wav2vec2_forward.9} parent=35 // pred_region
          %208 = dma.done [#allocation5], 16
        $region44: #{fairseq_wav2vec2_forward.9} parent=35 // pred_fallthru
          _
        // Predicated region
        $region45: #{fairseq_wav2vec2_forward.9} parent=35 // pred_check
          %p209 = pneg %p101
        $region46: #{fairseq_wav2vec2_forward.9} parent=35 // pred_check_branch
          %211 = sbr.rel (%p209) target = $region48
        $region47: #{fairseq_wav2vec2_forward.9} parent=35 // pred_region
          %213 = dma.done [#allocation5], 16
        $region48: #{fairseq_wav2vec2_forward.9} parent=35 // pred_fallthru
          _
        %p214 = scmp.lt.s32.totalorder %s17, 1
        %s215 = scalar_select %p214, %s17, 1
        %s216 = smul.addr %s215, 13
        %s217 = smul.addr %s216, 8
        %s218 = scalar_lea.vmem %s0, %s217
        %p219 = pneg %p38
        %p220 = pneg %p35
        %p221 = pneg %p59
        %p222 = pneg %p56
        %p223 = pneg %p80
        %p224 = pneg %p77
        %p225 = pneg %p101
        %p226 = pneg %p98
        %p227 = pneg %p127
        %p228 = pneg %p124
        %p229 = scmp.lt.s32.totalorder %s17, 1
        %s230 = scalar_select %p229, %s17, 1
        %s231 = smul.addr %s230, 13
        %s232 = smul.addr %s231, 8
        %s233 = scalar_lea.vmem %s4, %s232
        %p234 = scmp.lt.s32.totalorder %s17, 1
        %s235 = scalar_select %p234, %s17, 1
        %s236 = smul.addr %s235, 13
        %s237 = smul.addr %s236, 8
        %s238 = scalar_lea.vmem %s0, %s237
        %p239 = scmp.lt.s32.totalorder %s17, 1
        %s240 = scalar_select %p239, %s17, 1
        %s241 = smul.addr %s240, 13
        %s242 = smul.addr %s241, 8
        %s243 = scalar_lea.vmem %s4, %s242
        %v244 = vld [vmem:[%s238] sm:$0xff]
        %v245 = vld [vmem:[%s238 + $0x8] sm:$0xff]
        %v246 = vld [vmem:[%s238 + $0x10] sm:$0xff]
        %v247 = vld [vmem:[%s238 + $0x18] sm:$0xff]
        %v248 = vld [vmem:[%s238 + $0x20] sm:$0xff]
        %v249 = vld [vmem:[%s238 + $0x28] sm:$0xff]
        %v250 = vld [vmem:[%s238 + $0x30] sm:$0xff]
        %v251 = vld [vmem:[%s238 + $0x38] sm:$0xff]
        %v252 = vld [vmem:[%s238 + $0x40] sm:$0xff]
        %v253 = vld [vmem:[%s238 + $0x48] sm:$0xff]
        %v254 = vld [vmem:[%s238 + $0x50] sm:$0xff]
        %v255 = vld [vmem:[%s238 + $0x58] sm:$0xff]
        %v256 = vld [vmem:[%s238 + $0x60] sm:$0x3]
        %v257 = vld [vmem:[#allocation2] sm:$0xff]
        %v258 = vld [vmem:[#allocation2 + $0x8] sm:$0xff]
        %v259 = vld [vmem:[#allocation2 + $0x10] sm:$0xff]
        %v260 = vld [vmem:[#allocation2 + $0x18] sm:$0xff]
        %v261 = vld [vmem:[#allocation2 + $0x20] sm:$0xff]
        %v262 = vld [vmem:[#allocation2 + $0x28] sm:$0xff]
        %v263 = vld [vmem:[#allocation2 + $0x30] sm:$0xff]
        %v264 = vld [vmem:[#allocation2 + $0x38] sm:$0xff]
        %v265 = vld [vmem:[#allocation2 + $0x40] sm:$0xff]
        %v266 = vld [vmem:[#allocation2 + $0x48] sm:$0xff]
        %v267 = vld [vmem:[#allocation2 + $0x50] sm:$0xff]
        %v268 = vld [vmem:[#allocation2 + $0x58] sm:$0xff]
        %v269 = vld [vmem:[#allocation2 + $0x60] sm:$0xff]
        %v270 = vld [vmem:[#allocation2 + $0x68] sm:$0xff]
        %v271 = vld [vmem:[#allocation2 + $0x70] sm:$0xff]
        %v272 = vld [vmem:[#allocation2 + $0x78] sm:$0xff]
        %s273 = scalar_lea.vmem [#allocation2], 128
        %v274 = vld [vmem:[%s273] sm:$0xff]
        %v275 = vld [vmem:[%s273 + $0x8] sm:$0xff]
        %v276 = vld [vmem:[%s273 + $0x10] sm:$0xff]
        %v277 = vld [vmem:[%s273 + $0x18] sm:$0xff]
        %v278 = vld [vmem:[%s273 + $0x20] sm:$0xff]
        %v279 = vld [vmem:[%s273 + $0x28] sm:$0xff]
        %v280 = vld [vmem:[%s273 + $0x30] sm:$0xff]
        %v281 = vld [vmem:[%s273 + $0x38] sm:$0xff]
        %v282 = vld [vmem:[%s273 + $0x40] sm:$0xff]
        %v283 = vld [vmem:[%s273 + $0x48] sm:$0xff]
        %v284 = vld [vmem:[%s273 + $0x50] sm:$0xff]
        %v285 = vld [vmem:[%s273 + $0x58] sm:$0xff]
        %v286 = vld [vmem:[%s273 + $0x60] sm:$0xff]
        %v287 = vld [vmem:[%s273 + $0x68] sm:$0xff]
        %v288 = vld [vmem:[%s273 + $0x70] sm:$0xff]
        %v289 = vld [vmem:[%s273 + $0x78] sm:$0xff]
        %vm303 = vcmask 1046528
        %v304 = vrot.slane %v244, 1
        %v305 = vrot.slane %v245, 1
        %v306 = vsel %vm303, %v304, %v305
        %v307 = vrot.slane %v246, 1
        %v308 = vsel %vm303, %v305, %v307
        %v309 = vrot.slane %v247, 1
        %v310 = vsel %vm303, %v307, %v309
        %v311 = vrot.slane %v248, 1
        %v312 = vsel %vm303, %v309, %v311
        %v313 = vrot.slane %v249, 1
        %v314 = vsel %vm303, %v311, %v313
        %v315 = vrot.slane %v250, 1
        %v316 = vsel %vm303, %v313, %v315
        %v317 = vrot.slane %v251, 1
        %v318 = vsel %vm303, %v315, %v317
        %v319 = vrot.slane %v252, 1
        %v320 = vsel %vm303, %v317, %v319
        %v321 = vrot.slane %v253, 1
        %v322 = vsel %vm303, %v319, %v321
        %v323 = vrot.slane %v254, 1
        %v324 = vsel %vm303, %v321, %v323
        %v325 = vrot.slane %v255, 1
        %v326 = vsel %vm303, %v323, %v325
        %v327 = vrot.slane %v256, 1
        %v328 = vsel %vm303, %v325, %v327
        %342 = vmatpush.msra.mxu0 %v289
        %343 = vmatpush.msra.mxu0 %v288
        %344 = vmatpush.msra.mxu0 %v287
        %345 = vmatpush.msra.mxu0 %v286
        %346 = vmatpush.msra.mxu0 %v285
        %347 = vmatpush.msra.mxu0 %v284
        %348 = vmatpush.msra.mxu0 %v283
        %349 = vmatpush.msra.mxu0 %v282
        %350 = vmatpush.msra.mxu0 %v281
        %351 = vmatpush.msra.mxu0 %v280
        %352 = vmatpush.msra.mxu0 %v279
        %353 = vmatpush.msra.mxu0 %v278
        %354 = vmatpush.msra.mxu0 %v277
        %355 = vmatpush.msra.mxu0 %v276
        %356 = vmatpush.msra.mxu0 %v275
        %357 = vmatpush.msra.mxu0 %v274
        %358 = vmatmul.f32.gmra.mxu0 %v306
        %v359 = vpop.f32.mrf.mxu0
        %v360 = vadd.f32 0.0, %v359
        %361 = vmatmul.f32.gmra.mxu0 %v308
        %v362 = vpop.f32.mrf.mxu0
        %v363 = vadd.f32 0.0, %v362
        %364 = vmatmul.f32.gmra.mxu0 %v310
        %v365 = vpop.f32.mrf.mxu0
        %v366 = vadd.f32 0.0, %v365
        %367 = vmatmul.f32.gmra.mxu0 %v312
        %v368 = vpop.f32.mrf.mxu0
        %v369 = vadd.f32 0.0, %v368
        %370 = vmatmul.f32.gmra.mxu0 %v314
        %v371 = vpop.f32.mrf.mxu0
        %v372 = vadd.f32 0.0, %v371
        %373 = vmatmul.f32.gmra.mxu0 %v316
        %v374 = vpop.f32.mrf.mxu0
        %v375 = vadd.f32 0.0, %v374
        %376 = vmatmul.f32.gmra.mxu0 %v318
        %v377 = vpop.f32.mrf.mxu0
        %v378 = vadd.f32 0.0, %v377
        %379 = vmatmul.f32.gmra.mxu0 %v320
        %v380 = vpop.f32.mrf.mxu0
        %v381 = vadd.f32 0.0, %v380
        %382 = vmatmul.f32.gmra.mxu0 %v322
        %v383 = vpop.f32.mrf.mxu0
        %v384 = vadd.f32 0.0, %v383
        %385 = vmatmul.f32.gmra.mxu0 %v324
        %v386 = vpop.f32.mrf.mxu0
        %v387 = vadd.f32 0.0, %v386
        %388 = vmatmul.f32.gmra.mxu0 %v326
        %v389 = vpop.f32.mrf.mxu0
        %v390 = vadd.f32 0.0, %v389
        %391 = vmatmul.f32.gmra.mxu0 %v328
        %v392 = vpop.f32.mrf.mxu0
        %v393 = vadd.f32 0.0, %v392
        %394 = vmatmul.f32.gmra.mxu0 %v327
        %v395 = vpop.f32.mrf.mxu0
        %v396 = vadd.f32 0.0, %v395
        %397 = vdwg.mxu0
        %398 = vmatpush.msra.mxu0 %v272
        %399 = vmatpush.msra.mxu0 %v271
        %400 = vmatpush.msra.mxu0 %v270
        %401 = vmatpush.msra.mxu0 %v269
        %402 = vmatpush.msra.mxu0 %v268
        %403 = vmatpush.msra.mxu0 %v267
        %404 = vmatpush.msra.mxu0 %v266
        %405 = vmatpush.msra.mxu0 %v265
        %406 = vmatpush.msra.mxu0 %v264
        %407 = vmatpush.msra.mxu0 %v263
        %408 = vmatpush.msra.mxu0 %v262
        %409 = vmatpush.msra.mxu0 %v261
        %410 = vmatpush.msra.mxu0 %v260
        %411 = vmatpush.msra.mxu0 %v259
        %412 = vmatpush.msra.mxu0 %v258
        %413 = vmatpush.msra.mxu0 %v257
        %414 = vmatmul.f32.gmra.mxu0 %v244
        %v415 = vpop.f32.mrf.mxu0
        %v416 = vadd.f32 %v360, %v415
        %417 = vmatmul.f32.gmra.mxu0 %v245
        %v418 = vpop.f32.mrf.mxu0
        %v419 = vadd.f32 %v363, %v418
        %420 = vmatmul.f32.gmra.mxu0 %v246
        %v421 = vpop.f32.mrf.mxu0
        %v422 = vadd.f32 %v366, %v421
        %423 = vmatmul.f32.gmra.mxu0 %v247
        %v424 = vpop.f32.mrf.mxu0
        %v425 = vadd.f32 %v369, %v424
        %426 = vmatmul.f32.gmra.mxu0 %v248
        %v427 = vpop.f32.mrf.mxu0
        %v428 = vadd.f32 %v372, %v427
        %429 = vmatmul.f32.gmra.mxu0 %v249
        %v430 = vpop.f32.mrf.mxu0
        %v431 = vadd.f32 %v375, %v430
        %432 = vmatmul.f32.gmra.mxu0 %v250
        %v433 = vpop.f32.mrf.mxu0
        %v434 = vadd.f32 %v378, %v433
        %435 = vmatmul.f32.gmra.mxu0 %v251
        %v436 = vpop.f32.mrf.mxu0
        %v437 = vadd.f32 %v381, %v436
        %438 = vmatmul.f32.gmra.mxu0 %v252
        %v439 = vpop.f32.mrf.mxu0
        %v440 = vadd.f32 %v384, %v439
        %441 = vmatmul.f32.gmra.mxu0 %v253
        %v442 = vpop.f32.mrf.mxu0
        %v443 = vadd.f32 %v387, %v442
        %444 = vmatmul.f32.gmra.mxu0 %v254
        %v445 = vpop.f32.mrf.mxu0
        %v446 = vadd.f32 %v390, %v445
        %447 = vmatmul.f32.gmra.mxu0 %v255
        %v448 = vpop.f32.mrf.mxu0
        %v449 = vadd.f32 %v393, %v448
        %450 = vmatmul.f32.gmra.mxu0 %v256
        %v451 = vpop.f32.mrf.mxu0
        %v452 = vadd.f32 %v396, %v451
        %453 = vdwg.mxu0
        %v454 = vadd.f32 %v416, %v419
        %v455 = vadd.f32 %v454, %v422
        %v456 = vadd.f32 %v455, %v425
        %v457 = vadd.f32 %v456, %v428
        %v458 = vadd.f32 %v457, %v431
        %v459 = vadd.f32 %v458, %v434
        %v460 = vadd.f32 %v459, %v437
        %v461 = vadd.f32 %v460, %v440
        %v462 = vadd.f32 %v461, %v443
        %v463 = vadd.f32 %v462, %v446
        %v464 = vadd.f32 %v463, %v449
        %vm465 = vcmask 1040384
        %v466 = vsel %vm465, %v452, 0.0
        %v467 = vadd.f32 %v464, %v466
        %v468 = vrot.slane %v467, 4
        %v469 = vadd.f32 %v467, %v468
        %v470 = vrot.slane %v469, 2
        %v471 = vadd.f32 %v469, %v470
        %v472 = vrot.slane %v471, 1
        %v473 = vadd.f32 %v471, %v472
        %v474 = vrcp.pop 97.0
        %v475 = vmul.f32 97.0, %v474
        %v476 = vsub.f32 1.0, %v475
        %v477 = vmul.f32 %v474, %v476
        %v478 = vadd.f32 %v474, %v477
        %vm479 = vweird.f32 %v474
        %v480 = vsel %vm479, %v474, %v478
        %v481 = vmul.f32 %v473, %v480
        %v482 = vsub.f32 %v416, %v481
        %v483 = vsub.f32 %v419, %v481
        %v484 = vsub.f32 %v422, %v481
        %v485 = vsub.f32 %v425, %v481
        %v486 = vsub.f32 %v428, %v481
        %v487 = vsub.f32 %v431, %v481
        %v488 = vsub.f32 %v434, %v481
        %v489 = vsub.f32 %v437, %v481
        %v490 = vsub.f32 %v440, %v481
        %v491 = vsub.f32 %v443, %v481
        %v492 = vsub.f32 %v446, %v481
        %v493 = vsub.f32 %v449, %v481
        %v494 = vsub.f32 %v452, %v481
        %v495 = vmul.f32 %v482, %v482
        %v496 = vmul.f32 %v483, %v483
        %v497 = vmul.f32 %v484, %v484
        %v498 = vmul.f32 %v485, %v485
        %v499 = vmul.f32 %v486, %v486
        %v500 = vmul.f32 %v487, %v487
        %v501 = vmul.f32 %v488, %v488
        %v502 = vmul.f32 %v489, %v489
        %v503 = vmul.f32 %v490, %v490
        %v504 = vmul.f32 %v491, %v491
        %v505 = vmul.f32 %v492, %v492
        %v506 = vmul.f32 %v493, %v493
        %v507 = vmul.f32 %v494, %v494
        %v508 = vadd.f32 %v495, %v496
        %v509 = vadd.f32 %v508, %v497
        %v510 = vadd.f32 %v509, %v498
        %v511 = vadd.f32 %v510, %v499
        %v512 = vadd.f32 %v511, %v500
        %v513 = vadd.f32 %v512, %v501
        %v514 = vadd.f32 %v513, %v502
        %v515 = vadd.f32 %v514, %v503
        %v516 = vadd.f32 %v515, %v504
        %v517 = vadd.f32 %v516, %v505
        %v518 = vadd.f32 %v517, %v506
        %v519 = vsel %vm465, %v507, 0.0
        %v520 = vadd.f32 %v518, %v519
        %v521 = vrot.slane %v520, 4
        %v522 = vadd.f32 %v520, %v521
        %v523 = vrot.slane %v522, 2
        %v524 = vadd.f32 %v522, %v523
        %v525 = vrot.slane %v524, 1
        %v526 = vadd.f32 %v524, %v525
        %v527 = vmul.f32 %v526, %v480
        %v528 = vadd.f32 %v527, 1e-05
        %v529 = vrsqrt.pop %v528
        %v530 = vmul.f32 %v529, %v528
        %v531 = vmul.f32 %v530, %v529
        %v532 = vmul.f32 0.5, %v531
        %v533 = vsub.f32 1.5, %v532
        %v534 = vmul.f32 %v529, %v533
        %vm535 = vweird.f32 %v528
        %vm536 = vweird.f32 %v529
        %vm537 = vmor %vm535, %vm536
        %v538 = vsel %vm537, %v529, %v534
        %v539 = vmul.f32 %v482, %v538
        %v540 = vmul.f32 %v483, %v538
        %v541 = vmul.f32 %v484, %v538
        %v542 = vmul.f32 %v485, %v538
        %v543 = vmul.f32 %v486, %v538
        %v544 = vmul.f32 %v487, %v538
        %v545 = vmul.f32 %v488, %v538
        %v546 = vmul.f32 %v489, %v538
        %v547 = vmul.f32 %v490, %v538
        %v548 = vmul.f32 %v491, %v538
        %v549 = vmul.f32 %v492, %v538
        %v550 = vmul.f32 %v493, %v538
        %v551 = vmul.f32 %v494, %v538
        %v552 = vld [vmem:[#allocation4] sm:$0x1]
        %v554 = vperm.slane %v552, 0
        %v556 = vmul.f32 %v539, %v554
        %v557 = vmul.f32 %v540, %v554
        %v558 = vmul.f32 %v541, %v554
        %v559 = vmul.f32 %v542, %v554
        %v560 = vmul.f32 %v543, %v554
        %v561 = vmul.f32 %v544, %v554
        %v562 = vmul.f32 %v545, %v554
        %v563 = vmul.f32 %v546, %v554
        %v564 = vmul.f32 %v547, %v554
        %v565 = vmul.f32 %v548, %v554
        %v566 = vmul.f32 %v549, %v554
        %v567 = vmul.f32 %v550, %v554
        %v568 = vmul.f32 %v551, %v554
        %v569 = vld [vmem:[#allocation6] sm:$0x1]
        %v571 = vperm.slane %v569, 0
        %v573 = vadd.f32 %v556, %v571
        %v574 = vadd.f32 %v557, %v571
        %v575 = vadd.f32 %v558, %v571
        %v576 = vadd.f32 %v559, %v571
        %v577 = vadd.f32 %v560, %v571
        %v578 = vadd.f32 %v561, %v571
        %v579 = vadd.f32 %v562, %v571
        %v580 = vadd.f32 %v563, %v571
        %v581 = vadd.f32 %v564, %v571
        %v582 = vadd.f32 %v565, %v571
        %v583 = vadd.f32 %v566, %v571
        %v584 = vadd.f32 %v567, %v571
        %v585 = vadd.f32 %v568, %v571
        %v586 = vmul.f32 %v573, 0.5
        %v587 = vmul.f32 %v574, 0.5
        %v588 = vmul.f32 %v575, 0.5
        %v589 = vmul.f32 %v576, 0.5
        %v590 = vmul.f32 %v577, 0.5
        %v591 = vmul.f32 %v578, 0.5
        %v592 = vmul.f32 %v579, 0.5
        %v593 = vmul.f32 %v580, 0.5
        %v594 = vmul.f32 %v581, 0.5
        %v595 = vmul.f32 %v582, 0.5
        %v596 = vmul.f32 %v583, 0.5
        %v597 = vmul.f32 %v584, 0.5
        %v598 = vmul.f32 %v585, 0.5
        %v599 = vmul.f32 %v573, 0.70710677
        %v600 = vmul.f32 %v574, 0.70710677
        %v601 = vmul.f32 %v575, 0.70710677
        %v602 = vmul.f32 %v576, 0.70710677
        %v603 = vmul.f32 %v577, 0.70710677
        %v604 = vmul.f32 %v578, 0.70710677
        %v605 = vmul.f32 %v579, 0.70710677
        %v606 = vmul.f32 %v580, 0.70710677
        %v607 = vmul.f32 %v581, 0.70710677
        %v608 = vmul.f32 %v582, 0.70710677
        %v609 = vmul.f32 %v583, 0.70710677
        %v610 = vmul.f32 %v584, 0.70710677
        %v611 = vmul.f32 %v585, 0.70710677
        %v612 = vmul.f32 %v599, %v599
        %v613 = vmin.f32 16.0, %v612
        %v614 = vmul.f32 %v613, 2.1237322e-06
        %v615 = vadd.f32 %v614, 0.00028619796
        %v616 = vmul.f32 %v613, %v615
        %v617 = vadd.f32 %v616, 0.0036580483
        %v618 = vmul.f32 %v613, %v617
        %v619 = vadd.f32 %v618, 0.05243302
        %v620 = vmul.f32 %v613, %v619
        %v621 = vadd.f32 %v620, 0.18741608
        %v622 = vmul.f32 %v613, %v621
        %v623 = vadd.f32 %v622, 1.1283791
        %v624 = vmul.f32 %v599, %v623
        %v625 = vmul.f32 %v613, 3.8918573e-05
        %v626 = vadd.f32 %v625, 0.001143296
        %v627 = vmul.f32 %v613, %v626
        %v628 = vadd.f32 %v627, 0.014752088
        %v629 = vmul.f32 %v613, %v628
        %v630 = vadd.f32 %v629, 0.112945676
        %v631 = vmul.f32 %v613, %v630
        %v632 = vadd.f32 %v631, 0.4994258
        %v633 = vmul.f32 %v613, %v632
        %v634 = vadd.f32 %v633, 1.0
        %v635 = vrcp.pop %v634
        %v636 = vmul.f32 %v634, %v635
        %v637 = vsub.f32 1.0, %v636
        %v638 = vmul.f32 %v635, %v637
        %v639 = vadd.f32 %v635, %v638
        %vm640 = vweird.f32 %v634
        %vm641 = vweird.f32 %v635
        %vm642 = vmor %vm640, %vm641
        %v643 = vsel %vm642, %v635, %v639
        %v644 = vand.u32 2147483647, %v634
        %vm645 = vcmp.eq.f32.partialorder %v644, 8.507059e+37
        %v646 = vand.u32 %v634, 2147483648
        %v647 = vor.u32 1.1754944e-38, %v646
        %v648 = vsel %vm645, %v647, %v643
        %v649 = vmul.f32 %v624, %v648
        %v650 = vmin.f32 %v649, 1.0
        %v651 = vmax.f32 %v650, -1.0
        %v652 = vmul.f32 %v600, %v600
        %v653 = vmin.f32 16.0, %v652
        %v654 = vmul.f32 %v653, 2.1237322e-06
        %v655 = vadd.f32 %v654, 0.00028619796
        %v656 = vmul.f32 %v653, %v655
        %v657 = vadd.f32 %v656, 0.0036580483
        %v658 = vmul.f32 %v653, %v657
        %v659 = vadd.f32 %v658, 0.05243302
        %v660 = vmul.f32 %v653, %v659
        %v661 = vadd.f32 %v660, 0.18741608
        %v662 = vmul.f32 %v653, %v661
        %v663 = vadd.f32 %v662, 1.1283791
        %v664 = vmul.f32 %v600, %v663
        %v665 = vmul.f32 %v653, 3.8918573e-05
        %v666 = vadd.f32 %v665, 0.001143296
        %v667 = vmul.f32 %v653, %v666
        %v668 = vadd.f32 %v667, 0.014752088
        %v669 = vmul.f32 %v653, %v668
        %v670 = vadd.f32 %v669, 0.112945676
        %v671 = vmul.f32 %v653, %v670
        %v672 = vadd.f32 %v671, 0.4994258
        %v673 = vmul.f32 %v653, %v672
        %v674 = vadd.f32 %v673, 1.0
        %v675 = vrcp.pop %v674
        %v676 = vmul.f32 %v674, %v675
        %v677 = vsub.f32 1.0, %v676
        %v678 = vmul.f32 %v675, %v677
        %v679 = vadd.f32 %v675, %v678
        %vm680 = vweird.f32 %v674
        %vm681 = vweird.f32 %v675
        %vm682 = vmor %vm680, %vm681
        %v683 = vsel %vm682, %v675, %v679
        %v684 = vand.u32 2147483647, %v674
        %vm685 = vcmp.eq.f32.partialorder %v684, 8.507059e+37
        %v686 = vand.u32 %v674, 2147483648
        %v687 = vor.u32 1.1754944e-38, %v686
        %v688 = vsel %vm685, %v687, %v683
        %v689 = vmul.f32 %v664, %v688
        %v690 = vmin.f32 %v689, 1.0
        %v691 = vmax.f32 %v690, -1.0
        %v692 = vmul.f32 %v601, %v601
        %v693 = vmin.f32 16.0, %v692
        %v694 = vmul.f32 %v693, 2.1237322e-06
        %v695 = vadd.f32 %v694, 0.00028619796
        %v696 = vmul.f32 %v693, %v695
        %v697 = vadd.f32 %v696, 0.0036580483
        %v698 = vmul.f32 %v693, %v697
        %v699 = vadd.f32 %v698, 0.05243302
        %v700 = vmul.f32 %v693, %v699
        %v701 = vadd.f32 %v700, 0.18741608
        %v702 = vmul.f32 %v693, %v701
        %v703 = vadd.f32 %v702, 1.1283791
        %v704 = vmul.f32 %v601, %v703
        %v705 = vmul.f32 %v693, 3.8918573e-05
        %v706 = vadd.f32 %v705, 0.001143296
        %v707 = vmul.f32 %v693, %v706
        %v708 = vadd.f32 %v707, 0.014752088
        %v709 = vmul.f32 %v693, %v708
        %v710 = vadd.f32 %v709, 0.112945676
        %v711 = vmul.f32 %v693, %v710
        %v712 = vadd.f32 %v711, 0.4994258
        %v713 = vmul.f32 %v693, %v712
        %v714 = vadd.f32 %v713, 1.0
        %v715 = vrcp.pop %v714
        %v716 = vmul.f32 %v714, %v715
        %v717 = vsub.f32 1.0, %v716
        %v718 = vmul.f32 %v715, %v717
        %v719 = vadd.f32 %v715, %v718
        %vm720 = vweird.f32 %v714
        %vm721 = vweird.f32 %v715
        %vm722 = vmor %vm720, %vm721
        %v723 = vsel %vm722, %v715, %v719
        %v724 = vand.u32 2147483647, %v714
        %vm725 = vcmp.eq.f32.partialorder %v724, 8.507059e+37
        %v726 = vand.u32 %v714, 2147483648
        %v727 = vor.u32 1.1754944e-38, %v726
        %v728 = vsel %vm725, %v727, %v723
        %v729 = vmul.f32 %v704, %v728
        %v730 = vmin.f32 %v729, 1.0
        %v731 = vmax.f32 %v730, -1.0
        %v732 = vmul.f32 %v602, %v602
        %v733 = vmin.f32 16.0, %v732
        %v734 = vmul.f32 %v733, 2.1237322e-06
        %v735 = vadd.f32 %v734, 0.00028619796
        %v736 = vmul.f32 %v733, %v735
        %v737 = vadd.f32 %v736, 0.0036580483
        %v738 = vmul.f32 %v733, %v737
        %v739 = vadd.f32 %v738, 0.05243302
        %v740 = vmul.f32 %v733, %v739
        %v741 = vadd.f32 %v740, 0.18741608
        %v742 = vmul.f32 %v733, %v741
        %v743 = vadd.f32 %v742, 1.1283791
        %v744 = vmul.f32 %v602, %v743
        %v745 = vmul.f32 %v733, 3.8918573e-05
        %v746 = vadd.f32 %v745, 0.001143296
        %v747 = vmul.f32 %v733, %v746
        %v748 = vadd.f32 %v747, 0.014752088
        %v749 = vmul.f32 %v733, %v748
        %v750 = vadd.f32 %v749, 0.112945676
        %v751 = vmul.f32 %v733, %v750
        %v752 = vadd.f32 %v751, 0.4994258
        %v753 = vmul.f32 %v733, %v752
        %v754 = vadd.f32 %v753, 1.0
        %v755 = vrcp.pop %v754
        %v756 = vmul.f32 %v754, %v755
        %v757 = vsub.f32 1.0, %v756
        %v758 = vmul.f32 %v755, %v757
        %v759 = vadd.f32 %v755, %v758
        %vm760 = vweird.f32 %v754
        %vm761 = vweird.f32 %v755
        %vm762 = vmor %vm760, %vm761
        %v763 = vsel %vm762, %v755, %v759
        %v764 = vand.u32 2147483647, %v754
        %vm765 = vcmp.eq.f32.partialorder %v764, 8.507059e+37
        %v766 = vand.u32 %v754, 2147483648
        %v767 = vor.u32 1.1754944e-38, %v766
        %v768 = vsel %vm765, %v767, %v763
        %v769 = vmul.f32 %v744, %v768
        %v770 = vmin.f32 %v769, 1.0
        %v771 = vmax.f32 %v770, -1.0
        %v772 = vmul.f32 %v603, %v603
        %v773 = vmin.f32 16.0, %v772
        %v774 = vmul.f32 %v773, 2.1237322e-06
        %v775 = vadd.f32 %v774, 0.00028619796
        %v776 = vmul.f32 %v773, %v775
        %v777 = vadd.f32 %v776, 0.0036580483
        %v778 = vmul.f32 %v773, %v777
        %v779 = vadd.f32 %v778, 0.05243302
        %v780 = vmul.f32 %v773, %v779
        %v781 = vadd.f32 %v780, 0.18741608
        %v782 = vmul.f32 %v773, %v781
        %v783 = vadd.f32 %v782, 1.1283791
        %v784 = vmul.f32 %v603, %v783
        %v785 = vmul.f32 %v773, 3.8918573e-05
        %v786 = vadd.f32 %v785, 0.001143296
        %v787 = vmul.f32 %v773, %v786
        %v788 = vadd.f32 %v787, 0.014752088
        %v789 = vmul.f32 %v773, %v788
        %v790 = vadd.f32 %v789, 0.112945676
        %v791 = vmul.f32 %v773, %v790
        %v792 = vadd.f32 %v791, 0.4994258
        %v793 = vmul.f32 %v773, %v792
        %v794 = vadd.f32 %v793, 1.0
        %v795 = vrcp.pop %v794
        %v796 = vmul.f32 %v794, %v795
        %v797 = vsub.f32 1.0, %v796
        %v798 = vmul.f32 %v795, %v797
        %v799 = vadd.f32 %v795, %v798
        %vm800 = vweird.f32 %v794
        %vm801 = vweird.f32 %v795
        %vm802 = vmor %vm800, %vm801
        %v803 = vsel %vm802, %v795, %v799
        %v804 = vand.u32 2147483647, %v794
        %vm805 = vcmp.eq.f32.partialorder %v804, 8.507059e+37
        %v806 = vand.u32 %v794, 2147483648
        %v807 = vor.u32 1.1754944e-38, %v806
        %v808 = vsel %vm805, %v807, %v803
        %v809 = vmul.f32 %v784, %v808
        %v810 = vmin.f32 %v809, 1.0
        %v811 = vmax.f32 %v810, -1.0
        %v812 = vmul.f32 %v604, %v604
        %v813 = vmin.f32 16.0, %v812
        %v814 = vmul.f32 %v813, 2.1237322e-06
        %v815 = vadd.f32 %v814, 0.00028619796
        %v816 = vmul.f32 %v813, %v815
        %v817 = vadd.f32 %v816, 0.0036580483
        %v818 = vmul.f32 %v813, %v817
        %v819 = vadd.f32 %v818, 0.05243302
        %v820 = vmul.f32 %v813, %v819
        %v821 = vadd.f32 %v820, 0.18741608
        %v822 = vmul.f32 %v813, %v821
        %v823 = vadd.f32 %v822, 1.1283791
        %v824 = vmul.f32 %v604, %v823
        %v825 = vmul.f32 %v813, 3.8918573e-05
        %v826 = vadd.f32 %v825, 0.001143296
        %v827 = vmul.f32 %v813, %v826
        %v828 = vadd.f32 %v827, 0.014752088
        %v829 = vmul.f32 %v813, %v828
        %v830 = vadd.f32 %v829, 0.112945676
        %v831 = vmul.f32 %v813, %v830
        %v832 = vadd.f32 %v831, 0.4994258
        %v833 = vmul.f32 %v813, %v832
        %v834 = vadd.f32 %v833, 1.0
        %v835 = vrcp.pop %v834
        %v836 = vmul.f32 %v834, %v835
        %v837 = vsub.f32 1.0, %v836
        %v838 = vmul.f32 %v835, %v837
        %v839 = vadd.f32 %v835, %v838
        %vm840 = vweird.f32 %v834
        %vm841 = vweird.f32 %v835
        %vm842 = vmor %vm840, %vm841
        %v843 = vsel %vm842, %v835, %v839
        %v844 = vand.u32 2147483647, %v834
        %vm845 = vcmp.eq.f32.partialorder %v844, 8.507059e+37
        %v846 = vand.u32 %v834, 2147483648
        %v847 = vor.u32 1.1754944e-38, %v846
        %v848 = vsel %vm845, %v847, %v843
        %v849 = vmul.f32 %v824, %v848
        %v850 = vmin.f32 %v849, 1.0
        %v851 = vmax.f32 %v850, -1.0
        %v852 = vmul.f32 %v605, %v605
        %v853 = vmin.f32 16.0, %v852
        %v854 = vmul.f32 %v853, 2.1237322e-06
        %v855 = vadd.f32 %v854, 0.00028619796
        %v856 = vmul.f32 %v853, %v855
        %v857 = vadd.f32 %v856, 0.0036580483
        %v858 = vmul.f32 %v853, %v857
        %v859 = vadd.f32 %v858, 0.05243302
        %v860 = vmul.f32 %v853, %v859
        %v861 = vadd.f32 %v860, 0.18741608
        %v862 = vmul.f32 %v853, %v861
        %v863 = vadd.f32 %v862, 1.1283791
        %v864 = vmul.f32 %v605, %v863
        %v865 = vmul.f32 %v853, 3.8918573e-05
        %v866 = vadd.f32 %v865, 0.001143296
        %v867 = vmul.f32 %v853, %v866
        %v868 = vadd.f32 %v867, 0.014752088
        %v869 = vmul.f32 %v853, %v868
        %v870 = vadd.f32 %v869, 0.112945676
        %v871 = vmul.f32 %v853, %v870
        %v872 = vadd.f32 %v871, 0.4994258
        %v873 = vmul.f32 %v853, %v872
        %v874 = vadd.f32 %v873, 1.0
        %v875 = vrcp.pop %v874
        %v876 = vmul.f32 %v874, %v875
        %v877 = vsub.f32 1.0, %v876
        %v878 = vmul.f32 %v875, %v877
        %v879 = vadd.f32 %v875, %v878
        %vm880 = vweird.f32 %v874
        %vm881 = vweird.f32 %v875
        %vm882 = vmor %vm880, %vm881
        %v883 = vsel %vm882, %v875, %v879
        %v884 = vand.u32 2147483647, %v874
        %vm885 = vcmp.eq.f32.partialorder %v884, 8.507059e+37
        %v886 = vand.u32 %v874, 2147483648
        %v887 = vor.u32 1.1754944e-38, %v886
        %v888 = vsel %vm885, %v887, %v883
        %v889 = vmul.f32 %v864, %v888
        %v890 = vmin.f32 %v889, 1.0
        %v891 = vmax.f32 %v890, -1.0
        %v892 = vmul.f32 %v606, %v606
        %v893 = vmin.f32 16.0, %v892
        %v894 = vmul.f32 %v893, 2.1237322e-06
        %v895 = vadd.f32 %v894, 0.00028619796
        %v896 = vmul.f32 %v893, %v895
        %v897 = vadd.f32 %v896, 0.0036580483
        %v898 = vmul.f32 %v893, %v897
        %v899 = vadd.f32 %v898, 0.05243302
        %v900 = vmul.f32 %v893, %v899
        %v901 = vadd.f32 %v900, 0.18741608
        %v902 = vmul.f32 %v893, %v901
        %v903 = vadd.f32 %v902, 1.1283791
        %v904 = vmul.f32 %v606, %v903
        %v905 = vmul.f32 %v893, 3.8918573e-05
        %v906 = vadd.f32 %v905, 0.001143296
        %v907 = vmul.f32 %v893, %v906
        %v908 = vadd.f32 %v907, 0.014752088
        %v909 = vmul.f32 %v893, %v908
        %v910 = vadd.f32 %v909, 0.112945676
        %v911 = vmul.f32 %v893, %v910
        %v912 = vadd.f32 %v911, 0.4994258
        %v913 = vmul.f32 %v893, %v912
        %v914 = vadd.f32 %v913, 1.0
        %v915 = vrcp.pop %v914
        %v916 = vmul.f32 %v914, %v915
        %v917 = vsub.f32 1.0, %v916
        %v918 = vmul.f32 %v915, %v917
        %v919 = vadd.f32 %v915, %v918
        %vm920 = vweird.f32 %v914
        %vm921 = vweird.f32 %v915
        %vm922 = vmor %vm920, %vm921
        %v923 = vsel %vm922, %v915, %v919
        %v924 = vand.u32 2147483647, %v914
        %vm925 = vcmp.eq.f32.partialorder %v924, 8.507059e+37
        %v926 = vand.u32 %v914, 2147483648
        %v927 = vor.u32 1.1754944e-38, %v926
        %v928 = vsel %vm925, %v927, %v923
        %v929 = vmul.f32 %v904, %v928
        %v930 = vmin.f32 %v929, 1.0
        %v931 = vmax.f32 %v930, -1.0
        %v932 = vmul.f32 %v607, %v607
        %v933 = vmin.f32 16.0, %v932
        %v934 = vmul.f32 %v933, 2.1237322e-06
        %v935 = vadd.f32 %v934, 0.00028619796
        %v936 = vmul.f32 %v933, %v935
        %v937 = vadd.f32 %v936, 0.0036580483
        %v938 = vmul.f32 %v933, %v937
        %v939 = vadd.f32 %v938, 0.05243302
        %v940 = vmul.f32 %v933, %v939
        %v941 = vadd.f32 %v940, 0.18741608
        %v942 = vmul.f32 %v933, %v941
        %v943 = vadd.f32 %v942, 1.1283791
        %v944 = vmul.f32 %v607, %v943
        %v945 = vmul.f32 %v933, 3.8918573e-05
        %v946 = vadd.f32 %v945, 0.001143296
        %v947 = vmul.f32 %v933, %v946
        %v948 = vadd.f32 %v947, 0.014752088
        %v949 = vmul.f32 %v933, %v948
        %v950 = vadd.f32 %v949, 0.112945676
        %v951 = vmul.f32 %v933, %v950
        %v952 = vadd.f32 %v951, 0.4994258
        %v953 = vmul.f32 %v933, %v952
        %v954 = vadd.f32 %v953, 1.0
        %v955 = vrcp.pop %v954
        %v956 = vmul.f32 %v954, %v955
        %v957 = vsub.f32 1.0, %v956
        %v958 = vmul.f32 %v955, %v957
        %v959 = vadd.f32 %v955, %v958
        %vm960 = vweird.f32 %v954
        %vm961 = vweird.f32 %v955
        %vm962 = vmor %vm960, %vm961
        %v963 = vsel %vm962, %v955, %v959
        %v964 = vand.u32 2147483647, %v954
        %vm965 = vcmp.eq.f32.partialorder %v964, 8.507059e+37
        %v966 = vand.u32 %v954, 2147483648
        %v967 = vor.u32 1.1754944e-38, %v966
        %v968 = vsel %vm965, %v967, %v963
        %v969 = vmul.f32 %v944, %v968
        %v970 = vmin.f32 %v969, 1.0
        %v971 = vmax.f32 %v970, -1.0
        %v972 = vmul.f32 %v608, %v608
        %v973 = vmin.f32 16.0, %v972
        %v974 = vmul.f32 %v973, 2.1237322e-06
        %v975 = vadd.f32 %v974, 0.00028619796
        %v976 = vmul.f32 %v973, %v975
        %v977 = vadd.f32 %v976, 0.0036580483
        %v978 = vmul.f32 %v973, %v977
        %v979 = vadd.f32 %v978, 0.05243302
        %v980 = vmul.f32 %v973, %v979
        %v981 = vadd.f32 %v980, 0.18741608
        %v982 = vmul.f32 %v973, %v981
        %v983 = vadd.f32 %v982, 1.1283791
        %v984 = vmul.f32 %v608, %v983
        %v985 = vmul.f32 %v973, 3.8918573e-05
        %v986 = vadd.f32 %v985, 0.001143296
        %v987 = vmul.f32 %v973, %v986
        %v988 = vadd.f32 %v987, 0.014752088
        %v989 = vmul.f32 %v973, %v988
        %v990 = vadd.f32 %v989, 0.112945676
        %v991 = vmul.f32 %v973, %v990
        %v992 = vadd.f32 %v991, 0.4994258
        %v993 = vmul.f32 %v973, %v992
        %v994 = vadd.f32 %v993, 1.0
        %v995 = vrcp.pop %v994
        %v996 = vmul.f32 %v994, %v995
        %v997 = vsub.f32 1.0, %v996
        %v998 = vmul.f32 %v995, %v997
        %v999 = vadd.f32 %v995, %v998
        %vm1000 = vweird.f32 %v994
        %vm1001 = vweird.f32 %v995
        %vm1002 = vmor %vm1000, %vm1001
        %v1003 = vsel %vm1002, %v995, %v999
        %v1004 = vand.u32 2147483647, %v994
        %vm1005 = vcmp.eq.f32.partialorder %v1004, 8.507059e+37
        %v1006 = vand.u32 %v994, 2147483648
        %v1007 = vor.u32 1.1754944e-38, %v1006
        %v1008 = vsel %vm1005, %v1007, %v1003
        %v1009 = vmul.f32 %v984, %v1008
        %v1010 = vmin.f32 %v1009, 1.0
        %v1011 = vmax.f32 %v1010, -1.0
        %v1012 = vmul.f32 %v609, %v609
        %v1013 = vmin.f32 16.0, %v1012
        %v1014 = vmul.f32 %v1013, 2.1237322e-06
        %v1015 = vadd.f32 %v1014, 0.00028619796
        %v1016 = vmul.f32 %v1013, %v1015
        %v1017 = vadd.f32 %v1016, 0.0036580483
        %v1018 = vmul.f32 %v1013, %v1017
        %v1019 = vadd.f32 %v1018, 0.05243302
        %v1020 = vmul.f32 %v1013, %v1019
        %v1021 = vadd.f32 %v1020, 0.18741608
        %v1022 = vmul.f32 %v1013, %v1021
        %v1023 = vadd.f32 %v1022, 1.1283791
        %v1024 = vmul.f32 %v609, %v1023
        %v1025 = vmul.f32 %v1013, 3.8918573e-05
        %v1026 = vadd.f32 %v1025, 0.001143296
        %v1027 = vmul.f32 %v1013, %v1026
        %v1028 = vadd.f32 %v1027, 0.014752088
        %v1029 = vmul.f32 %v1013, %v1028
        %v1030 = vadd.f32 %v1029, 0.112945676
        %v1031 = vmul.f32 %v1013, %v1030
        %v1032 = vadd.f32 %v1031, 0.4994258
        %v1033 = vmul.f32 %v1013, %v1032
        %v1034 = vadd.f32 %v1033, 1.0
        %v1035 = vrcp.pop %v1034
        %v1036 = vmul.f32 %v1034, %v1035
        %v1037 = vsub.f32 1.0, %v1036
        %v1038 = vmul.f32 %v1035, %v1037
        %v1039 = vadd.f32 %v1035, %v1038
        %vm1040 = vweird.f32 %v1034
        %vm1041 = vweird.f32 %v1035
        %vm1042 = vmor %vm1040, %vm1041
        %v1043 = vsel %vm1042, %v1035, %v1039
        %v1044 = vand.u32 2147483647, %v1034
        %vm1045 = vcmp.eq.f32.partialorder %v1044, 8.507059e+37
        %v1046 = vand.u32 %v1034, 2147483648
        %v1047 = vor.u32 1.1754944e-38, %v1046
        %v1048 = vsel %vm1045, %v1047, %v1043
        %v1049 = vmul.f32 %v1024, %v1048
        %v1050 = vmin.f32 %v1049, 1.0
        %v1051 = vmax.f32 %v1050, -1.0
        %v1052 = vmul.f32 %v610, %v610
        %v1053 = vmin.f32 16.0, %v1052
        %v1054 = vmul.f32 %v1053, 2.1237322e-06
        %v1055 = vadd.f32 %v1054, 0.00028619796
        %v1056 = vmul.f32 %v1053, %v1055
        %v1057 = vadd.f32 %v1056, 0.0036580483
        %v1058 = vmul.f32 %v1053, %v1057
        %v1059 = vadd.f32 %v1058, 0.05243302
        %v1060 = vmul.f32 %v1053, %v1059
        %v1061 = vadd.f32 %v1060, 0.18741608
        %v1062 = vmul.f32 %v1053, %v1061
        %v1063 = vadd.f32 %v1062, 1.1283791
        %v1064 = vmul.f32 %v610, %v1063
        %v1065 = vmul.f32 %v1053, 3.8918573e-05
        %v1066 = vadd.f32 %v1065, 0.001143296
        %v1067 = vmul.f32 %v1053, %v1066
        %v1068 = vadd.f32 %v1067, 0.014752088
        %v1069 = vmul.f32 %v1053, %v1068
        %v1070 = vadd.f32 %v1069, 0.112945676
        %v1071 = vmul.f32 %v1053, %v1070
        %v1072 = vadd.f32 %v1071, 0.4994258
        %v1073 = vmul.f32 %v1053, %v1072
        %v1074 = vadd.f32 %v1073, 1.0
        %v1075 = vrcp.pop %v1074
        %v1076 = vmul.f32 %v1074, %v1075
        %v1077 = vsub.f32 1.0, %v1076
        %v1078 = vmul.f32 %v1075, %v1077
        %v1079 = vadd.f32 %v1075, %v1078
        %vm1080 = vweird.f32 %v1074
        %vm1081 = vweird.f32 %v1075
        %vm1082 = vmor %vm1080, %vm1081
        %v1083 = vsel %vm1082, %v1075, %v1079
        %v1084 = vand.u32 2147483647, %v1074
        %vm1085 = vcmp.eq.f32.partialorder %v1084, 8.507059e+37
        %v1086 = vand.u32 %v1074, 2147483648
        %v1087 = vor.u32 1.1754944e-38, %v1086
        %v1088 = vsel %vm1085, %v1087, %v1083
        %v1089 = vmul.f32 %v1064, %v1088
        %v1090 = vmin.f32 %v1089, 1.0
        %v1091 = vmax.f32 %v1090, -1.0
        %v1092 = vmul.f32 %v611, %v611
        %v1093 = vmin.f32 16.0, %v1092
        %v1094 = vmul.f32 %v1093, 2.1237322e-06
        %v1095 = vadd.f32 %v1094, 0.00028619796
        %v1096 = vmul.f32 %v1093, %v1095
        %v1097 = vadd.f32 %v1096, 0.0036580483
        %v1098 = vmul.f32 %v1093, %v1097
        %v1099 = vadd.f32 %v1098, 0.05243302
        %v1100 = vmul.f32 %v1093, %v1099
        %v1101 = vadd.f32 %v1100, 0.18741608
        %v1102 = vmul.f32 %v1093, %v1101
        %v1103 = vadd.f32 %v1102, 1.1283791
        %v1104 = vmul.f32 %v611, %v1103
        %v1105 = vmul.f32 %v1093, 3.8918573e-05
        %v1106 = vadd.f32 %v1105, 0.001143296
        %v1107 = vmul.f32 %v1093, %v1106
        %v1108 = vadd.f32 %v1107, 0.014752088
        %v1109 = vmul.f32 %v1093, %v1108
        %v1110 = vadd.f32 %v1109, 0.112945676
        %v1111 = vmul.f32 %v1093, %v1110
        %v1112 = vadd.f32 %v1111, 0.4994258
        %v1113 = vmul.f32 %v1093, %v1112
        %v1114 = vadd.f32 %v1113, 1.0
        %v1115 = vrcp.pop %v1114
        %v1116 = vmul.f32 %v1114, %v1115
        %v1117 = vsub.f32 1.0, %v1116
        %v1118 = vmul.f32 %v1115, %v1117
        %v1119 = vadd.f32 %v1115, %v1118
        %vm1120 = vweird.f32 %v1114
        %vm1121 = vweird.f32 %v1115
        %vm1122 = vmor %vm1120, %vm1121
        %v1123 = vsel %vm1122, %v1115, %v1119
        %v1124 = vand.u32 2147483647, %v1114
        %vm1125 = vcmp.eq.f32.partialorder %v1124, 8.507059e+37
        %v1126 = vand.u32 %v1114, 2147483648
        %v1127 = vor.u32 1.1754944e-38, %v1126
        %v1128 = vsel %vm1125, %v1127, %v1123
        %v1129 = vmul.f32 %v1104, %v1128
        %v1130 = vmin.f32 %v1129, 1.0
        %v1131 = vmax.f32 %v1130, -1.0
        %v1132 = vadd.f32 %v651, 1.0
        %v1133 = vadd.f32 %v691, 1.0
        %v1134 = vadd.f32 %v731, 1.0
        %v1135 = vadd.f32 %v771, 1.0
        %v1136 = vadd.f32 %v811, 1.0
        %v1137 = vadd.f32 %v851, 1.0
        %v1138 = vadd.f32 %v891, 1.0
        %v1139 = vadd.f32 %v931, 1.0
        %v1140 = vadd.f32 %v971, 1.0
        %v1141 = vadd.f32 %v1011, 1.0
        %v1142 = vadd.f32 %v1051, 1.0
        %v1143 = vadd.f32 %v1091, 1.0
        %v1144 = vadd.f32 %v1131, 1.0
        %v1145 = vmul.f32 %v586, %v1132
        %v1146 = vmul.f32 %v587, %v1133
        %v1147 = vmul.f32 %v588, %v1134
        %v1148 = vmul.f32 %v589, %v1135
        %v1149 = vmul.f32 %v590, %v1136
        %v1150 = vmul.f32 %v591, %v1137
        %v1151 = vmul.f32 %v592, %v1138
        %v1152 = vmul.f32 %v593, %v1139
        %v1153 = vmul.f32 %v594, %v1140
        %v1154 = vmul.f32 %v595, %v1141
        %v1155 = vmul.f32 %v596, %v1142
        %v1156 = vmul.f32 %v597, %v1143
        %v1157 = vmul.f32 %v598, %v1144
        %1158 = vst [vmem:[%s243] sm:$0xff] %v1145
        %1159 = vst [vmem:[%s243 + $0x8] sm:$0xff] %v1146
        %1160 = vst [vmem:[%s243 + $0x10] sm:$0xff] %v1147
        %1161 = vst [vmem:[%s243 + $0x18] sm:$0xff] %v1148
        %1162 = vst [vmem:[%s243 + $0x20] sm:$0xff] %v1149
        %1163 = vst [vmem:[%s243 + $0x28] sm:$0xff] %v1150
        %1164 = vst [vmem:[%s243 + $0x30] sm:$0xff] %v1151
        %1165 = vst [vmem:[%s243 + $0x38] sm:$0xff] %v1152
        %1166 = vst [vmem:[%s243 + $0x40] sm:$0xff] %v1153
        %1167 = vst [vmem:[%s243 + $0x48] sm:$0xff] %v1154
        %1168 = vst [vmem:[%s243 + $0x50] sm:$0xff] %v1155
        %1169 = vst [vmem:[%s243 + $0x58] sm:$0xff] %v1156
        %1170 = vst [vmem:[%s243 + $0x60] sm:$0x1] %v1157
        %p1171 = scmp.lt.s32.totalorder %s17, 1
        %s1172 = scalar_select %p1171, %s17, 1
        %s1173 = smul.addr %s1172, 13
        %s1174 = smul.addr %s1173, 8
        %s1175 = scalar_lea.vmem %s4, %s1174
        // Predicated region
        $region49: #{fairseq_wav2vec2_forward.9} parent=35 // pred_check
          %p1176 = pneg %p124
        $region50: #{fairseq_wav2vec2_forward.9} parent=35 // pred_check_branch
          %1178 = sbr.rel (%p1176) target = $region52
        $region51: #{fairseq_wav2vec2_forward.9} parent=35 // pred_region
          _
        $region52: #{fairseq_wav2vec2_forward.9} parent=35 // pred_fallthru
          _
      $region36: #{fairseq_wav2vec2_forward.9} parent=5 // pred_fallthru
        _
      %p1179 = scmp.le.s32.totalorder 2, %s12
      // Predicated region
      $region53: #{fairseq_wav2vec2_forward.9} parent=5 // pred_check
        %p1180 = pneg %p1179
      $region54: #{fairseq_wav2vec2_forward.9} parent=5 // pred_check_branch
        %1182 = sbr.rel (%p1180) target = $region56
      $region55: #{fairseq_wav2vec2_forward.9} parent=5 // pred_region
        %s1183 = ssub.s32 %s12, 2
        // Predicated region
        $region57: #{fairseq_wav2vec2_forward.9} parent=55 // pred_check
          %p1184 = pneg %p130
        $region58: #{fairseq_wav2vec2_forward.9} parent=55 // pred_check_branch
          %1186 = sbr.rel (%p1184) target = $region60
        $region59: #{fairseq_wav2vec2_forward.9} parent=55 // pred_region
          %p1187 = scmp.lt.s32.totalorder %s18, 1
          %s1188 = scalar_select %p1187, %s18, 1
          %s1189 = smul.addr %s1188, 13
          %s1190 = smul.addr %s1189, 8
          %s1191 = scalar_lea.vmem %s4, %s1190
        $region60: #{fairseq_wav2vec2_forward.9} parent=55 // pred_fallthru
          _
      $region56: #{fairseq_wav2vec2_forward.9} parent=5 // pred_fallthru
        _
    $region6: #{fairseq_wav2vec2_forward.9} parent=1 // loop_footer
      %s16 = sadd.s32 1, %s12
    $region7: #{fairseq_wav2vec2_forward.9} parent=1 // loop_footer_branch
      %11 = sbr.rel target = $region3
    $region8: #{fairseq_wav2vec2_forward.9} parent=1 // loop_exit
      _
    %1192 = vsyncpa [#allocation3], 1
    %s1193 = scalar_lea.sflag [#allocation3], 1
    %1194 = vsyncpa %s1193, 1
    %1195 = vsyncpa [#allocation5], 1

// kernel: fairseq_wav2vec2_forward.10
$region0: #{fairseq_wav2vec2_forward.10}
  #allocation0 [shape = 'u32[]', space=smem, size = 0x4, offset = 0x4, fixed_abs, tag = 'smem constant byte address 0x4 - core index']
  #allocation1 [shape = 'u32[72,128]{1,0:T(1,128)}', space=vmem, size = 0x9000, scoped, tag = 'internal scratch']
  %s0 = inlined_call_operand.vmem [shape: f32[2,49,256], index: 0, kind: input, shape index: {}]
  %s1 = inlined_call_operand.hbm [shape: f32[2,256,128], index: 1, kind: input, shape index: {}]
  %s2 = inlined_call_operand.vmem [shape: f32[2,48,128], index: 2, kind: output, shape index: {}]
  %s3 = sld [smem:[#allocation0]]
  $region45: #{fairseq_wav2vec2_forward.10} parent=0
    _
  %s5 = ssub.s32 1, %s3
  %s6 = scalar_select 0, %s5, %s3
  $region1: #{fairseq_wav2vec2_forward.10} parent=0
    #allocation2 [shape = 'u8[262144]{0}', space=vmem, size = 0x40000, scoped, tag = 'input window, operand 1, single buffered']
    #allocation3 [shape = 's32[2]{0}', space=sflag, size = 0x8, scoped, tag = 'scoped memory for fairseq_wav2vec2_forward.10']
    %7 = vsyncpa [#allocation3], 0
    loop: start=0, step=1, limit=4
    $region2: #{fairseq_wav2vec2_forward.10} parent=1 // loop_pre_header
      _
    $region3: #{fairseq_wav2vec2_forward.10} parent=1 // loop_header
      %s9 = sphi 0, %s13
      %p10 = scmp.ge.s32.totalorder %s9, 4
      %s19 = sphi 0, %s21
      %s22 = sphi 0, %s19
      %s23 = sphi 0, %s22
      %s39 = sphi 0, %s23
      %s43 = sphi 0, %s43
      %s45 = sphi 0, %s43
      %s46 = sphi 0, %s45
      %s60 = sphi 0, %s46
      %s66 = sphi 0, %s68
      %s69 = sphi 0, %s66
      %s70 = sphi 0, %s69
      %s86 = sphi 0, %s70
    $region4: #{fairseq_wav2vec2_forward.10} parent=1 // loop_header_branch
      %12 = sbr.rel (%p10) target = $region8
    $region5: #{fairseq_wav2vec2_forward.10} parent=1 // loop_body
      %s14 = ssub.s32 %s9, 1
      %s15 = ssub.s32 %s9, 2
      %s16 = sadd.s32 %s9, 1
      %s17 = ssub.s32 %s9, %s16
      %p18 = scmp.eq.s32.totalorder %s17, 0
      %s20 = sadd.s32 %s19, 1
      %s21 = scalar_select %p18, %s19, %s20
      %p24 = pneg %p18
      %p25 = scmp.eq.s32.totalorder %s9, 1
      %p26 = por %p24, %p25
      %p27 = scmp.ne.s32.totalorder %s19, %s22
      %p28 = scmp.eq.s32.totalorder %s9, 0
      %p29 = por %p27, %p28
      %p30 = scmp.ne.s32.totalorder %s19, %s22
      %p31 = scmp.eq.s32.totalorder %s14, 1
      %p32 = por %p30, %p31
      %p33 = scmp.ne.s32.totalorder %s22, %s23
      %p34 = scmp.eq.s32.totalorder %s14, 0
      %p35 = por %p33, %p34
      %p36 = scmp.ne.s32.totalorder %s22, %s23
      %p37 = scmp.eq.s32.totalorder %s15, 1
      %p38 = por %p36, %p37
      %p40 = scmp.ne.s32.totalorder %s23, %s39
      %p41 = scmp.eq.s32.totalorder %s15, 0
      %p42 = por %p40, %p41
      %s44 = sadd.s32 %s43, 1
      %p47 = scmp.eq.s32.totalorder %s9, 1
      %p48 = scmp.ne.s32.totalorder %s43, %s45
      %p49 = scmp.eq.s32.totalorder %s9, 0
      %p50 = por %p48, %p49
      %p51 = scmp.ne.s32.totalorder %s43, %s45
      %p52 = scmp.eq.s32.totalorder %s14, 1
      %p53 = por %p51, %p52
      %p54 = scmp.ne.s32.totalorder %s45, %s46
      %p55 = scmp.eq.s32.totalorder %s14, 0
      %p56 = por %p54, %p55
      %p57 = scmp.ne.s32.totalorder %s45, %s46
      %p58 = scmp.eq.s32.totalorder %s15, 1
      %p59 = por %p57, %p58
      %p61 = scmp.ne.s32.totalorder %s46, %s60
      %p62 = scmp.eq.s32.totalorder %s15, 0
      %p63 = por %p61, %p62
      %s64 = ssub.s32 %s9, %s16
      %p65 = scmp.eq.s32.totalorder %s64, 0
      %s67 = sadd.s32 %s66, 1
      %s68 = scalar_select %p65, %s66, %s67
      %p71 = pneg %p65
      %p72 = scmp.eq.s32.totalorder %s9, 1
      %p73 = por %p71, %p72
      %p74 = scmp.ne.s32.totalorder %s66, %s69
      %p75 = scmp.eq.s32.totalorder %s9, 0
      %p76 = por %p74, %p75
      %p77 = scmp.ne.s32.totalorder %s66, %s69
      %p78 = scmp.eq.s32.totalorder %s14, 1
      %p79 = por %p77, %p78
      %p80 = scmp.ne.s32.totalorder %s69, %s70
      %p81 = scmp.eq.s32.totalorder %s14, 0
      %p82 = por %p80, %p81
      %p83 = scmp.ne.s32.totalorder %s69, %s70
      %p84 = scmp.eq.s32.totalorder %s15, 1
      %p85 = por %p83, %p84
      %p87 = scmp.ne.s32.totalorder %s70, %s86
      %p88 = scmp.eq.s32.totalorder %s15, 0
      %p89 = por %p87, %p88
      %p90 = scmp.le.s32.totalorder 1, %s9
      %p91 = scmp.lt.s32.totalorder %s9, 3
      %p92 = pnand %p90, %p91
      %p93 = pneg %p92
      // Predicated region
      $region9: #{fairseq_wav2vec2_forward.10} parent=5 // pred_check
        _
      $region10: #{fairseq_wav2vec2_forward.10} parent=5 // pred_check_branch
        %95 = sbr.rel (%p92) target = $region12
      $region11: #{fairseq_wav2vec2_forward.10} parent=5 // pred_region
        %s96 = ssub.s32 %s9, 1
        // Predicated region
        $region13: #{fairseq_wav2vec2_forward.10} parent=11 // pred_check
          %p97 = pneg %p56
        $region14: #{fairseq_wav2vec2_forward.10} parent=11 // pred_check_branch
          %99 = sbr.rel (%p97) target = $region16
        $region15: #{fairseq_wav2vec2_forward.10} parent=11 // pred_region
          %101 = vsyncadd [#allocation3], 0
          %s102 = sshll.u32 %s1, 4
          %s103 = int_to_ptr.hbm [resolvable:$true] %s102
          %s104 = sshll.u32 [#allocation2], 4
          %s105 = int_to_ptr.vmem [resolvable:$true] %s104
          %110 = dma.hbm_to_vmem [thread:$0]  %s103, 8192, %s105, [#allocation3], 128, 128, 8
        $region16: #{fairseq_wav2vec2_forward.10} parent=11 // pred_fallthru
          _
      $region12: #{fairseq_wav2vec2_forward.10} parent=5 // pred_fallthru
        _
      %p111 = scmp.lt.s32.totalorder %s9, 2
      // Predicated region
      $region17: #{fairseq_wav2vec2_forward.10} parent=5 // pred_check
        %p112 = pneg %p111
      $region18: #{fairseq_wav2vec2_forward.10} parent=5 // pred_check_branch
        %114 = sbr.rel (%p112) target = $region20
      $region19: #{fairseq_wav2vec2_forward.10} parent=5 // pred_region
        // Predicated region
        $region21: #{fairseq_wav2vec2_forward.10} parent=19 // pred_check
          %p115 = pneg %p29
        $region22: #{fairseq_wav2vec2_forward.10} parent=19 // pred_check_branch
          %117 = sbr.rel (%p115) target = $region24
        $region23: #{fairseq_wav2vec2_forward.10} parent=19 // pred_region
          %p118 = scmp.lt.s32.totalorder %s9, 1
          %s119 = scalar_select %p118, %s9, 1
          %s120 = smul.addr %s119, 14
          %s121 = smul.addr %s120, 8
          %s122 = scalar_lea.vmem %s0, %s121
        $region24: #{fairseq_wav2vec2_forward.10} parent=19 // pred_fallthru
          _
      $region20: #{fairseq_wav2vec2_forward.10} parent=5 // pred_fallthru
        _
      %p123 = scmp.le.s32.totalorder 1, %s9
      %p124 = scmp.lt.s32.totalorder %s9, 3
      %p125 = pnand %p123, %p124
      %p126 = pneg %p125
      // Predicated region
      $region25: #{fairseq_wav2vec2_forward.10} parent=5 // pred_check
        _
      $region26: #{fairseq_wav2vec2_forward.10} parent=5 // pred_check_branch
        %128 = sbr.rel (%p125) target = $region28
      $region27: #{fairseq_wav2vec2_forward.10} parent=5 // pred_region
        %s129 = ssub.s32 %s9, 1
        // Predicated region
        $region29: #{fairseq_wav2vec2_forward.10} parent=27 // pred_check
          %p130 = pneg %p56
        $region30: #{fairseq_wav2vec2_forward.10} parent=27 // pred_check_branch
          %132 = sbr.rel (%p130) target = $region32
        $region31: #{fairseq_wav2vec2_forward.10} parent=27 // pred_region
          %134 = dma.done [#allocation3], 8192
        $region32: #{fairseq_wav2vec2_forward.10} parent=27 // pred_fallthru
          _
        %p135 = scmp.lt.s32.totalorder %s14, 1
        %s136 = scalar_select %p135, %s14, 1
        %s137 = smul.addr %s136, 14
        %s138 = smul.addr %s137, 8
        %s139 = scalar_lea.vmem %s0, %s138
        %p140 = pneg %p35
        %p141 = pneg %p32
        %p142 = pneg %p56
        %p143 = pneg %p53
        %p144 = pneg %p82
        %p145 = pneg %p79
        %p146 = scmp.lt.s32.totalorder %s14, 1
        %s147 = scalar_select %p146, %s14, 1
        %s148 = smul.addr %s147, 6
        %s149 = smul.addr %s148, 8
        %s150 = scalar_lea.vmem %s2, %s149
        %p151 = scmp.lt.s32.totalorder %s14, 1
        %s152 = scalar_select %p151, %s14, 1
        %s153 = smul.addr %s152, 14
        %s154 = smul.addr %s153, 8
        %s155 = scalar_lea.vmem %s0, %s154
        %p156 = scmp.lt.s32.totalorder %s14, 1
        %s157 = scalar_select %p156, %s14, 1
        %s158 = smul.addr %s157, 6
        %s159 = smul.addr %s158, 8
        %s160 = scalar_lea.vmem %s2, %s159
        %v161 = vld [vmem:[%s155] sm:$0xff]
        %v162 = vld [vmem:[%s155 + $0x8] sm:$0xff]
        %v163 = vld [vmem:[%s155 + $0x10] sm:$0xff]
        %v164 = vld [vmem:[%s155 + $0x18] sm:$0xff]
        %v165 = vld [vmem:[%s155 + $0x20] sm:$0xff]
        %v166 = vld [vmem:[%s155 + $0x28] sm:$0xff]
        %v167 = vld [vmem:[%s155 + $0x30] sm:$0xff]
        %v168 = vld [vmem:[%s155 + $0x38] sm:$0xff]
        %v169 = vld [vmem:[%s155 + $0x40] sm:$0xff]
        %v170 = vld [vmem:[%s155 + $0x48] sm:$0xff]
        %v171 = vld [vmem:[%s155 + $0x50] sm:$0xff]
        %v172 = vld [vmem:[%s155 + $0x58] sm:$0xff]
        %v173 = vld [vmem:[%s155 + $0x60] sm:$0x1]
        %v174 = vld [vmem:[%s155 + $0x68] sm:$0x1]
        %v175 = vld [vmem:[#allocation2] sm:$0xff]
        %v176 = vld [vmem:[#allocation2 + $0x8] sm:$0xff]
        %v177 = vld [vmem:[#allocation2 + $0x10] sm:$0xff]
        %v178 = vld [vmem:[#allocation2 + $0x18] sm:$0xff]
        %v179 = vld [vmem:[#allocation2 + $0x20] sm:$0xff]
        %v180 = vld [vmem:[#allocation2 + $0x28] sm:$0xff]
        %v181 = vld [vmem:[#allocation2 + $0x30] sm:$0xff]
        %v182 = vld [vmem:[#allocation2 + $0x38] sm:$0xff]
        %v183 = vld [vmem:[#allocation2 + $0x40] sm:$0xff]
        %v184 = vld [vmem:[#allocation2 + $0x48] sm:$0xff]
        %v185 = vld [vmem:[#allocation2 + $0x50] sm:$0xff]
        %v186 = vld [vmem:[#allocation2 + $0x58] sm:$0xff]
        %v187 = vld [vmem:[#allocation2 + $0x60] sm:$0xff]
        %v188 = vld [vmem:[#allocation2 + $0x68] sm:$0xff]
        %v189 = vld [vmem:[#allocation2 + $0x70] sm:$0xff]
        %v190 = vld [vmem:[#allocation2 + $0x78] sm:$0xff]
        %v191 = vld [vmem:[#allocation2 + $0x80] sm:$0xff]
        %v192 = vld [vmem:[#allocation2 + $0x88] sm:$0xff]
        %v193 = vld [vmem:[#allocation2 + $0x90] sm:$0xff]
        %v194 = vld [vmem:[#allocation2 + $0x98] sm:$0xff]
        %v195 = vld [vmem:[#allocation2 + $0xa0] sm:$0xff]
        %v196 = vld [vmem:[#allocation2 + $0xa8] sm:$0xff]
        %v197 = vld [vmem:[#allocation2 + $0xb0] sm:$0xff]
        %v198 = vld [vmem:[#allocation2 + $0xb8] sm:$0xff]
        %v199 = vld [vmem:[#allocation2 + $0xc0] sm:$0xff]
        %v200 = vld [vmem:[#allocation2 + $0xc8] sm:$0xff]
        %v201 = vld [vmem:[#allocation2 + $0xd0] sm:$0xff]
        %v202 = vld [vmem:[#allocation2 + $0xd8] sm:$0xff]
        %v203 = vld [vmem:[#allocation2 + $0xe0] sm:$0xff]
        %v204 = vld [vmem:[#allocation2 + $0xe8] sm:$0xff]
        %v205 = vld [vmem:[#allocation2 + $0xf0] sm:$0xff]
        %v206 = vld [vmem:[#allocation2 + $0xf8] sm:$0xff]
        %s207 = scalar_lea.vmem [#allocation2], 256
        %v208 = vld [vmem:[%s207] sm:$0xff]
        %v209 = vld [vmem:[%s207 + $0x8] sm:$0xff]
        %v210 = vld [vmem:[%s207 + $0x10] sm:$0xff]
        %v211 = vld [vmem:[%s207 + $0x18] sm:$0xff]
        %v212 = vld [vmem:[%s207 + $0x20] sm:$0xff]
        %v213 = vld [vmem:[%s207 + $0x28] sm:$0xff]
        %v214 = vld [vmem:[%s207 + $0x30] sm:$0xff]
        %v215 = vld [vmem:[%s207 + $0x38] sm:$0xff]
        %v216 = vld [vmem:[%s207 + $0x40] sm:$0xff]
        %v217 = vld [vmem:[%s207 + $0x48] sm:$0xff]
        %v218 = vld [vmem:[%s207 + $0x50] sm:$0xff]
        %v219 = vld [vmem:[%s207 + $0x58] sm:$0xff]
        %v220 = vld [vmem:[%s207 + $0x60] sm:$0xff]
        %v221 = vld [vmem:[%s207 + $0x68] sm:$0xff]
        %v222 = vld [vmem:[%s207 + $0x70] sm:$0xff]
        %v223 = vld [vmem:[%s207 + $0x78] sm:$0xff]
        %v224 = vld [vmem:[%s207 + $0x80] sm:$0xff]
        %v225 = vld [vmem:[%s207 + $0x88] sm:$0xff]
        %v226 = vld [vmem:[%s207 + $0x90] sm:$0xff]
        %v227 = vld [vmem:[%s207 + $0x98] sm:$0xff]
        %v228 = vld [vmem:[%s207 + $0xa0] sm:$0xff]
        %v229 = vld [vmem:[%s207 + $0xa8] sm:$0xff]
        %v230 = vld [vmem:[%s207 + $0xb0] sm:$0xff]
        %v231 = vld [vmem:[%s207 + $0xb8] sm:$0xff]
        %v232 = vld [vmem:[%s207 + $0xc0] sm:$0xff]
        %v233 = vld [vmem:[%s207 + $0xc8] sm:$0xff]
        %v234 = vld [vmem:[%s207 + $0xd0] sm:$0xff]
        %v235 = vld [vmem:[%s207 + $0xd8] sm:$0xff]
        %v236 = vld [vmem:[%s207 + $0xe0] sm:$0xff]
        %v237 = vld [vmem:[%s207 + $0xe8] sm:$0xff]
        %v238 = vld [vmem:[%s207 + $0xf0] sm:$0xff]
        %v239 = vld [vmem:[%s207 + $0xf8] sm:$0xff]
        %vm254 = vcmask 1046528
        %v255 = vrot.slane %v161, 1
        %v256 = vrot.slane %v163, 1
        %v257 = vsel %vm254, %v255, %v256
        %v258 = vrot.slane %v162, 1
        %v259 = vrot.slane %v164, 1
        %v260 = vsel %vm254, %v258, %v259
        %v261 = vrot.slane %v165, 1
        %v262 = vsel %vm254, %v256, %v261
        %v263 = vrot.slane %v166, 1
        %v264 = vsel %vm254, %v259, %v263
        %v265 = vrot.slane %v167, 1
        %v266 = vsel %vm254, %v261, %v265
        %v267 = vrot.slane %v168, 1
        %v268 = vsel %vm254, %v263, %v267
        %v269 = vrot.slane %v169, 1
        %v270 = vsel %vm254, %v265, %v269
        %v271 = vrot.slane %v170, 1
        %v272 = vsel %vm254, %v267, %v271
        %v273 = vrot.slane %v171, 1
        %v274 = vsel %vm254, %v269, %v273
        %v275 = vrot.slane %v172, 1
        %v276 = vsel %vm254, %v271, %v275
        %v277 = vrot.slane %v173, 1
        %v278 = vsel %vm254, %v273, %v277
        %v279 = vrot.slane %v174, 1
        %v280 = vsel %vm254, %v275, %v279
        %293 = vmatpush.msra.mxu0 %v223
        %294 = vmatpush.msra.mxu0 %v222
        %295 = vmatpush.msra.mxu0 %v221
        %296 = vmatpush.msra.mxu0 %v220
        %297 = vmatpush.msra.mxu0 %v219
        %298 = vmatpush.msra.mxu0 %v218
        %299 = vmatpush.msra.mxu0 %v217
        %300 = vmatpush.msra.mxu0 %v216
        %301 = vmatpush.msra.mxu0 %v215
        %302 = vmatpush.msra.mxu0 %v214
        %303 = vmatpush.msra.mxu0 %v213
        %304 = vmatpush.msra.mxu0 %v212
        %305 = vmatpush.msra.mxu0 %v211
        %306 = vmatpush.msra.mxu0 %v210
        %307 = vmatpush.msra.mxu0 %v209
        %308 = vmatpush.msra.mxu0 %v208
        %309 = vmatmul.f32.gmra.mxu0 %v257
        %v310 = vpop.f32.mrf.mxu0
        %v311 = vadd.f32 0.0, %v310
        %312 = vmatmul.f32.gmra.mxu0 %v262
        %v313 = vpop.f32.mrf.mxu0
        %v314 = vadd.f32 0.0, %v313
        %315 = vmatmul.f32.gmra.mxu0 %v266
        %v316 = vpop.f32.mrf.mxu0
        %v317 = vadd.f32 0.0, %v316
        %318 = vmatmul.f32.gmra.mxu0 %v270
        %v319 = vpop.f32.mrf.mxu0
        %v320 = vadd.f32 0.0, %v319
        %321 = vmatmul.f32.gmra.mxu0 %v274
        %v322 = vpop.f32.mrf.mxu0
        %v323 = vadd.f32 0.0, %v322
        %324 = vmatmul.f32.gmra.mxu0 %v278
        %v325 = vpop.f32.mrf.mxu0
        %v326 = vadd.f32 0.0, %v325
        %327 = vdwg.mxu0
        %328 = vmatpush.msra.mxu0 %v239
        %329 = vmatpush.msra.mxu0 %v238
        %330 = vmatpush.msra.mxu0 %v237
        %331 = vmatpush.msra.mxu0 %v236
        %332 = vmatpush.msra.mxu0 %v235
        %333 = vmatpush.msra.mxu0 %v234
        %334 = vmatpush.msra.mxu0 %v233
        %335 = vmatpush.msra.mxu0 %v232
        %336 = vmatpush.msra.mxu0 %v231
        %337 = vmatpush.msra.mxu0 %v230
        %338 = vmatpush.msra.mxu0 %v229
        %339 = vmatpush.msra.mxu0 %v228
        %340 = vmatpush.msra.mxu0 %v227
        %341 = vmatpush.msra.mxu0 %v226
        %342 = vmatpush.msra.mxu0 %v225
        %343 = vmatpush.msra.mxu0 %v224
        %344 = vmatmul.f32.gmra.mxu0 %v260
        %v345 = vpop.f32.mrf.mxu0
        %v346 = vadd.f32 %v311, %v345
        %347 = vmatmul.f32.gmra.mxu0 %v264
        %v348 = vpop.f32.mrf.mxu0
        %v349 = vadd.f32 %v314, %v348
        %350 = vmatmul.f32.gmra.mxu0 %v268
        %v351 = vpop.f32.mrf.mxu0
        %v352 = vadd.f32 %v317, %v351
        %353 = vmatmul.f32.gmra.mxu0 %v272
        %v354 = vpop.f32.mrf.mxu0
        %v355 = vadd.f32 %v320, %v354
        %356 = vmatmul.f32.gmra.mxu0 %v276
        %v357 = vpop.f32.mrf.mxu0
        %v358 = vadd.f32 %v323, %v357
        %359 = vmatmul.f32.gmra.mxu0 %v280
        %v360 = vpop.f32.mrf.mxu0
        %v361 = vadd.f32 %v326, %v360
        %362 = vdwg.mxu0
        %363 = vmatpush.msra.mxu0 %v190
        %364 = vmatpush.msra.mxu0 %v189
        %365 = vmatpush.msra.mxu0 %v188
        %366 = vmatpush.msra.mxu0 %v187
        %367 = vmatpush.msra.mxu0 %v186
        %368 = vmatpush.msra.mxu0 %v185
        %369 = vmatpush.msra.mxu0 %v184
        %370 = vmatpush.msra.mxu0 %v183
        %371 = vmatpush.msra.mxu0 %v182
        %372 = vmatpush.msra.mxu0 %v181
        %373 = vmatpush.msra.mxu0 %v180
        %374 = vmatpush.msra.mxu0 %v179
        %375 = vmatpush.msra.mxu0 %v178
        %376 = vmatpush.msra.mxu0 %v177
        %377 = vmatpush.msra.mxu0 %v176
        %378 = vmatpush.msra.mxu0 %v175
        %379 = vmatmul.f32.gmra.mxu0 %v161
        %v380 = vpop.f32.mrf.mxu0
        %v381 = vadd.f32 %v346, %v380
        %382 = vmatmul.f32.gmra.mxu0 %v163
        %v383 = vpop.f32.mrf.mxu0
        %v384 = vadd.f32 %v349, %v383
        %385 = vmatmul.f32.gmra.mxu0 %v165
        %v386 = vpop.f32.mrf.mxu0
        %v387 = vadd.f32 %v352, %v386
        %388 = vmatmul.f32.gmra.mxu0 %v167
        %v389 = vpop.f32.mrf.mxu0
        %v390 = vadd.f32 %v355, %v389
        %391 = vmatmul.f32.gmra.mxu0 %v169
        %v392 = vpop.f32.mrf.mxu0
        %v393 = vadd.f32 %v358, %v392
        %394 = vmatmul.f32.gmra.mxu0 %v171
        %v395 = vpop.f32.mrf.mxu0
        %v396 = vadd.f32 %v361, %v395
        %397 = vdwg.mxu0
        %398 = vmatpush.msra.mxu0 %v206
        %399 = vmatpush.msra.mxu0 %v205
        %400 = vmatpush.msra.mxu0 %v204
        %401 = vmatpush.msra.mxu0 %v203
        %402 = vmatpush.msra.mxu0 %v202
        %403 = vmatpush.msra.mxu0 %v201
        %404 = vmatpush.msra.mxu0 %v200
        %405 = vmatpush.msra.mxu0 %v199
        %406 = vmatpush.msra.mxu0 %v198
        %407 = vmatpush.msra.mxu0 %v197
        %408 = vmatpush.msra.mxu0 %v196
        %409 = vmatpush.msra.mxu0 %v195
        %410 = vmatpush.msra.mxu0 %v194
        %411 = vmatpush.msra.mxu0 %v193
        %412 = vmatpush.msra.mxu0 %v192
        %413 = vmatpush.msra.mxu0 %v191
        %414 = vmatmul.f32.gmra.mxu0 %v162
        %v415 = vpop.f32.mrf.mxu0
        %v416 = vadd.f32 %v381, %v415
        %417 = vmatmul.f32.gmra.mxu0 %v164
        %v418 = vpop.f32.mrf.mxu0
        %v419 = vadd.f32 %v384, %v418
        %420 = vmatmul.f32.gmra.mxu0 %v166
        %v421 = vpop.f32.mrf.mxu0
        %v422 = vadd.f32 %v387, %v421
        %423 = vmatmul.f32.gmra.mxu0 %v168
        %v424 = vpop.f32.mrf.mxu0
        %v425 = vadd.f32 %v390, %v424
        %426 = vmatmul.f32.gmra.mxu0 %v170
        %v427 = vpop.f32.mrf.mxu0
        %v428 = vadd.f32 %v393, %v427
        %429 = vmatmul.f32.gmra.mxu0 %v172
        %v430 = vpop.f32.mrf.mxu0
        %v431 = vadd.f32 %v396, %v430
        %432 = vdwg.mxu0
        %v433 = vmul.f32 %v416, 0.5
        %v434 = vmul.f32 %v419, 0.5
        %v435 = vmul.f32 %v422, 0.5
        %v436 = vmul.f32 %v425, 0.5
        %v437 = vmul.f32 %v428, 0.5
        %v438 = vmul.f32 %v431, 0.5
        %v439 = vmul.f32 %v416, 0.70710677
        %v440 = vmul.f32 %v419, 0.70710677
        %v441 = vmul.f32 %v422, 0.70710677
        %v442 = vmul.f32 %v425, 0.70710677
        %v443 = vmul.f32 %v428, 0.70710677
        %v444 = vmul.f32 %v431, 0.70710677
        %v445 = vmul.f32 %v439, %v439
        %v446 = vmin.f32 16.0, %v445
        %v447 = vmul.f32 %v446, 2.1237322e-06
        %v448 = vadd.f32 %v447, 0.00028619796
        %v449 = vmul.f32 %v446, %v448
        %v450 = vadd.f32 %v449, 0.0036580483
        %v451 = vmul.f32 %v446, %v450
        %v452 = vadd.f32 %v451, 0.05243302
        %v453 = vmul.f32 %v446, %v452
        %v454 = vadd.f32 %v453, 0.18741608
        %v455 = vmul.f32 %v446, %v454
        %v456 = vadd.f32 %v455, 1.1283791
        %v457 = vmul.f32 %v439, %v456
        %v458 = vmul.f32 %v446, 3.8918573e-05
        %v459 = vadd.f32 %v458, 0.001143296
        %v460 = vmul.f32 %v446, %v459
        %v461 = vadd.f32 %v460, 0.014752088
        %v462 = vmul.f32 %v446, %v461
        %v463 = vadd.f32 %v462, 0.112945676
        %v464 = vmul.f32 %v446, %v463
        %v465 = vadd.f32 %v464, 0.4994258
        %v466 = vmul.f32 %v446, %v465
        %v467 = vadd.f32 %v466, 1.0
        %v468 = vrcp.pop %v467
        %v469 = vmul.f32 %v467, %v468
        %v470 = vsub.f32 1.0, %v469
        %v471 = vmul.f32 %v468, %v470
        %v472 = vadd.f32 %v468, %v471
        %vm473 = vweird.f32 %v467
        %vm474 = vweird.f32 %v468
        %vm475 = vmor %vm473, %vm474
        %v476 = vsel %vm475, %v468, %v472
        %v477 = vand.u32 2147483647, %v467
        %vm478 = vcmp.eq.f32.partialorder %v477, 8.507059e+37
        %v479 = vand.u32 %v467, 2147483648
        %v480 = vor.u32 1.1754944e-38, %v479
        %v481 = vsel %vm478, %v480, %v476
        %v482 = vmul.f32 %v457, %v481
        %v483 = vmin.f32 %v482, 1.0
        %v484 = vmax.f32 %v483, -1.0
        %v485 = vmul.f32 %v440, %v440
        %v486 = vmin.f32 16.0, %v485
        %v487 = vmul.f32 %v486, 2.1237322e-06
        %v488 = vadd.f32 %v487, 0.00028619796
        %v489 = vmul.f32 %v486, %v488
        %v490 = vadd.f32 %v489, 0.0036580483
        %v491 = vmul.f32 %v486, %v490
        %v492 = vadd.f32 %v491, 0.05243302
        %v493 = vmul.f32 %v486, %v492
        %v494 = vadd.f32 %v493, 0.18741608
        %v495 = vmul.f32 %v486, %v494
        %v496 = vadd.f32 %v495, 1.1283791
        %v497 = vmul.f32 %v440, %v496
        %v498 = vmul.f32 %v486, 3.8918573e-05
        %v499 = vadd.f32 %v498, 0.001143296
        %v500 = vmul.f32 %v486, %v499
        %v501 = vadd.f32 %v500, 0.014752088
        %v502 = vmul.f32 %v486, %v501
        %v503 = vadd.f32 %v502, 0.112945676
        %v504 = vmul.f32 %v486, %v503
        %v505 = vadd.f32 %v504, 0.4994258
        %v506 = vmul.f32 %v486, %v505
        %v507 = vadd.f32 %v506, 1.0
        %v508 = vrcp.pop %v507
        %v509 = vmul.f32 %v507, %v508
        %v510 = vsub.f32 1.0, %v509
        %v511 = vmul.f32 %v508, %v510
        %v512 = vadd.f32 %v508, %v511
        %vm513 = vweird.f32 %v507
        %vm514 = vweird.f32 %v508
        %vm515 = vmor %vm513, %vm514
        %v516 = vsel %vm515, %v508, %v512
        %v517 = vand.u32 2147483647, %v507
        %vm518 = vcmp.eq.f32.partialorder %v517, 8.507059e+37
        %v519 = vand.u32 %v507, 2147483648
        %v520 = vor.u32 1.1754944e-38, %v519
        %v521 = vsel %vm518, %v520, %v516
        %v522 = vmul.f32 %v497, %v521
        %v523 = vmin.f32 %v522, 1.0
        %v524 = vmax.f32 %v523, -1.0
        %v525 = vmul.f32 %v441, %v441
        %v526 = vmin.f32 16.0, %v525
        %v527 = vmul.f32 %v526, 2.1237322e-06
        %v528 = vadd.f32 %v527, 0.00028619796
        %v529 = vmul.f32 %v526, %v528
        %v530 = vadd.f32 %v529, 0.0036580483
        %v531 = vmul.f32 %v526, %v530
        %v532 = vadd.f32 %v531, 0.05243302
        %v533 = vmul.f32 %v526, %v532
        %v534 = vadd.f32 %v533, 0.18741608
        %v535 = vmul.f32 %v526, %v534
        %v536 = vadd.f32 %v535, 1.1283791
        %v537 = vmul.f32 %v441, %v536
        %v538 = vmul.f32 %v526, 3.8918573e-05
        %v539 = vadd.f32 %v538, 0.001143296
        %v540 = vmul.f32 %v526, %v539
        %v541 = vadd.f32 %v540, 0.014752088
        %v542 = vmul.f32 %v526, %v541
        %v543 = vadd.f32 %v542, 0.112945676
        %v544 = vmul.f32 %v526, %v543
        %v545 = vadd.f32 %v544, 0.4994258
        %v546 = vmul.f32 %v526, %v545
        %v547 = vadd.f32 %v546, 1.0
        %v548 = vrcp.pop %v547
        %v549 = vmul.f32 %v547, %v548
        %v550 = vsub.f32 1.0, %v549
        %v551 = vmul.f32 %v548, %v550
        %v552 = vadd.f32 %v548, %v551
        %vm553 = vweird.f32 %v547
        %vm554 = vweird.f32 %v548
        %vm555 = vmor %vm553, %vm554
        %v556 = vsel %vm555, %v548, %v552
        %v557 = vand.u32 2147483647, %v547
        %vm558 = vcmp.eq.f32.partialorder %v557, 8.507059e+37
        %v559 = vand.u32 %v547, 2147483648
        %v560 = vor.u32 1.1754944e-38, %v559
        %v561 = vsel %vm558, %v560, %v556
        %v562 = vmul.f32 %v537, %v561
        %v563 = vmin.f32 %v562, 1.0
        %v564 = vmax.f32 %v563, -1.0
        %v565 = vmul.f32 %v442, %v442
        %v566 = vmin.f32 16.0, %v565
        %v567 = vmul.f32 %v566, 2.1237322e-06
        %v568 = vadd.f32 %v567, 0.00028619796
        %v569 = vmul.f32 %v566, %v568
        %v570 = vadd.f32 %v569, 0.0036580483
        %v571 = vmul.f32 %v566, %v570
        %v572 = vadd.f32 %v571, 0.05243302
        %v573 = vmul.f32 %v566, %v572
        %v574 = vadd.f32 %v573, 0.18741608
        %v575 = vmul.f32 %v566, %v574
        %v576 = vadd.f32 %v575, 1.1283791
        %v577 = vmul.f32 %v442, %v576
        %v578 = vmul.f32 %v566, 3.8918573e-05
        %v579 = vadd.f32 %v578, 0.001143296
        %v580 = vmul.f32 %v566, %v579
        %v581 = vadd.f32 %v580, 0.014752088
        %v582 = vmul.f32 %v566, %v581
        %v583 = vadd.f32 %v582, 0.112945676
        %v584 = vmul.f32 %v566, %v583
        %v585 = vadd.f32 %v584, 0.4994258
        %v586 = vmul.f32 %v566, %v585
        %v587 = vadd.f32 %v586, 1.0
        %v588 = vrcp.pop %v587
        %v589 = vmul.f32 %v587, %v588
        %v590 = vsub.f32 1.0, %v589
        %v591 = vmul.f32 %v588, %v590
        %v592 = vadd.f32 %v588, %v591
        %vm593 = vweird.f32 %v587
        %vm594 = vweird.f32 %v588
        %vm595 = vmor %vm593, %vm594
        %v596 = vsel %vm595, %v588, %v592
        %v597 = vand.u32 2147483647, %v587
        %vm598 = vcmp.eq.f32.partialorder %v597, 8.507059e+37
        %v599 = vand.u32 %v587, 2147483648
        %v600 = vor.u32 1.1754944e-38, %v599
        %v601 = vsel %vm598, %v600, %v596
        %v602 = vmul.f32 %v577, %v601
        %v603 = vmin.f32 %v602, 1.0
        %v604 = vmax.f32 %v603, -1.0
        %v605 = vmul.f32 %v443, %v443
        %v606 = vmin.f32 16.0, %v605
        %v607 = vmul.f32 %v606, 2.1237322e-06
        %v608 = vadd.f32 %v607, 0.00028619796
        %v609 = vmul.f32 %v606, %v608
        %v610 = vadd.f32 %v609, 0.0036580483
        %v611 = vmul.f32 %v606, %v610
        %v612 = vadd.f32 %v611, 0.05243302
        %v613 = vmul.f32 %v606, %v612
        %v614 = vadd.f32 %v613, 0.18741608
        %v615 = vmul.f32 %v606, %v614
        %v616 = vadd.f32 %v615, 1.1283791
        %v617 = vmul.f32 %v443, %v616
        %v618 = vmul.f32 %v606, 3.8918573e-05
        %v619 = vadd.f32 %v618, 0.001143296
        %v620 = vmul.f32 %v606, %v619
        %v621 = vadd.f32 %v620, 0.014752088
        %v622 = vmul.f32 %v606, %v621
        %v623 = vadd.f32 %v622, 0.112945676
        %v624 = vmul.f32 %v606, %v623
        %v625 = vadd.f32 %v624, 0.4994258
        %v626 = vmul.f32 %v606, %v625
        %v627 = vadd.f32 %v626, 1.0
        %v628 = vrcp.pop %v627
        %v629 = vmul.f32 %v627, %v628
        %v630 = vsub.f32 1.0, %v629
        %v631 = vmul.f32 %v628, %v630
        %v632 = vadd.f32 %v628, %v631
        %vm633 = vweird.f32 %v627
        %vm634 = vweird.f32 %v628
        %vm635 = vmor %vm633, %vm634
        %v636 = vsel %vm635, %v628, %v632
        %v637 = vand.u32 2147483647, %v627
        %vm638 = vcmp.eq.f32.partialorder %v637, 8.507059e+37
        %v639 = vand.u32 %v627, 2147483648
        %v640 = vor.u32 1.1754944e-38, %v639
        %v641 = vsel %vm638, %v640, %v636
        %v642 = vmul.f32 %v617, %v641
        %v643 = vmin.f32 %v642, 1.0
        %v644 = vmax.f32 %v643, -1.0
        %v645 = vmul.f32 %v444, %v444
        %v646 = vmin.f32 16.0, %v645
        %v647 = vmul.f32 %v646, 2.1237322e-06
        %v648 = vadd.f32 %v647, 0.00028619796
        %v649 = vmul.f32 %v646, %v648
        %v650 = vadd.f32 %v649, 0.0036580483
        %v651 = vmul.f32 %v646, %v650
        %v652 = vadd.f32 %v651, 0.05243302
        %v653 = vmul.f32 %v646, %v652
        %v654 = vadd.f32 %v653, 0.18741608
        %v655 = vmul.f32 %v646, %v654
        %v656 = vadd.f32 %v655, 1.1283791
        %v657 = vmul.f32 %v444, %v656
        %v658 = vmul.f32 %v646, 3.8918573e-05
        %v659 = vadd.f32 %v658, 0.001143296
        %v660 = vmul.f32 %v646, %v659
        %v661 = vadd.f32 %v660, 0.014752088
        %v662 = vmul.f32 %v646, %v661
        %v663 = vadd.f32 %v662, 0.112945676
        %v664 = vmul.f32 %v646, %v663
        %v665 = vadd.f32 %v664, 0.4994258
        %v666 = vmul.f32 %v646, %v665
        %v667 = vadd.f32 %v666, 1.0
        %v668 = vrcp.pop %v667
        %v669 = vmul.f32 %v667, %v668
        %v670 = vsub.f32 1.0, %v669
        %v671 = vmul.f32 %v668, %v670
        %v672 = vadd.f32 %v668, %v671
        %vm673 = vweird.f32 %v667
        %vm674 = vweird.f32 %v668
        %vm675 = vmor %vm673, %vm674
        %v676 = vsel %vm675, %v668, %v672
        %v677 = vand.u32 2147483647, %v667
        %vm678 = vcmp.eq.f32.partialorder %v677, 8.507059e+37
        %v679 = vand.u32 %v667, 2147483648
        %v680 = vor.u32 1.1754944e-38, %v679
        %v681 = vsel %vm678, %v680, %v676
        %v682 = vmul.f32 %v657, %v681
        %v683 = vmin.f32 %v682, 1.0
        %v684 = vmax.f32 %v683, -1.0
        %v685 = vadd.f32 %v484, 1.0
        %v686 = vadd.f32 %v524, 1.0
        %v687 = vadd.f32 %v564, 1.0
        %v688 = vadd.f32 %v604, 1.0
        %v689 = vadd.f32 %v644, 1.0
        %v690 = vadd.f32 %v684, 1.0
        %v691 = vmul.f32 %v433, %v685
        %v692 = vmul.f32 %v434, %v686
        %v693 = vmul.f32 %v435, %v687
        %v694 = vmul.f32 %v436, %v688
        %v695 = vmul.f32 %v437, %v689
        %v696 = vmul.f32 %v438, %v690
        %697 = vst [vmem:[%s160] sm:$0xff] %v691
        %698 = vst [vmem:[%s160 + $0x8] sm:$0xff] %v692
        %699 = vst [vmem:[%s160 + $0x10] sm:$0xff] %v693
        %700 = vst [vmem:[%s160 + $0x18] sm:$0xff] %v694
        %701 = vst [vmem:[%s160 + $0x20] sm:$0xff] %v695
        %702 = vst [vmem:[%s160 + $0x28] sm:$0xff] %v696
        %p703 = scmp.lt.s32.totalorder %s14, 1
        %s704 = scalar_select %p703, %s14, 1
        %s705 = smul.addr %s704, 6
        %s706 = smul.addr %s705, 8
        %s707 = scalar_lea.vmem %s2, %s706
        // Predicated region
        $region33: #{fairseq_wav2vec2_forward.10} parent=27 // pred_check
          %p708 = pneg %p79
        $region34: #{fairseq_wav2vec2_forward.10} parent=27 // pred_check_branch
          %710 = sbr.rel (%p708) target = $region36
        $region35: #{fairseq_wav2vec2_forward.10} parent=27 // pred_region
          _
        $region36: #{fairseq_wav2vec2_forward.10} parent=27 // pred_fallthru
          _
      $region28: #{fairseq_wav2vec2_forward.10} parent=5 // pred_fallthru
        _
      %p711 = scmp.le.s32.totalorder 2, %s9
      // Predicated region
      $region37: #{fairseq_wav2vec2_forward.10} parent=5 // pred_check
        %p712 = pneg %p711
      $region38: #{fairseq_wav2vec2_forward.10} parent=5 // pred_check_branch
        %714 = sbr.rel (%p712) target = $region40
      $region39: #{fairseq_wav2vec2_forward.10} parent=5 // pred_region
        %s715 = ssub.s32 %s9, 2
        // Predicated region
        $region41: #{fairseq_wav2vec2_forward.10} parent=39 // pred_check
          %p716 = pneg %p85
        $region42: #{fairseq_wav2vec2_forward.10} parent=39 // pred_check_branch
          %718 = sbr.rel (%p716) target = $region44
        $region43: #{fairseq_wav2vec2_forward.10} parent=39 // pred_region
          %p719 = scmp.lt.s32.totalorder %s15, 1
          %s720 = scalar_select %p719, %s15, 1
          %s721 = smul.addr %s720, 6
          %s722 = smul.addr %s721, 8
          %s723 = scalar_lea.vmem %s2, %s722
        $region44: #{fairseq_wav2vec2_forward.10} parent=39 // pred_fallthru
          _
      $region40: #{fairseq_wav2vec2_forward.10} parent=5 // pred_fallthru
        _
    $region6: #{fairseq_wav2vec2_forward.10} parent=1 // loop_footer
      %s13 = sadd.s32 1, %s9
    $region7: #{fairseq_wav2vec2_forward.10} parent=1 // loop_footer_branch
      %8 = sbr.rel target = $region3
    $region8: #{fairseq_wav2vec2_forward.10} parent=1 // loop_exit
      _
    %724 = vsyncpa [#allocation3], 1
    %s725 = scalar_lea.sflag [#allocation3], 1
    %726 = vsyncpa %s725, 1

// kernel: fairseq_wav2vec2_forward.11
$region0: #{fairseq_wav2vec2_forward.11}
  #allocation0 [shape = 'u32[]', space=smem, size = 0x4, offset = 0x4, fixed_abs, tag = 'smem constant byte address 0x4 - core index']
  #allocation1 [shape = 'u32[72,128]{1,0:T(1,128)}', space=vmem, size = 0x9000, scoped, tag = 'internal scratch']
  %s0 = inlined_call_operand.vmem [shape: f32[2,24,256], index: 0, kind: input, shape index: {}]
  %s1 = inlined_call_operand.hbm [shape: f32[1,256,128], index: 1, kind: input, shape index: {}]
  %s2 = inlined_call_operand.vmem [shape: f32[1,128], index: 2, kind: input, shape index: {}]
  %s3 = inlined_call_operand.vmem [shape: f32[1,128], index: 3, kind: input, shape index: {}]
  %s4 = inlined_call_operand.hbm [shape: f32[128,128], index: 4, kind: input, shape index: {}]
  %s5 = inlined_call_operand.vmem [shape: f32[1,128], index: 5, kind: input, shape index: {}]
  %s6 = inlined_call_operand.vmem [shape: f32[2,24,128], index: 6, kind: output, shape index: {}]
  %s7 = sld [smem:[#allocation0]]
  $region65: #{fairseq_wav2vec2_forward.11} parent=0
    _
  %s9 = ssub.s32 1, %s7
  %s10 = scalar_select 0, %s9, %s7
  $region1: #{fairseq_wav2vec2_forward.11} parent=0
    #allocation2 [shape = 'u8[131072]{0}', space=vmem, size = 0x20000, scoped, tag = 'input window, operand 1, single buffered']
    #allocation3 [shape = 's32[2]{0}', space=sflag, size = 0x8, scoped, tag = 'scoped memory for fairseq_wav2vec2_forward.11']
    #allocation4 [shape = 'u8[65536]{0}', space=vmem, size = 0x10000, scoped, tag = 'input window, operand 4, single buffered']
    #allocation5 [shape = 's32[1]{0}', space=sflag, size = 0x4, scoped, tag = 'scoped memory for fairseq_wav2vec2_forward.11']
    %11 = vsyncpa [#allocation3], 0
    %12 = vsyncpa [#allocation5], 0
    loop: start=0, step=1, limit=4
    $region2: #{fairseq_wav2vec2_forward.11} parent=1 // loop_pre_header
      _
    $region3: #{fairseq_wav2vec2_forward.11} parent=1 // loop_header
      %s14 = sphi 0, %s18
      %p15 = scmp.ge.s32.totalorder %s14, 4
      %s24 = sphi 0, %s26
      %s27 = sphi 0, %s24
      %s28 = sphi 0, %s27
      %s44 = sphi 0, %s28
      %s48 = sphi 0, %s48
      %s50 = sphi 0, %s48
      %s51 = sphi 0, %s50
      %s65 = sphi 0, %s51
      %s69 = sphi 0, %s69
      %s71 = sphi 0, %s69
      %s72 = sphi 0, %s71
      %s86 = sphi 0, %s72
      %s90 = sphi 0, %s90
      %s92 = sphi 0, %s90
      %s93 = sphi 0, %s92
      %s107 = sphi 0, %s93
      %s111 = sphi 0, %s111
      %s113 = sphi 0, %s111
      %s114 = sphi 0, %s113
      %s128 = sphi 0, %s114
      %s132 = sphi 0, %s132
      %s134 = sphi 0, %s132
      %s135 = sphi 0, %s134
      %s149 = sphi 0, %s135
      %s155 = sphi 0, %s157
      %s158 = sphi 0, %s155
      %s159 = sphi 0, %s158
      %s175 = sphi 0, %s159
    $region4: #{fairseq_wav2vec2_forward.11} parent=1 // loop_header_branch
      %17 = sbr.rel (%p15) target = $region8
    $region5: #{fairseq_wav2vec2_forward.11} parent=1 // loop_body
      %s19 = ssub.s32 %s14, 1
      %s20 = ssub.s32 %s14, 2
      %s21 = sadd.s32 %s14, 1
      %s22 = ssub.s32 %s14, %s21
      %p23 = scmp.eq.s32.totalorder %s22, 0
      %s25 = sadd.s32 %s24, 1
      %s26 = scalar_select %p23, %s24, %s25
      %p29 = pneg %p23
      %p30 = scmp.eq.s32.totalorder %s14, 1
      %p31 = por %p29, %p30
      %p32 = scmp.ne.s32.totalorder %s24, %s27
      %p33 = scmp.eq.s32.totalorder %s14, 0
      %p34 = por %p32, %p33
      %p35 = scmp.ne.s32.totalorder %s24, %s27
      %p36 = scmp.eq.s32.totalorder %s19, 1
      %p37 = por %p35, %p36
      %p38 = scmp.ne.s32.totalorder %s27, %s28
      %p39 = scmp.eq.s32.totalorder %s19, 0
      %p40 = por %p38, %p39
      %p41 = scmp.ne.s32.totalorder %s27, %s28
      %p42 = scmp.eq.s32.totalorder %s20, 1
      %p43 = por %p41, %p42
      %p45 = scmp.ne.s32.totalorder %s28, %s44
      %p46 = scmp.eq.s32.totalorder %s20, 0
      %p47 = por %p45, %p46
      %s49 = sadd.s32 %s48, 1
      %p52 = scmp.eq.s32.totalorder %s14, 1
      %p53 = scmp.ne.s32.totalorder %s48, %s50
      %p54 = scmp.eq.s32.totalorder %s14, 0
      %p55 = por %p53, %p54
      %p56 = scmp.ne.s32.totalorder %s48, %s50
      %p57 = scmp.eq.s32.totalorder %s19, 1
      %p58 = por %p56, %p57
      %p59 = scmp.ne.s32.totalorder %s50, %s51
      %p60 = scmp.eq.s32.totalorder %s19, 0
      %p61 = por %p59, %p60
      %p62 = scmp.ne.s32.totalorder %s50, %s51
      %p63 = scmp.eq.s32.totalorder %s20, 1
      %p64 = por %p62, %p63
      %p66 = scmp.ne.s32.totalorder %s51, %s65
      %p67 = scmp.eq.s32.totalorder %s20, 0
      %p68 = por %p66, %p67
      %s70 = sadd.s32 %s69, 1
      %p73 = scmp.eq.s32.totalorder %s14, 1
      %p74 = scmp.ne.s32.totalorder %s69, %s71
      %p75 = scmp.eq.s32.totalorder %s14, 0
      %p76 = por %p74, %p75
      %p77 = scmp.ne.s32.totalorder %s69, %s71
      %p78 = scmp.eq.s32.totalorder %s19, 1
      %p79 = por %p77, %p78
      %p80 = scmp.ne.s32.totalorder %s71, %s72
      %p81 = scmp.eq.s32.totalorder %s19, 0
      %p82 = por %p80, %p81
      %p83 = scmp.ne.s32.totalorder %s71, %s72
      %p84 = scmp.eq.s32.totalorder %s20, 1
      %p85 = por %p83, %p84
      %p87 = scmp.ne.s32.totalorder %s72, %s86
      %p88 = scmp.eq.s32.totalorder %s20, 0
      %p89 = por %p87, %p88
      %s91 = sadd.s32 %s90, 1
      %p94 = scmp.eq.s32.totalorder %s14, 1
      %p95 = scmp.ne.s32.totalorder %s90, %s92
      %p96 = scmp.eq.s32.totalorder %s14, 0
      %p97 = por %p95, %p96
      %p98 = scmp.ne.s32.totalorder %s90, %s92
      %p99 = scmp.eq.s32.totalorder %s19, 1
      %p100 = por %p98, %p99
      %p101 = scmp.ne.s32.totalorder %s92, %s93
      %p102 = scmp.eq.s32.totalorder %s19, 0
      %p103 = por %p101, %p102
      %p104 = scmp.ne.s32.totalorder %s92, %s93
      %p105 = scmp.eq.s32.totalorder %s20, 1
      %p106 = por %p104, %p105
      %p108 = scmp.ne.s32.totalorder %s93, %s107
      %p109 = scmp.eq.s32.totalorder %s20, 0
      %p110 = por %p108, %p109
      %s112 = sadd.s32 %s111, 1
      %p115 = scmp.eq.s32.totalorder %s14, 1
      %p116 = scmp.ne.s32.totalorder %s111, %s113
      %p117 = scmp.eq.s32.totalorder %s14, 0
      %p118 = por %p116, %p117
      %p119 = scmp.ne.s32.totalorder %s111, %s113
      %p120 = scmp.eq.s32.totalorder %s19, 1
      %p121 = por %p119, %p120
      %p122 = scmp.ne.s32.totalorder %s113, %s114
      %p123 = scmp.eq.s32.totalorder %s19, 0
      %p124 = por %p122, %p123
      %p125 = scmp.ne.s32.totalorder %s113, %s114
      %p126 = scmp.eq.s32.totalorder %s20, 1
      %p127 = por %p125, %p126
      %p129 = scmp.ne.s32.totalorder %s114, %s128
      %p130 = scmp.eq.s32.totalorder %s20, 0
      %p131 = por %p129, %p130
      %s133 = sadd.s32 %s132, 1
      %p136 = scmp.eq.s32.totalorder %s14, 1
      %p137 = scmp.ne.s32.totalorder %s132, %s134
      %p138 = scmp.eq.s32.totalorder %s14, 0
      %p139 = por %p137, %p138
      %p140 = scmp.ne.s32.totalorder %s132, %s134
      %p141 = scmp.eq.s32.totalorder %s19, 1
      %p142 = por %p140, %p141
      %p143 = scmp.ne.s32.totalorder %s134, %s135
      %p144 = scmp.eq.s32.totalorder %s19, 0
      %p145 = por %p143, %p144
      %p146 = scmp.ne.s32.totalorder %s134, %s135
      %p147 = scmp.eq.s32.totalorder %s20, 1
      %p148 = por %p146, %p147
      %p150 = scmp.ne.s32.totalorder %s135, %s149
      %p151 = scmp.eq.s32.totalorder %s20, 0
      %p152 = por %p150, %p151
      %s153 = ssub.s32 %s14, %s21
      %p154 = scmp.eq.s32.totalorder %s153, 0
      %s156 = sadd.s32 %s155, 1
      %s157 = scalar_select %p154, %s155, %s156
      %p160 = pneg %p154
      %p161 = scmp.eq.s32.totalorder %s14, 1
      %p162 = por %p160, %p161
      %p163 = scmp.ne.s32.totalorder %s155, %s158
      %p164 = scmp.eq.s32.totalorder %s14, 0
      %p165 = por %p163, %p164
      %p166 = scmp.ne.s32.totalorder %s155, %s158
      %p167 = scmp.eq.s32.totalorder %s19, 1
      %p168 = por %p166, %p167
      %p169 = scmp.ne.s32.totalorder %s158, %s159
      %p170 = scmp.eq.s32.totalorder %s19, 0
      %p171 = por %p169, %p170
      %p172 = scmp.ne.s32.totalorder %s158, %s159
      %p173 = scmp.eq.s32.totalorder %s20, 1
      %p174 = por %p172, %p173
      %p176 = scmp.ne.s32.totalorder %s159, %s175
      %p177 = scmp.eq.s32.totalorder %s20, 0
      %p178 = por %p176, %p177
      %p179 = scmp.le.s32.totalorder 1, %s14
      %p180 = scmp.lt.s32.totalorder %s14, 3
      %p181 = pnand %p179, %p180
      %p182 = pneg %p181
      // Predicated region
      $region9: #{fairseq_wav2vec2_forward.11} parent=5 // pred_check
        _
      $region10: #{fairseq_wav2vec2_forward.11} parent=5 // pred_check_branch
        %184 = sbr.rel (%p181) target = $region12
      $region11: #{fairseq_wav2vec2_forward.11} parent=5 // pred_region
        %s185 = ssub.s32 %s14, 1
        // Predicated region
        $region13: #{fairseq_wav2vec2_forward.11} parent=11 // pred_check
          %p186 = pneg %p61
        $region14: #{fairseq_wav2vec2_forward.11} parent=11 // pred_check_branch
          %188 = sbr.rel (%p186) target = $region16
        $region15: #{fairseq_wav2vec2_forward.11} parent=11 // pred_region
          %190 = vsyncadd [#allocation3], 0
          %s191 = sshll.u32 %s1, 4
          %s192 = int_to_ptr.hbm [resolvable:$true] %s191
          %s193 = sshll.u32 [#allocation2], 4
          %s194 = int_to_ptr.vmem [resolvable:$true] %s193
          %199 = dma.hbm_to_vmem [thread:$0]  %s192, 4096, %s194, [#allocation3], 128, 128, 8
        $region16: #{fairseq_wav2vec2_forward.11} parent=11 // pred_fallthru
          _
        // Predicated region
        $region17: #{fairseq_wav2vec2_forward.11} parent=11 // pred_check
          %p200 = pneg %p82
        $region18: #{fairseq_wav2vec2_forward.11} parent=11 // pred_check_branch
          %202 = sbr.rel (%p200) target = $region20
        $region19: #{fairseq_wav2vec2_forward.11} parent=11 // pred_region
          _
        $region20: #{fairseq_wav2vec2_forward.11} parent=11 // pred_fallthru
          _
        // Predicated region
        $region21: #{fairseq_wav2vec2_forward.11} parent=11 // pred_check
          %p203 = pneg %p103
        $region22: #{fairseq_wav2vec2_forward.11} parent=11 // pred_check_branch
          %205 = sbr.rel (%p203) target = $region24
        $region23: #{fairseq_wav2vec2_forward.11} parent=11 // pred_region
          _
        $region24: #{fairseq_wav2vec2_forward.11} parent=11 // pred_fallthru
          _
        // Predicated region
        $region25: #{fairseq_wav2vec2_forward.11} parent=11 // pred_check
          %p206 = pneg %p124
        $region26: #{fairseq_wav2vec2_forward.11} parent=11 // pred_check_branch
          %208 = sbr.rel (%p206) target = $region28
        $region27: #{fairseq_wav2vec2_forward.11} parent=11 // pred_region
          %210 = vsyncadd [#allocation5], 0
          %s211 = sshll.u32 %s4, 4
          %s212 = int_to_ptr.hbm [resolvable:$true] %s211
          %s213 = sshll.u32 [#allocation4], 4
          %s214 = int_to_ptr.vmem [resolvable:$true] %s213
          %219 = dma.hbm_to_vmem [thread:$0]  %s212, 2048, %s214, [#allocation5], 128, 128, 8
        $region28: #{fairseq_wav2vec2_forward.11} parent=11 // pred_fallthru
          _
        // Predicated region
        $region29: #{fairseq_wav2vec2_forward.11} parent=11 // pred_check
          %p220 = pneg %p145
        $region30: #{fairseq_wav2vec2_forward.11} parent=11 // pred_check_branch
          %222 = sbr.rel (%p220) target = $region32
        $region31: #{fairseq_wav2vec2_forward.11} parent=11 // pred_region
          _
        $region32: #{fairseq_wav2vec2_forward.11} parent=11 // pred_fallthru
          _
      $region12: #{fairseq_wav2vec2_forward.11} parent=5 // pred_fallthru
        _
      %p223 = scmp.lt.s32.totalorder %s14, 2
      // Predicated region
      $region33: #{fairseq_wav2vec2_forward.11} parent=5 // pred_check
        %p224 = pneg %p223
      $region34: #{fairseq_wav2vec2_forward.11} parent=5 // pred_check_branch
        %226 = sbr.rel (%p224) target = $region36
      $region35: #{fairseq_wav2vec2_forward.11} parent=5 // pred_region
        // Predicated region
        $region37: #{fairseq_wav2vec2_forward.11} parent=35 // pred_check
          %p227 = pneg %p34
        $region38: #{fairseq_wav2vec2_forward.11} parent=35 // pred_check_branch
          %229 = sbr.rel (%p227) target = $region40
        $region39: #{fairseq_wav2vec2_forward.11} parent=35 // pred_region
          %p230 = scmp.lt.s32.totalorder %s14, 1
          %s231 = scalar_select %p230, %s14, 1
          %s232 = smul.addr %s231, 6
          %s233 = smul.addr %s232, 8
          %s234 = scalar_lea.vmem %s0, %s233
        $region40: #{fairseq_wav2vec2_forward.11} parent=35 // pred_fallthru
          _
      $region36: #{fairseq_wav2vec2_forward.11} parent=5 // pred_fallthru
        _
      %p235 = scmp.le.s32.totalorder 1, %s14
      %p236 = scmp.lt.s32.totalorder %s14, 3
      %p237 = pnand %p235, %p236
      %p238 = pneg %p237
      // Predicated region
      $region41: #{fairseq_wav2vec2_forward.11} parent=5 // pred_check
        _
      $region42: #{fairseq_wav2vec2_forward.11} parent=5 // pred_check_branch
        %240 = sbr.rel (%p237) target = $region44
      $region43: #{fairseq_wav2vec2_forward.11} parent=5 // pred_region
        %s241 = ssub.s32 %s14, 1
        // Predicated region
        $region45: #{fairseq_wav2vec2_forward.11} parent=43 // pred_check
          %p242 = pneg %p61
        $region46: #{fairseq_wav2vec2_forward.11} parent=43 // pred_check_branch
          %244 = sbr.rel (%p242) target = $region48
        $region47: #{fairseq_wav2vec2_forward.11} parent=43 // pred_region
          %246 = dma.done [#allocation3], 4096
        $region48: #{fairseq_wav2vec2_forward.11} parent=43 // pred_fallthru
          _
        // Predicated region
        $region49: #{fairseq_wav2vec2_forward.11} parent=43 // pred_check
          %p247 = pneg %p124
        $region50: #{fairseq_wav2vec2_forward.11} parent=43 // pred_check_branch
          %249 = sbr.rel (%p247) target = $region52
        $region51: #{fairseq_wav2vec2_forward.11} parent=43 // pred_region
          %251 = dma.done [#allocation5], 2048
        $region52: #{fairseq_wav2vec2_forward.11} parent=43 // pred_fallthru
          _
        %p252 = scmp.lt.s32.totalorder %s19, 1
        %s253 = scalar_select %p252, %s19, 1
        %s254 = smul.addr %s253, 6
        %s255 = smul.addr %s254, 8
        %s256 = scalar_lea.vmem %s0, %s255
        %p257 = pneg %p40
        %p258 = pneg %p37
        %p259 = pneg %p61
        %p260 = pneg %p58
        %p261 = pneg %p82
        %p262 = pneg %p79
        %p263 = pneg %p103
        %p264 = pneg %p100
        %p265 = pneg %p124
        %p266 = pneg %p121
        %p267 = pneg %p145
        %p268 = pneg %p142
        %p269 = pneg %p171
        %p270 = pneg %p168
        %p271 = scmp.lt.s32.totalorder %s19, 1
        %s272 = scalar_select %p271, %s19, 1
        %s273 = smul.addr %s272, 3
        %s274 = smul.addr %s273, 8
        %s275 = scalar_lea.vmem %s6, %s274
        %p276 = scmp.lt.s32.totalorder %s19, 1
        %s277 = scalar_select %p276, %s19, 1
        %s278 = smul.addr %s277, 6
        %s279 = smul.addr %s278, 8
        %s280 = scalar_lea.vmem %s0, %s279
        %p281 = scmp.lt.s32.totalorder %s19, 1
        %s282 = scalar_select %p281, %s19, 1
        %s283 = smul.addr %s282, 3
        %s284 = smul.addr %s283, 8
        %s285 = scalar_lea.vmem %s6, %s284
        %v286 = vld [vmem:[%s280] sm:$0xff]
        %v287 = vld [vmem:[%s280 + $0x8] sm:$0xff]
        %v288 = vld [vmem:[%s280 + $0x10] sm:$0xff]
        %v289 = vld [vmem:[%s280 + $0x18] sm:$0xff]
        %v290 = vld [vmem:[%s280 + $0x20] sm:$0xff]
        %v291 = vld [vmem:[%s280 + $0x28] sm:$0xff]
        %v292 = vld [vmem:[#allocation2] sm:$0xff]
        %v293 = vld [vmem:[#allocation2 + $0x8] sm:$0xff]
        %v294 = vld [vmem:[#allocation2 + $0x10] sm:$0xff]
        %v295 = vld [vmem:[#allocation2 + $0x18] sm:$0xff]
        %v296 = vld [vmem:[#allocation2 + $0x20] sm:$0xff]
        %v297 = vld [vmem:[#allocation2 + $0x28] sm:$0xff]
        %v298 = vld [vmem:[#allocation2 + $0x30] sm:$0xff]
        %v299 = vld [vmem:[#allocation2 + $0x38] sm:$0xff]
        %v300 = vld [vmem:[#allocation2 + $0x40] sm:$0xff]
        %v301 = vld [vmem:[#allocation2 + $0x48] sm:$0xff]
        %v302 = vld [vmem:[#allocation2 + $0x50] sm:$0xff]
        %v303 = vld [vmem:[#allocation2 + $0x58] sm:$0xff]
        %v304 = vld [vmem:[#allocation2 + $0x60] sm:$0xff]
        %v305 = vld [vmem:[#allocation2 + $0x68] sm:$0xff]
        %v306 = vld [vmem:[#allocation2 + $0x70] sm:$0xff]
        %v307 = vld [vmem:[#allocation2 + $0x78] sm:$0xff]
        %v308 = vld [vmem:[#allocation2 + $0x80] sm:$0xff]
        %v309 = vld [vmem:[#allocation2 + $0x88] sm:$0xff]
        %v310 = vld [vmem:[#allocation2 + $0x90] sm:$0xff]
        %v311 = vld [vmem:[#allocation2 + $0x98] sm:$0xff]
        %v312 = vld [vmem:[#allocation2 + $0xa0] sm:$0xff]
        %v313 = vld [vmem:[#allocation2 + $0xa8] sm:$0xff]
        %v314 = vld [vmem:[#allocation2 + $0xb0] sm:$0xff]
        %v315 = vld [vmem:[#allocation2 + $0xb8] sm:$0xff]
        %v316 = vld [vmem:[#allocation2 + $0xc0] sm:$0xff]
        %v317 = vld [vmem:[#allocation2 + $0xc8] sm:$0xff]
        %v318 = vld [vmem:[#allocation2 + $0xd0] sm:$0xff]
        %v319 = vld [vmem:[#allocation2 + $0xd8] sm:$0xff]
        %v320 = vld [vmem:[#allocation2 + $0xe0] sm:$0xff]
        %v321 = vld [vmem:[#allocation2 + $0xe8] sm:$0xff]
        %v322 = vld [vmem:[#allocation2 + $0xf0] sm:$0xff]
        %v323 = vld [vmem:[#allocation2 + $0xf8] sm:$0xff]
        %324 = vmatpush.msra.mxu0 %v307
        %325 = vmatpush.msra.mxu0 %v306
        %326 = vmatpush.msra.mxu0 %v305
        %327 = vmatpush.msra.mxu0 %v304
        %328 = vmatpush.msra.mxu0 %v303
        %329 = vmatpush.msra.mxu0 %v302
        %330 = vmatpush.msra.mxu0 %v301
        %331 = vmatpush.msra.mxu0 %v300
        %332 = vmatpush.msra.mxu0 %v299
        %333 = vmatpush.msra.mxu0 %v298
        %334 = vmatpush.msra.mxu0 %v297
        %335 = vmatpush.msra.mxu0 %v296
        %336 = vmatpush.msra.mxu0 %v295
        %337 = vmatpush.msra.mxu0 %v294
        %338 = vmatpush.msra.mxu0 %v293
        %339 = vmatpush.msra.mxu0 %v292
        %340 = vmatmul.f32.gmra.mxu0 %v286
        %v341 = vpop.f32.mrf.mxu0
        %v342 = vadd.f32 0.0, %v341
        %343 = vmatmul.f32.gmra.mxu0 %v288
        %v344 = vpop.f32.mrf.mxu0
        %v345 = vadd.f32 0.0, %v344
        %346 = vmatmul.f32.gmra.mxu0 %v290
        %v347 = vpop.f32.mrf.mxu0
        %v348 = vadd.f32 0.0, %v347
        %349 = vdwg.mxu0
        %350 = vmatpush.msra.mxu0 %v323
        %351 = vmatpush.msra.mxu0 %v322
        %352 = vmatpush.msra.mxu0 %v321
        %353 = vmatpush.msra.mxu0 %v320
        %354 = vmatpush.msra.mxu0 %v319
        %355 = vmatpush.msra.mxu0 %v318
        %356 = vmatpush.msra.mxu0 %v317
        %357 = vmatpush.msra.mxu0 %v316
        %358 = vmatpush.msra.mxu0 %v315
        %359 = vmatpush.msra.mxu0 %v314
        %360 = vmatpush.msra.mxu0 %v313
        %361 = vmatpush.msra.mxu0 %v312
        %362 = vmatpush.msra.mxu0 %v311
        %363 = vmatpush.msra.mxu0 %v310
        %364 = vmatpush.msra.mxu0 %v309
        %365 = vmatpush.msra.mxu0 %v308
        %366 = vmatmul.f32.gmra.mxu0 %v287
        %v367 = vpop.f32.mrf.mxu0
        %v368 = vadd.f32 %v342, %v367
        %369 = vmatmul.f32.gmra.mxu0 %v289
        %v370 = vpop.f32.mrf.mxu0
        %v371 = vadd.f32 %v345, %v370
        %372 = vmatmul.f32.gmra.mxu0 %v291
        %v373 = vpop.f32.mrf.mxu0
        %v374 = vadd.f32 %v348, %v373
        %375 = vdwg.mxu0
        %v376 = vmul.f32 %v368, 0.5
        %v377 = vmul.f32 %v371, 0.5
        %v378 = vmul.f32 %v374, 0.5
        %v379 = vmul.f32 %v368, 0.70710677
        %v380 = vmul.f32 %v371, 0.70710677
        %v381 = vmul.f32 %v374, 0.70710677
        %v382 = vmul.f32 %v379, %v379
        %v383 = vmin.f32 16.0, %v382
        %v384 = vmul.f32 %v383, 2.1237322e-06
        %v385 = vadd.f32 %v384, 0.00028619796
        %v386 = vmul.f32 %v383, %v385
        %v387 = vadd.f32 %v386, 0.0036580483
        %v388 = vmul.f32 %v383, %v387
        %v389 = vadd.f32 %v388, 0.05243302
        %v390 = vmul.f32 %v383, %v389
        %v391 = vadd.f32 %v390, 0.18741608
        %v392 = vmul.f32 %v383, %v391
        %v393 = vadd.f32 %v392, 1.1283791
        %v394 = vmul.f32 %v379, %v393
        %v395 = vmul.f32 %v383, 3.8918573e-05
        %v396 = vadd.f32 %v395, 0.001143296
        %v397 = vmul.f32 %v383, %v396
        %v398 = vadd.f32 %v397, 0.014752088
        %v399 = vmul.f32 %v383, %v398
        %v400 = vadd.f32 %v399, 0.112945676
        %v401 = vmul.f32 %v383, %v400
        %v402 = vadd.f32 %v401, 0.4994258
        %v403 = vmul.f32 %v383, %v402
        %v404 = vadd.f32 %v403, 1.0
        %v405 = vrcp.pop %v404
        %v406 = vmul.f32 %v404, %v405
        %v407 = vsub.f32 1.0, %v406
        %v408 = vmul.f32 %v405, %v407
        %v409 = vadd.f32 %v405, %v408
        %vm410 = vweird.f32 %v404
        %vm411 = vweird.f32 %v405
        %vm412 = vmor %vm410, %vm411
        %v413 = vsel %vm412, %v405, %v409
        %v414 = vand.u32 2147483647, %v404
        %vm415 = vcmp.eq.f32.partialorder %v414, 8.507059e+37
        %v416 = vand.u32 %v404, 2147483648
        %v417 = vor.u32 1.1754944e-38, %v416
        %v418 = vsel %vm415, %v417, %v413
        %v419 = vmul.f32 %v394, %v418
        %v420 = vmin.f32 %v419, 1.0
        %v421 = vmax.f32 %v420, -1.0
        %v422 = vmul.f32 %v380, %v380
        %v423 = vmin.f32 16.0, %v422
        %v424 = vmul.f32 %v423, 2.1237322e-06
        %v425 = vadd.f32 %v424, 0.00028619796
        %v426 = vmul.f32 %v423, %v425
        %v427 = vadd.f32 %v426, 0.0036580483
        %v428 = vmul.f32 %v423, %v427
        %v429 = vadd.f32 %v428, 0.05243302
        %v430 = vmul.f32 %v423, %v429
        %v431 = vadd.f32 %v430, 0.18741608
        %v432 = vmul.f32 %v423, %v431
        %v433 = vadd.f32 %v432, 1.1283791
        %v434 = vmul.f32 %v380, %v433
        %v435 = vmul.f32 %v423, 3.8918573e-05
        %v436 = vadd.f32 %v435, 0.001143296
        %v437 = vmul.f32 %v423, %v436
        %v438 = vadd.f32 %v437, 0.014752088
        %v439 = vmul.f32 %v423, %v438
        %v440 = vadd.f32 %v439, 0.112945676
        %v441 = vmul.f32 %v423, %v440
        %v442 = vadd.f32 %v441, 0.4994258
        %v443 = vmul.f32 %v423, %v442
        %v444 = vadd.f32 %v443, 1.0
        %v445 = vrcp.pop %v444
        %v446 = vmul.f32 %v444, %v445
        %v447 = vsub.f32 1.0, %v446
        %v448 = vmul.f32 %v445, %v447
        %v449 = vadd.f32 %v445, %v448
        %vm450 = vweird.f32 %v444
        %vm451 = vweird.f32 %v445
        %vm452 = vmor %vm450, %vm451
        %v453 = vsel %vm452, %v445, %v449
        %v454 = vand.u32 2147483647, %v444
        %vm455 = vcmp.eq.f32.partialorder %v454, 8.507059e+37
        %v456 = vand.u32 %v444, 2147483648
        %v457 = vor.u32 1.1754944e-38, %v456
        %v458 = vsel %vm455, %v457, %v453
        %v459 = vmul.f32 %v434, %v458
        %v460 = vmin.f32 %v459, 1.0
        %v461 = vmax.f32 %v460, -1.0
        %v462 = vmul.f32 %v381, %v381
        %v463 = vmin.f32 16.0, %v462
        %v464 = vmul.f32 %v463, 2.1237322e-06
        %v465 = vadd.f32 %v464, 0.00028619796
        %v466 = vmul.f32 %v463, %v465
        %v467 = vadd.f32 %v466, 0.0036580483
        %v468 = vmul.f32 %v463, %v467
        %v469 = vadd.f32 %v468, 0.05243302
        %v470 = vmul.f32 %v463, %v469
        %v471 = vadd.f32 %v470, 0.18741608
        %v472 = vmul.f32 %v463, %v471
        %v473 = vadd.f32 %v472, 1.1283791
        %v474 = vmul.f32 %v381, %v473
        %v475 = vmul.f32 %v463, 3.8918573e-05
        %v476 = vadd.f32 %v475, 0.001143296
        %v477 = vmul.f32 %v463, %v476
        %v478 = vadd.f32 %v477, 0.014752088
        %v479 = vmul.f32 %v463, %v478
        %v480 = vadd.f32 %v479, 0.112945676
        %v481 = vmul.f32 %v463, %v480
        %v482 = vadd.f32 %v481, 0.4994258
        %v483 = vmul.f32 %v463, %v482
        %v484 = vadd.f32 %v483, 1.0
        %v485 = vrcp.pop %v484
        %v486 = vmul.f32 %v484, %v485
        %v487 = vsub.f32 1.0, %v486
        %v488 = vmul.f32 %v485, %v487
        %v489 = vadd.f32 %v485, %v488
        %vm490 = vweird.f32 %v484
        %vm491 = vweird.f32 %v485
        %vm492 = vmor %vm490, %vm491
        %v493 = vsel %vm492, %v485, %v489
        %v494 = vand.u32 2147483647, %v484
        %vm495 = vcmp.eq.f32.partialorder %v494, 8.507059e+37
        %v496 = vand.u32 %v484, 2147483648
        %v497 = vor.u32 1.1754944e-38, %v496
        %v498 = vsel %vm495, %v497, %v493
        %v499 = vmul.f32 %v474, %v498
        %v500 = vmin.f32 %v499, 1.0
        %v501 = vmax.f32 %v500, -1.0
        %v502 = vadd.f32 %v421, 1.0
        %v503 = vadd.f32 %v461, 1.0
        %v504 = vadd.f32 %v501, 1.0
        %v505 = vmul.f32 %v376, %v502
        %v506 = vmul.f32 %v377, %v503
        %v507 = vmul.f32 %v378, %v504
        %508 = vadd.xlane.f32.xlu0 %v505
        %v509 = vpop.xlane.xlu0 %508
        %510 = vadd.xlane.f32.xlu0 %v506
        %v511 = vpop.xlane.xlu0 %510
        %512 = vadd.xlane.f32.xlu0 %v507
        %v513 = vpop.xlane.xlu0 %512
        %v514 = vrcp.pop 128.0
        %v515 = vmul.f32 128.0, %v514
        %v516 = vsub.f32 1.0, %v515
        %v517 = vmul.f32 %v514, %v516
        %v518 = vadd.f32 %v514, %v517
        %vm519 = vweird.f32 %v514
        %v520 = vsel %vm519, %v514, %v518
        %v521 = vmul.f32 %v509, %v520
        %v522 = vmul.f32 %v511, %v520
        %v523 = vmul.f32 %v513, %v520
        %v524 = vsub.f32 %v505, %v521
        %v525 = vsub.f32 %v506, %v522
        %v526 = vsub.f32 %v507, %v523
        %v527 = vmul.f32 %v524, %v524
        %v528 = vmul.f32 %v525, %v525
        %v529 = vmul.f32 %v526, %v526
        %530 = vadd.xlane.f32.xlu0 %v527
        %v531 = vpop.xlane.xlu0 %530
        %532 = vadd.xlane.f32.xlu0 %v528
        %v533 = vpop.xlane.xlu0 %532
        %534 = vadd.xlane.f32.xlu0 %v529
        %v535 = vpop.xlane.xlu0 %534
        %v536 = vmul.f32 %v531, %v520
        %v537 = vmul.f32 %v533, %v520
        %v538 = vmul.f32 %v535, %v520
        %v539 = vadd.f32 %v536, 1e-05
        %v540 = vadd.f32 %v537, 1e-05
        %v541 = vadd.f32 %v538, 1e-05
        %v542 = vrsqrt.pop %v539
        %v543 = vmul.f32 %v542, %v539
        %v544 = vmul.f32 %v543, %v542
        %v545 = vmul.f32 0.5, %v544
        %v546 = vsub.f32 1.5, %v545
        %v547 = vmul.f32 %v542, %v546
        %vm548 = vweird.f32 %v539
        %vm549 = vweird.f32 %v542
        %vm550 = vmor %vm548, %vm549
        %v551 = vsel %vm550, %v542, %v547
        %v552 = vrsqrt.pop %v540
        %v553 = vmul.f32 %v552, %v540
        %v554 = vmul.f32 %v553, %v552
        %v555 = vmul.f32 0.5, %v554
        %v556 = vsub.f32 1.5, %v555
        %v557 = vmul.f32 %v552, %v556
        %vm558 = vweird.f32 %v540
        %vm559 = vweird.f32 %v552
        %vm560 = vmor %vm558, %vm559
        %v561 = vsel %vm560, %v552, %v557
        %v562 = vrsqrt.pop %v541
        %v563 = vmul.f32 %v562, %v541
        %v564 = vmul.f32 %v563, %v562
        %v565 = vmul.f32 0.5, %v564
        %v566 = vsub.f32 1.5, %v565
        %v567 = vmul.f32 %v562, %v566
        %vm568 = vweird.f32 %v541
        %vm569 = vweird.f32 %v562
        %vm570 = vmor %vm568, %vm569
        %v571 = vsel %vm570, %v562, %v567
        %v572 = vmul.f32 %v524, %v551
        %v573 = vmul.f32 %v525, %v561
        %v574 = vmul.f32 %v526, %v571
        %v575 = vld [vmem:[%s2] sm:$0x1]
        %v577 = vperm.slane %v575, 0
        %v579 = vmul.f32 %v572, %v577
        %v580 = vmul.f32 %v573, %v577
        %v581 = vmul.f32 %v574, %v577
        %v582 = vld [vmem:[%s3] sm:$0x1]
        %v584 = vperm.slane %v582, 0
        %v586 = vadd.f32 %v579, %v584
        %v587 = vadd.f32 %v580, %v584
        %v588 = vadd.f32 %v581, %v584
        %v589 = vld [vmem:[#allocation4] sm:$0xff]
        %v590 = vld [vmem:[#allocation4 + $0x8] sm:$0xff]
        %v591 = vld [vmem:[#allocation4 + $0x10] sm:$0xff]
        %v592 = vld [vmem:[#allocation4 + $0x18] sm:$0xff]
        %v593 = vld [vmem:[#allocation4 + $0x20] sm:$0xff]
        %v594 = vld [vmem:[#allocation4 + $0x28] sm:$0xff]
        %v595 = vld [vmem:[#allocation4 + $0x30] sm:$0xff]
        %v596 = vld [vmem:[#allocation4 + $0x38] sm:$0xff]
        %v597 = vld [vmem:[#allocation4 + $0x40] sm:$0xff]
        %v598 = vld [vmem:[#allocation4 + $0x48] sm:$0xff]
        %v599 = vld [vmem:[#allocation4 + $0x50] sm:$0xff]
        %v600 = vld [vmem:[#allocation4 + $0x58] sm:$0xff]
        %v601 = vld [vmem:[#allocation4 + $0x60] sm:$0xff]
        %v602 = vld [vmem:[#allocation4 + $0x68] sm:$0xff]
        %v603 = vld [vmem:[#allocation4 + $0x70] sm:$0xff]
        %v604 = vld [vmem:[#allocation4 + $0x78] sm:$0xff]
        %v605 = vld [vmem:[%s5] sm:$0x1]
        %v607 = vperm.slane %v605, 0
        %609 = vmatpush.msra.mxu0 %v604
        %610 = vmatpush.msra.mxu0 %v603
        %611 = vmatpush.msra.mxu0 %v602
        %612 = vmatpush.msra.mxu0 %v601
        %613 = vmatpush.msra.mxu0 %v600
        %614 = vmatpush.msra.mxu0 %v599
        %615 = vmatpush.msra.mxu0 %v598
        %616 = vmatpush.msra.mxu0 %v597
        %617 = vmatpush.msra.mxu0 %v596
        %618 = vmatpush.msra.mxu0 %v595
        %619 = vmatpush.msra.mxu0 %v594
        %620 = vmatpush.msra.mxu0 %v593
        %621 = vmatpush.msra.mxu0 %v592
        %622 = vmatpush.msra.mxu0 %v591
        %623 = vmatpush.msra.mxu0 %v590
        %624 = vmatpush.msra.mxu0 %v589
        %625 = vmatmul.f32.gmra.mxu0 %v586
        %v626 = vpop.f32.mrf.mxu0
        %v627 = vadd.f32 %v607, %v626
        %628 = vmatmul.f32.gmra.mxu0 %v587
        %v629 = vpop.f32.mrf.mxu0
        %v630 = vadd.f32 %v607, %v629
        %631 = vmatmul.f32.gmra.mxu0 %v588
        %v632 = vpop.f32.mrf.mxu0
        %v633 = vadd.f32 %v607, %v632
        %634 = vdwg.mxu0
        %635 = vst [vmem:[%s285] sm:$0xff] %v627
        %636 = vst [vmem:[%s285 + $0x8] sm:$0xff] %v630
        %637 = vst [vmem:[%s285 + $0x10] sm:$0xff] %v633
        %p638 = scmp.lt.s32.totalorder %s19, 1
        %s639 = scalar_select %p638, %s19, 1
        %s640 = smul.addr %s639, 3
        %s641 = smul.addr %s640, 8
        %s642 = scalar_lea.vmem %s6, %s641
        // Predicated region
        $region53: #{fairseq_wav2vec2_forward.11} parent=43 // pred_check
          %p643 = pneg %p168
        $region54: #{fairseq_wav2vec2_forward.11} parent=43 // pred_check_branch
          %645 = sbr.rel (%p643) target = $region56
        $region55: #{fairseq_wav2vec2_forward.11} parent=43 // pred_region
          _
        $region56: #{fairseq_wav2vec2_forward.11} parent=43 // pred_fallthru
          _
      $region44: #{fairseq_wav2vec2_forward.11} parent=5 // pred_fallthru
        _
      %p646 = scmp.le.s32.totalorder 2, %s14
      // Predicated region
      $region57: #{fairseq_wav2vec2_forward.11} parent=5 // pred_check
        %p647 = pneg %p646
      $region58: #{fairseq_wav2vec2_forward.11} parent=5 // pred_check_branch
        %649 = sbr.rel (%p647) target = $region60
      $region59: #{fairseq_wav2vec2_forward.11} parent=5 // pred_region
        %s650 = ssub.s32 %s14, 2
        // Predicated region
        $region61: #{fairseq_wav2vec2_forward.11} parent=59 // pred_check
          %p651 = pneg %p174
        $region62: #{fairseq_wav2vec2_forward.11} parent=59 // pred_check_branch
          %653 = sbr.rel (%p651) target = $region64
        $region63: #{fairseq_wav2vec2_forward.11} parent=59 // pred_region
          %p654 = scmp.lt.s32.totalorder %s20, 1
          %s655 = scalar_select %p654, %s20, 1
          %s656 = smul.addr %s655, 3
          %s657 = smul.addr %s656, 8
          %s658 = scalar_lea.vmem %s6, %s657
        $region64: #{fairseq_wav2vec2_forward.11} parent=59 // pred_fallthru
          _
      $region60: #{fairseq_wav2vec2_forward.11} parent=5 // pred_fallthru
        _
    $region6: #{fairseq_wav2vec2_forward.11} parent=1 // loop_footer
      %s18 = sadd.s32 1, %s14
    $region7: #{fairseq_wav2vec2_forward.11} parent=1 // loop_footer_branch
      %13 = sbr.rel target = $region3
    $region8: #{fairseq_wav2vec2_forward.11} parent=1 // loop_exit
      _
    %659 = vsyncpa [#allocation3], 1
    %s660 = scalar_lea.sflag [#allocation3], 1
    %661 = vsyncpa %s660, 1
    %662 = vsyncpa [#allocation5], 1

// kernel: fairseq_wav2vec2_forward.12
$region0: #{fairseq_wav2vec2_forward.12}
  #allocation0 [shape = 'u32[]', space=smem, size = 0x4, offset = 0x4, fixed_abs, tag = 'smem constant byte address 0x4 - core index']
  #allocation1 [shape = 'u32[72,128]{1,0:T(1,128)}', space=vmem, size = 0x9000, scoped, tag = 'internal scratch']
  %s0 = inlined_call_operand.vmem [shape: f32[2,32,128], index: 0, kind: input, shape index: {}]
  %s1 = inlined_call_operand.vmem [shape: f32[1024,128], index: 1, kind: input, shape index: {}]
  %s2 = inlined_call_operand.vmem [shape: f32[1,128], index: 2, kind: input, shape index: {}]
  %s3 = inlined_call_operand.vmem [shape: f32[1,128], index: 3, kind: input, shape index: {}]
  %s4 = inlined_call_operand.vmem [shape: f32[1,128], index: 4, kind: input, shape index: {}]
  %s5 = inlined_call_operand.vmem [shape: f32[2,24,128], index: 5, kind: output, shape index: {}]
  %s6 = sld [smem:[#allocation0]]
  $region53: #{fairseq_wav2vec2_forward.12} parent=0
    _
  %s8 = ssub.s32 1, %s6
  %s9 = scalar_select 0, %s8, %s6
  loop: start=0, step=1, limit=4
  $region2: #{fairseq_wav2vec2_forward.12} parent=0 // loop_pre_header
    _
  $region3: #{fairseq_wav2vec2_forward.12} parent=0 // loop_header
    %s11 = sphi 0, %s15
    %p12 = scmp.ge.s32.totalorder %s11, 4
    %s21 = sphi 0, %s23
    %s24 = sphi 0, %s21
    %s25 = sphi 0, %s24
    %s41 = sphi 0, %s25
    %s45 = sphi 0, %s45
    %s47 = sphi 0, %s45
    %s48 = sphi 0, %s47
    %s62 = sphi 0, %s48
    %s66 = sphi 0, %s66
    %s68 = sphi 0, %s66
    %s69 = sphi 0, %s68
    %s83 = sphi 0, %s69
    %s87 = sphi 0, %s87
    %s89 = sphi 0, %s87
    %s90 = sphi 0, %s89
    %s104 = sphi 0, %s90
    %s108 = sphi 0, %s108
    %s110 = sphi 0, %s108
    %s111 = sphi 0, %s110
    %s125 = sphi 0, %s111
    %s131 = sphi 0, %s133
    %s134 = sphi 0, %s131
    %s135 = sphi 0, %s134
    %s151 = sphi 0, %s135
  $region4: #{fairseq_wav2vec2_forward.12} parent=0 // loop_header_branch
    %14 = sbr.rel (%p12) target = $region8
  $region5: #{fairseq_wav2vec2_forward.12} parent=0 // loop_body
    %s16 = ssub.s32 %s11, 1
    %s17 = ssub.s32 %s11, 2
    %s18 = sadd.s32 %s11, 1
    %s19 = ssub.s32 %s11, %s18
    %p20 = scmp.eq.s32.totalorder %s19, 0
    %s22 = sadd.s32 %s21, 1
    %s23 = scalar_select %p20, %s21, %s22
    %p26 = pneg %p20
    %p27 = scmp.eq.s32.totalorder %s11, 1
    %p28 = por %p26, %p27
    %p29 = scmp.ne.s32.totalorder %s21, %s24
    %p30 = scmp.eq.s32.totalorder %s11, 0
    %p31 = por %p29, %p30
    %p32 = scmp.ne.s32.totalorder %s21, %s24
    %p33 = scmp.eq.s32.totalorder %s16, 1
    %p34 = por %p32, %p33
    %p35 = scmp.ne.s32.totalorder %s24, %s25
    %p36 = scmp.eq.s32.totalorder %s16, 0
    %p37 = por %p35, %p36
    %p38 = scmp.ne.s32.totalorder %s24, %s25
    %p39 = scmp.eq.s32.totalorder %s17, 1
    %p40 = por %p38, %p39
    %p42 = scmp.ne.s32.totalorder %s25, %s41
    %p43 = scmp.eq.s32.totalorder %s17, 0
    %p44 = por %p42, %p43
    %s46 = sadd.s32 %s45, 1
    %p49 = scmp.eq.s32.totalorder %s11, 1
    %p50 = scmp.ne.s32.totalorder %s45, %s47
    %p51 = scmp.eq.s32.totalorder %s11, 0
    %p52 = por %p50, %p51
    %p53 = scmp.ne.s32.totalorder %s45, %s47
    %p54 = scmp.eq.s32.totalorder %s16, 1
    %p55 = por %p53, %p54
    %p56 = scmp.ne.s32.totalorder %s47, %s48
    %p57 = scmp.eq.s32.totalorder %s16, 0
    %p58 = por %p56, %p57
    %p59 = scmp.ne.s32.totalorder %s47, %s48
    %p60 = scmp.eq.s32.totalorder %s17, 1
    %p61 = por %p59, %p60
    %p63 = scmp.ne.s32.totalorder %s48, %s62
    %p64 = scmp.eq.s32.totalorder %s17, 0
    %p65 = por %p63, %p64
    %s67 = sadd.s32 %s66, 1
    %p70 = scmp.eq.s32.totalorder %s11, 1
    %p71 = scmp.ne.s32.totalorder %s66, %s68
    %p72 = scmp.eq.s32.totalorder %s11, 0
    %p73 = por %p71, %p72
    %p74 = scmp.ne.s32.totalorder %s66, %s68
    %p75 = scmp.eq.s32.totalorder %s16, 1
    %p76 = por %p74, %p75
    %p77 = scmp.ne.s32.totalorder %s68, %s69
    %p78 = scmp.eq.s32.totalorder %s16, 0
    %p79 = por %p77, %p78
    %p80 = scmp.ne.s32.totalorder %s68, %s69
    %p81 = scmp.eq.s32.totalorder %s17, 1
    %p82 = por %p80, %p81
    %p84 = scmp.ne.s32.totalorder %s69, %s83
    %p85 = scmp.eq.s32.totalorder %s17, 0
    %p86 = por %p84, %p85
    %s88 = sadd.s32 %s87, 1
    %p91 = scmp.eq.s32.totalorder %s11, 1
    %p92 = scmp.ne.s32.totalorder %s87, %s89
    %p93 = scmp.eq.s32.totalorder %s11, 0
    %p94 = por %p92, %p93
    %p95 = scmp.ne.s32.totalorder %s87, %s89
    %p96 = scmp.eq.s32.totalorder %s16, 1
    %p97 = por %p95, %p96
    %p98 = scmp.ne.s32.totalorder %s89, %s90
    %p99 = scmp.eq.s32.totalorder %s16, 0
    %p100 = por %p98, %p99
    %p101 = scmp.ne.s32.totalorder %s89, %s90
    %p102 = scmp.eq.s32.totalorder %s17, 1
    %p103 = por %p101, %p102
    %p105 = scmp.ne.s32.totalorder %s90, %s104
    %p106 = scmp.eq.s32.totalorder %s17, 0
    %p107 = por %p105, %p106
    %s109 = sadd.s32 %s108, 1
    %p112 = scmp.eq.s32.totalorder %s11, 1
    %p113 = scmp.ne.s32.totalorder %s108, %s110
    %p114 = scmp.eq.s32.totalorder %s11, 0
    %p115 = por %p113, %p114
    %p116 = scmp.ne.s32.totalorder %s108, %s110
    %p117 = scmp.eq.s32.totalorder %s16, 1
    %p118 = por %p116, %p117
    %p119 = scmp.ne.s32.totalorder %s110, %s111
    %p120 = scmp.eq.s32.totalorder %s16, 0
    %p121 = por %p119, %p120
    %p122 = scmp.ne.s32.totalorder %s110, %s111
    %p123 = scmp.eq.s32.totalorder %s17, 1
    %p124 = por %p122, %p123
    %p126 = scmp.ne.s32.totalorder %s111, %s125
    %p127 = scmp.eq.s32.totalorder %s17, 0
    %p128 = por %p126, %p127
    %s129 = ssub.s32 %s11, %s18
    %p130 = scmp.eq.s32.totalorder %s129, 0
    %s132 = sadd.s32 %s131, 1
    %s133 = scalar_select %p130, %s131, %s132
    %p136 = pneg %p130
    %p137 = scmp.eq.s32.totalorder %s11, 1
    %p138 = por %p136, %p137
    %p139 = scmp.ne.s32.totalorder %s131, %s134
    %p140 = scmp.eq.s32.totalorder %s11, 0
    %p141 = por %p139, %p140
    %p142 = scmp.ne.s32.totalorder %s131, %s134
    %p143 = scmp.eq.s32.totalorder %s16, 1
    %p144 = por %p142, %p143
    %p145 = scmp.ne.s32.totalorder %s134, %s135
    %p146 = scmp.eq.s32.totalorder %s16, 0
    %p147 = por %p145, %p146
    %p148 = scmp.ne.s32.totalorder %s134, %s135
    %p149 = scmp.eq.s32.totalorder %s17, 1
    %p150 = por %p148, %p149
    %p152 = scmp.ne.s32.totalorder %s135, %s151
    %p153 = scmp.eq.s32.totalorder %s17, 0
    %p154 = por %p152, %p153
    %p155 = scmp.le.s32.totalorder 1, %s11
    %p156 = scmp.lt.s32.totalorder %s11, 3
    %p157 = pnand %p155, %p156
    %p158 = pneg %p157
    // Predicated region
    $region9: #{fairseq_wav2vec2_forward.12} parent=5 // pred_check
      _
    $region10: #{fairseq_wav2vec2_forward.12} parent=5 // pred_check_branch
      %160 = sbr.rel (%p157) target = $region12
    $region11: #{fairseq_wav2vec2_forward.12} parent=5 // pred_region
      %s161 = ssub.s32 %s11, 1
      // Predicated region
      $region13: #{fairseq_wav2vec2_forward.12} parent=11 // pred_check
        %p162 = pneg %p58
      $region14: #{fairseq_wav2vec2_forward.12} parent=11 // pred_check_branch
        %164 = sbr.rel (%p162) target = $region16
      $region15: #{fairseq_wav2vec2_forward.12} parent=11 // pred_region
        _
      $region16: #{fairseq_wav2vec2_forward.12} parent=11 // pred_fallthru
        _
      // Predicated region
      $region17: #{fairseq_wav2vec2_forward.12} parent=11 // pred_check
        %p165 = pneg %p79
      $region18: #{fairseq_wav2vec2_forward.12} parent=11 // pred_check_branch
        %167 = sbr.rel (%p165) target = $region20
      $region19: #{fairseq_wav2vec2_forward.12} parent=11 // pred_region
        _
      $region20: #{fairseq_wav2vec2_forward.12} parent=11 // pred_fallthru
        _
      // Predicated region
      $region21: #{fairseq_wav2vec2_forward.12} parent=11 // pred_check
        %p168 = pneg %p100
      $region22: #{fairseq_wav2vec2_forward.12} parent=11 // pred_check_branch
        %170 = sbr.rel (%p168) target = $region24
      $region23: #{fairseq_wav2vec2_forward.12} parent=11 // pred_region
        _
      $region24: #{fairseq_wav2vec2_forward.12} parent=11 // pred_fallthru
        _
      // Predicated region
      $region25: #{fairseq_wav2vec2_forward.12} parent=11 // pred_check
        %p171 = pneg %p121
      $region26: #{fairseq_wav2vec2_forward.12} parent=11 // pred_check_branch
        %173 = sbr.rel (%p171) target = $region28
      $region27: #{fairseq_wav2vec2_forward.12} parent=11 // pred_region
        _
      $region28: #{fairseq_wav2vec2_forward.12} parent=11 // pred_fallthru
        _
    $region12: #{fairseq_wav2vec2_forward.12} parent=5 // pred_fallthru
      _
    %p174 = scmp.lt.s32.totalorder %s11, 2
    // Predicated region
    $region29: #{fairseq_wav2vec2_forward.12} parent=5 // pred_check
      %p175 = pneg %p174
    $region30: #{fairseq_wav2vec2_forward.12} parent=5 // pred_check_branch
      %177 = sbr.rel (%p175) target = $region32
    $region31: #{fairseq_wav2vec2_forward.12} parent=5 // pred_region
      // Predicated region
      $region33: #{fairseq_wav2vec2_forward.12} parent=31 // pred_check
        %p178 = pneg %p31
      $region34: #{fairseq_wav2vec2_forward.12} parent=31 // pred_check_branch
        %180 = sbr.rel (%p178) target = $region36
      $region35: #{fairseq_wav2vec2_forward.12} parent=31 // pred_region
        %p181 = scmp.lt.s32.totalorder %s11, 1
        %s182 = scalar_select %p181, %s11, 1
        %s183 = smul.addr %s182, 4
        %s184 = smul.addr %s183, 8
        %s185 = scalar_lea.vmem %s0, %s184
      $region36: #{fairseq_wav2vec2_forward.12} parent=31 // pred_fallthru
        _
    $region32: #{fairseq_wav2vec2_forward.12} parent=5 // pred_fallthru
      _
    %p186 = scmp.le.s32.totalorder 1, %s11
    %p187 = scmp.lt.s32.totalorder %s11, 3
    %p188 = pnand %p186, %p187
    %p189 = pneg %p188
    // Predicated region
    $region37: #{fairseq_wav2vec2_forward.12} parent=5 // pred_check
      _
    $region38: #{fairseq_wav2vec2_forward.12} parent=5 // pred_check_branch
      %191 = sbr.rel (%p188) target = $region40
    $region39: #{fairseq_wav2vec2_forward.12} parent=5 // pred_region
      %s192 = ssub.s32 %s11, 1
      %p193 = scmp.lt.s32.totalorder %s16, 1
      %s194 = scalar_select %p193, %s16, 1
      %s195 = smul.addr %s194, 4
      %s196 = smul.addr %s195, 8
      %s197 = scalar_lea.vmem %s0, %s196
      %p198 = pneg %p37
      %p199 = pneg %p34
      %p200 = pneg %p58
      %p201 = pneg %p55
      %p202 = pneg %p79
      %p203 = pneg %p76
      %p204 = pneg %p100
      %p205 = pneg %p97
      %p206 = pneg %p121
      %p207 = pneg %p118
      %p208 = pneg %p147
      %p209 = pneg %p144
      %p210 = scmp.lt.s32.totalorder %s16, 1
      %s211 = scalar_select %p210, %s16, 1
      %s212 = smul.addr %s211, 3
      %s213 = smul.addr %s212, 8
      %s214 = scalar_lea.vmem %s5, %s213
      %p215 = scmp.lt.s32.totalorder %s16, 1
      %s216 = scalar_select %p215, %s16, 1
      %s217 = smul.addr %s216, 4
      %s218 = smul.addr %s217, 8
      %s219 = scalar_lea.vmem %s0, %s218
      %p220 = scmp.lt.s32.totalorder %s16, 1
      %s221 = scalar_select %p220, %s16, 1
      %s222 = smul.addr %s221, 3
      %s223 = smul.addr %s222, 8
      %s224 = scalar_lea.vmem %s5, %s223
      %v225 = vld [vmem:[%s219] sm:$0xff]
      %v226 = vld [vmem:[%s219 + $0x8] sm:$0xff]
      %v227 = vld [vmem:[%s219 + $0x10] sm:$0xff]
      %v228 = vld [vmem:[%s219 + $0x18] sm:$0xff]
      %vm233 = vcmask 1046528
      %v234 = vrot.slane %v225, 1
      %v235 = vrot.slane %v226, 1
      %v236 = vsel %vm233, %v234, %v235
      %v237 = vrot.slane %v227, 1
      %v238 = vsel %vm233, %v235, %v237
      %v239 = vrot.slane %v228, 1
      %v240 = vsel %vm233, %v237, %v239
      %vm244 = vcmask 1045504
      %v245 = vrot.slane %v225, 2
      %v246 = vrot.slane %v226, 2
      %v247 = vsel %vm244, %v245, %v246
      %v248 = vrot.slane %v227, 2
      %v249 = vsel %vm244, %v246, %v248
      %v250 = vrot.slane %v228, 2
      %v251 = vsel %vm244, %v248, %v250
      %vm255 = vcmask 1044480
      %v256 = vrot.slane %v225, 3
      %v257 = vrot.slane %v226, 3
      %v258 = vsel %vm255, %v256, %v257
      %v259 = vrot.slane %v227, 3
      %v260 = vsel %vm255, %v257, %v259
      %v261 = vrot.slane %v228, 3
      %v262 = vsel %vm255, %v259, %v261
      %vm266 = vcmask 1043456
      %v267 = vrot.slane %v225, 4
      %v268 = vrot.slane %v226, 4
      %v269 = vsel %vm266, %v267, %v268
      %v270 = vrot.slane %v227, 4
      %v271 = vsel %vm266, %v268, %v270
      %v272 = vrot.slane %v228, 4
      %v273 = vsel %vm266, %v270, %v272
      %vm277 = vcmask 1042432
      %v278 = vrot.slane %v225, 5
      %v279 = vrot.slane %v226, 5
      %v280 = vsel %vm277, %v278, %v279
      %v281 = vrot.slane %v227, 5
      %v282 = vsel %vm277, %v279, %v281
      %v283 = vrot.slane %v228, 5
      %v284 = vsel %vm277, %v281, %v283
      %vm288 = vcmask 1041408
      %v289 = vrot.slane %v225, 6
      %v290 = vrot.slane %v226, 6
      %v291 = vsel %vm288, %v289, %v290
      %v292 = vrot.slane %v227, 6
      %v293 = vsel %vm288, %v290, %v292
      %v294 = vrot.slane %v228, 6
      %v295 = vsel %vm288, %v292, %v294
      %vm299 = vcmask 1040384
      %v300 = vrot.slane %v225, 7
      %v301 = vrot.slane %v226, 7
      %v302 = vsel %vm299, %v300, %v301
      %v303 = vrot.slane %v227, 7
      %v304 = vsel %vm299, %v301, %v303
      %v305 = vrot.slane %v228, 7
      %v306 = vsel %vm299, %v303, %v305
      %v310 = vld [vmem:[%s1] sm:$0xff]
      %v311 = vld [vmem:[%s1 + $0x8] sm:$0xff]
      %v312 = vld [vmem:[%s1 + $0x10] sm:$0xff]
      %v313 = vld [vmem:[%s1 + $0x18] sm:$0xff]
      %v314 = vld [vmem:[%s1 + $0x20] sm:$0xff]
      %v315 = vld [vmem:[%s1 + $0x28] sm:$0xff]
      %v316 = vld [vmem:[%s1 + $0x30] sm:$0xff]
      %v317 = vld [vmem:[%s1 + $0x38] sm:$0xff]
      %v318 = vld [vmem:[%s1 + $0x40] sm:$0xff]
      %v319 = vld [vmem:[%s1 + $0x48] sm:$0xff]
      %v320 = vld [vmem:[%s1 + $0x50] sm:$0xff]
      %v321 = vld [vmem:[%s1 + $0x58] sm:$0xff]
      %v322 = vld [vmem:[%s1 + $0x60] sm:$0xff]
      %v323 = vld [vmem:[%s1 + $0x68] sm:$0xff]
      %v324 = vld [vmem:[%s1 + $0x70] sm:$0xff]
      %v325 = vld [vmem:[%s1 + $0x78] sm:$0xff]
      %v326 = vld [vmem:[%s1 + $0x80] sm:$0xff]
      %v327 = vld [vmem:[%s1 + $0x88] sm:$0xff]
      %v328 = vld [vmem:[%s1 + $0x90] sm:$0xff]
      %v329 = vld [vmem:[%s1 + $0x98] sm:$0xff]
      %v330 = vld [vmem:[%s1 + $0xa0] sm:$0xff]
      %v331 = vld [vmem:[%s1 + $0xa8] sm:$0xff]
      %v332 = vld [vmem:[%s1 + $0xb0] sm:$0xff]
      %v333 = vld [vmem:[%s1 + $0xb8] sm:$0xff]
      %v334 = vld [vmem:[%s1 + $0xc0] sm:$0xff]
      %v335 = vld [vmem:[%s1 + $0xc8] sm:$0xff]
      %v336 = vld [vmem:[%s1 + $0xd0] sm:$0xff]
      %v337 = vld [vmem:[%s1 + $0xd8] sm:$0xff]
      %v338 = vld [vmem:[%s1 + $0xe0] sm:$0xff]
      %v339 = vld [vmem:[%s1 + $0xe8] sm:$0xff]
      %v340 = vld [vmem:[%s1 + $0xf0] sm:$0xff]
      %v341 = vld [vmem:[%s1 + $0xf8] sm:$0xff]
      %v342 = vld [vmem:[%s1 + $0x100] sm:$0xff]
      %v343 = vld [vmem:[%s1 + $0x108] sm:$0xff]
      %v344 = vld [vmem:[%s1 + $0x110] sm:$0xff]
      %v345 = vld [vmem:[%s1 + $0x118] sm:$0xff]
      %v346 = vld [vmem:[%s1 + $0x120] sm:$0xff]
      %v347 = vld [vmem:[%s1 + $0x128] sm:$0xff]
      %v348 = vld [vmem:[%s1 + $0x130] sm:$0xff]
      %v349 = vld [vmem:[%s1 + $0x138] sm:$0xff]
      %v350 = vld [vmem:[%s1 + $0x140] sm:$0xff]
      %v351 = vld [vmem:[%s1 + $0x148] sm:$0xff]
      %v352 = vld [vmem:[%s1 + $0x150] sm:$0xff]
      %v353 = vld [vmem:[%s1 + $0x158] sm:$0xff]
      %v354 = vld [vmem:[%s1 + $0x160] sm:$0xff]
      %v355 = vld [vmem:[%s1 + $0x168] sm:$0xff]
      %v356 = vld [vmem:[%s1 + $0x170] sm:$0xff]
      %v357 = vld [vmem:[%s1 + $0x178] sm:$0xff]
      %v358 = vld [vmem:[%s1 + $0x180] sm:$0xff]
      %v359 = vld [vmem:[%s1 + $0x188] sm:$0xff]
      %v360 = vld [vmem:[%s1 + $0x190] sm:$0xff]
      %v361 = vld [vmem:[%s1 + $0x198] sm:$0xff]
      %v362 = vld [vmem:[%s1 + $0x1a0] sm:$0xff]
      %v363 = vld [vmem:[%s1 + $0x1a8] sm:$0xff]
      %v364 = vld [vmem:[%s1 + $0x1b0] sm:$0xff]
      %v365 = vld [vmem:[%s1 + $0x1b8] sm:$0xff]
      %v366 = vld [vmem:[%s1 + $0x1c0] sm:$0xff]
      %v367 = vld [vmem:[%s1 + $0x1c8] sm:$0xff]
      %v368 = vld [vmem:[%s1 + $0x1d0] sm:$0xff]
      %v369 = vld [vmem:[%s1 + $0x1d8] sm:$0xff]
      %v370 = vld [vmem:[%s1 + $0x1e0] sm:$0xff]
      %v371 = vld [vmem:[%s1 + $0x1e8] sm:$0xff]
      %v372 = vld [vmem:[%s1 + $0x1f0] sm:$0xff]
      %v373 = vld [vmem:[%s1 + $0x1f8] sm:$0xff]
      %v374 = vld [vmem:[%s1 + $0x200] sm:$0xff]
      %v375 = vld [vmem:[%s1 + $0x208] sm:$0xff]
      %v376 = vld [vmem:[%s1 + $0x210] sm:$0xff]
      %v377 = vld [vmem:[%s1 + $0x218] sm:$0xff]
      %v378 = vld [vmem:[%s1 + $0x220] sm:$0xff]
      %v379 = vld [vmem:[%s1 + $0x228] sm:$0xff]
      %v380 = vld [vmem:[%s1 + $0x230] sm:$0xff]
      %v381 = vld [vmem:[%s1 + $0x238] sm:$0xff]
      %v382 = vld [vmem:[%s1 + $0x240] sm:$0xff]
      %v383 = vld [vmem:[%s1 + $0x248] sm:$0xff]
      %v384 = vld [vmem:[%s1 + $0x250] sm:$0xff]
      %v385 = vld [vmem:[%s1 + $0x258] sm:$0xff]
      %v386 = vld [vmem:[%s1 + $0x260] sm:$0xff]
      %v387 = vld [vmem:[%s1 + $0x268] sm:$0xff]
      %v388 = vld [vmem:[%s1 + $0x270] sm:$0xff]
      %v389 = vld [vmem:[%s1 + $0x278] sm:$0xff]
      %v390 = vld [vmem:[%s1 + $0x280] sm:$0xff]
      %v391 = vld [vmem:[%s1 + $0x288] sm:$0xff]
      %v392 = vld [vmem:[%s1 + $0x290] sm:$0xff]
      %v393 = vld [vmem:[%s1 + $0x298] sm:$0xff]
      %v394 = vld [vmem:[%s1 + $0x2a0] sm:$0xff]
      %v395 = vld [vmem:[%s1 + $0x2a8] sm:$0xff]
      %v396 = vld [vmem:[%s1 + $0x2b0] sm:$0xff]
      %v397 = vld [vmem:[%s1 + $0x2b8] sm:$0xff]
      %v398 = vld [vmem:[%s1 + $0x2c0] sm:$0xff]
      %v399 = vld [vmem:[%s1 + $0x2c8] sm:$0xff]
      %v400 = vld [vmem:[%s1 + $0x2d0] sm:$0xff]
      %v401 = vld [vmem:[%s1 + $0x2d8] sm:$0xff]
      %v402 = vld [vmem:[%s1 + $0x2e0] sm:$0xff]
      %v403 = vld [vmem:[%s1 + $0x2e8] sm:$0xff]
      %v404 = vld [vmem:[%s1 + $0x2f0] sm:$0xff]
      %v405 = vld [vmem:[%s1 + $0x2f8] sm:$0xff]
      %v406 = vld [vmem:[%s1 + $0x300] sm:$0xff]
      %v407 = vld [vmem:[%s1 + $0x308] sm:$0xff]
      %v408 = vld [vmem:[%s1 + $0x310] sm:$0xff]
      %v409 = vld [vmem:[%s1 + $0x318] sm:$0xff]
      %v410 = vld [vmem:[%s1 + $0x320] sm:$0xff]
      %v411 = vld [vmem:[%s1 + $0x328] sm:$0xff]
      %v412 = vld [vmem:[%s1 + $0x330] sm:$0xff]
      %v413 = vld [vmem:[%s1 + $0x338] sm:$0xff]
      %v414 = vld [vmem:[%s1 + $0x340] sm:$0xff]
      %v415 = vld [vmem:[%s1 + $0x348] sm:$0xff]
      %v416 = vld [vmem:[%s1 + $0x350] sm:$0xff]
      %v417 = vld [vmem:[%s1 + $0x358] sm:$0xff]
      %v418 = vld [vmem:[%s1 + $0x360] sm:$0xff]
      %v419 = vld [vmem:[%s1 + $0x368] sm:$0xff]
      %v420 = vld [vmem:[%s1 + $0x370] sm:$0xff]
      %v421 = vld [vmem:[%s1 + $0x378] sm:$0xff]
      %v422 = vld [vmem:[%s1 + $0x380] sm:$0xff]
      %v423 = vld [vmem:[%s1 + $0x388] sm:$0xff]
      %v424 = vld [vmem:[%s1 + $0x390] sm:$0xff]
      %v425 = vld [vmem:[%s1 + $0x398] sm:$0xff]
      %v426 = vld [vmem:[%s1 + $0x3a0] sm:$0xff]
      %v427 = vld [vmem:[%s1 + $0x3a8] sm:$0xff]
      %v428 = vld [vmem:[%s1 + $0x3b0] sm:$0xff]
      %v429 = vld [vmem:[%s1 + $0x3b8] sm:$0xff]
      %v430 = vld [vmem:[%s1 + $0x3c0] sm:$0xff]
      %v431 = vld [vmem:[%s1 + $0x3c8] sm:$0xff]
      %v432 = vld [vmem:[%s1 + $0x3d0] sm:$0xff]
      %v433 = vld [vmem:[%s1 + $0x3d8] sm:$0xff]
      %v434 = vld [vmem:[%s1 + $0x3e0] sm:$0xff]
      %v435 = vld [vmem:[%s1 + $0x3e8] sm:$0xff]
      %v436 = vld [vmem:[%s1 + $0x3f0] sm:$0xff]
      %v437 = vld [vmem:[%s1 + $0x3f8] sm:$0xff]
      %v438 = vld [vmem:[%s2] sm:$0x1]
      %v440 = vperm.slane %v438, 0
      %442 = vmatpush.msra.mxu0 %v325
      %443 = vmatpush.msra.mxu0 %v324
      %444 = vmatpush.msra.mxu0 %v323
      %445 = vmatpush.msra.mxu0 %v322
      %446 = vmatpush.msra.mxu0 %v321
      %447 = vmatpush.msra.mxu0 %v320
      %448 = vmatpush.msra.mxu0 %v319
      %449 = vmatpush.msra.mxu0 %v318
      %450 = vmatpush.msra.mxu0 %v317
      %451 = vmatpush.msra.mxu0 %v316
      %452 = vmatpush.msra.mxu0 %v315
      %453 = vmatpush.msra.mxu0 %v314
      %454 = vmatpush.msra.mxu0 %v313
      %455 = vmatpush.msra.mxu0 %v312
      %456 = vmatpush.msra.mxu0 %v311
      %457 = vmatpush.msra.mxu0 %v310
      %458 = vmatmul.f32.gmra.mxu0 %v225
      %v459 = vpop.f32.mrf.mxu0
      %v460 = vadd.f32 %v440, %v459
      %461 = vmatmul.f32.gmra.mxu0 %v226
      %v462 = vpop.f32.mrf.mxu0
      %v463 = vadd.f32 %v440, %v462
      %464 = vmatmul.f32.gmra.mxu0 %v227
      %v465 = vpop.f32.mrf.mxu0
      %v466 = vadd.f32 %v440, %v465
      %467 = vdwg.mxu0
      %468 = vmatpush.msra.mxu0 %v341
      %469 = vmatpush.msra.mxu0 %v340
      %470 = vmatpush.msra.mxu0 %v339
      %471 = vmatpush.msra.mxu0 %v338
      %472 = vmatpush.msra.mxu0 %v337
      %473 = vmatpush.msra.mxu0 %v336
      %474 = vmatpush.msra.mxu0 %v335
      %475 = vmatpush.msra.mxu0 %v334
      %476 = vmatpush.msra.mxu0 %v333
      %477 = vmatpush.msra.mxu0 %v332
      %478 = vmatpush.msra.mxu0 %v331
      %479 = vmatpush.msra.mxu0 %v330
      %480 = vmatpush.msra.mxu0 %v329
      %481 = vmatpush.msra.mxu0 %v328
      %482 = vmatpush.msra.mxu0 %v327
      %483 = vmatpush.msra.mxu0 %v326
      %484 = vmatmul.f32.gmra.mxu0 %v236
      %v485 = vpop.f32.mrf.mxu0
      %v486 = vadd.f32 %v460, %v485
      %487 = vmatmul.f32.gmra.mxu0 %v238
      %v488 = vpop.f32.mrf.mxu0
      %v489 = vadd.f32 %v463, %v488
      %490 = vmatmul.f32.gmra.mxu0 %v240
      %v491 = vpop.f32.mrf.mxu0
      %v492 = vadd.f32 %v466, %v491
      %493 = vdwg.mxu0
      %494 = vmatpush.msra.mxu0 %v357
      %495 = vmatpush.msra.mxu0 %v356
      %496 = vmatpush.msra.mxu0 %v355
      %497 = vmatpush.msra.mxu0 %v354
      %498 = vmatpush.msra.mxu0 %v353
      %499 = vmatpush.msra.mxu0 %v352
      %500 = vmatpush.msra.mxu0 %v351
      %501 = vmatpush.msra.mxu0 %v350
      %502 = vmatpush.msra.mxu0 %v349
      %503 = vmatpush.msra.mxu0 %v348
      %504 = vmatpush.msra.mxu0 %v347
      %505 = vmatpush.msra.mxu0 %v346
      %506 = vmatpush.msra.mxu0 %v345
      %507 = vmatpush.msra.mxu0 %v344
      %508 = vmatpush.msra.mxu0 %v343
      %509 = vmatpush.msra.mxu0 %v342
      %510 = vmatmul.f32.gmra.mxu0 %v247
      %v511 = vpop.f32.mrf.mxu0
      %v512 = vadd.f32 %v486, %v511
      %513 = vmatmul.f32.gmra.mxu0 %v249
      %v514 = vpop.f32.mrf.mxu0
      %v515 = vadd.f32 %v489, %v514
      %516 = vmatmul.f32.gmra.mxu0 %v251
      %v517 = vpop.f32.mrf.mxu0
      %v518 = vadd.f32 %v492, %v517
      %519 = vdwg.mxu0
      %520 = vmatpush.msra.mxu0 %v373
      %521 = vmatpush.msra.mxu0 %v372
      %522 = vmatpush.msra.mxu0 %v371
      %523 = vmatpush.msra.mxu0 %v370
      %524 = vmatpush.msra.mxu0 %v369
      %525 = vmatpush.msra.mxu0 %v368
      %526 = vmatpush.msra.mxu0 %v367
      %527 = vmatpush.msra.mxu0 %v366
      %528 = vmatpush.msra.mxu0 %v365
      %529 = vmatpush.msra.mxu0 %v364
      %530 = vmatpush.msra.mxu0 %v363
      %531 = vmatpush.msra.mxu0 %v362
      %532 = vmatpush.msra.mxu0 %v361
      %533 = vmatpush.msra.mxu0 %v360
      %534 = vmatpush.msra.mxu0 %v359
      %535 = vmatpush.msra.mxu0 %v358
      %536 = vmatmul.f32.gmra.mxu0 %v258
      %v537 = vpop.f32.mrf.mxu0
      %v538 = vadd.f32 %v512, %v537
      %539 = vmatmul.f32.gmra.mxu0 %v260
      %v540 = vpop.f32.mrf.mxu0
      %v541 = vadd.f32 %v515, %v540
      %542 = vmatmul.f32.gmra.mxu0 %v262
      %v543 = vpop.f32.mrf.mxu0
      %v544 = vadd.f32 %v518, %v543
      %545 = vdwg.mxu0
      %546 = vmatpush.msra.mxu0 %v389
      %547 = vmatpush.msra.mxu0 %v388
      %548 = vmatpush.msra.mxu0 %v387
      %549 = vmatpush.msra.mxu0 %v386
      %550 = vmatpush.msra.mxu0 %v385
      %551 = vmatpush.msra.mxu0 %v384
      %552 = vmatpush.msra.mxu0 %v383
      %553 = vmatpush.msra.mxu0 %v382
      %554 = vmatpush.msra.mxu0 %v381
      %555 = vmatpush.msra.mxu0 %v380
      %556 = vmatpush.msra.mxu0 %v379
      %557 = vmatpush.msra.mxu0 %v378
      %558 = vmatpush.msra.mxu0 %v377
      %559 = vmatpush.msra.mxu0 %v376
      %560 = vmatpush.msra.mxu0 %v375
      %561 = vmatpush.msra.mxu0 %v374
      %562 = vmatmul.f32.gmra.mxu0 %v269
      %v563 = vpop.f32.mrf.mxu0
      %v564 = vadd.f32 %v538, %v563
      %565 = vmatmul.f32.gmra.mxu0 %v271
      %v566 = vpop.f32.mrf.mxu0
      %v567 = vadd.f32 %v541, %v566
      %568 = vmatmul.f32.gmra.mxu0 %v273
      %v569 = vpop.f32.mrf.mxu0
      %v570 = vadd.f32 %v544, %v569
      %571 = vdwg.mxu0
      %572 = vmatpush.msra.mxu0 %v405
      %573 = vmatpush.msra.mxu0 %v404
      %574 = vmatpush.msra.mxu0 %v403
      %575 = vmatpush.msra.mxu0 %v402
      %576 = vmatpush.msra.mxu0 %v401
      %577 = vmatpush.msra.mxu0 %v400
      %578 = vmatpush.msra.mxu0 %v399
      %579 = vmatpush.msra.mxu0 %v398
      %580 = vmatpush.msra.mxu0 %v397
      %581 = vmatpush.msra.mxu0 %v396
      %582 = vmatpush.msra.mxu0 %v395
      %583 = vmatpush.msra.mxu0 %v394
      %584 = vmatpush.msra.mxu0 %v393
      %585 = vmatpush.msra.mxu0 %v392
      %586 = vmatpush.msra.mxu0 %v391
      %587 = vmatpush.msra.mxu0 %v390
      %588 = vmatmul.f32.gmra.mxu0 %v280
      %v589 = vpop.f32.mrf.mxu0
      %v590 = vadd.f32 %v564, %v589
      %591 = vmatmul.f32.gmra.mxu0 %v282
      %v592 = vpop.f32.mrf.mxu0
      %v593 = vadd.f32 %v567, %v592
      %594 = vmatmul.f32.gmra.mxu0 %v284
      %v595 = vpop.f32.mrf.mxu0
      %v596 = vadd.f32 %v570, %v595
      %597 = vdwg.mxu0
      %598 = vmatpush.msra.mxu0 %v421
      %599 = vmatpush.msra.mxu0 %v420
      %600 = vmatpush.msra.mxu0 %v419
      %601 = vmatpush.msra.mxu0 %v418
      %602 = vmatpush.msra.mxu0 %v417
      %603 = vmatpush.msra.mxu0 %v416
      %604 = vmatpush.msra.mxu0 %v415
      %605 = vmatpush.msra.mxu0 %v414
      %606 = vmatpush.msra.mxu0 %v413
      %607 = vmatpush.msra.mxu0 %v412
      %608 = vmatpush.msra.mxu0 %v411
      %609 = vmatpush.msra.mxu0 %v410
      %610 = vmatpush.msra.mxu0 %v409
      %611 = vmatpush.msra.mxu0 %v408
      %612 = vmatpush.msra.mxu0 %v407
      %613 = vmatpush.msra.mxu0 %v406
      %614 = vmatmul.f32.gmra.mxu0 %v291
      %v615 = vpop.f32.mrf.mxu0
      %v616 = vadd.f32 %v590, %v615
      %617 = vmatmul.f32.gmra.mxu0 %v293
      %v618 = vpop.f32.mrf.mxu0
      %v619 = vadd.f32 %v593, %v618
      %620 = vmatmul.f32.gmra.mxu0 %v295
      %v621 = vpop.f32.mrf.mxu0
      %v622 = vadd.f32 %v596, %v621
      %623 = vdwg.mxu0
      %624 = vmatpush.msra.mxu0 %v437
      %625 = vmatpush.msra.mxu0 %v436
      %626 = vmatpush.msra.mxu0 %v435
      %627 = vmatpush.msra.mxu0 %v434
      %628 = vmatpush.msra.mxu0 %v433
      %629 = vmatpush.msra.mxu0 %v432
      %630 = vmatpush.msra.mxu0 %v431
      %631 = vmatpush.msra.mxu0 %v430
      %632 = vmatpush.msra.mxu0 %v429
      %633 = vmatpush.msra.mxu0 %v428
      %634 = vmatpush.msra.mxu0 %v427
      %635 = vmatpush.msra.mxu0 %v426
      %636 = vmatpush.msra.mxu0 %v425
      %637 = vmatpush.msra.mxu0 %v424
      %638 = vmatpush.msra.mxu0 %v423
      %639 = vmatpush.msra.mxu0 %v422
      %640 = vmatmul.f32.gmra.mxu0 %v302
      %v641 = vpop.f32.mrf.mxu0
      %v642 = vadd.f32 %v616, %v641
      %643 = vmatmul.f32.gmra.mxu0 %v304
      %v644 = vpop.f32.mrf.mxu0
      %v645 = vadd.f32 %v619, %v644
      %646 = vmatmul.f32.gmra.mxu0 %v306
      %v647 = vpop.f32.mrf.mxu0
      %v648 = vadd.f32 %v622, %v647
      %649 = vdwg.mxu0
      %v650 = vmul.f32 %v642, 0.5
      %v651 = vmul.f32 %v645, 0.5
      %v652 = vmul.f32 %v648, 0.5
      %v653 = vmul.f32 %v642, 0.70710677
      %v654 = vmul.f32 %v645, 0.70710677
      %v655 = vmul.f32 %v648, 0.70710677
      %v656 = vmul.f32 %v653, %v653
      %v657 = vmin.f32 16.0, %v656
      %v658 = vmul.f32 %v657, 2.1237322e-06
      %v659 = vadd.f32 %v658, 0.00028619796
      %v660 = vmul.f32 %v657, %v659
      %v661 = vadd.f32 %v660, 0.0036580483
      %v662 = vmul.f32 %v657, %v661
      %v663 = vadd.f32 %v662, 0.05243302
      %v664 = vmul.f32 %v657, %v663
      %v665 = vadd.f32 %v664, 0.18741608
      %v666 = vmul.f32 %v657, %v665
      %v667 = vadd.f32 %v666, 1.1283791
      %v668 = vmul.f32 %v653, %v667
      %v669 = vmul.f32 %v657, 3.8918573e-05
      %v670 = vadd.f32 %v669, 0.001143296
      %v671 = vmul.f32 %v657, %v670
      %v672 = vadd.f32 %v671, 0.014752088
      %v673 = vmul.f32 %v657, %v672
      %v674 = vadd.f32 %v673, 0.112945676
      %v675 = vmul.f32 %v657, %v674
      %v676 = vadd.f32 %v675, 0.4994258
      %v677 = vmul.f32 %v657, %v676
      %v678 = vadd.f32 %v677, 1.0
      %v679 = vrcp.pop %v678
      %v680 = vmul.f32 %v678, %v679
      %v681 = vsub.f32 1.0, %v680
      %v682 = vmul.f32 %v679, %v681
      %v683 = vadd.f32 %v679, %v682
      %vm684 = vweird.f32 %v678
      %vm685 = vweird.f32 %v679
      %vm686 = vmor %vm684, %vm685
      %v687 = vsel %vm686, %v679, %v683
      %v688 = vand.u32 2147483647, %v678
      %vm689 = vcmp.eq.f32.partialorder %v688, 8.507059e+37
      %v690 = vand.u32 %v678, 2147483648
      %v691 = vor.u32 1.1754944e-38, %v690
      %v692 = vsel %vm689, %v691, %v687
      %v693 = vmul.f32 %v668, %v692
      %v694 = vmin.f32 %v693, 1.0
      %v695 = vmax.f32 %v694, -1.0
      %v696 = vmul.f32 %v654, %v654
      %v697 = vmin.f32 16.0, %v696
      %v698 = vmul.f32 %v697, 2.1237322e-06
      %v699 = vadd.f32 %v698, 0.00028619796
      %v700 = vmul.f32 %v697, %v699
      %v701 = vadd.f32 %v700, 0.0036580483
      %v702 = vmul.f32 %v697, %v701
      %v703 = vadd.f32 %v702, 0.05243302
      %v704 = vmul.f32 %v697, %v703
      %v705 = vadd.f32 %v704, 0.18741608
      %v706 = vmul.f32 %v697, %v705
      %v707 = vadd.f32 %v706, 1.1283791
      %v708 = vmul.f32 %v654, %v707
      %v709 = vmul.f32 %v697, 3.8918573e-05
      %v710 = vadd.f32 %v709, 0.001143296
      %v711 = vmul.f32 %v697, %v710
      %v712 = vadd.f32 %v711, 0.014752088
      %v713 = vmul.f32 %v697, %v712
      %v714 = vadd.f32 %v713, 0.112945676
      %v715 = vmul.f32 %v697, %v714
      %v716 = vadd.f32 %v715, 0.4994258
      %v717 = vmul.f32 %v697, %v716
      %v718 = vadd.f32 %v717, 1.0
      %v719 = vrcp.pop %v718
      %v720 = vmul.f32 %v718, %v719
      %v721 = vsub.f32 1.0, %v720
      %v722 = vmul.f32 %v719, %v721
      %v723 = vadd.f32 %v719, %v722
      %vm724 = vweird.f32 %v718
      %vm725 = vweird.f32 %v719
      %vm726 = vmor %vm724, %vm725
      %v727 = vsel %vm726, %v719, %v723
      %v728 = vand.u32 2147483647, %v718
      %vm729 = vcmp.eq.f32.partialorder %v728, 8.507059e+37
      %v730 = vand.u32 %v718, 2147483648
      %v731 = vor.u32 1.1754944e-38, %v730
      %v732 = vsel %vm729, %v731, %v727
      %v733 = vmul.f32 %v708, %v732
      %v734 = vmin.f32 %v733, 1.0
      %v735 = vmax.f32 %v734, -1.0
      %v736 = vmul.f32 %v655, %v655
      %v737 = vmin.f32 16.0, %v736
      %v738 = vmul.f32 %v737, 2.1237322e-06
      %v739 = vadd.f32 %v738, 0.00028619796
      %v740 = vmul.f32 %v737, %v739
      %v741 = vadd.f32 %v740, 0.0036580483
      %v742 = vmul.f32 %v737, %v741
      %v743 = vadd.f32 %v742, 0.05243302
      %v744 = vmul.f32 %v737, %v743
      %v745 = vadd.f32 %v744, 0.18741608
      %v746 = vmul.f32 %v737, %v745
      %v747 = vadd.f32 %v746, 1.1283791
      %v748 = vmul.f32 %v655, %v747
      %v749 = vmul.f32 %v737, 3.8918573e-05
      %v750 = vadd.f32 %v749, 0.001143296
      %v751 = vmul.f32 %v737, %v750
      %v752 = vadd.f32 %v751, 0.014752088
      %v753 = vmul.f32 %v737, %v752
      %v754 = vadd.f32 %v753, 0.112945676
      %v755 = vmul.f32 %v737, %v754
      %v756 = vadd.f32 %v755, 0.4994258
      %v757 = vmul.f32 %v737, %v756
      %v758 = vadd.f32 %v757, 1.0
      %v759 = vrcp.pop %v758
      %v760 = vmul.f32 %v758, %v759
      %v761 = vsub.f32 1.0, %v760
      %v762 = vmul.f32 %v759, %v761
      %v763 = vadd.f32 %v759, %v762
      %vm764 = vweird.f32 %v758
      %vm765 = vweird.f32 %v759
      %vm766 = vmor %vm764, %vm765
      %v767 = vsel %vm766, %v759, %v763
      %v768 = vand.u32 2147483647, %v758
      %vm769 = vcmp.eq.f32.partialorder %v768, 8.507059e+37
      %v770 = vand.u32 %v758, 2147483648
      %v771 = vor.u32 1.1754944e-38, %v770
      %v772 = vsel %vm769, %v771, %v767
      %v773 = vmul.f32 %v748, %v772
      %v774 = vmin.f32 %v773, 1.0
      %v775 = vmax.f32 %v774, -1.0
      %v776 = vadd.f32 %v695, 1.0
      %v777 = vadd.f32 %v735, 1.0
      %v778 = vadd.f32 %v775, 1.0
      %v779 = vmul.f32 %v650, %v776
      %v780 = vmul.f32 %v651, %v777
      %v781 = vmul.f32 %v652, %v778
      %v785 = vrot.slane %v779, 4
      %v786 = vrot.slane %v780, 4
      %v787 = vsel %vm266, %v785, %v786
      %v788 = vrot.slane %v781, 4
      %v789 = vsel %vm266, %v786, %v788
      %v794 = vadd.f32 %v225, %v785
      %v795 = vadd.f32 %v226, %v787
      %v796 = vadd.f32 %v227, %v789
      %v797 = vadd.f32 %v228, %v788
      %vm798 = vcmask 1047556
      %v799 = vsel %vm798, %v794, 0.0
      %800 = vadd.xlane.f32.xlu0 %v799
      %v801 = vpop.xlane.xlu0 %800
      %802 = vadd.xlane.f32.xlu0 %v795
      %v803 = vpop.xlane.xlu0 %802
      %804 = vadd.xlane.f32.xlu0 %v796
      %v805 = vpop.xlane.xlu0 %804
      %v806 = vsel %vm266, %v797, 0.0
      %807 = vadd.xlane.f32.xlu0 %v806
      %v808 = vpop.xlane.xlu0 %807
      %v809 = vrcp.pop 128.0
      %v810 = vmul.f32 128.0, %v809
      %v811 = vsub.f32 1.0, %v810
      %v812 = vmul.f32 %v809, %v811
      %v813 = vadd.f32 %v809, %v812
      %vm814 = vweird.f32 %v809
      %v815 = vsel %vm814, %v809, %v813
      %v816 = vmul.f32 %v801, %v815
      %v817 = vmul.f32 %v803, %v815
      %v818 = vmul.f32 %v805, %v815
      %v819 = vmul.f32 %v808, %v815
      %v820 = vsub.f32 %v794, %v816
      %v821 = vsub.f32 %v795, %v817
      %v822 = vsub.f32 %v796, %v818
      %v823 = vsub.f32 %v797, %v819
      %v824 = vmul.f32 %v820, %v820
      %v825 = vmul.f32 %v821, %v821
      %v826 = vmul.f32 %v822, %v822
      %v827 = vmul.f32 %v823, %v823
      %v828 = vsel %vm798, %v824, 0.0
      %829 = vadd.xlane.f32.xlu0 %v828
      %v830 = vpop.xlane.xlu0 %829
      %831 = vadd.xlane.f32.xlu0 %v825
      %v832 = vpop.xlane.xlu0 %831
      %833 = vadd.xlane.f32.xlu0 %v826
      %v834 = vpop.xlane.xlu0 %833
      %v835 = vsel %vm266, %v827, 0.0
      %836 = vadd.xlane.f32.xlu0 %v835
      %v837 = vpop.xlane.xlu0 %836
      %v838 = vmul.f32 %v830, %v815
      %v839 = vmul.f32 %v832, %v815
      %v840 = vmul.f32 %v834, %v815
      %v841 = vmul.f32 %v837, %v815
      %v842 = vadd.f32 %v838, 1e-05
      %v843 = vadd.f32 %v839, 1e-05
      %v844 = vadd.f32 %v840, 1e-05
      %v845 = vadd.f32 %v841, 1e-05
      %v846 = vrsqrt.pop %v842
      %v847 = vmul.f32 %v846, %v842
      %v848 = vmul.f32 %v847, %v846
      %v849 = vmul.f32 0.5, %v848
      %v850 = vsub.f32 1.5, %v849
      %v851 = vmul.f32 %v846, %v850
      %vm852 = vweird.f32 %v842
      %vm853 = vweird.f32 %v846
      %vm854 = vmor %vm852, %vm853
      %v855 = vsel %vm854, %v846, %v851
      %v856 = vrsqrt.pop %v843
      %v857 = vmul.f32 %v856, %v843
      %v858 = vmul.f32 %v857, %v856
      %v859 = vmul.f32 0.5, %v858
      %v860 = vsub.f32 1.5, %v859
      %v861 = vmul.f32 %v856, %v860
      %vm862 = vweird.f32 %v843
      %vm863 = vweird.f32 %v856
      %vm864 = vmor %vm862, %vm863
      %v865 = vsel %vm864, %v856, %v861
      %v866 = vrsqrt.pop %v844
      %v867 = vmul.f32 %v866, %v844
      %v868 = vmul.f32 %v867, %v866
      %v869 = vmul.f32 0.5, %v868
      %v870 = vsub.f32 1.5, %v869
      %v871 = vmul.f32 %v866, %v870
      %vm872 = vweird.f32 %v844
      %vm873 = vweird.f32 %v866
      %vm874 = vmor %vm872, %vm873
      %v875 = vsel %vm874, %v866, %v871
      %v876 = vrsqrt.pop %v845
      %v877 = vmul.f32 %v876, %v845
      %v878 = vmul.f32 %v877, %v876
      %v879 = vmul.f32 0.5, %v878
      %v880 = vsub.f32 1.5, %v879
      %v881 = vmul.f32 %v876, %v880
      %vm882 = vweird.f32 %v845
      %vm883 = vweird.f32 %v876
      %vm884 = vmor %vm882, %vm883
      %v885 = vsel %vm884, %v876, %v881
      %v886 = vmul.f32 %v820, %v855
      %v887 = vmul.f32 %v821, %v865
      %v888 = vmul.f32 %v822, %v875
      %v889 = vmul.f32 %v823, %v885
      %v890 = vld [vmem:[%s3] sm:$0x1]
      %v892 = vperm.slane %v890, 0
      %v894 = vmul.f32 %v886, %v892
      %v895 = vmul.f32 %v887, %v892
      %v896 = vmul.f32 %v888, %v892
      %v897 = vmul.f32 %v889, %v892
      %v898 = vld [vmem:[%s4] sm:$0x1]
      %v900 = vperm.slane %v898, 0
      %v902 = vadd.f32 %v894, %v900
      %v903 = vadd.f32 %v895, %v900
      %v904 = vadd.f32 %v896, %v900
      %v905 = vadd.f32 %v897, %v900
      %906 = vst [vmem:[%s224 - $0x4] sm:$0xf0] %v902
      %907 = vst [vmem:[%s224 + $0x4] sm:$0xff] %v903
      %908 = vst [vmem:[%s224 + $0xc] sm:$0xff] %v904
      %909 = vst [vmem:[%s224 + $0x14] sm:$0xf] %v905
      %p910 = scmp.lt.s32.totalorder %s16, 1
      %s911 = scalar_select %p910, %s16, 1
      %s912 = smul.addr %s911, 3
      %s913 = smul.addr %s912, 8
      %s914 = scalar_lea.vmem %s5, %s913
      // Predicated region
      $region41: #{fairseq_wav2vec2_forward.12} parent=39 // pred_check
        %p915 = pneg %p144
      $region42: #{fairseq_wav2vec2_forward.12} parent=39 // pred_check_branch
        %917 = sbr.rel (%p915) target = $region44
      $region43: #{fairseq_wav2vec2_forward.12} parent=39 // pred_region
        _
      $region44: #{fairseq_wav2vec2_forward.12} parent=39 // pred_fallthru
        _
    $region40: #{fairseq_wav2vec2_forward.12} parent=5 // pred_fallthru
      _
    %p918 = scmp.le.s32.totalorder 2, %s11
    // Predicated region
    $region45: #{fairseq_wav2vec2_forward.12} parent=5 // pred_check
      %p919 = pneg %p918
    $region46: #{fairseq_wav2vec2_forward.12} parent=5 // pred_check_branch
      %921 = sbr.rel (%p919) target = $region48
    $region47: #{fairseq_wav2vec2_forward.12} parent=5 // pred_region
      %s922 = ssub.s32 %s11, 2
      // Predicated region
      $region49: #{fairseq_wav2vec2_forward.12} parent=47 // pred_check
        %p923 = pneg %p150
      $region50: #{fairseq_wav2vec2_forward.12} parent=47 // pred_check_branch
        %925 = sbr.rel (%p923) target = $region52
      $region51: #{fairseq_wav2vec2_forward.12} parent=47 // pred_region
        %p926 = scmp.lt.s32.totalorder %s17, 1
        %s927 = scalar_select %p926, %s17, 1
        %s928 = smul.addr %s927, 3
        %s929 = smul.addr %s928, 8
        %s930 = scalar_lea.vmem %s5, %s929
      $region52: #{fairseq_wav2vec2_forward.12} parent=47 // pred_fallthru
        _
    $region48: #{fairseq_wav2vec2_forward.12} parent=5 // pred_fallthru
      _
  $region6: #{fairseq_wav2vec2_forward.12} parent=0 // loop_footer
    %s15 = sadd.s32 1, %s11
  $region7: #{fairseq_wav2vec2_forward.12} parent=0 // loop_footer_branch
    %10 = sbr.rel target = $region3
  $region8: #{fairseq_wav2vec2_forward.12} parent=0 // loop_exit
    _

// kernel: fairseq_wav2vec2_forward.15
$region0: #{fairseq_wav2vec2_forward.15}
  #allocation0 [shape = 'u32[]', space=smem, size = 0x4, offset = 0x4, fixed_abs, tag = 'smem constant byte address 0x4 - core index']
  #allocation1 [shape = 'u32[72,128]{1,0:T(1,128)}', space=vmem, size = 0x9000, scoped, tag = 'internal scratch']
  %s0 = inlined_call_operand.vmem [shape: f32[96,128], index: 0, kind: input, shape index: {}]
  %s1 = inlined_call_operand.hbm [shape: f32[96,128], index: 1, kind: output, shape index: {}]
  %s2 = sld [smem:[#allocation0]]
  $region14: #{fairseq_wav2vec2_forward.15} parent=0
    _
  %s4 = ssub.s32 1, %s2
  %s5 = scalar_select 0, %s4, %s2
  $region1: #{fairseq_wav2vec2_forward.15} parent=0
    #allocation2 [shape = 'u8[49152]{0}', space=vmem, size = 0xc000, scoped, tag = 'output window, operand 0, single buffered']
    #allocation3 [shape = 's32[1]{0}', space=sflag, size = 0x4, scoped, tag = 'scoped memory for fairseq_wav2vec2_forward.15']
    %6 = vsyncpa [#allocation3], 0
    // Predicated region
    $region2: #{fairseq_wav2vec2_forward.15} parent=1 // pred_check
      _
    $region3: #{fairseq_wav2vec2_forward.15} parent=1 // pred_check_branch
      %8 = sbr.rel (0) target = $region5
    $region4: #{fairseq_wav2vec2_forward.15} parent=1 // pred_region
      _
    $region5: #{fairseq_wav2vec2_forward.15} parent=1 // pred_fallthru
      _
    %v9 = vld [vmem:[%s0] sm:$0xff]
    %v10 = vld [vmem:[%s0 + $0x8] sm:$0xff]
    %v11 = vld [vmem:[%s0 + $0x10] sm:$0xff]
    %v12 = vld [vmem:[%s0 + $0x18] sm:$0xff]
    %v13 = vld [vmem:[%s0 + $0x20] sm:$0xff]
    %v14 = vld [vmem:[%s0 + $0x28] sm:$0xff]
    %v15 = vld [vmem:[%s0 + $0x30] sm:$0xff]
    %v16 = vld [vmem:[%s0 + $0x38] sm:$0xff]
    %v17 = vld [vmem:[%s0 + $0x40] sm:$0xff]
    %v18 = vld [vmem:[%s0 + $0x48] sm:$0xff]
    %v19 = vld [vmem:[%s0 + $0x50] sm:$0xff]
    %v20 = vld [vmem:[%s0 + $0x58] sm:$0xff]
    %v21 = vadd.f32 %v9, %v10
    %v22 = vadd.f32 %v21, %v11
    %v23 = vadd.f32 %v22, %v12
    %v24 = vadd.f32 %v23, %v13
    %v25 = vadd.f32 %v24, %v14
    %v26 = vadd.f32 %v25, %v15
    %v27 = vadd.f32 %v26, %v16
    %v28 = vadd.f32 %v27, %v17
    %v29 = vadd.f32 %v28, %v18
    %v30 = vadd.f32 %v29, %v19
    %v31 = vadd.f32 %v30, %v20
    %32 = vadd.xlane.f32.xlu0 %v31
    %v33 = vpop.xlane.xlu0 %32
    %v34 = vrot.slane %v33, 4
    %v35 = vadd.f32 %v33, %v34
    %v36 = vrot.slane %v35, 2
    %v37 = vadd.f32 %v35, %v36
    %v38 = vrot.slane %v37, 1
    %v39 = vadd.f32 %v37, %v38
    %s40 = vtos %v39
    %v41 = vrcp.pop 12288.0
    %v42 = vmul.f32 12288.0, %v41
    %v43 = vsub.f32 1.0, %v42
    %v44 = vmul.f32 %v41, %v43
    %v45 = vadd.f32 %v41, %v44
    %vm46 = vweird.f32 %v41
    %v47 = vsel %vm46, %v41, %v45
    %s48 = vtos %v47
    %s49 = smul.f32 %s40, %s48
    %v50 = vstv %s49
    %v51 = vsub.f32 %v9, %v50
    %v52 = vsub.f32 %v10, %v50
    %v53 = vsub.f32 %v11, %v50
    %v54 = vsub.f32 %v12, %v50
    %v55 = vsub.f32 %v13, %v50
    %v56 = vsub.f32 %v14, %v50
    %v57 = vsub.f32 %v15, %v50
    %v58 = vsub.f32 %v16, %v50
    %v59 = vsub.f32 %v17, %v50
    %v60 = vsub.f32 %v18, %v50
    %v61 = vsub.f32 %v19, %v50
    %v62 = vsub.f32 %v20, %v50
    %v63 = vmul.f32 %v51, %v51
    %v64 = vmul.f32 %v52, %v52
    %v65 = vmul.f32 %v53, %v53
    %v66 = vmul.f32 %v54, %v54
    %v67 = vmul.f32 %v55, %v55
    %v68 = vmul.f32 %v56, %v56
    %v69 = vmul.f32 %v57, %v57
    %v70 = vmul.f32 %v58, %v58
    %v71 = vmul.f32 %v59, %v59
    %v72 = vmul.f32 %v60, %v60
    %v73 = vmul.f32 %v61, %v61
    %v74 = vmul.f32 %v62, %v62
    %v75 = vadd.f32 %v63, %v64
    %v76 = vadd.f32 %v75, %v65
    %v77 = vadd.f32 %v76, %v66
    %v78 = vadd.f32 %v77, %v67
    %v79 = vadd.f32 %v78, %v68
    %v80 = vadd.f32 %v79, %v69
    %v81 = vadd.f32 %v80, %v70
    %v82 = vadd.f32 %v81, %v71
    %v83 = vadd.f32 %v82, %v72
    %v84 = vadd.f32 %v83, %v73
    %v85 = vadd.f32 %v84, %v74
    %86 = vadd.xlane.f32.xlu0 %v85
    %v87 = vpop.xlane.xlu0 %86
    %v88 = vrot.slane %v87, 4
    %v89 = vadd.f32 %v87, %v88
    %v90 = vrot.slane %v89, 2
    %v91 = vadd.f32 %v89, %v90
    %v92 = vrot.slane %v91, 1
    %v93 = vadd.f32 %v91, %v92
    %s94 = vtos %v93
    %v95 = vrcp.pop 12288.0
    %v96 = vmul.f32 12288.0, %v95
    %v97 = vsub.f32 1.0, %v96
    %v98 = vmul.f32 %v95, %v97
    %v99 = vadd.f32 %v95, %v98
    %vm100 = vweird.f32 %v95
    %v101 = vsel %vm100, %v95, %v99
    %s102 = vtos %v101
    %s103 = smul.f32 %s94, %s102
    %s104 = sadd.f32 %s103, 1e-05
    %v105 = vstv %s104
    %v106 = vrsqrt.pop %v105
    %v107 = vmul.f32 %v106, %v105
    %v108 = vmul.f32 %v107, %v106
    %v109 = vmul.f32 0.5, %v108
    %v110 = vsub.f32 1.5, %v109
    %v111 = vmul.f32 %v106, %v110
    %vm112 = vweird.f32 %v105
    %vm113 = vweird.f32 %v106
    %vm114 = vmor %vm112, %vm113
    %v115 = vsel %vm114, %v106, %v111
    %s116 = vtos %v115
    %v117 = vstv %s116
    %v118 = vmul.f32 %v51, %v117
    %v119 = vmul.f32 %v52, %v117
    %v120 = vmul.f32 %v53, %v117
    %v121 = vmul.f32 %v54, %v117
    %v122 = vmul.f32 %v55, %v117
    %v123 = vmul.f32 %v56, %v117
    %v124 = vmul.f32 %v57, %v117
    %v125 = vmul.f32 %v58, %v117
    %v126 = vmul.f32 %v59, %v117
    %v127 = vmul.f32 %v60, %v117
    %v128 = vmul.f32 %v61, %v117
    %v129 = vmul.f32 %v62, %v117
    %130 = vst [vmem:[#allocation2] sm:$0xff] %v118
    %131 = vst [vmem:[#allocation2 + $0x8] sm:$0xff] %v119
    %132 = vst [vmem:[#allocation2 + $0x10] sm:$0xff] %v120
    %133 = vst [vmem:[#allocation2 + $0x18] sm:$0xff] %v121
    %134 = vst [vmem:[#allocation2 + $0x20] sm:$0xff] %v122
    %135 = vst [vmem:[#allocation2 + $0x28] sm:$0xff] %v123
    %136 = vst [vmem:[#allocation2 + $0x30] sm:$0xff] %v124
    %137 = vst [vmem:[#allocation2 + $0x38] sm:$0xff] %v125
    %138 = vst [vmem:[#allocation2 + $0x40] sm:$0xff] %v126
    %139 = vst [vmem:[#allocation2 + $0x48] sm:$0xff] %v127
    %140 = vst [vmem:[#allocation2 + $0x50] sm:$0xff] %v128
    %141 = vst [vmem:[#allocation2 + $0x58] sm:$0xff] %v129
    // Predicated region
    $region6: #{fairseq_wav2vec2_forward.15} parent=1 // pred_check
      _
    $region7: #{fairseq_wav2vec2_forward.15} parent=1 // pred_check_branch
      %143 = sbr.rel (0) target = $region9
    $region8: #{fairseq_wav2vec2_forward.15} parent=1 // pred_region
      %145 = vsyncadd [#allocation3], 0
      %s146 = sshll.u32 [#allocation2], 4
      %s147 = int_to_ptr.vmem [resolvable:$true] %s146
      %s148 = sshll.u32 %s1, 4
      %s149 = int_to_ptr.hbm [resolvable:$true] %s148
      %154 = dma.vmem_to_hbm [thread:$0]  %s147, 1536, %s149, [#allocation3], 128, 128, 8
    $region9: #{fairseq_wav2vec2_forward.15} parent=1 // pred_fallthru
      _
    // Predicated region
    $region10: #{fairseq_wav2vec2_forward.15} parent=1 // pred_check
      _
    $region11: #{fairseq_wav2vec2_forward.15} parent=1 // pred_check_branch
      %156 = sbr.rel (0) target = $region13
    $region12: #{fairseq_wav2vec2_forward.15} parent=1 // pred_region
      %158 = dma.done [#allocation3], 1536
    $region13: #{fairseq_wav2vec2_forward.15} parent=1 // pred_fallthru
      _
    %159 = vsyncpa [#allocation3], 1

// kernel: fairseq_wav2vec2_forward.13
$region0: #{fairseq_wav2vec2_forward.13}
  #allocation0 [shape = 'u32[]', space=smem, size = 0x4, offset = 0x4, fixed_abs, tag = 'smem constant byte address 0x4 - core index']
  #allocation1 [shape = 'u32[72,128]{1,0:T(1,128)}', space=vmem, size = 0x9000, scoped, tag = 'internal scratch']
  %s0 = inlined_call_operand.vmem [shape: f32[2,24,128], index: 0, kind: input, shape index: {}]
  %s1 = inlined_call_operand.vmem [shape: f32[128,384], index: 1, kind: input, shape index: {}]
  %s2 = inlined_call_operand.vmem [shape: f32[1,384], index: 2, kind: input, shape index: {}]
  %s3 = inlined_call_operand.hbm [shape: f32[128,128], index: 3, kind: input, shape index: {}]
  %s4 = inlined_call_operand.vmem [shape: f32[1,128], index: 4, kind: input, shape index: {}]
  %s5 = inlined_call_operand.vmem [shape: f32[1,128], index: 5, kind: input, shape index: {}]
  %s6 = inlined_call_operand.vmem [shape: f32[1,128], index: 6, kind: input, shape index: {}]
  %s7 = inlined_call_operand.hbm [shape: f32[128,256], index: 7, kind: input, shape index: {}]
  %s8 = inlined_call_operand.vmem [shape: f32[1,256], index: 8, kind: input, shape index: {}]
  %s9 = inlined_call_operand.hbm [shape: f32[256,128], index: 9, kind: input, shape index: {}]
  %s10 = inlined_call_operand.vmem [shape: f32[1,128], index: 10, kind: input, shape index: {}]
  %s11 = inlined_call_operand.vmem [shape: f32[1,128], index: 11, kind: input, shape index: {}]
  %s12 = inlined_call_operand.vmem [shape: f32[1,128], index: 12, kind: input, shape index: {}]
  %s13 = inlined_call_operand.vmem [shape: f32[2,24,128], index: 13, kind: output, shape index: {}]
  %s14 = sld [smem:[#allocation0]]
  $region97: #{fairseq_wav2vec2_forward.13} parent=0
    _
  %s16 = ssub.s32 1, %s14
  %s17 = scalar_select 0, %s16, %s14
  $region1: #{fairseq_wav2vec2_forward.13} parent=0
    #allocation2 [shape = 'u8[65536]{0}', space=vmem, size = 0x10000, scoped, tag = 'input window, operand 3, single buffered']
    #allocation3 [shape = 's32[2]{0}', space=sflag, size = 0x8, scoped, tag = 'scoped memory for fairseq_wav2vec2_forward.13']
    #allocation4 [shape = 'u8[131072]{0}', space=vmem, size = 0x20000, scoped, tag = 'input window, operand 7, single buffered']
    #allocation5 [shape = 's32[1]{0}', space=sflag, size = 0x4, scoped, tag = 'scoped memory for fairseq_wav2vec2_forward.13']
    #allocation6 [shape = 'u8[131072]{0}', space=vmem, size = 0x20000, scoped, tag = 'input window, operand 9, single buffered']
    %18 = vsyncpa [#allocation3], 0
    %19 = vsyncpa [#allocation5], 0
    loop: start=0, step=1, limit=4
    $region2: #{fairseq_wav2vec2_forward.13} parent=1 // loop_pre_header
      _
    $region3: #{fairseq_wav2vec2_forward.13} parent=1 // loop_header
      %s21 = sphi 0, %s25
      %p22 = scmp.ge.s32.totalorder %s21, 4
      %s31 = sphi 0, %s33
      %s34 = sphi 0, %s31
      %s35 = sphi 0, %s34
      %s51 = sphi 0, %s35
      %s55 = sphi 0, %s55
      %s57 = sphi 0, %s55
      %s58 = sphi 0, %s57
      %s72 = sphi 0, %s58
      %s76 = sphi 0, %s76
      %s78 = sphi 0, %s76
      %s79 = sphi 0, %s78
      %s93 = sphi 0, %s79
      %s97 = sphi 0, %s97
      %s99 = sphi 0, %s97
      %s100 = sphi 0, %s99
      %s114 = sphi 0, %s100
      %s118 = sphi 0, %s118
      %s120 = sphi 0, %s118
      %s121 = sphi 0, %s120
      %s135 = sphi 0, %s121
      %s139 = sphi 0, %s139
      %s141 = sphi 0, %s139
      %s142 = sphi 0, %s141
      %s156 = sphi 0, %s142
      %s160 = sphi 0, %s160
      %s162 = sphi 0, %s160
      %s163 = sphi 0, %s162
      %s177 = sphi 0, %s163
      %s181 = sphi 0, %s181
      %s183 = sphi 0, %s181
      %s184 = sphi 0, %s183
      %s198 = sphi 0, %s184
      %s202 = sphi 0, %s202
      %s204 = sphi 0, %s202
      %s205 = sphi 0, %s204
      %s219 = sphi 0, %s205
      %s223 = sphi 0, %s223
      %s225 = sphi 0, %s223
      %s226 = sphi 0, %s225
      %s240 = sphi 0, %s226
      %s244 = sphi 0, %s244
      %s246 = sphi 0, %s244
      %s247 = sphi 0, %s246
      %s261 = sphi 0, %s247
      %s265 = sphi 0, %s265
      %s267 = sphi 0, %s265
      %s268 = sphi 0, %s267
      %s282 = sphi 0, %s268
      %s286 = sphi 0, %s286
      %s288 = sphi 0, %s286
      %s289 = sphi 0, %s288
      %s303 = sphi 0, %s289
      %s309 = sphi 0, %s311
      %s312 = sphi 0, %s309
      %s313 = sphi 0, %s312
      %s329 = sphi 0, %s313
    $region4: #{fairseq_wav2vec2_forward.13} parent=1 // loop_header_branch
      %24 = sbr.rel (%p22) target = $region8
    $region5: #{fairseq_wav2vec2_forward.13} parent=1 // loop_body
      %s26 = ssub.s32 %s21, 1
      %s27 = ssub.s32 %s21, 2
      %s28 = sadd.s32 %s21, 1
      %s29 = ssub.s32 %s21, %s28
      %p30 = scmp.eq.s32.totalorder %s29, 0
      %s32 = sadd.s32 %s31, 1
      %s33 = scalar_select %p30, %s31, %s32
      %p36 = pneg %p30
      %p37 = scmp.eq.s32.totalorder %s21, 1
      %p38 = por %p36, %p37
      %p39 = scmp.ne.s32.totalorder %s31, %s34
      %p40 = scmp.eq.s32.totalorder %s21, 0
      %p41 = por %p39, %p40
      %p42 = scmp.ne.s32.totalorder %s31, %s34
      %p43 = scmp.eq.s32.totalorder %s26, 1
      %p44 = por %p42, %p43
      %p45 = scmp.ne.s32.totalorder %s34, %s35
      %p46 = scmp.eq.s32.totalorder %s26, 0
      %p47 = por %p45, %p46
      %p48 = scmp.ne.s32.totalorder %s34, %s35
      %p49 = scmp.eq.s32.totalorder %s27, 1
      %p50 = por %p48, %p49
      %p52 = scmp.ne.s32.totalorder %s35, %s51
      %p53 = scmp.eq.s32.totalorder %s27, 0
      %p54 = por %p52, %p53
      %s56 = sadd.s32 %s55, 1
      %p59 = scmp.eq.s32.totalorder %s21, 1
      %p60 = scmp.ne.s32.totalorder %s55, %s57
      %p61 = scmp.eq.s32.totalorder %s21, 0
      %p62 = por %p60, %p61
      %p63 = scmp.ne.s32.totalorder %s55, %s57
      %p64 = scmp.eq.s32.totalorder %s26, 1
      %p65 = por %p63, %p64
      %p66 = scmp.ne.s32.totalorder %s57, %s58
      %p67 = scmp.eq.s32.totalorder %s26, 0
      %p68 = por %p66, %p67
      %p69 = scmp.ne.s32.totalorder %s57, %s58
      %p70 = scmp.eq.s32.totalorder %s27, 1
      %p71 = por %p69, %p70
      %p73 = scmp.ne.s32.totalorder %s58, %s72
      %p74 = scmp.eq.s32.totalorder %s27, 0
      %p75 = por %p73, %p74
      %s77 = sadd.s32 %s76, 1
      %p80 = scmp.eq.s32.totalorder %s21, 1
      %p81 = scmp.ne.s32.totalorder %s76, %s78
      %p82 = scmp.eq.s32.totalorder %s21, 0
      %p83 = por %p81, %p82
      %p84 = scmp.ne.s32.totalorder %s76, %s78
      %p85 = scmp.eq.s32.totalorder %s26, 1
      %p86 = por %p84, %p85
      %p87 = scmp.ne.s32.totalorder %s78, %s79
      %p88 = scmp.eq.s32.totalorder %s26, 0
      %p89 = por %p87, %p88
      %p90 = scmp.ne.s32.totalorder %s78, %s79
      %p91 = scmp.eq.s32.totalorder %s27, 1
      %p92 = por %p90, %p91
      %p94 = scmp.ne.s32.totalorder %s79, %s93
      %p95 = scmp.eq.s32.totalorder %s27, 0
      %p96 = por %p94, %p95
      %s98 = sadd.s32 %s97, 1
      %p101 = scmp.eq.s32.totalorder %s21, 1
      %p102 = scmp.ne.s32.totalorder %s97, %s99
      %p103 = scmp.eq.s32.totalorder %s21, 0
      %p104 = por %p102, %p103
      %p105 = scmp.ne.s32.totalorder %s97, %s99
      %p106 = scmp.eq.s32.totalorder %s26, 1
      %p107 = por %p105, %p106
      %p108 = scmp.ne.s32.totalorder %s99, %s100
      %p109 = scmp.eq.s32.totalorder %s26, 0
      %p110 = por %p108, %p109
      %p111 = scmp.ne.s32.totalorder %s99, %s100
      %p112 = scmp.eq.s32.totalorder %s27, 1
      %p113 = por %p111, %p112
      %p115 = scmp.ne.s32.totalorder %s100, %s114
      %p116 = scmp.eq.s32.totalorder %s27, 0
      %p117 = por %p115, %p116
      %s119 = sadd.s32 %s118, 1
      %p122 = scmp.eq.s32.totalorder %s21, 1
      %p123 = scmp.ne.s32.totalorder %s118, %s120
      %p124 = scmp.eq.s32.totalorder %s21, 0
      %p125 = por %p123, %p124
      %p126 = scmp.ne.s32.totalorder %s118, %s120
      %p127 = scmp.eq.s32.totalorder %s26, 1
      %p128 = por %p126, %p127
      %p129 = scmp.ne.s32.totalorder %s120, %s121
      %p130 = scmp.eq.s32.totalorder %s26, 0
      %p131 = por %p129, %p130
      %p132 = scmp.ne.s32.totalorder %s120, %s121
      %p133 = scmp.eq.s32.totalorder %s27, 1
      %p134 = por %p132, %p133
      %p136 = scmp.ne.s32.totalorder %s121, %s135
      %p137 = scmp.eq.s32.totalorder %s27, 0
      %p138 = por %p136, %p137
      %s140 = sadd.s32 %s139, 1
      %p143 = scmp.eq.s32.totalorder %s21, 1
      %p144 = scmp.ne.s32.totalorder %s139, %s141
      %p145 = scmp.eq.s32.totalorder %s21, 0
      %p146 = por %p144, %p145
      %p147 = scmp.ne.s32.totalorder %s139, %s141
      %p148 = scmp.eq.s32.totalorder %s26, 1
      %p149 = por %p147, %p148
      %p150 = scmp.ne.s32.totalorder %s141, %s142
      %p151 = scmp.eq.s32.totalorder %s26, 0
      %p152 = por %p150, %p151
      %p153 = scmp.ne.s32.totalorder %s141, %s142
      %p154 = scmp.eq.s32.totalorder %s27, 1
      %p155 = por %p153, %p154
      %p157 = scmp.ne.s32.totalorder %s142, %s156
      %p158 = scmp.eq.s32.totalorder %s27, 0
      %p159 = por %p157, %p158
      %s161 = sadd.s32 %s160, 1
      %p164 = scmp.eq.s32.totalorder %s21, 1
      %p165 = scmp.ne.s32.totalorder %s160, %s162
      %p166 = scmp.eq.s32.totalorder %s21, 0
      %p167 = por %p165, %p166
      %p168 = scmp.ne.s32.totalorder %s160, %s162
      %p169 = scmp.eq.s32.totalorder %s26, 1
      %p170 = por %p168, %p169
      %p171 = scmp.ne.s32.totalorder %s162, %s163
      %p172 = scmp.eq.s32.totalorder %s26, 0
      %p173 = por %p171, %p172
      %p174 = scmp.ne.s32.totalorder %s162, %s163
      %p175 = scmp.eq.s32.totalorder %s27, 1
      %p176 = por %p174, %p175
      %p178 = scmp.ne.s32.totalorder %s163, %s177
      %p179 = scmp.eq.s32.totalorder %s27, 0
      %p180 = por %p178, %p179
      %s182 = sadd.s32 %s181, 1
      %p185 = scmp.eq.s32.totalorder %s21, 1
      %p186 = scmp.ne.s32.totalorder %s181, %s183
      %p187 = scmp.eq.s32.totalorder %s21, 0
      %p188 = por %p186, %p187
      %p189 = scmp.ne.s32.totalorder %s181, %s183
      %p190 = scmp.eq.s32.totalorder %s26, 1
      %p191 = por %p189, %p190
      %p192 = scmp.ne.s32.totalorder %s183, %s184
      %p193 = scmp.eq.s32.totalorder %s26, 0
      %p194 = por %p192, %p193
      %p195 = scmp.ne.s32.totalorder %s183, %s184
      %p196 = scmp.eq.s32.totalorder %s27, 1
      %p197 = por %p195, %p196
      %p199 = scmp.ne.s32.totalorder %s184, %s198
      %p200 = scmp.eq.s32.totalorder %s27, 0
      %p201 = por %p199, %p200
      %s203 = sadd.s32 %s202, 1
      %p206 = scmp.eq.s32.totalorder %s21, 1
      %p207 = scmp.ne.s32.totalorder %s202, %s204
      %p208 = scmp.eq.s32.totalorder %s21, 0
      %p209 = por %p207, %p208
      %p210 = scmp.ne.s32.totalorder %s202, %s204
      %p211 = scmp.eq.s32.totalorder %s26, 1
      %p212 = por %p210, %p211
      %p213 = scmp.ne.s32.totalorder %s204, %s205
      %p214 = scmp.eq.s32.totalorder %s26, 0
      %p215 = por %p213, %p214
      %p216 = scmp.ne.s32.totalorder %s204, %s205
      %p217 = scmp.eq.s32.totalorder %s27, 1
      %p218 = por %p216, %p217
      %p220 = scmp.ne.s32.totalorder %s205, %s219
      %p221 = scmp.eq.s32.totalorder %s27, 0
      %p222 = por %p220, %p221
      %s224 = sadd.s32 %s223, 1
      %p227 = scmp.eq.s32.totalorder %s21, 1
      %p228 = scmp.ne.s32.totalorder %s223, %s225
      %p229 = scmp.eq.s32.totalorder %s21, 0
      %p230 = por %p228, %p229
      %p231 = scmp.ne.s32.totalorder %s223, %s225
      %p232 = scmp.eq.s32.totalorder %s26, 1
      %p233 = por %p231, %p232
      %p234 = scmp.ne.s32.totalorder %s225, %s226
      %p235 = scmp.eq.s32.totalorder %s26, 0
      %p236 = por %p234, %p235
      %p237 = scmp.ne.s32.totalorder %s225, %s226
      %p238 = scmp.eq.s32.totalorder %s27, 1
      %p239 = por %p237, %p238
      %p241 = scmp.ne.s32.totalorder %s226, %s240
      %p242 = scmp.eq.s32.totalorder %s27, 0
      %p243 = por %p241, %p242
      %s245 = sadd.s32 %s244, 1
      %p248 = scmp.eq.s32.totalorder %s21, 1
      %p249 = scmp.ne.s32.totalorder %s244, %s246
      %p250 = scmp.eq.s32.totalorder %s21, 0
      %p251 = por %p249, %p250
      %p252 = scmp.ne.s32.totalorder %s244, %s246
      %p253 = scmp.eq.s32.totalorder %s26, 1
      %p254 = por %p252, %p253
      %p255 = scmp.ne.s32.totalorder %s246, %s247
      %p256 = scmp.eq.s32.totalorder %s26, 0
      %p257 = por %p255, %p256
      %p258 = scmp.ne.s32.totalorder %s246, %s247
      %p259 = scmp.eq.s32.totalorder %s27, 1
      %p260 = por %p258, %p259
      %p262 = scmp.ne.s32.totalorder %s247, %s261
      %p263 = scmp.eq.s32.totalorder %s27, 0
      %p264 = por %p262, %p263
      %s266 = sadd.s32 %s265, 1
      %p269 = scmp.eq.s32.totalorder %s21, 1
      %p270 = scmp.ne.s32.totalorder %s265, %s267
      %p271 = scmp.eq.s32.totalorder %s21, 0
      %p272 = por %p270, %p271
      %p273 = scmp.ne.s32.totalorder %s265, %s267
      %p274 = scmp.eq.s32.totalorder %s26, 1
      %p275 = por %p273, %p274
      %p276 = scmp.ne.s32.totalorder %s267, %s268
      %p277 = scmp.eq.s32.totalorder %s26, 0
      %p278 = por %p276, %p277
      %p279 = scmp.ne.s32.totalorder %s267, %s268
      %p280 = scmp.eq.s32.totalorder %s27, 1
      %p281 = por %p279, %p280
      %p283 = scmp.ne.s32.totalorder %s268, %s282
      %p284 = scmp.eq.s32.totalorder %s27, 0
      %p285 = por %p283, %p284
      %s287 = sadd.s32 %s286, 1
      %p290 = scmp.eq.s32.totalorder %s21, 1
      %p291 = scmp.ne.s32.totalorder %s286, %s288
      %p292 = scmp.eq.s32.totalorder %s21, 0
      %p293 = por %p291, %p292
      %p294 = scmp.ne.s32.totalorder %s286, %s288
      %p295 = scmp.eq.s32.totalorder %s26, 1
      %p296 = por %p294, %p295
      %p297 = scmp.ne.s32.totalorder %s288, %s289
      %p298 = scmp.eq.s32.totalorder %s26, 0
      %p299 = por %p297, %p298
      %p300 = scmp.ne.s32.totalorder %s288, %s289
      %p301 = scmp.eq.s32.totalorder %s27, 1
      %p302 = por %p300, %p301
      %p304 = scmp.ne.s32.totalorder %s289, %s303
      %p305 = scmp.eq.s32.totalorder %s27, 0
      %p306 = por %p304, %p305
      %s307 = ssub.s32 %s21, %s28
      %p308 = scmp.eq.s32.totalorder %s307, 0
      %s310 = sadd.s32 %s309, 1
      %s311 = scalar_select %p308, %s309, %s310
      %p314 = pneg %p308
      %p315 = scmp.eq.s32.totalorder %s21, 1
      %p316 = por %p314, %p315
      %p317 = scmp.ne.s32.totalorder %s309, %s312
      %p318 = scmp.eq.s32.totalorder %s21, 0
      %p319 = por %p317, %p318
      %p320 = scmp.ne.s32.totalorder %s309, %s312
      %p321 = scmp.eq.s32.totalorder %s26, 1
      %p322 = por %p320, %p321
      %p323 = scmp.ne.s32.totalorder %s312, %s313
      %p324 = scmp.eq.s32.totalorder %s26, 0
      %p325 = por %p323, %p324
      %p326 = scmp.ne.s32.totalorder %s312, %s313
      %p327 = scmp.eq.s32.totalorder %s27, 1
      %p328 = por %p326, %p327
      %p330 = scmp.ne.s32.totalorder %s313, %s329
      %p331 = scmp.eq.s32.totalorder %s27, 0
      %p332 = por %p330, %p331
      %p333 = scmp.le.s32.totalorder 1, %s21
      %p334 = scmp.lt.s32.totalorder %s21, 3
      %p335 = pnand %p333, %p334
      %p336 = pneg %p335
      // Predicated region
      $region9: #{fairseq_wav2vec2_forward.13} parent=5 // pred_check
        _
      $region10: #{fairseq_wav2vec2_forward.13} parent=5 // pred_check_branch
        %338 = sbr.rel (%p335) target = $region12
      $region11: #{fairseq_wav2vec2_forward.13} parent=5 // pred_region
        %s339 = ssub.s32 %s21, 1
        // Predicated region
        $region13: #{fairseq_wav2vec2_forward.13} parent=11 // pred_check
          %p340 = pneg %p68
        $region14: #{fairseq_wav2vec2_forward.13} parent=11 // pred_check_branch
          %342 = sbr.rel (%p340) target = $region16
        $region15: #{fairseq_wav2vec2_forward.13} parent=11 // pred_region
          _
        $region16: #{fairseq_wav2vec2_forward.13} parent=11 // pred_fallthru
          _
        // Predicated region
        $region17: #{fairseq_wav2vec2_forward.13} parent=11 // pred_check
          %p343 = pneg %p89
        $region18: #{fairseq_wav2vec2_forward.13} parent=11 // pred_check_branch
          %345 = sbr.rel (%p343) target = $region20
        $region19: #{fairseq_wav2vec2_forward.13} parent=11 // pred_region
          _
        $region20: #{fairseq_wav2vec2_forward.13} parent=11 // pred_fallthru
          _
        // Predicated region
        $region21: #{fairseq_wav2vec2_forward.13} parent=11 // pred_check
          %p346 = pneg %p110
        $region22: #{fairseq_wav2vec2_forward.13} parent=11 // pred_check_branch
          %348 = sbr.rel (%p346) target = $region24
        $region23: #{fairseq_wav2vec2_forward.13} parent=11 // pred_region
          %350 = vsyncadd [#allocation3], 0
          %s351 = sshll.u32 %s3, 4
          %s352 = int_to_ptr.hbm [resolvable:$true] %s351
          %s353 = sshll.u32 [#allocation2], 4
          %s354 = int_to_ptr.vmem [resolvable:$true] %s353
          %359 = dma.hbm_to_vmem [thread:$0]  %s352, 2048, %s354, [#allocation3], 128, 128, 8
        $region24: #{fairseq_wav2vec2_forward.13} parent=11 // pred_fallthru
          _
        // Predicated region
        $region25: #{fairseq_wav2vec2_forward.13} parent=11 // pred_check
          %p360 = pneg %p131
        $region26: #{fairseq_wav2vec2_forward.13} parent=11 // pred_check_branch
          %362 = sbr.rel (%p360) target = $region28
        $region27: #{fairseq_wav2vec2_forward.13} parent=11 // pred_region
          _
        $region28: #{fairseq_wav2vec2_forward.13} parent=11 // pred_fallthru
          _
        // Predicated region
        $region29: #{fairseq_wav2vec2_forward.13} parent=11 // pred_check
          %p363 = pneg %p152
        $region30: #{fairseq_wav2vec2_forward.13} parent=11 // pred_check_branch
          %365 = sbr.rel (%p363) target = $region32
        $region31: #{fairseq_wav2vec2_forward.13} parent=11 // pred_region
          _
        $region32: #{fairseq_wav2vec2_forward.13} parent=11 // pred_fallthru
          _
        // Predicated region
        $region33: #{fairseq_wav2vec2_forward.13} parent=11 // pred_check
          %p366 = pneg %p173
        $region34: #{fairseq_wav2vec2_forward.13} parent=11 // pred_check_branch
          %368 = sbr.rel (%p366) target = $region36
        $region35: #{fairseq_wav2vec2_forward.13} parent=11 // pred_region
          _
        $region36: #{fairseq_wav2vec2_forward.13} parent=11 // pred_fallthru
          _
        // Predicated region
        $region37: #{fairseq_wav2vec2_forward.13} parent=11 // pred_check
          %p369 = pneg %p194
        $region38: #{fairseq_wav2vec2_forward.13} parent=11 // pred_check_branch
          %371 = sbr.rel (%p369) target = $region40
        $region39: #{fairseq_wav2vec2_forward.13} parent=11 // pred_region
          %373 = vsyncadd [#allocation5], 0
          %s374 = sshll.u32 %s7, 4
          %s375 = int_to_ptr.hbm [resolvable:$true] %s374
          %s376 = sshll.u32 [#allocation4], 4
          %s377 = int_to_ptr.vmem [resolvable:$true] %s376
          %382 = dma.hbm_to_vmem [thread:$0]  %s375, 4096, %s377, [#allocation5], 256, 256, 16
        $region40: #{fairseq_wav2vec2_forward.13} parent=11 // pred_fallthru
          _
        // Predicated region
        $region41: #{fairseq_wav2vec2_forward.13} parent=11 // pred_check
          %p383 = pneg %p215
        $region42: #{fairseq_wav2vec2_forward.13} parent=11 // pred_check_branch
          %385 = sbr.rel (%p383) target = $region44
        $region43: #{fairseq_wav2vec2_forward.13} parent=11 // pred_region
          _
        $region44: #{fairseq_wav2vec2_forward.13} parent=11 // pred_fallthru
          _
        // Predicated region
        $region45: #{fairseq_wav2vec2_forward.13} parent=11 // pred_check
          %p386 = pneg %p236
        $region46: #{fairseq_wav2vec2_forward.13} parent=11 // pred_check_branch
          %388 = sbr.rel (%p386) target = $region48
        $region47: #{fairseq_wav2vec2_forward.13} parent=11 // pred_region
          %390 = vsyncadd [#allocation5], 0
          %s391 = sshll.u32 %s9, 4
          %s392 = int_to_ptr.hbm [resolvable:$true] %s391
          %s393 = sshll.u32 [#allocation6], 4
          %s394 = int_to_ptr.vmem [resolvable:$true] %s393
          %399 = dma.hbm_to_vmem [thread:$0]  %s392, 4096, %s394, [#allocation5], 128, 128, 8
        $region48: #{fairseq_wav2vec2_forward.13} parent=11 // pred_fallthru
          _
        // Predicated region
        $region49: #{fairseq_wav2vec2_forward.13} parent=11 // pred_check
          %p400 = pneg %p257
        $region50: #{fairseq_wav2vec2_forward.13} parent=11 // pred_check_branch
          %402 = sbr.rel (%p400) target = $region52
        $region51: #{fairseq_wav2vec2_forward.13} parent=11 // pred_region
          _
        $region52: #{fairseq_wav2vec2_forward.13} parent=11 // pred_fallthru
          _
        // Predicated region
        $region53: #{fairseq_wav2vec2_forward.13} parent=11 // pred_check
          %p403 = pneg %p278
        $region54: #{fairseq_wav2vec2_forward.13} parent=11 // pred_check_branch
          %405 = sbr.rel (%p403) target = $region56
        $region55: #{fairseq_wav2vec2_forward.13} parent=11 // pred_region
          _
        $region56: #{fairseq_wav2vec2_forward.13} parent=11 // pred_fallthru
          _
        // Predicated region
        $region57: #{fairseq_wav2vec2_forward.13} parent=11 // pred_check
          %p406 = pneg %p299
        $region58: #{fairseq_wav2vec2_forward.13} parent=11 // pred_check_branch
          %408 = sbr.rel (%p406) target = $region60
        $region59: #{fairseq_wav2vec2_forward.13} parent=11 // pred_region
          _
        $region60: #{fairseq_wav2vec2_forward.13} parent=11 // pred_fallthru
          _
      $region12: #{fairseq_wav2vec2_forward.13} parent=5 // pred_fallthru
        _
      %p409 = scmp.lt.s32.totalorder %s21, 2
      // Predicated region
      $region61: #{fairseq_wav2vec2_forward.13} parent=5 // pred_check
        %p410 = pneg %p409
      $region62: #{fairseq_wav2vec2_forward.13} parent=5 // pred_check_branch
        %412 = sbr.rel (%p410) target = $region64
      $region63: #{fairseq_wav2vec2_forward.13} parent=5 // pred_region
        // Predicated region
        $region65: #{fairseq_wav2vec2_forward.13} parent=63 // pred_check
          %p413 = pneg %p41
        $region66: #{fairseq_wav2vec2_forward.13} parent=63 // pred_check_branch
          %415 = sbr.rel (%p413) target = $region68
        $region67: #{fairseq_wav2vec2_forward.13} parent=63 // pred_region
          %p416 = scmp.lt.s32.totalorder %s21, 1
          %s417 = scalar_select %p416, %s21, 1
          %s418 = smul.addr %s417, 3
          %s419 = smul.addr %s418, 8
          %s420 = scalar_lea.vmem %s0, %s419
        $region68: #{fairseq_wav2vec2_forward.13} parent=63 // pred_fallthru
          _
      $region64: #{fairseq_wav2vec2_forward.13} parent=5 // pred_fallthru
        _
      %p421 = scmp.le.s32.totalorder 1, %s21
      %p422 = scmp.lt.s32.totalorder %s21, 3
      %p423 = pnand %p421, %p422
      %p424 = pneg %p423
      // Predicated region
      $region69: #{fairseq_wav2vec2_forward.13} parent=5 // pred_check
        _
      $region70: #{fairseq_wav2vec2_forward.13} parent=5 // pred_check_branch
        %426 = sbr.rel (%p423) target = $region72
      $region71: #{fairseq_wav2vec2_forward.13} parent=5 // pred_region
        %s427 = ssub.s32 %s21, 1
        // Predicated region
        $region73: #{fairseq_wav2vec2_forward.13} parent=71 // pred_check
          %p428 = pneg %p110
        $region74: #{fairseq_wav2vec2_forward.13} parent=71 // pred_check_branch
          %430 = sbr.rel (%p428) target = $region76
        $region75: #{fairseq_wav2vec2_forward.13} parent=71 // pred_region
          %432 = dma.done [#allocation3], 2048
        $region76: #{fairseq_wav2vec2_forward.13} parent=71 // pred_fallthru
          _
        // Predicated region
        $region77: #{fairseq_wav2vec2_forward.13} parent=71 // pred_check
          %p433 = pneg %p194
        $region78: #{fairseq_wav2vec2_forward.13} parent=71 // pred_check_branch
          %435 = sbr.rel (%p433) target = $region80
        $region79: #{fairseq_wav2vec2_forward.13} parent=71 // pred_region
          %437 = dma.done [#allocation5], 4096
        $region80: #{fairseq_wav2vec2_forward.13} parent=71 // pred_fallthru
          _
        // Predicated region
        $region81: #{fairseq_wav2vec2_forward.13} parent=71 // pred_check
          %p438 = pneg %p236
        $region82: #{fairseq_wav2vec2_forward.13} parent=71 // pred_check_branch
          %440 = sbr.rel (%p438) target = $region84
        $region83: #{fairseq_wav2vec2_forward.13} parent=71 // pred_region
          %442 = dma.done [#allocation5], 4096
        $region84: #{fairseq_wav2vec2_forward.13} parent=71 // pred_fallthru
          _
        %p443 = scmp.lt.s32.totalorder %s26, 1
        %s444 = scalar_select %p443, %s26, 1
        %s445 = smul.addr %s444, 3
        %s446 = smul.addr %s445, 8
        %s447 = scalar_lea.vmem %s0, %s446
        %p448 = pneg %p47
        %p449 = pneg %p44
        %p450 = pneg %p68
        %p451 = pneg %p65
        %p452 = pneg %p89
        %p453 = pneg %p86
        %p454 = pneg %p110
        %p455 = pneg %p107
        %p456 = pneg %p131
        %p457 = pneg %p128
        %p458 = pneg %p152
        %p459 = pneg %p149
        %p460 = pneg %p173
        %p461 = pneg %p170
        %p462 = pneg %p194
        %p463 = pneg %p191
        %p464 = pneg %p215
        %p465 = pneg %p212
        %p466 = pneg %p236
        %p467 = pneg %p233
        %p468 = pneg %p257
        %p469 = pneg %p254
        %p470 = pneg %p278
        %p471 = pneg %p275
        %p472 = pneg %p299
        %p473 = pneg %p296
        %p474 = pneg %p325
        %p475 = pneg %p322
        %p476 = scmp.lt.s32.totalorder %s26, 1
        %s477 = scalar_select %p476, %s26, 1
        %s478 = smul.addr %s477, 3
        %s479 = smul.addr %s478, 8
        %s480 = scalar_lea.vmem %s13, %s479
        %p481 = scmp.lt.s32.totalorder %s26, 1
        %s482 = scalar_select %p481, %s26, 1
        %s483 = smul.addr %s482, 3
        %s484 = smul.addr %s483, 8
        %s485 = scalar_lea.vmem %s0, %s484
        %p486 = scmp.lt.s32.totalorder %s26, 1
        %s487 = scalar_select %p486, %s26, 1
        %s488 = smul.addr %s487, 3
        %s489 = smul.addr %s488, 8
        %s490 = scalar_lea.vmem %s13, %s489
        %v491 = vld [vmem:[%s485] sm:$0xff]
        %v492 = vld [vmem:[%s485 + $0x8] sm:$0xff]
        %v493 = vld [vmem:[%s485 + $0x10] sm:$0xff]
        %v494 = vld [vmem:[%s1] sm:$0xff]
        %v495 = vld [vmem:[%s1 + $0x8] sm:$0xff]
        %v496 = vld [vmem:[%s1 + $0x10] sm:$0xff]
        %v497 = vld [vmem:[%s1 + $0x18] sm:$0xff]
        %v498 = vld [vmem:[%s1 + $0x20] sm:$0xff]
        %v499 = vld [vmem:[%s1 + $0x28] sm:$0xff]
        %v500 = vld [vmem:[%s1 + $0x30] sm:$0xff]
        %v501 = vld [vmem:[%s1 + $0x38] sm:$0xff]
        %v502 = vld [vmem:[%s1 + $0x40] sm:$0xff]
        %v503 = vld [vmem:[%s1 + $0x48] sm:$0xff]
        %v504 = vld [vmem:[%s1 + $0x50] sm:$0xff]
        %v505 = vld [vmem:[%s1 + $0x58] sm:$0xff]
        %v506 = vld [vmem:[%s1 + $0x60] sm:$0xff]
        %v507 = vld [vmem:[%s1 + $0x68] sm:$0xff]
        %v508 = vld [vmem:[%s1 + $0x70] sm:$0xff]
        %v509 = vld [vmem:[%s1 + $0x78] sm:$0xff]
        %v510 = vld [vmem:[%s1 + $0x80] sm:$0xff]
        %v511 = vld [vmem:[%s1 + $0x88] sm:$0xff]
        %v512 = vld [vmem:[%s1 + $0x90] sm:$0xff]
        %v513 = vld [vmem:[%s1 + $0x98] sm:$0xff]
        %v514 = vld [vmem:[%s1 + $0xa0] sm:$0xff]
        %v515 = vld [vmem:[%s1 + $0xa8] sm:$0xff]
        %v516 = vld [vmem:[%s1 + $0xb0] sm:$0xff]
        %v517 = vld [vmem:[%s1 + $0xb8] sm:$0xff]
        %v518 = vld [vmem:[%s1 + $0xc0] sm:$0xff]
        %v519 = vld [vmem:[%s1 + $0xc8] sm:$0xff]
        %v520 = vld [vmem:[%s1 + $0xd0] sm:$0xff]
        %v521 = vld [vmem:[%s1 + $0xd8] sm:$0xff]
        %v522 = vld [vmem:[%s1 + $0xe0] sm:$0xff]
        %v523 = vld [vmem:[%s1 + $0xe8] sm:$0xff]
        %v524 = vld [vmem:[%s1 + $0xf0] sm:$0xff]
        %v525 = vld [vmem:[%s1 + $0xf8] sm:$0xff]
        %v526 = vld [vmem:[%s1 + $0x100] sm:$0xff]
        %v527 = vld [vmem:[%s1 + $0x108] sm:$0xff]
        %v528 = vld [vmem:[%s1 + $0x110] sm:$0xff]
        %v529 = vld [vmem:[%s1 + $0x118] sm:$0xff]
        %v530 = vld [vmem:[%s1 + $0x120] sm:$0xff]
        %v531 = vld [vmem:[%s1 + $0x128] sm:$0xff]
        %v532 = vld [vmem:[%s1 + $0x130] sm:$0xff]
        %v533 = vld [vmem:[%s1 + $0x138] sm:$0xff]
        %v534 = vld [vmem:[%s1 + $0x140] sm:$0xff]
        %v535 = vld [vmem:[%s1 + $0x148] sm:$0xff]
        %v536 = vld [vmem:[%s1 + $0x150] sm:$0xff]
        %v537 = vld [vmem:[%s1 + $0x158] sm:$0xff]
        %v538 = vld [vmem:[%s1 + $0x160] sm:$0xff]
        %v539 = vld [vmem:[%s1 + $0x168] sm:$0xff]
        %v540 = vld [vmem:[%s1 + $0x170] sm:$0xff]
        %v541 = vld [vmem:[%s1 + $0x178] sm:$0xff]
        %v542 = vld [vmem:[%s2] sm:$0x7]
        %v544 = vperm.slane %v542, 0
        %v545 = vperm.slane %v542, 1
        %v546 = vperm.slane %v542, 2
        %550 = vmatpush.msra.mxu0 %v539
        %551 = vmatpush.msra.mxu0 %v536
        %552 = vmatpush.msra.mxu0 %v533
        %553 = vmatpush.msra.mxu0 %v530
        %554 = vmatpush.msra.mxu0 %v527
        %555 = vmatpush.msra.mxu0 %v524
        %556 = vmatpush.msra.mxu0 %v521
        %557 = vmatpush.msra.mxu0 %v518
        %558 = vmatpush.msra.mxu0 %v515
        %559 = vmatpush.msra.mxu0 %v512
        %560 = vmatpush.msra.mxu0 %v509
        %561 = vmatpush.msra.mxu0 %v506
        %562 = vmatpush.msra.mxu0 %v503
        %563 = vmatpush.msra.mxu0 %v500
        %564 = vmatpush.msra.mxu0 %v497
        %565 = vmatpush.msra.mxu0 %v494
        %566 = vmatmul.f32.gmra.mxu0 %v491
        %v567 = vpop.f32.mrf.mxu0
        %v568 = vadd.f32 %v544, %v567
        %569 = vmatmul.f32.gmra.mxu0 %v492
        %v570 = vpop.f32.mrf.mxu0
        %v571 = vadd.f32 %v544, %v570
        %572 = vmatmul.f32.gmra.mxu0 %v493
        %v573 = vpop.f32.mrf.mxu0
        %v574 = vadd.f32 %v544, %v573
        %575 = vdwg.mxu0
        %576 = vmatpush.msra.mxu0 %v540
        %577 = vmatpush.msra.mxu0 %v537
        %578 = vmatpush.msra.mxu0 %v534
        %579 = vmatpush.msra.mxu0 %v531
        %580 = vmatpush.msra.mxu0 %v528
        %581 = vmatpush.msra.mxu0 %v525
        %582 = vmatpush.msra.mxu0 %v522
        %583 = vmatpush.msra.mxu0 %v519
        %584 = vmatpush.msra.mxu0 %v516
        %585 = vmatpush.msra.mxu0 %v513
        %586 = vmatpush.msra.mxu0 %v510
        %587 = vmatpush.msra.mxu0 %v507
        %588 = vmatpush.msra.mxu0 %v504
        %589 = vmatpush.msra.mxu0 %v501
        %590 = vmatpush.msra.mxu0 %v498
        %591 = vmatpush.msra.mxu0 %v495
        %592 = vmatmul.f32.gmra.mxu0 %v491
        %v593 = vpop.f32.mrf.mxu0
        %v594 = vadd.f32 %v545, %v593
        %595 = vmatmul.f32.gmra.mxu0 %v492
        %v596 = vpop.f32.mrf.mxu0
        %v597 = vadd.f32 %v545, %v596
        %598 = vmatmul.f32.gmra.mxu0 %v493
        %v599 = vpop.f32.mrf.mxu0
        %v600 = vadd.f32 %v545, %v599
        %601 = vdwg.mxu0
        %602 = vmatpush.msra.mxu0 %v541
        %603 = vmatpush.msra.mxu0 %v538
        %604 = vmatpush.msra.mxu0 %v535
        %605 = vmatpush.msra.mxu0 %v532
        %606 = vmatpush.msra.mxu0 %v529
        %607 = vmatpush.msra.mxu0 %v526
        %608 = vmatpush.msra.mxu0 %v523
        %609 = vmatpush.msra.mxu0 %v520
        %610 = vmatpush.msra.mxu0 %v517
        %611 = vmatpush.msra.mxu0 %v514
        %612 = vmatpush.msra.mxu0 %v511
        %613 = vmatpush.msra.mxu0 %v508
        %614 = vmatpush.msra.mxu0 %v505
        %615 = vmatpush.msra.mxu0 %v502
        %616 = vmatpush.msra.mxu0 %v499
        %617 = vmatpush.msra.mxu0 %v496
        %618 = vmatmul.f32.gmra.mxu0 %v491
        %v619 = vpop.f32.mrf.mxu0
        %v620 = vadd.f32 %v546, %v619
        %621 = vmatmul.f32.gmra.mxu0 %v492
        %v622 = vpop.f32.mrf.mxu0
        %v623 = vadd.f32 %v546, %v622
        %624 = vmatmul.f32.gmra.mxu0 %v493
        %v625 = vpop.f32.mrf.mxu0
        %v626 = vadd.f32 %v546, %v625
        %627 = vdwg.mxu0
        %v628 = vmul.f32 %v568, 0.17677669
        %v629 = vmul.f32 %v571, 0.17677669
        %v630 = vmul.f32 %v574, 0.17677669
        %vm631 = vcmask 261120
        %v633 = vsel %vm631, %v628, 0
        %v636 = vsel %vm631, %v629, 0
        %v639 = vsel %vm631, %v630, 0
        %v642 = vsel %vm631, %v594, 0
        %v645 = vsel %vm631, %v597, 0
        %v648 = vsel %vm631, %v600, 0
        %650 = vmatpush.xpose.msra.mxu0 0.0
        %651 = vmatpush.xpose.msra.mxu0 0.0
        %652 = vmatpush.xpose.msra.mxu0 0.0
        %653 = vmatpush.xpose.msra.mxu0 0.0
        %654 = vmatpush.xpose.msra.mxu0 0.0
        %655 = vmatpush.xpose.msra.mxu0 0.0
        %656 = vmatpush.xpose.msra.mxu0 0.0
        %657 = vmatpush.xpose.msra.mxu0 0.0
        %658 = vmatpush.xpose.msra.mxu0 0.0
        %659 = vmatpush.xpose.msra.mxu0 0.0
        %660 = vmatpush.xpose.msra.mxu0 0.0
        %661 = vmatpush.xpose.msra.mxu0 0.0
        %662 = vmatpush.xpose.msra.mxu0 0.0
        %663 = vmatpush.xpose.msra.mxu0 %v648
        %664 = vmatpush.xpose.msra.mxu0 %v645
        %665 = vmatpush.xpose.msra.mxu0 %v642
        %666 = vmatmul.f32.gmra.mxu0 %v633
        %v667 = vpop.f32.mrf.mxu0
        %v668 = vadd.f32 0.0, %v667
        %669 = vmatmul.f32.gmra.mxu0 %v636
        %v670 = vpop.f32.mrf.mxu0
        %v671 = vadd.f32 0.0, %v670
        %672 = vmatmul.f32.gmra.mxu0 %v639
        %v673 = vpop.f32.mrf.mxu0
        %v674 = vadd.f32 0.0, %v673
        %675 = vdwg.mxu0
        %vm676 = vcmask 195584
        %v677 = vsel %vm676, %v668, -inf
        %678 = vmax.xlane.f32.xlu0 %v677
        %v679 = vpop.xlane.xlu0 %678
        %v680 = vsel %vm676, %v671, -inf
        %681 = vmax.xlane.f32.xlu0 %v680
        %v682 = vpop.xlane.xlu0 %681
        %v683 = vsel %vm676, %v674, -inf
        %684 = vmax.xlane.f32.xlu0 %v683
        %v685 = vpop.xlane.xlu0 %684
        %v686 = vsub.f32 %v668, %v679
        %v687 = vsub.f32 %v671, %v682
        %v688 = vsub.f32 %v674, %v685
        %v689 = vmul.f32 %v686, 1.442695
        %v690 = vpow.pop %v689
        %v691 = vmul.f32 %v687, 1.442695
        %v692 = vpow.pop %v691
        %v693 = vmul.f32 %v688, 1.442695
        %v694 = vpow.pop %v693
        %v695 = vsel %vm676, %v690, 0.0
        %696 = vadd.xlane.f32.xlu0 %v695
        %v697 = vpop.xlane.xlu0 %696
        %v698 = vsel %vm676, %v692, 0.0
        %699 = vadd.xlane.f32.xlu0 %v698
        %v700 = vpop.xlane.xlu0 %699
        %v701 = vsel %vm676, %v694, 0.0
        %702 = vadd.xlane.f32.xlu0 %v701
        %v703 = vpop.xlane.xlu0 %702
        %v704 = vrcp.pop %v697
        %v705 = vrcp.pop %v700
        %v706 = vrcp.pop %v703
        %v707 = vmul.f32 %v690, %v704
        %v708 = vmul.f32 %v692, %v705
        %v709 = vmul.f32 %v694, %v706
        %v711 = vsel %vm676, %v707, 0
        %v714 = vsel %vm676, %v708, 0
        %v717 = vsel %vm676, %v709, 0
        %719 = vmatpush.msra.mxu0 0.0
        %720 = vmatpush.msra.mxu0 0.0
        %721 = vmatpush.msra.mxu0 0.0
        %722 = vmatpush.msra.mxu0 0.0
        %723 = vmatpush.msra.mxu0 0.0
        %724 = vmatpush.msra.mxu0 0.0
        %725 = vmatpush.msra.mxu0 0.0
        %726 = vmatpush.msra.mxu0 0.0
        %727 = vmatpush.msra.mxu0 0.0
        %728 = vmatpush.msra.mxu0 0.0
        %729 = vmatpush.msra.mxu0 0.0
        %730 = vmatpush.msra.mxu0 0.0
        %731 = vmatpush.msra.mxu0 0.0
        %732 = vmatpush.msra.mxu0 %v626
        %733 = vmatpush.msra.mxu0 %v623
        %734 = vmatpush.msra.mxu0 %v620
        %735 = vmatmul.f32.gmra.mxu0 %v711
        %v736 = vpop.f32.mrf.mxu0
        %v737 = vadd.f32 0.0, %v736
        %738 = vmatmul.f32.gmra.mxu0 %v714
        %v739 = vpop.f32.mrf.mxu0
        %v740 = vadd.f32 0.0, %v739
        %741 = vmatmul.f32.gmra.mxu0 %v717
        %v742 = vpop.f32.mrf.mxu0
        %v743 = vadd.f32 0.0, %v742
        %744 = vdwg.mxu0
        %v745 = vld [vmem:[#allocation2] sm:$0xff]
        %v746 = vld [vmem:[#allocation2 + $0x8] sm:$0xff]
        %v747 = vld [vmem:[#allocation2 + $0x10] sm:$0xff]
        %v748 = vld [vmem:[#allocation2 + $0x18] sm:$0xff]
        %749 = vrot.lane.b32.xlu0 %v628, 96
        %v750 = vpop.permute.xlu0 %749
        %751 = vrot.lane.b32.xlu0 %v629, 96
        %v752 = vpop.permute.xlu0 %751
        %753 = vrot.lane.b32.xlu0 %v630, 96
        %v754 = vpop.permute.xlu0 %753
        %755 = vrot.lane.b32.xlu0 %v594, 96
        %v756 = vpop.permute.xlu0 %755
        %757 = vrot.lane.b32.xlu0 %v597, 96
        %v758 = vpop.permute.xlu0 %757
        %759 = vrot.lane.b32.xlu0 %v600, 96
        %v760 = vpop.permute.xlu0 %759
        %v761 = vsel %vm631, %v750, 0
        %v763 = vsel %vm631, %v752, 0
        %v765 = vsel %vm631, %v754, 0
        %v767 = vsel %vm631, %v756, 0
        %v769 = vsel %vm631, %v758, 0
        %v771 = vsel %vm631, %v760, 0
        %773 = vmatpush.xpose.msra.mxu0 0.0
        %774 = vmatpush.xpose.msra.mxu0 0.0
        %775 = vmatpush.xpose.msra.mxu0 0.0
        %776 = vmatpush.xpose.msra.mxu0 0.0
        %777 = vmatpush.xpose.msra.mxu0 0.0
        %778 = vmatpush.xpose.msra.mxu0 0.0
        %779 = vmatpush.xpose.msra.mxu0 0.0
        %780 = vmatpush.xpose.msra.mxu0 0.0
        %781 = vmatpush.xpose.msra.mxu0 0.0
        %782 = vmatpush.xpose.msra.mxu0 0.0
        %783 = vmatpush.xpose.msra.mxu0 0.0
        %784 = vmatpush.xpose.msra.mxu0 0.0
        %785 = vmatpush.xpose.msra.mxu0 0.0
        %786 = vmatpush.xpose.msra.mxu0 %v771
        %787 = vmatpush.xpose.msra.mxu0 %v769
        %788 = vmatpush.xpose.msra.mxu0 %v767
        %789 = vmatmul.f32.gmra.mxu0 %v761
        %v790 = vpop.f32.mrf.mxu0
        %v791 = vadd.f32 0.0, %v790
        %792 = vmatmul.f32.gmra.mxu0 %v763
        %v793 = vpop.f32.mrf.mxu0
        %v794 = vadd.f32 0.0, %v793
        %795 = vmatmul.f32.gmra.mxu0 %v765
        %v796 = vpop.f32.mrf.mxu0
        %v797 = vadd.f32 0.0, %v796
        %798 = vdwg.mxu0
        %v799 = vsel %vm676, %v791, -inf
        %800 = vmax.xlane.f32.xlu0 %v799
        %v801 = vpop.xlane.xlu0 %800
        %v802 = vsel %vm676, %v794, -inf
        %803 = vmax.xlane.f32.xlu0 %v802
        %v804 = vpop.xlane.xlu0 %803
        %v805 = vsel %vm676, %v797, -inf
        %806 = vmax.xlane.f32.xlu0 %v805
        %v807 = vpop.xlane.xlu0 %806
        %v808 = vsub.f32 %v791, %v801
        %v809 = vsub.f32 %v794, %v804
        %v810 = vsub.f32 %v797, %v807
        %v811 = vmul.f32 %v808, 1.442695
        %v812 = vpow.pop %v811
        %v813 = vmul.f32 %v809, 1.442695
        %v814 = vpow.pop %v813
        %v815 = vmul.f32 %v810, 1.442695
        %v816 = vpow.pop %v815
        %v817 = vsel %vm676, %v812, 0.0
        %818 = vadd.xlane.f32.xlu0 %v817
        %v819 = vpop.xlane.xlu0 %818
        %v820 = vsel %vm676, %v814, 0.0
        %821 = vadd.xlane.f32.xlu0 %v820
        %v822 = vpop.xlane.xlu0 %821
        %v823 = vsel %vm676, %v816, 0.0
        %824 = vadd.xlane.f32.xlu0 %v823
        %v825 = vpop.xlane.xlu0 %824
        %v826 = vrcp.pop %v819
        %v827 = vrcp.pop %v822
        %v828 = vrcp.pop %v825
        %v829 = vmul.f32 %v812, %v826
        %v830 = vmul.f32 %v814, %v827
        %v831 = vmul.f32 %v816, %v828
        %835 = vrot.lane.b32.xlu0 %v620, 96
        %v836 = vpop.permute.xlu0 %835
        %837 = vrot.lane.b32.xlu0 %v623, 96
        %v838 = vpop.permute.xlu0 %837
        %839 = vrot.lane.b32.xlu0 %v626, 96
        %v840 = vpop.permute.xlu0 %839
        %v845 = vsel %vm676, %v829, 0
        %v848 = vsel %vm676, %v830, 0
        %v851 = vsel %vm676, %v831, 0
        %853 = vmatpush.msra.mxu0 0.0
        %854 = vmatpush.msra.mxu0 0.0
        %855 = vmatpush.msra.mxu0 0.0
        %856 = vmatpush.msra.mxu0 0.0
        %857 = vmatpush.msra.mxu0 0.0
        %858 = vmatpush.msra.mxu0 0.0
        %859 = vmatpush.msra.mxu0 0.0
        %860 = vmatpush.msra.mxu0 0.0
        %861 = vmatpush.msra.mxu0 0.0
        %862 = vmatpush.msra.mxu0 0.0
        %863 = vmatpush.msra.mxu0 0.0
        %864 = vmatpush.msra.mxu0 0.0
        %865 = vmatpush.msra.mxu0 0.0
        %866 = vmatpush.msra.mxu0 %v840
        %867 = vmatpush.msra.mxu0 %v838
        %868 = vmatpush.msra.mxu0 %v836
        %869 = vmatmul.f32.gmra.mxu0 %v845
        %v870 = vpop.f32.mrf.mxu0
        %v871 = vadd.f32 0.0, %v870
        %872 = vmatmul.f32.gmra.mxu0 %v848
        %v873 = vpop.f32.mrf.mxu0
        %v874 = vadd.f32 0.0, %v873
        %875 = vmatmul.f32.gmra.mxu0 %v851
        %v876 = vpop.f32.mrf.mxu0
        %v877 = vadd.f32 0.0, %v876
        %878 = vdwg.mxu0
        %v879 = vld [vmem:[#allocation2 + $0x20] sm:$0xff]
        %v880 = vld [vmem:[#allocation2 + $0x28] sm:$0xff]
        %v881 = vld [vmem:[#allocation2 + $0x30] sm:$0xff]
        %v882 = vld [vmem:[#allocation2 + $0x38] sm:$0xff]
        %v884 = vsel %vm631, %v871, 0
        %v887 = vsel %vm631, %v874, 0
        %v890 = vsel %vm631, %v877, 0
        %892 = vmatpush.msra.mxu0 0.0
        %893 = vmatpush.msra.mxu0 0.0
        %894 = vmatpush.msra.mxu0 0.0
        %895 = vmatpush.msra.mxu0 0.0
        %896 = vmatpush.msra.mxu0 0.0
        %897 = vmatpush.msra.mxu0 0.0
        %898 = vmatpush.msra.mxu0 0.0
        %899 = vmatpush.msra.mxu0 0.0
        %900 = vmatpush.msra.mxu0 0.0
        %901 = vmatpush.msra.mxu0 0.0
        %902 = vmatpush.msra.mxu0 0.0
        %903 = vmatpush.msra.mxu0 0.0
        %904 = vmatpush.msra.mxu0 %v882
        %905 = vmatpush.msra.mxu0 %v881
        %906 = vmatpush.msra.mxu0 %v880
        %907 = vmatpush.msra.mxu0 %v879
        %908 = vmatmul.f32.gmra.mxu0 %v884
        %v909 = vpop.f32.mrf.mxu0
        %v910 = vadd.f32 0.0, %v909
        %911 = vmatmul.f32.gmra.mxu0 %v887
        %v912 = vpop.f32.mrf.mxu0
        %v913 = vadd.f32 0.0, %v912
        %914 = vmatmul.f32.gmra.mxu0 %v890
        %v915 = vpop.f32.mrf.mxu0
        %v916 = vadd.f32 0.0, %v915
        %917 = vdwg.mxu0
        %v919 = vsel %vm631, %v737, 0
        %v922 = vsel %vm631, %v740, 0
        %v925 = vsel %vm631, %v743, 0
        %927 = vmatpush.msra.mxu0 0.0
        %928 = vmatpush.msra.mxu0 0.0
        %929 = vmatpush.msra.mxu0 0.0
        %930 = vmatpush.msra.mxu0 0.0
        %931 = vmatpush.msra.mxu0 0.0
        %932 = vmatpush.msra.mxu0 0.0
        %933 = vmatpush.msra.mxu0 0.0
        %934 = vmatpush.msra.mxu0 0.0
        %935 = vmatpush.msra.mxu0 0.0
        %936 = vmatpush.msra.mxu0 0.0
        %937 = vmatpush.msra.mxu0 0.0
        %938 = vmatpush.msra.mxu0 0.0
        %939 = vmatpush.msra.mxu0 %v748
        %940 = vmatpush.msra.mxu0 %v747
        %941 = vmatpush.msra.mxu0 %v746
        %942 = vmatpush.msra.mxu0 %v745
        %943 = vmatmul.f32.gmra.mxu0 %v919
        %v944 = vpop.f32.mrf.mxu0
        %v945 = vadd.f32 %v910, %v944
        %946 = vmatmul.f32.gmra.mxu0 %v922
        %v947 = vpop.f32.mrf.mxu0
        %v948 = vadd.f32 %v913, %v947
        %949 = vmatmul.f32.gmra.mxu0 %v925
        %v950 = vpop.f32.mrf.mxu0
        %v951 = vadd.f32 %v916, %v950
        %952 = vdwg.mxu0
        %953 = vrot.lane.b32.xlu0 %v628, 64
        %v954 = vpop.permute.xlu0 %953
        %955 = vrot.lane.b32.xlu0 %v629, 64
        %v956 = vpop.permute.xlu0 %955
        %957 = vrot.lane.b32.xlu0 %v630, 64
        %v958 = vpop.permute.xlu0 %957
        %959 = vrot.lane.b32.xlu0 %v594, 64
        %v960 = vpop.permute.xlu0 %959
        %961 = vrot.lane.b32.xlu0 %v597, 64
        %v962 = vpop.permute.xlu0 %961
        %963 = vrot.lane.b32.xlu0 %v600, 64
        %v964 = vpop.permute.xlu0 %963
        %v965 = vsel %vm631, %v954, 0
        %v967 = vsel %vm631, %v956, 0
        %v969 = vsel %vm631, %v958, 0
        %v971 = vsel %vm631, %v960, 0
        %v973 = vsel %vm631, %v962, 0
        %v975 = vsel %vm631, %v964, 0
        %977 = vmatpush.xpose.msra.mxu0 0.0
        %978 = vmatpush.xpose.msra.mxu0 0.0
        %979 = vmatpush.xpose.msra.mxu0 0.0
        %980 = vmatpush.xpose.msra.mxu0 0.0
        %981 = vmatpush.xpose.msra.mxu0 0.0
        %982 = vmatpush.xpose.msra.mxu0 0.0
        %983 = vmatpush.xpose.msra.mxu0 0.0
        %984 = vmatpush.xpose.msra.mxu0 0.0
        %985 = vmatpush.xpose.msra.mxu0 0.0
        %986 = vmatpush.xpose.msra.mxu0 0.0
        %987 = vmatpush.xpose.msra.mxu0 0.0
        %988 = vmatpush.xpose.msra.mxu0 0.0
        %989 = vmatpush.xpose.msra.mxu0 0.0
        %990 = vmatpush.xpose.msra.mxu0 %v975
        %991 = vmatpush.xpose.msra.mxu0 %v973
        %992 = vmatpush.xpose.msra.mxu0 %v971
        %993 = vmatmul.f32.gmra.mxu0 %v965
        %v994 = vpop.f32.mrf.mxu0
        %v995 = vadd.f32 0.0, %v994
        %996 = vmatmul.f32.gmra.mxu0 %v967
        %v997 = vpop.f32.mrf.mxu0
        %v998 = vadd.f32 0.0, %v997
        %999 = vmatmul.f32.gmra.mxu0 %v969
        %v1000 = vpop.f32.mrf.mxu0
        %v1001 = vadd.f32 0.0, %v1000
        %1002 = vdwg.mxu0
        %v1003 = vsel %vm676, %v995, -inf
        %1004 = vmax.xlane.f32.xlu0 %v1003
        %v1005 = vpop.xlane.xlu0 %1004
        %v1006 = vsel %vm676, %v998, -inf
        %1007 = vmax.xlane.f32.xlu0 %v1006
        %v1008 = vpop.xlane.xlu0 %1007
        %v1009 = vsel %vm676, %v1001, -inf
        %1010 = vmax.xlane.f32.xlu0 %v1009
        %v1011 = vpop.xlane.xlu0 %1010
        %v1012 = vsub.f32 %v995, %v1005
        %v1013 = vsub.f32 %v998, %v1008
        %v1014 = vsub.f32 %v1001, %v1011
        %v1015 = vmul.f32 %v1012, 1.442695
        %v1016 = vpow.pop %v1015
        %v1017 = vmul.f32 %v1013, 1.442695
        %v1018 = vpow.pop %v1017
        %v1019 = vmul.f32 %v1014, 1.442695
        %v1020 = vpow.pop %v1019
        %v1021 = vsel %vm676, %v1016, 0.0
        %1022 = vadd.xlane.f32.xlu0 %v1021
        %v1023 = vpop.xlane.xlu0 %1022
        %v1024 = vsel %vm676, %v1018, 0.0
        %1025 = vadd.xlane.f32.xlu0 %v1024
        %v1026 = vpop.xlane.xlu0 %1025
        %v1027 = vsel %vm676, %v1020, 0.0
        %1028 = vadd.xlane.f32.xlu0 %v1027
        %v1029 = vpop.xlane.xlu0 %1028
        %v1030 = vrcp.pop %v1023
        %v1031 = vrcp.pop %v1026
        %v1032 = vrcp.pop %v1029
        %v1033 = vmul.f32 %v1016, %v1030
        %v1034 = vmul.f32 %v1018, %v1031
        %v1035 = vmul.f32 %v1020, %v1032
        %1036 = vrot.lane.b32.xlu0 %v620, 64
        %v1037 = vpop.permute.xlu0 %1036
        %1038 = vrot.lane.b32.xlu0 %v623, 64
        %v1039 = vpop.permute.xlu0 %1038
        %1040 = vrot.lane.b32.xlu0 %v626, 64
        %v1041 = vpop.permute.xlu0 %1040
        %v1046 = vsel %vm676, %v1033, 0
        %v1049 = vsel %vm676, %v1034, 0
        %v1052 = vsel %vm676, %v1035, 0
        %1054 = vmatpush.msra.mxu0 0.0
        %1055 = vmatpush.msra.mxu0 0.0
        %1056 = vmatpush.msra.mxu0 0.0
        %1057 = vmatpush.msra.mxu0 0.0
        %1058 = vmatpush.msra.mxu0 0.0
        %1059 = vmatpush.msra.mxu0 0.0
        %1060 = vmatpush.msra.mxu0 0.0
        %1061 = vmatpush.msra.mxu0 0.0
        %1062 = vmatpush.msra.mxu0 0.0
        %1063 = vmatpush.msra.mxu0 0.0
        %1064 = vmatpush.msra.mxu0 0.0
        %1065 = vmatpush.msra.mxu0 0.0
        %1066 = vmatpush.msra.mxu0 0.0
        %1067 = vmatpush.msra.mxu0 %v1041
        %1068 = vmatpush.msra.mxu0 %v1039
        %1069 = vmatpush.msra.mxu0 %v1037
        %1070 = vmatmul.f32.gmra.mxu0 %v1046
        %v1071 = vpop.f32.mrf.mxu0
        %v1072 = vadd.f32 0.0, %v1071
        %1073 = vmatmul.f32.gmra.mxu0 %v1049
        %v1074 = vpop.f32.mrf.mxu0
        %v1075 = vadd.f32 0.0, %v1074
        %1076 = vmatmul.f32.gmra.mxu0 %v1052
        %v1077 = vpop.f32.mrf.mxu0
        %v1078 = vadd.f32 0.0, %v1077
        %1079 = vdwg.mxu0
        %v1080 = vld [vmem:[#allocation2 + $0x40] sm:$0xff]
        %v1081 = vld [vmem:[#allocation2 + $0x48] sm:$0xff]
        %v1082 = vld [vmem:[#allocation2 + $0x50] sm:$0xff]
        %v1083 = vld [vmem:[#allocation2 + $0x58] sm:$0xff]
        %v1085 = vsel %vm631, %v1072, 0
        %v1088 = vsel %vm631, %v1075, 0
        %v1091 = vsel %vm631, %v1078, 0
        %1093 = vmatpush.msra.mxu0 0.0
        %1094 = vmatpush.msra.mxu0 0.0
        %1095 = vmatpush.msra.mxu0 0.0
        %1096 = vmatpush.msra.mxu0 0.0
        %1097 = vmatpush.msra.mxu0 0.0
        %1098 = vmatpush.msra.mxu0 0.0
        %1099 = vmatpush.msra.mxu0 0.0
        %1100 = vmatpush.msra.mxu0 0.0
        %1101 = vmatpush.msra.mxu0 0.0
        %1102 = vmatpush.msra.mxu0 0.0
        %1103 = vmatpush.msra.mxu0 0.0
        %1104 = vmatpush.msra.mxu0 0.0
        %1105 = vmatpush.msra.mxu0 %v1083
        %1106 = vmatpush.msra.mxu0 %v1082
        %1107 = vmatpush.msra.mxu0 %v1081
        %1108 = vmatpush.msra.mxu0 %v1080
        %1109 = vmatmul.f32.gmra.mxu0 %v1085
        %v1110 = vpop.f32.mrf.mxu0
        %v1111 = vadd.f32 0.0, %v1110
        %1112 = vmatmul.f32.gmra.mxu0 %v1088
        %v1113 = vpop.f32.mrf.mxu0
        %v1114 = vadd.f32 0.0, %v1113
        %1115 = vmatmul.f32.gmra.mxu0 %v1091
        %v1116 = vpop.f32.mrf.mxu0
        %v1117 = vadd.f32 0.0, %v1116
        %1118 = vdwg.mxu0
        %v1119 = vadd.f32 %v945, %v1111
        %v1120 = vadd.f32 %v948, %v1114
        %v1121 = vadd.f32 %v951, %v1117
        %1122 = vrot.lane.b32.xlu0 %v628, 32
        %v1123 = vpop.permute.xlu0 %1122
        %1124 = vrot.lane.b32.xlu0 %v629, 32
        %v1125 = vpop.permute.xlu0 %1124
        %1126 = vrot.lane.b32.xlu0 %v630, 32
        %v1127 = vpop.permute.xlu0 %1126
        %1128 = vrot.lane.b32.xlu0 %v594, 32
        %v1129 = vpop.permute.xlu0 %1128
        %1130 = vrot.lane.b32.xlu0 %v597, 32
        %v1131 = vpop.permute.xlu0 %1130
        %1132 = vrot.lane.b32.xlu0 %v600, 32
        %v1133 = vpop.permute.xlu0 %1132
        %v1134 = vsel %vm631, %v1123, 0
        %v1136 = vsel %vm631, %v1125, 0
        %v1138 = vsel %vm631, %v1127, 0
        %v1140 = vsel %vm631, %v1129, 0
        %v1142 = vsel %vm631, %v1131, 0
        %v1144 = vsel %vm631, %v1133, 0
        %1146 = vmatpush.xpose.msra.mxu0 0.0
        %1147 = vmatpush.xpose.msra.mxu0 0.0
        %1148 = vmatpush.xpose.msra.mxu0 0.0
        %1149 = vmatpush.xpose.msra.mxu0 0.0
        %1150 = vmatpush.xpose.msra.mxu0 0.0
        %1151 = vmatpush.xpose.msra.mxu0 0.0
        %1152 = vmatpush.xpose.msra.mxu0 0.0
        %1153 = vmatpush.xpose.msra.mxu0 0.0
        %1154 = vmatpush.xpose.msra.mxu0 0.0
        %1155 = vmatpush.xpose.msra.mxu0 0.0
        %1156 = vmatpush.xpose.msra.mxu0 0.0
        %1157 = vmatpush.xpose.msra.mxu0 0.0
        %1158 = vmatpush.xpose.msra.mxu0 0.0
        %1159 = vmatpush.xpose.msra.mxu0 %v1144
        %1160 = vmatpush.xpose.msra.mxu0 %v1142
        %1161 = vmatpush.xpose.msra.mxu0 %v1140
        %1162 = vmatmul.f32.gmra.mxu0 %v1134
        %v1163 = vpop.f32.mrf.mxu0
        %v1164 = vadd.f32 0.0, %v1163
        %1165 = vmatmul.f32.gmra.mxu0 %v1136
        %v1166 = vpop.f32.mrf.mxu0
        %v1167 = vadd.f32 0.0, %v1166
        %1168 = vmatmul.f32.gmra.mxu0 %v1138
        %v1169 = vpop.f32.mrf.mxu0
        %v1170 = vadd.f32 0.0, %v1169
        %1171 = vdwg.mxu0
        %v1172 = vsel %vm676, %v1164, -inf
        %1173 = vmax.xlane.f32.xlu0 %v1172
        %v1174 = vpop.xlane.xlu0 %1173
        %v1175 = vsel %vm676, %v1167, -inf
        %1176 = vmax.xlane.f32.xlu0 %v1175
        %v1177 = vpop.xlane.xlu0 %1176
        %v1178 = vsel %vm676, %v1170, -inf
        %1179 = vmax.xlane.f32.xlu0 %v1178
        %v1180 = vpop.xlane.xlu0 %1179
        %v1181 = vsub.f32 %v1164, %v1174
        %v1182 = vsub.f32 %v1167, %v1177
        %v1183 = vsub.f32 %v1170, %v1180
        %v1184 = vmul.f32 %v1181, 1.442695
        %v1185 = vpow.pop %v1184
        %v1186 = vmul.f32 %v1182, 1.442695
        %v1187 = vpow.pop %v1186
        %v1188 = vmul.f32 %v1183, 1.442695
        %v1189 = vpow.pop %v1188
        %v1190 = vsel %vm676, %v1185, 0.0
        %1191 = vadd.xlane.f32.xlu0 %v1190
        %v1192 = vpop.xlane.xlu0 %1191
        %v1193 = vsel %vm676, %v1187, 0.0
        %1194 = vadd.xlane.f32.xlu0 %v1193
        %v1195 = vpop.xlane.xlu0 %1194
        %v1196 = vsel %vm676, %v1189, 0.0
        %1197 = vadd.xlane.f32.xlu0 %v1196
        %v1198 = vpop.xlane.xlu0 %1197
        %v1199 = vrcp.pop %v1192
        %v1200 = vrcp.pop %v1195
        %v1201 = vrcp.pop %v1198
        %v1202 = vmul.f32 %v1185, %v1199
        %v1203 = vmul.f32 %v1187, %v1200
        %v1204 = vmul.f32 %v1189, %v1201
        %1205 = vrot.lane.b32.xlu0 %v620, 32
        %v1206 = vpop.permute.xlu0 %1205
        %1207 = vrot.lane.b32.xlu0 %v623, 32
        %v1208 = vpop.permute.xlu0 %1207
        %1209 = vrot.lane.b32.xlu0 %v626, 32
        %v1210 = vpop.permute.xlu0 %1209
        %v1215 = vsel %vm676, %v1202, 0
        %v1218 = vsel %vm676, %v1203, 0
        %v1221 = vsel %vm676, %v1204, 0
        %1223 = vmatpush.msra.mxu0 0.0
        %1224 = vmatpush.msra.mxu0 0.0
        %1225 = vmatpush.msra.mxu0 0.0
        %1226 = vmatpush.msra.mxu0 0.0
        %1227 = vmatpush.msra.mxu0 0.0
        %1228 = vmatpush.msra.mxu0 0.0
        %1229 = vmatpush.msra.mxu0 0.0
        %1230 = vmatpush.msra.mxu0 0.0
        %1231 = vmatpush.msra.mxu0 0.0
        %1232 = vmatpush.msra.mxu0 0.0
        %1233 = vmatpush.msra.mxu0 0.0
        %1234 = vmatpush.msra.mxu0 0.0
        %1235 = vmatpush.msra.mxu0 0.0
        %1236 = vmatpush.msra.mxu0 %v1210
        %1237 = vmatpush.msra.mxu0 %v1208
        %1238 = vmatpush.msra.mxu0 %v1206
        %1239 = vmatmul.f32.gmra.mxu0 %v1215
        %v1240 = vpop.f32.mrf.mxu0
        %v1241 = vadd.f32 0.0, %v1240
        %1242 = vmatmul.f32.gmra.mxu0 %v1218
        %v1243 = vpop.f32.mrf.mxu0
        %v1244 = vadd.f32 0.0, %v1243
        %1245 = vmatmul.f32.gmra.mxu0 %v1221
        %v1246 = vpop.f32.mrf.mxu0
        %v1247 = vadd.f32 0.0, %v1246
        %1248 = vdwg.mxu0
        %v1249 = vld [vmem:[#allocation2 + $0x60] sm:$0xff]
        %v1250 = vld [vmem:[#allocation2 + $0x68] sm:$0xff]
        %v1251 = vld [vmem:[#allocation2 + $0x70] sm:$0xff]
        %v1252 = vld [vmem:[#allocation2 + $0x78] sm:$0xff]
        %v1254 = vsel %vm631, %v1241, 0
        %v1257 = vsel %vm631, %v1244, 0
        %v1260 = vsel %vm631, %v1247, 0
        %1262 = vmatpush.msra.mxu0 0.0
        %1263 = vmatpush.msra.mxu0 0.0
        %1264 = vmatpush.msra.mxu0 0.0
        %1265 = vmatpush.msra.mxu0 0.0
        %1266 = vmatpush.msra.mxu0 0.0
        %1267 = vmatpush.msra.mxu0 0.0
        %1268 = vmatpush.msra.mxu0 0.0
        %1269 = vmatpush.msra.mxu0 0.0
        %1270 = vmatpush.msra.mxu0 0.0
        %1271 = vmatpush.msra.mxu0 0.0
        %1272 = vmatpush.msra.mxu0 0.0
        %1273 = vmatpush.msra.mxu0 0.0
        %1274 = vmatpush.msra.mxu0 %v1252
        %1275 = vmatpush.msra.mxu0 %v1251
        %1276 = vmatpush.msra.mxu0 %v1250
        %1277 = vmatpush.msra.mxu0 %v1249
        %1278 = vmatmul.f32.gmra.mxu0 %v1254
        %v1279 = vpop.f32.mrf.mxu0
        %v1280 = vadd.f32 0.0, %v1279
        %1281 = vmatmul.f32.gmra.mxu0 %v1257
        %v1282 = vpop.f32.mrf.mxu0
        %v1283 = vadd.f32 0.0, %v1282
        %1284 = vmatmul.f32.gmra.mxu0 %v1260
        %v1285 = vpop.f32.mrf.mxu0
        %v1286 = vadd.f32 0.0, %v1285
        %1287 = vdwg.mxu0
        %v1288 = vadd.f32 %v1119, %v1280
        %v1289 = vadd.f32 %v1120, %v1283
        %v1290 = vadd.f32 %v1121, %v1286
        %v1291 = vadd.f32 %v491, %v1288
        %v1292 = vadd.f32 %v492, %v1289
        %v1293 = vadd.f32 %v493, %v1290
        %v1294 = vld [vmem:[%s4] sm:$0x1]
        %v1296 = vperm.slane %v1294, 0
        %v1298 = vadd.f32 %v1291, %v1296
        %v1299 = vadd.f32 %v1292, %v1296
        %v1300 = vadd.f32 %v1293, %v1296
        %1301 = vadd.xlane.f32.xlu0 %v1298
        %v1302 = vpop.xlane.xlu0 %1301
        %1303 = vadd.xlane.f32.xlu0 %v1299
        %v1304 = vpop.xlane.xlu0 %1303
        %1305 = vadd.xlane.f32.xlu0 %v1300
        %v1306 = vpop.xlane.xlu0 %1305
        %v1307 = vrcp.pop 128.0
        %v1308 = vmul.f32 128.0, %v1307
        %v1309 = vsub.f32 1.0, %v1308
        %v1310 = vmul.f32 %v1307, %v1309
        %v1311 = vadd.f32 %v1307, %v1310
        %vm1312 = vweird.f32 %v1307
        %v1313 = vsel %vm1312, %v1307, %v1311
        %v1314 = vmul.f32 %v1302, %v1313
        %v1315 = vmul.f32 %v1304, %v1313
        %v1316 = vmul.f32 %v1306, %v1313
        %v1317 = vsub.f32 %v1298, %v1314
        %v1318 = vsub.f32 %v1299, %v1315
        %v1319 = vsub.f32 %v1300, %v1316
        %v1320 = vmul.f32 %v1317, %v1317
        %v1321 = vmul.f32 %v1318, %v1318
        %v1322 = vmul.f32 %v1319, %v1319
        %1323 = vadd.xlane.f32.xlu0 %v1320
        %v1324 = vpop.xlane.xlu0 %1323
        %1325 = vadd.xlane.f32.xlu0 %v1321
        %v1326 = vpop.xlane.xlu0 %1325
        %1327 = vadd.xlane.f32.xlu0 %v1322
        %v1328 = vpop.xlane.xlu0 %1327
        %v1329 = vmul.f32 %v1324, %v1313
        %v1330 = vmul.f32 %v1326, %v1313
        %v1331 = vmul.f32 %v1328, %v1313
        %v1332 = vadd.f32 %v1329, 1e-05
        %v1333 = vadd.f32 %v1330, 1e-05
        %v1334 = vadd.f32 %v1331, 1e-05
        %v1335 = vrsqrt.pop %v1332
        %v1336 = vmul.f32 %v1335, %v1332
        %v1337 = vmul.f32 %v1336, %v1335
        %v1338 = vmul.f32 0.5, %v1337
        %v1339 = vsub.f32 1.5, %v1338
        %v1340 = vmul.f32 %v1335, %v1339
        %vm1341 = vweird.f32 %v1332
        %vm1342 = vweird.f32 %v1335
        %vm1343 = vmor %vm1341, %vm1342
        %v1344 = vsel %vm1343, %v1335, %v1340
        %v1345 = vrsqrt.pop %v1333
        %v1346 = vmul.f32 %v1345, %v1333
        %v1347 = vmul.f32 %v1346, %v1345
        %v1348 = vmul.f32 0.5, %v1347
        %v1349 = vsub.f32 1.5, %v1348
        %v1350 = vmul.f32 %v1345, %v1349
        %vm1351 = vweird.f32 %v1333
        %vm1352 = vweird.f32 %v1345
        %vm1353 = vmor %vm1351, %vm1352
        %v1354 = vsel %vm1353, %v1345, %v1350
        %v1355 = vrsqrt.pop %v1334
        %v1356 = vmul.f32 %v1355, %v1334
        %v1357 = vmul.f32 %v1356, %v1355
        %v1358 = vmul.f32 0.5, %v1357
        %v1359 = vsub.f32 1.5, %v1358
        %v1360 = vmul.f32 %v1355, %v1359
        %vm1361 = vweird.f32 %v1334
        %vm1362 = vweird.f32 %v1355
        %vm1363 = vmor %vm1361, %vm1362
        %v1364 = vsel %vm1363, %v1355, %v1360
        %v1365 = vmul.f32 %v1317, %v1344
        %v1366 = vmul.f32 %v1318, %v1354
        %v1367 = vmul.f32 %v1319, %v1364
        %v1368 = vld [vmem:[%s5] sm:$0x1]
        %v1370 = vperm.slane %v1368, 0
        %v1372 = vmul.f32 %v1365, %v1370
        %v1373 = vmul.f32 %v1366, %v1370
        %v1374 = vmul.f32 %v1367, %v1370
        %v1375 = vld [vmem:[%s6] sm:$0x1]
        %v1377 = vperm.slane %v1375, 0
        %v1379 = vadd.f32 %v1372, %v1377
        %v1380 = vadd.f32 %v1373, %v1377
        %v1381 = vadd.f32 %v1374, %v1377
        %v1382 = vld [vmem:[#allocation4] sm:$0xff]
        %v1383 = vld [vmem:[#allocation4 + $0x8] sm:$0xff]
        %v1384 = vld [vmem:[#allocation4 + $0x10] sm:$0xff]
        %v1385 = vld [vmem:[#allocation4 + $0x18] sm:$0xff]
        %v1386 = vld [vmem:[#allocation4 + $0x20] sm:$0xff]
        %v1387 = vld [vmem:[#allocation4 + $0x28] sm:$0xff]
        %v1388 = vld [vmem:[#allocation4 + $0x30] sm:$0xff]
        %v1389 = vld [vmem:[#allocation4 + $0x38] sm:$0xff]
        %v1390 = vld [vmem:[#allocation4 + $0x40] sm:$0xff]
        %v1391 = vld [vmem:[#allocation4 + $0x48] sm:$0xff]
        %v1392 = vld [vmem:[#allocation4 + $0x50] sm:$0xff]
        %v1393 = vld [vmem:[#allocation4 + $0x58] sm:$0xff]
        %v1394 = vld [vmem:[#allocation4 + $0x60] sm:$0xff]
        %v1395 = vld [vmem:[#allocation4 + $0x68] sm:$0xff]
        %v1396 = vld [vmem:[#allocation4 + $0x70] sm:$0xff]
        %v1397 = vld [vmem:[#allocation4 + $0x78] sm:$0xff]
        %v1398 = vld [vmem:[#allocation4 + $0x80] sm:$0xff]
        %v1399 = vld [vmem:[#allocation4 + $0x88] sm:$0xff]
        %v1400 = vld [vmem:[#allocation4 + $0x90] sm:$0xff]
        %v1401 = vld [vmem:[#allocation4 + $0x98] sm:$0xff]
        %v1402 = vld [vmem:[#allocation4 + $0xa0] sm:$0xff]
        %v1403 = vld [vmem:[#allocation4 + $0xa8] sm:$0xff]
        %v1404 = vld [vmem:[#allocation4 + $0xb0] sm:$0xff]
        %v1405 = vld [vmem:[#allocation4 + $0xb8] sm:$0xff]
        %v1406 = vld [vmem:[#allocation4 + $0xc0] sm:$0xff]
        %v1407 = vld [vmem:[#allocation4 + $0xc8] sm:$0xff]
        %v1408 = vld [vmem:[#allocation4 + $0xd0] sm:$0xff]
        %v1409 = vld [vmem:[#allocation4 + $0xd8] sm:$0xff]
        %v1410 = vld [vmem:[#allocation4 + $0xe0] sm:$0xff]
        %v1411 = vld [vmem:[#allocation4 + $0xe8] sm:$0xff]
        %v1412 = vld [vmem:[#allocation4 + $0xf0] sm:$0xff]
        %v1413 = vld [vmem:[#allocation4 + $0xf8] sm:$0xff]
        %v1414 = vld [vmem:[%s8] sm:$0x3]
        %v1416 = vperm.slane %v1414, 0
        %v1417 = vperm.slane %v1414, 1
        %1420 = vmatpush.msra.mxu0 %v1412
        %1421 = vmatpush.msra.mxu0 %v1410
        %1422 = vmatpush.msra.mxu0 %v1408
        %1423 = vmatpush.msra.mxu0 %v1406
        %1424 = vmatpush.msra.mxu0 %v1404
        %1425 = vmatpush.msra.mxu0 %v1402
        %1426 = vmatpush.msra.mxu0 %v1400
        %1427 = vmatpush.msra.mxu0 %v1398
        %1428 = vmatpush.msra.mxu0 %v1396
        %1429 = vmatpush.msra.mxu0 %v1394
        %1430 = vmatpush.msra.mxu0 %v1392
        %1431 = vmatpush.msra.mxu0 %v1390
        %1432 = vmatpush.msra.mxu0 %v1388
        %1433 = vmatpush.msra.mxu0 %v1386
        %1434 = vmatpush.msra.mxu0 %v1384
        %1435 = vmatpush.msra.mxu0 %v1382
        %1436 = vmatmul.f32.gmra.mxu0 %v1379
        %v1437 = vpop.f32.mrf.mxu0
        %v1438 = vadd.f32 %v1416, %v1437
        %1439 = vmatmul.f32.gmra.mxu0 %v1380
        %v1440 = vpop.f32.mrf.mxu0
        %v1441 = vadd.f32 %v1416, %v1440
        %1442 = vmatmul.f32.gmra.mxu0 %v1381
        %v1443 = vpop.f32.mrf.mxu0
        %v1444 = vadd.f32 %v1416, %v1443
        %1445 = vdwg.mxu0
        %1446 = vmatpush.msra.mxu0 %v1413
        %1447 = vmatpush.msra.mxu0 %v1411
        %1448 = vmatpush.msra.mxu0 %v1409
        %1449 = vmatpush.msra.mxu0 %v1407
        %1450 = vmatpush.msra.mxu0 %v1405
        %1451 = vmatpush.msra.mxu0 %v1403
        %1452 = vmatpush.msra.mxu0 %v1401
        %1453 = vmatpush.msra.mxu0 %v1399
        %1454 = vmatpush.msra.mxu0 %v1397
        %1455 = vmatpush.msra.mxu0 %v1395
        %1456 = vmatpush.msra.mxu0 %v1393
        %1457 = vmatpush.msra.mxu0 %v1391
        %1458 = vmatpush.msra.mxu0 %v1389
        %1459 = vmatpush.msra.mxu0 %v1387
        %1460 = vmatpush.msra.mxu0 %v1385
        %1461 = vmatpush.msra.mxu0 %v1383
        %1462 = vmatmul.f32.gmra.mxu0 %v1379
        %v1463 = vpop.f32.mrf.mxu0
        %v1464 = vadd.f32 %v1417, %v1463
        %1465 = vmatmul.f32.gmra.mxu0 %v1380
        %v1466 = vpop.f32.mrf.mxu0
        %v1467 = vadd.f32 %v1417, %v1466
        %1468 = vmatmul.f32.gmra.mxu0 %v1381
        %v1469 = vpop.f32.mrf.mxu0
        %v1470 = vadd.f32 %v1417, %v1469
        %1471 = vdwg.mxu0
        %v1472 = vmul.f32 %v1438, 0.5
        %v1473 = vmul.f32 %v1464, 0.5
        %v1474 = vmul.f32 %v1441, 0.5
        %v1475 = vmul.f32 %v1467, 0.5
        %v1476 = vmul.f32 %v1444, 0.5
        %v1477 = vmul.f32 %v1470, 0.5
        %v1478 = vmul.f32 %v1438, 0.70710677
        %v1479 = vmul.f32 %v1464, 0.70710677
        %v1480 = vmul.f32 %v1441, 0.70710677
        %v1481 = vmul.f32 %v1467, 0.70710677
        %v1482 = vmul.f32 %v1444, 0.70710677
        %v1483 = vmul.f32 %v1470, 0.70710677
        %v1484 = vmul.f32 %v1478, %v1478
        %v1485 = vmin.f32 16.0, %v1484
        %v1486 = vmul.f32 %v1485, 2.1237322e-06
        %v1487 = vadd.f32 %v1486, 0.00028619796
        %v1488 = vmul.f32 %v1485, %v1487
        %v1489 = vadd.f32 %v1488, 0.0036580483
        %v1490 = vmul.f32 %v1485, %v1489
        %v1491 = vadd.f32 %v1490, 0.05243302
        %v1492 = vmul.f32 %v1485, %v1491
        %v1493 = vadd.f32 %v1492, 0.18741608
        %v1494 = vmul.f32 %v1485, %v1493
        %v1495 = vadd.f32 %v1494, 1.1283791
        %v1496 = vmul.f32 %v1478, %v1495
        %v1497 = vmul.f32 %v1485, 3.8918573e-05
        %v1498 = vadd.f32 %v1497, 0.001143296
        %v1499 = vmul.f32 %v1485, %v1498
        %v1500 = vadd.f32 %v1499, 0.014752088
        %v1501 = vmul.f32 %v1485, %v1500
        %v1502 = vadd.f32 %v1501, 0.112945676
        %v1503 = vmul.f32 %v1485, %v1502
        %v1504 = vadd.f32 %v1503, 0.4994258
        %v1505 = vmul.f32 %v1485, %v1504
        %v1506 = vadd.f32 %v1505, 1.0
        %v1507 = vrcp.pop %v1506
        %v1508 = vmul.f32 %v1506, %v1507
        %v1509 = vsub.f32 1.0, %v1508
        %v1510 = vmul.f32 %v1507, %v1509
        %v1511 = vadd.f32 %v1507, %v1510
        %vm1512 = vweird.f32 %v1506
        %vm1513 = vweird.f32 %v1507
        %vm1514 = vmor %vm1512, %vm1513
        %v1515 = vsel %vm1514, %v1507, %v1511
        %v1516 = vand.u32 2147483647, %v1506
        %vm1517 = vcmp.eq.f32.partialorder %v1516, 8.507059e+37
        %v1518 = vand.u32 %v1506, 2147483648
        %v1519 = vor.u32 1.1754944e-38, %v1518
        %v1520 = vsel %vm1517, %v1519, %v1515
        %v1521 = vmul.f32 %v1496, %v1520
        %v1522 = vmin.f32 %v1521, 1.0
        %v1523 = vmax.f32 %v1522, -1.0
        %v1524 = vmul.f32 %v1479, %v1479
        %v1525 = vmin.f32 16.0, %v1524
        %v1526 = vmul.f32 %v1525, 2.1237322e-06
        %v1527 = vadd.f32 %v1526, 0.00028619796
        %v1528 = vmul.f32 %v1525, %v1527
        %v1529 = vadd.f32 %v1528, 0.0036580483
        %v1530 = vmul.f32 %v1525, %v1529
        %v1531 = vadd.f32 %v1530, 0.05243302
        %v1532 = vmul.f32 %v1525, %v1531
        %v1533 = vadd.f32 %v1532, 0.18741608
        %v1534 = vmul.f32 %v1525, %v1533
        %v1535 = vadd.f32 %v1534, 1.1283791
        %v1536 = vmul.f32 %v1479, %v1535
        %v1537 = vmul.f32 %v1525, 3.8918573e-05
        %v1538 = vadd.f32 %v1537, 0.001143296
        %v1539 = vmul.f32 %v1525, %v1538
        %v1540 = vadd.f32 %v1539, 0.014752088
        %v1541 = vmul.f32 %v1525, %v1540
        %v1542 = vadd.f32 %v1541, 0.112945676
        %v1543 = vmul.f32 %v1525, %v1542
        %v1544 = vadd.f32 %v1543, 0.4994258
        %v1545 = vmul.f32 %v1525, %v1544
        %v1546 = vadd.f32 %v1545, 1.0
        %v1547 = vrcp.pop %v1546
        %v1548 = vmul.f32 %v1546, %v1547
        %v1549 = vsub.f32 1.0, %v1548
        %v1550 = vmul.f32 %v1547, %v1549
        %v1551 = vadd.f32 %v1547, %v1550
        %vm1552 = vweird.f32 %v1546
        %vm1553 = vweird.f32 %v1547
        %vm1554 = vmor %vm1552, %vm1553
        %v1555 = vsel %vm1554, %v1547, %v1551
        %v1556 = vand.u32 2147483647, %v1546
        %vm1557 = vcmp.eq.f32.partialorder %v1556, 8.507059e+37
        %v1558 = vand.u32 %v1546, 2147483648
        %v1559 = vor.u32 1.1754944e-38, %v1558
        %v1560 = vsel %vm1557, %v1559, %v1555
        %v1561 = vmul.f32 %v1536, %v1560
        %v1562 = vmin.f32 %v1561, 1.0
        %v1563 = vmax.f32 %v1562, -1.0
        %v1564 = vmul.f32 %v1480, %v1480
        %v1565 = vmin.f32 16.0, %v1564
        %v1566 = vmul.f32 %v1565, 2.1237322e-06
        %v1567 = vadd.f32 %v1566, 0.00028619796
        %v1568 = vmul.f32 %v1565, %v1567
        %v1569 = vadd.f32 %v1568, 0.0036580483
        %v1570 = vmul.f32 %v1565, %v1569
        %v1571 = vadd.f32 %v1570, 0.05243302
        %v1572 = vmul.f32 %v1565, %v1571
        %v1573 = vadd.f32 %v1572, 0.18741608
        %v1574 = vmul.f32 %v1565, %v1573
        %v1575 = vadd.f32 %v1574, 1.1283791
        %v1576 = vmul.f32 %v1480, %v1575
        %v1577 = vmul.f32 %v1565, 3.8918573e-05
        %v1578 = vadd.f32 %v1577, 0.001143296
        %v1579 = vmul.f32 %v1565, %v1578
        %v1580 = vadd.f32 %v1579, 0.014752088
        %v1581 = vmul.f32 %v1565, %v1580
        %v1582 = vadd.f32 %v1581, 0.112945676
        %v1583 = vmul.f32 %v1565, %v1582
        %v1584 = vadd.f32 %v1583, 0.4994258
        %v1585 = vmul.f32 %v1565, %v1584
        %v1586 = vadd.f32 %v1585, 1.0
        %v1587 = vrcp.pop %v1586
        %v1588 = vmul.f32 %v1586, %v1587
        %v1589 = vsub.f32 1.0, %v1588
        %v1590 = vmul.f32 %v1587, %v1589
        %v1591 = vadd.f32 %v1587, %v1590
        %vm1592 = vweird.f32 %v1586
        %vm1593 = vweird.f32 %v1587
        %vm1594 = vmor %vm1592, %vm1593
        %v1595 = vsel %vm1594, %v1587, %v1591
        %v1596 = vand.u32 2147483647, %v1586
        %vm1597 = vcmp.eq.f32.partialorder %v1596, 8.507059e+37
        %v1598 = vand.u32 %v1586, 2147483648
        %v1599 = vor.u32 1.1754944e-38, %v1598
        %v1600 = vsel %vm1597, %v1599, %v1595
        %v1601 = vmul.f32 %v1576, %v1600
        %v1602 = vmin.f32 %v1601, 1.0
        %v1603 = vmax.f32 %v1602, -1.0
        %v1604 = vmul.f32 %v1481, %v1481
        %v1605 = vmin.f32 16.0, %v1604
        %v1606 = vmul.f32 %v1605, 2.1237322e-06
        %v1607 = vadd.f32 %v1606, 0.00028619796
        %v1608 = vmul.f32 %v1605, %v1607
        %v1609 = vadd.f32 %v1608, 0.0036580483
        %v1610 = vmul.f32 %v1605, %v1609
        %v1611 = vadd.f32 %v1610, 0.05243302
        %v1612 = vmul.f32 %v1605, %v1611
        %v1613 = vadd.f32 %v1612, 0.18741608
        %v1614 = vmul.f32 %v1605, %v1613
        %v1615 = vadd.f32 %v1614, 1.1283791
        %v1616 = vmul.f32 %v1481, %v1615
        %v1617 = vmul.f32 %v1605, 3.8918573e-05
        %v1618 = vadd.f32 %v1617, 0.001143296
        %v1619 = vmul.f32 %v1605, %v1618
        %v1620 = vadd.f32 %v1619, 0.014752088
        %v1621 = vmul.f32 %v1605, %v1620
        %v1622 = vadd.f32 %v1621, 0.112945676
        %v1623 = vmul.f32 %v1605, %v1622
        %v1624 = vadd.f32 %v1623, 0.4994258
        %v1625 = vmul.f32 %v1605, %v1624
        %v1626 = vadd.f32 %v1625, 1.0
        %v1627 = vrcp.pop %v1626
        %v1628 = vmul.f32 %v1626, %v1627
        %v1629 = vsub.f32 1.0, %v1628
        %v1630 = vmul.f32 %v1627, %v1629
        %v1631 = vadd.f32 %v1627, %v1630
        %vm1632 = vweird.f32 %v1626
        %vm1633 = vweird.f32 %v1627
        %vm1634 = vmor %vm1632, %vm1633
        %v1635 = vsel %vm1634, %v1627, %v1631
        %v1636 = vand.u32 2147483647, %v1626
        %vm1637 = vcmp.eq.f32.partialorder %v1636, 8.507059e+37
        %v1638 = vand.u32 %v1626, 2147483648
        %v1639 = vor.u32 1.1754944e-38, %v1638
        %v1640 = vsel %vm1637, %v1639, %v1635
        %v1641 = vmul.f32 %v1616, %v1640
        %v1642 = vmin.f32 %v1641, 1.0
        %v1643 = vmax.f32 %v1642, -1.0
        %v1644 = vmul.f32 %v1482, %v1482
        %v1645 = vmin.f32 16.0, %v1644
        %v1646 = vmul.f32 %v1645, 2.1237322e-06
        %v1647 = vadd.f32 %v1646, 0.00028619796
        %v1648 = vmul.f32 %v1645, %v1647
        %v1649 = vadd.f32 %v1648, 0.0036580483
        %v1650 = vmul.f32 %v1645, %v1649
        %v1651 = vadd.f32 %v1650, 0.05243302
        %v1652 = vmul.f32 %v1645, %v1651
        %v1653 = vadd.f32 %v1652, 0.18741608
        %v1654 = vmul.f32 %v1645, %v1653
        %v1655 = vadd.f32 %v1654, 1.1283791
        %v1656 = vmul.f32 %v1482, %v1655
        %v1657 = vmul.f32 %v1645, 3.8918573e-05
        %v1658 = vadd.f32 %v1657, 0.001143296
        %v1659 = vmul.f32 %v1645, %v1658
        %v1660 = vadd.f32 %v1659, 0.014752088
        %v1661 = vmul.f32 %v1645, %v1660
        %v1662 = vadd.f32 %v1661, 0.112945676
        %v1663 = vmul.f32 %v1645, %v1662
        %v1664 = vadd.f32 %v1663, 0.4994258
        %v1665 = vmul.f32 %v1645, %v1664
        %v1666 = vadd.f32 %v1665, 1.0
        %v1667 = vrcp.pop %v1666
        %v1668 = vmul.f32 %v1666, %v1667
        %v1669 = vsub.f32 1.0, %v1668
        %v1670 = vmul.f32 %v1667, %v1669
        %v1671 = vadd.f32 %v1667, %v1670
        %vm1672 = vweird.f32 %v1666
        %vm1673 = vweird.f32 %v1667
        %vm1674 = vmor %vm1672, %vm1673
        %v1675 = vsel %vm1674, %v1667, %v1671
        %v1676 = vand.u32 2147483647, %v1666
        %vm1677 = vcmp.eq.f32.partialorder %v1676, 8.507059e+37
        %v1678 = vand.u32 %v1666, 2147483648
        %v1679 = vor.u32 1.1754944e-38, %v1678
        %v1680 = vsel %vm1677, %v1679, %v1675
        %v1681 = vmul.f32 %v1656, %v1680
        %v1682 = vmin.f32 %v1681, 1.0
        %v1683 = vmax.f32 %v1682, -1.0
        %v1684 = vmul.f32 %v1483, %v1483
        %v1685 = vmin.f32 16.0, %v1684
        %v1686 = vmul.f32 %v1685, 2.1237322e-06
        %v1687 = vadd.f32 %v1686, 0.00028619796
        %v1688 = vmul.f32 %v1685, %v1687
        %v1689 = vadd.f32 %v1688, 0.0036580483
        %v1690 = vmul.f32 %v1685, %v1689
        %v1691 = vadd.f32 %v1690, 0.05243302
        %v1692 = vmul.f32 %v1685, %v1691
        %v1693 = vadd.f32 %v1692, 0.18741608
        %v1694 = vmul.f32 %v1685, %v1693
        %v1695 = vadd.f32 %v1694, 1.1283791
        %v1696 = vmul.f32 %v1483, %v1695
        %v1697 = vmul.f32 %v1685, 3.8918573e-05
        %v1698 = vadd.f32 %v1697, 0.001143296
        %v1699 = vmul.f32 %v1685, %v1698
        %v1700 = vadd.f32 %v1699, 0.014752088
        %v1701 = vmul.f32 %v1685, %v1700
        %v1702 = vadd.f32 %v1701, 0.112945676
        %v1703 = vmul.f32 %v1685, %v1702
        %v1704 = vadd.f32 %v1703, 0.4994258
        %v1705 = vmul.f32 %v1685, %v1704
        %v1706 = vadd.f32 %v1705, 1.0
        %v1707 = vrcp.pop %v1706
        %v1708 = vmul.f32 %v1706, %v1707
        %v1709 = vsub.f32 1.0, %v1708
        %v1710 = vmul.f32 %v1707, %v1709
        %v1711 = vadd.f32 %v1707, %v1710
        %vm1712 = vweird.f32 %v1706
        %vm1713 = vweird.f32 %v1707
        %vm1714 = vmor %vm1712, %vm1713
        %v1715 = vsel %vm1714, %v1707, %v1711
        %v1716 = vand.u32 2147483647, %v1706
        %vm1717 = vcmp.eq.f32.partialorder %v1716, 8.507059e+37
        %v1718 = vand.u32 %v1706, 2147483648
        %v1719 = vor.u32 1.1754944e-38, %v1718
        %v1720 = vsel %vm1717, %v1719, %v1715
        %v1721 = vmul.f32 %v1696, %v1720
        %v1722 = vmin.f32 %v1721, 1.0
        %v1723 = vmax.f32 %v1722, -1.0
        %v1724 = vadd.f32 %v1523, 1.0
        %v1725 = vadd.f32 %v1563, 1.0
        %v1726 = vadd.f32 %v1603, 1.0
        %v1727 = vadd.f32 %v1643, 1.0
        %v1728 = vadd.f32 %v1683, 1.0
        %v1729 = vadd.f32 %v1723, 1.0
        %v1730 = vmul.f32 %v1472, %v1724
        %v1731 = vmul.f32 %v1473, %v1725
        %v1732 = vmul.f32 %v1474, %v1726
        %v1733 = vmul.f32 %v1475, %v1727
        %v1734 = vmul.f32 %v1476, %v1728
        %v1735 = vmul.f32 %v1477, %v1729
        %v1736 = vld [vmem:[#allocation6] sm:$0xff]
        %v1737 = vld [vmem:[#allocation6 + $0x8] sm:$0xff]
        %v1738 = vld [vmem:[#allocation6 + $0x10] sm:$0xff]
        %v1739 = vld [vmem:[#allocation6 + $0x18] sm:$0xff]
        %v1740 = vld [vmem:[#allocation6 + $0x20] sm:$0xff]
        %v1741 = vld [vmem:[#allocation6 + $0x28] sm:$0xff]
        %v1742 = vld [vmem:[#allocation6 + $0x30] sm:$0xff]
        %v1743 = vld [vmem:[#allocation6 + $0x38] sm:$0xff]
        %v1744 = vld [vmem:[#allocation6 + $0x40] sm:$0xff]
        %v1745 = vld [vmem:[#allocation6 + $0x48] sm:$0xff]
        %v1746 = vld [vmem:[#allocation6 + $0x50] sm:$0xff]
        %v1747 = vld [vmem:[#allocation6 + $0x58] sm:$0xff]
        %v1748 = vld [vmem:[#allocation6 + $0x60] sm:$0xff]
        %v1749 = vld [vmem:[#allocation6 + $0x68] sm:$0xff]
        %v1750 = vld [vmem:[#allocation6 + $0x70] sm:$0xff]
        %v1751 = vld [vmem:[#allocation6 + $0x78] sm:$0xff]
        %v1752 = vld [vmem:[#allocation6 + $0x80] sm:$0xff]
        %v1753 = vld [vmem:[#allocation6 + $0x88] sm:$0xff]
        %v1754 = vld [vmem:[#allocation6 + $0x90] sm:$0xff]
        %v1755 = vld [vmem:[#allocation6 + $0x98] sm:$0xff]
        %v1756 = vld [vmem:[#allocation6 + $0xa0] sm:$0xff]
        %v1757 = vld [vmem:[#allocation6 + $0xa8] sm:$0xff]
        %v1758 = vld [vmem:[#allocation6 + $0xb0] sm:$0xff]
        %v1759 = vld [vmem:[#allocation6 + $0xb8] sm:$0xff]
        %v1760 = vld [vmem:[#allocation6 + $0xc0] sm:$0xff]
        %v1761 = vld [vmem:[#allocation6 + $0xc8] sm:$0xff]
        %v1762 = vld [vmem:[#allocation6 + $0xd0] sm:$0xff]
        %v1763 = vld [vmem:[#allocation6 + $0xd8] sm:$0xff]
        %v1764 = vld [vmem:[#allocation6 + $0xe0] sm:$0xff]
        %v1765 = vld [vmem:[#allocation6 + $0xe8] sm:$0xff]
        %v1766 = vld [vmem:[#allocation6 + $0xf0] sm:$0xff]
        %v1767 = vld [vmem:[#allocation6 + $0xf8] sm:$0xff]
        %1768 = vmatpush.msra.mxu0 %v1751
        %1769 = vmatpush.msra.mxu0 %v1750
        %1770 = vmatpush.msra.mxu0 %v1749
        %1771 = vmatpush.msra.mxu0 %v1748
        %1772 = vmatpush.msra.mxu0 %v1747
        %1773 = vmatpush.msra.mxu0 %v1746
        %1774 = vmatpush.msra.mxu0 %v1745
        %1775 = vmatpush.msra.mxu0 %v1744
        %1776 = vmatpush.msra.mxu0 %v1743
        %1777 = vmatpush.msra.mxu0 %v1742
        %1778 = vmatpush.msra.mxu0 %v1741
        %1779 = vmatpush.msra.mxu0 %v1740
        %1780 = vmatpush.msra.mxu0 %v1739
        %1781 = vmatpush.msra.mxu0 %v1738
        %1782 = vmatpush.msra.mxu0 %v1737
        %1783 = vmatpush.msra.mxu0 %v1736
        %1784 = vmatmul.f32.gmra.mxu0 %v1730
        %v1785 = vpop.f32.mrf.mxu0
        %v1786 = vadd.f32 0.0, %v1785
        %1787 = vmatmul.f32.gmra.mxu0 %v1732
        %v1788 = vpop.f32.mrf.mxu0
        %v1789 = vadd.f32 0.0, %v1788
        %1790 = vmatmul.f32.gmra.mxu0 %v1734
        %v1791 = vpop.f32.mrf.mxu0
        %v1792 = vadd.f32 0.0, %v1791
        %1793 = vdwg.mxu0
        %1794 = vmatpush.msra.mxu0 %v1767
        %1795 = vmatpush.msra.mxu0 %v1766
        %1796 = vmatpush.msra.mxu0 %v1765
        %1797 = vmatpush.msra.mxu0 %v1764
        %1798 = vmatpush.msra.mxu0 %v1763
        %1799 = vmatpush.msra.mxu0 %v1762
        %1800 = vmatpush.msra.mxu0 %v1761
        %1801 = vmatpush.msra.mxu0 %v1760
        %1802 = vmatpush.msra.mxu0 %v1759
        %1803 = vmatpush.msra.mxu0 %v1758
        %1804 = vmatpush.msra.mxu0 %v1757
        %1805 = vmatpush.msra.mxu0 %v1756
        %1806 = vmatpush.msra.mxu0 %v1755
        %1807 = vmatpush.msra.mxu0 %v1754
        %1808 = vmatpush.msra.mxu0 %v1753
        %1809 = vmatpush.msra.mxu0 %v1752
        %1810 = vmatmul.f32.gmra.mxu0 %v1731
        %v1811 = vpop.f32.mrf.mxu0
        %v1812 = vadd.f32 %v1786, %v1811
        %1813 = vmatmul.f32.gmra.mxu0 %v1733
        %v1814 = vpop.f32.mrf.mxu0
        %v1815 = vadd.f32 %v1789, %v1814
        %1816 = vmatmul.f32.gmra.mxu0 %v1735
        %v1817 = vpop.f32.mrf.mxu0
        %v1818 = vadd.f32 %v1792, %v1817
        %1819 = vdwg.mxu0
        %v1820 = vadd.f32 %v1379, %v1812
        %v1821 = vadd.f32 %v1380, %v1815
        %v1822 = vadd.f32 %v1381, %v1818
        %v1823 = vld [vmem:[%s10] sm:$0x1]
        %v1825 = vperm.slane %v1823, 0
        %v1827 = vadd.f32 %v1820, %v1825
        %v1828 = vadd.f32 %v1821, %v1825
        %v1829 = vadd.f32 %v1822, %v1825
        %1830 = vadd.xlane.f32.xlu0 %v1827
        %v1831 = vpop.xlane.xlu0 %1830
        %1832 = vadd.xlane.f32.xlu0 %v1828
        %v1833 = vpop.xlane.xlu0 %1832
        %1834 = vadd.xlane.f32.xlu0 %v1829
        %v1835 = vpop.xlane.xlu0 %1834
        %v1836 = vmul.f32 %v1831, %v1313
        %v1837 = vmul.f32 %v1833, %v1313
        %v1838 = vmul.f32 %v1835, %v1313
        %v1839 = vsub.f32 %v1827, %v1836
        %v1840 = vsub.f32 %v1828, %v1837
        %v1841 = vsub.f32 %v1829, %v1838
        %v1842 = vmul.f32 %v1839, %v1839
        %v1843 = vmul.f32 %v1840, %v1840
        %v1844 = vmul.f32 %v1841, %v1841
        %1845 = vadd.xlane.f32.xlu0 %v1842
        %v1846 = vpop.xlane.xlu0 %1845
        %1847 = vadd.xlane.f32.xlu0 %v1843
        %v1848 = vpop.xlane.xlu0 %1847
        %1849 = vadd.xlane.f32.xlu0 %v1844
        %v1850 = vpop.xlane.xlu0 %1849
        %v1851 = vmul.f32 %v1846, %v1313
        %v1852 = vmul.f32 %v1848, %v1313
        %v1853 = vmul.f32 %v1850, %v1313
        %v1854 = vadd.f32 %v1851, 1e-05
        %v1855 = vadd.f32 %v1852, 1e-05
        %v1856 = vadd.f32 %v1853, 1e-05
        %v1857 = vrsqrt.pop %v1854
        %v1858 = vmul.f32 %v1857, %v1854
        %v1859 = vmul.f32 %v1858, %v1857
        %v1860 = vmul.f32 0.5, %v1859
        %v1861 = vsub.f32 1.5, %v1860
        %v1862 = vmul.f32 %v1857, %v1861
        %vm1863 = vweird.f32 %v1854
        %vm1864 = vweird.f32 %v1857
        %vm1865 = vmor %vm1863, %vm1864
        %v1866 = vsel %vm1865, %v1857, %v1862
        %v1867 = vrsqrt.pop %v1855
        %v1868 = vmul.f32 %v1867, %v1855
        %v1869 = vmul.f32 %v1868, %v1867
        %v1870 = vmul.f32 0.5, %v1869
        %v1871 = vsub.f32 1.5, %v1870
        %v1872 = vmul.f32 %v1867, %v1871
        %vm1873 = vweird.f32 %v1855
        %vm1874 = vweird.f32 %v1867
        %vm1875 = vmor %vm1873, %vm1874
        %v1876 = vsel %vm1875, %v1867, %v1872
        %v1877 = vrsqrt.pop %v1856
        %v1878 = vmul.f32 %v1877, %v1856
        %v1879 = vmul.f32 %v1878, %v1877
        %v1880 = vmul.f32 0.5, %v1879
        %v1881 = vsub.f32 1.5, %v1880
        %v1882 = vmul.f32 %v1877, %v1881
        %vm1883 = vweird.f32 %v1856
        %vm1884 = vweird.f32 %v1877
        %vm1885 = vmor %vm1883, %vm1884
        %v1886 = vsel %vm1885, %v1877, %v1882
        %v1887 = vmul.f32 %v1839, %v1866
        %v1888 = vmul.f32 %v1840, %v1876
        %v1889 = vmul.f32 %v1841, %v1886
        %v1890 = vld [vmem:[%s11] sm:$0x1]
        %v1892 = vperm.slane %v1890, 0
        %v1894 = vmul.f32 %v1887, %v1892
        %v1895 = vmul.f32 %v1888, %v1892
        %v1896 = vmul.f32 %v1889, %v1892
        %v1897 = vld [vmem:[%s12] sm:$0x1]
        %v1899 = vperm.slane %v1897, 0
        %v1901 = vadd.f32 %v1894, %v1899
        %v1902 = vadd.f32 %v1895, %v1899
        %v1903 = vadd.f32 %v1896, %v1899
        %1904 = vst [vmem:[%s490] sm:$0xff] %v1901
        %1905 = vst [vmem:[%s490 + $0x8] sm:$0xff] %v1902
        %1906 = vst [vmem:[%s490 + $0x10] sm:$0xff] %v1903
        %p1907 = scmp.lt.s32.totalorder %s26, 1
        %s1908 = scalar_select %p1907, %s26, 1
        %s1909 = smul.addr %s1908, 3
        %s1910 = smul.addr %s1909, 8
        %s1911 = scalar_lea.vmem %s13, %s1910
        // Predicated region
        $region85: #{fairseq_wav2vec2_forward.13} parent=71 // pred_check
          %p1912 = pneg %p322
        $region86: #{fairseq_wav2vec2_forward.13} parent=71 // pred_check_branch
          %1914 = sbr.rel (%p1912) target = $region88
        $region87: #{fairseq_wav2vec2_forward.13} parent=71 // pred_region
          _
        $region88: #{fairseq_wav2vec2_forward.13} parent=71 // pred_fallthru
          _
      $region72: #{fairseq_wav2vec2_forward.13} parent=5 // pred_fallthru
        _
      %p1915 = scmp.le.s32.totalorder 2, %s21
      // Predicated region
      $region89: #{fairseq_wav2vec2_forward.13} parent=5 // pred_check
        %p1916 = pneg %p1915
      $region90: #{fairseq_wav2vec2_forward.13} parent=5 // pred_check_branch
        %1918 = sbr.rel (%p1916) target = $region92
      $region91: #{fairseq_wav2vec2_forward.13} parent=5 // pred_region
        %s1919 = ssub.s32 %s21, 2
        // Predicated region
        $region93: #{fairseq_wav2vec2_forward.13} parent=91 // pred_check
          %p1920 = pneg %p328
        $region94: #{fairseq_wav2vec2_forward.13} parent=91 // pred_check_branch
          %1922 = sbr.rel (%p1920) target = $region96
        $region95: #{fairseq_wav2vec2_forward.13} parent=91 // pred_region
          %p1923 = scmp.lt.s32.totalorder %s27, 1
          %s1924 = scalar_select %p1923, %s27, 1
          %s1925 = smul.addr %s1924, 3
          %s1926 = smul.addr %s1925, 8
          %s1927 = scalar_lea.vmem %s13, %s1926
        $region96: #{fairseq_wav2vec2_forward.13} parent=91 // pred_fallthru
          _
      $region92: #{fairseq_wav2vec2_forward.13} parent=5 // pred_fallthru
        _
    $region6: #{fairseq_wav2vec2_forward.13} parent=1 // loop_footer
      %s25 = sadd.s32 1, %s21
    $region7: #{fairseq_wav2vec2_forward.13} parent=1 // loop_footer_branch
      %20 = sbr.rel target = $region3
    $region8: #{fairseq_wav2vec2_forward.13} parent=1 // loop_exit
      _
    %1928 = vsyncpa [#allocation3], 1
    %s1929 = scalar_lea.sflag [#allocation3], 1
    %1930 = vsyncpa %s1929, 1
    %1931 = vsyncpa [#allocation5], 1

</llo_original>
